<compile_context>
chip_gen: v7x
topology: tpu7x:2x2x1
jax: 0.10.0
libtpu: 0.0.40
codegen_flags: <defaults>
</compile_context>

<pallas_src>
import functools

import jax
import jax.numpy as jnp
from jax import lax
from jax.experimental import pallas as pl
from jax.experimental.pallas import tpu as pltpu


# ----------------------------------------------------------------------------
# In-kernel helpers
# ----------------------------------------------------------------------------
def _fill_padded(pad_scr, interior, pad):
    """Place `interior` at the centre of pad_scr and (re)zero the halo strips.

    Only the thin border strips are zeroed (not the whole scratch): the
    interior is overwritten on every grid step, and strip-zeroing stays correct
    even when the batch grid axis is sharded across TensorCores.
    """
    Hp, Wp, C = pad_scr.shape
    H, W = Hp - 2 * pad, Wp - 2 * pad
    if pad > 0:
        zrow = jnp.zeros((pad, Wp, C), pad_scr.dtype)
        pad_scr[0:pad, :, :] = zrow
        pad_scr[Hp - pad:Hp, :, :] = zrow
        zcol = jnp.zeros((Hp, pad, C), pad_scr.dtype)
        pad_scr[:, 0:pad, :] = zcol
        pad_scr[:, Wp - pad:Wp, :] = zcol
    pad_scr[pad:pad + H, pad:pad + W, :] = interior


def _conv_accum(pad_scr, w_ref, b_ref, KH, KW):
    """Direct conv as KH*KW accumulated per-tap matmuls (real channel counts).

    pad_scr: (Ho+KH-1, Wo+KW-1, Cin) zero-bordered activation in VMEM.
    w_ref:   (KH*KW, Cin, Cout) weights, tap-major.
    b_ref:   (1, Cout) bias.
    Returns  (Ho*Wo, Cout) f32 pre-BN conv output.
    """
    Hp, Wp, Cin = pad_scr.shape
    Ho, Wo = Hp - KH + 1, Wp - KW + 1
    acc = None
    for ky in range(KH):
        for kx in range(KW):
            tap = pad_scr[ky:ky + Ho, kx:kx + Wo, :].reshape(Ho * Wo, Cin)
            part = jnp.dot(tap, w_ref[ky * KW + kx],
                           preferred_element_type=jnp.float32)
            acc = part if acc is None else acc + part
    return acc + b_ref[...]


def _tile_stats(z):
    """Per-channel (mean, M2) of one tile, two-pass (numerically stable)."""
    mu = jnp.mean(z, axis=0, keepdims=True)                   # (1, C)
    d = z - mu
    m2 = jnp.sum(d * d, axis=0, keepdims=True)                # (1, C)
    return jnp.concatenate([mu, m2], axis=0)                  # (2, C)


# ----------------------------------------------------------------------------
# Kernels
# ----------------------------------------------------------------------------
def _conv_stats_kernel(x_ref, w_ref, b_ref, z_ref, ps_ref, pad_scr,
                       *, KH, KW, pad):
    """Pass A: conv1 + bias for one image; write pre-BN output + tile stats."""
    _fill_padded(pad_scr, x_ref[0], pad)
    z = _conv_accum(pad_scr, w_ref, b_ref, KH, KW)            # (Ho*Wo, C1) f32
    _, Ho, Wo, C = z_ref.shape
    z_ref[...] = z.reshape(1, Ho, Wo, C)
    ps_ref[...] = _tile_stats(z)[None]


def _bn_relu_conv_stats_kernel(z1_ref, s1_ref, t1_ref, w2_ref, b2_ref,
                               z2_ref, ps2_ref, pad_scr, *, KH, KW, pad):
    """Pass B: BN1 + ReLU (kept in VMEM) fused with conv2 + bias + tile stats."""
    a = jnp.maximum(z1_ref[0] * s1_ref[...] + t1_ref[...], 0.0)   # (H1, W1, C1)
    _fill_padded(pad_scr, a, pad)
    z2 = _conv_accum(pad_scr, w2_ref, b2_ref, KH, KW)             # (H2*W2, C2)
    _, Ho, Wo, C = z2_ref.shape
    z2_ref[...] = z2.reshape(1, Ho, Wo, C)
    ps2_ref[...] = _tile_stats(z2)[None]


def _bn_relu_kernel(z_ref, s_ref, t_ref, y_ref):
    """Pass C: BN2 + ReLU as one fused FMA; emits the real C2 channels."""
    y_ref[...] = jnp.maximum(z_ref[...] * s_ref[...] + t_ref[...], 0.0)


# ----------------------------------------------------------------------------
# Wrapper-side BN fold (tiny (N,2,C) -> (1,C) reduction, done once per stage)
# ----------------------------------------------------------------------------
def _fold_bn(ps, gamma, beta, *, n_per_tile, eps):
    """Merge per-image (mean, M2) partials exactly; fold BN into y = z*s + t."""
    means, m2s = ps[:, 0, :], ps[:, 1, :]                     # (N, C) each
    n_tiles = ps.shape[0]
    mu = jnp.mean(means, axis=0, keepdims=True)               # (1, C)
    dm = means - mu
    var = (jnp.sum(m2s, axis=0, keepdims=True)
           + n_per_tile * jnp.sum(dm * dm, axis=0, keepdims=True)
           ) / (n_tiles * n_per_tile)                         # biased, as in BN
    s = gamma.reshape(1, -1) * lax.rsqrt(var + eps)
    t = beta.reshape(1, -1) - mu * s
    return s, t


# ----------------------------------------------------------------------------
# Forward wrapper (layout glue: NCHW<->NHWC, tap-major weights, pallas_calls)
# ----------------------------------------------------------------------------
_COMPILER_PARAMS = pltpu.CompilerParams(
    dimension_semantics=("parallel",),          # batch grid axis -> both v7x TCs
    vmem_limit_bytes=32 * 1024 * 1024)          # tiny per-step footprint here


def conv_block_forward(x_nchw, params, *, padding, eps=1e-5):
    """conv_block.forward: (Conv2d+BN2d+ReLU) x 2. Input/output NCHW float32."""
    x = jnp.transpose(x_nchw, (0, 2, 3, 1)).astype(jnp.float32)   # NCHW -> NHWC
    N, H, W, Cin = x.shape
    w1, w2 = params["w1"], params["w2"]
    KH, KW, _, C1 = w1.shape
    C2 = w2.shape[-1]

    H1, W1 = H + 2 * padding - KH + 1, W + 2 * padding - KW + 1
    H2, W2 = H1 + 2 * padding - KH + 1, W1 + 2 * padding - KW + 1

    # Tap-major weights / row-vector biases at their REAL sizes (no lane pad).
    w1t = w1.reshape(KH * KW, Cin, C1)
    b1 = params["b1"].reshape(1, C1)
    w2t = w2.reshape(KH * KW, C1, C2)
    b2 = params["b2"].reshape(1, C2)

    # ---- pass A: conv1 + bias -> z1 (real channels) + per-image stats ----
    z1, ps1 = pl.pallas_call(
        functools.partial(_conv_stats_kernel, KH=KH, KW=KW, pad=padding),
        grid=(N,),
        in_specs=[
            pl.BlockSpec((1, H, W, Cin), lambda i: (i, 0, 0, 0)),
            pl.BlockSpec((KH * KW, Cin, C1), lambda i: (0, 0, 0)),
            pl.BlockSpec((1, C1), lambda i: (0, 0)),
        ],
        out_specs=[
            pl.BlockSpec((1, H1, W1, C1), lambda i: (i, 0, 0, 0)),
            pl.BlockSpec((1, 2, C1), lambda i: (i, 0, 0)),
        ],
        out_shape=[
            jax.ShapeDtypeStruct((N, H1, W1, C1), jnp.float32),
            jax.ShapeDtypeStruct((N, 2, C1), jnp.float32),
        ],
        scratch_shapes=[
            pltpu.VMEM((H + 2 * padding, W + 2 * padding, Cin), jnp.float32)],
        compiler_params=_COMPILER_PARAMS,
    )(x, w1t, b1)

    # Fold BN1 partials into per-channel (scale, shift) once, outside the grid.
    s1, t1 = _fold_bn(ps1, params["gamma1"], params["beta1"],
                      n_per_tile=float(H1 * W1), eps=eps)

    # ---- pass B: BN1+ReLU (VMEM-resident) fused with conv2 + bias + stats ----
    z2, ps2 = pl.pallas_call(
        functools.partial(_bn_relu_conv_stats_kernel,
                          KH=KH, KW=KW, pad=padding),
        grid=(N,),
        in_specs=[
            pl.BlockSpec((1, H1, W1, C1), lambda i: (i, 0, 0, 0)),
            pl.BlockSpec((1, C1), lambda i: (0, 0)),
            pl.BlockSpec((1, C1), lambda i: (0, 0)),
            pl.BlockSpec((KH * KW, C1, C2), lambda i: (0, 0, 0)),
            pl.BlockSpec((1, C2), lambda i: (0, 0)),
        ],
        out_specs=[
            pl.BlockSpec((1, H2, W2, C2), lambda i: (i, 0, 0, 0)),
            pl.BlockSpec((1, 2, C2), lambda i: (i, 0, 0)),
        ],
        out_shape=[
            jax.ShapeDtypeStruct((N, H2, W2, C2), jnp.float32),
            jax.ShapeDtypeStruct((N, 2, C2), jnp.float32),
        ],
        scratch_shapes=[
            pltpu.VMEM((H1 + 2 * padding, W1 + 2 * padding, C1), jnp.float32)],
        compiler_params=_COMPILER_PARAMS,
    )(z1, s1, t1, w2t, b2)

    s2, t2 = _fold_bn(ps2, params["gamma2"], params["beta2"],
                      n_per_tile=float(H2 * W2), eps=eps)

    # ---- pass C: BN2 + ReLU -> final activation (real C2 channels) ----
    y = pl.pallas_call(
        _bn_relu_kernel,
        grid=(N,),
        in_specs=[
            pl.BlockSpec((1, H2, W2, C2), lambda i: (i, 0, 0, 0)),
            pl.BlockSpec((1, C2), lambda i: (0, 0)),
            pl.BlockSpec((1, C2), lambda i: (0, 0)),
        ],
        out_specs=pl.BlockSpec((1, H2, W2, C2), lambda i: (i, 0, 0, 0)),
        out_shape=jax.ShapeDtypeStruct((N, H2, W2, C2), jnp.float32),
        compiler_params=_COMPILER_PARAMS,
    )(z2, s2, t2)

    return jnp.transpose(y, (0, 3, 1, 2))              # NHWC -> NCHW (glue)


# ----------------------------------------------------------------------------
# Parameters, pure-JAX reference, and self-test
# ----------------------------------------------------------------------------
def init_conv_block_params(key, in_channels, out_channels, kernel_size, codeword):
    """Deterministic synthetic parameters matching conv_block.__init__ shapes."""
    c2_out = out_channels if codeword == 'C' else out_channels // 2
    ks = jax.random.split(key, 4)
    return {
        "w1": 0.1 * jax.random.normal(
            ks[0], (kernel_size, kernel_size, in_channels, out_channels), jnp.float32),
        "b1": 0.1 * jax.random.normal(ks[1], (out_channels,), jnp.float32),
        "gamma1": jnp.ones((out_channels,), jnp.float32),
        "beta1": jnp.zeros((out_channels,), jnp.float32),
        "w2": 0.1 * jax.random.normal(
            ks[2], (kernel_size, kernel_size, out_channels, c2_out), jnp.float32),
        "b2": 0.1 * jax.random.normal(ks[3], (c2_out,), jnp.float32),
        "gamma2": jnp.ones((c2_out,), jnp.float32),
        "beta2": jnp.zeros((c2_out,), jnp.float32),
    }


def _reference_conv_block(x_nchw, params, *, padding, eps=1e-5):
    """Pure-JAX reference of the PyTorch forward (training-mode BN)."""
    def stage(x, w, b, gamma, beta):
        z = lax.conv_general_dilated(
            x, w, window_strides=(1, 1),
            padding=[(padding, padding), (padding, padding)],
            dimension_numbers=("NHWC", "HWIO", "NHWC"),
            precision=lax.Precision.HIGHEST) + b
        mean = jnp.mean(z, axis=(0, 1, 2), keepdims=True)
        var = jnp.mean((z - mean) ** 2, axis=(0, 1, 2), keepdims=True)
        y = (z - mean) * lax.rsqrt(var + eps) * gamma + beta
        return jnp.maximum(y, 0.0)

    x = jnp.transpose(x_nchw, (0, 2, 3, 1))
    x = stage(x, params["w1"], params["b1"], params["gamma1"], params["beta1"])
    x = stage(x, params["w2"], params["b2"], params["gamma2"], params["beta2"])
    return jnp.transpose(x, (0, 3, 1, 2))


if __name__ == "__main__":
    key = jax.random.PRNGKey(0)
    k_x, k_p = jax.random.split(key)

    N, Cin, H, W = 2, 4, 16, 16
    Cout = 8
    kernel_size, padding = 3, 1
    codeword = 'C'   # conv2 keeps Cout channels ('E' would halve them)

    x = jax.random.normal(k_x, (N, Cin, H, W), jnp.float32)    # PyTorch-style NCHW
    params = init_conv_block_params(k_p, Cin, Cout, kernel_size, codeword)

    fwd = jax.jit(functools.partial(conv_block_forward, padding=padding))
    y = jax.block_until_ready(fwd(x, params))

    expected_c2 = Cout if codeword == 'C' else Cout // 2
    assert y.shape == (N, expected_c2, H, W), y.shape
    assert y.dtype == jnp.float32

    y_ref = _reference_conv_block(x, params, padding=padding)
    max_err = float(jnp.max(jnp.abs(y - y_ref)))
    assert jnp.allclose(y, y_ref, atol=1e-3, rtol=1e-3), max_err

    print("KERNEL_OK")
</pallas_src>

<mosaic_0001>
module attributes {stable_mosaic.version = 11 : i64} {
  func.func @_conv_stats_kernel(%arg0: i32, %arg1: memref<1x16x16x4xf32, #tpu.memory_space<vmem>>, %arg2: memref<9x4x8xf32, #tpu.memory_space<vmem>>, %arg3: memref<1x8xf32, #tpu.memory_space<vmem>>, %arg4: memref<1x16x16x8xf32, #tpu.memory_space<vmem>>, %arg5: memref<1x2x8xf32, #tpu.memory_space<vmem>>, %arg6: memref<18x18x4xf32, #tpu.memory_space<vmem>>) attributes {dimension_semantics = [#tpu.dimension_semantics<parallel>], iteration_bounds = array<i64: 2>, scalar_prefetch = 0 : i64, scratch_operands = 1 : i64, tpu.core_type = #tpu.core_type<tc>, window_params = [{transform_indices = @transform_0, window_bounds = array<i64: 1, 16, 16, 4>}, {pipeline_mode = #tpu.pipeline_mode<synchronous>, transform_indices = @transform_1, window_bounds = array<i64: 9, 4, 8>}, {pipeline_mode = #tpu.pipeline_mode<synchronous>, transform_indices = @transform_2, window_bounds = array<i64: 1, 8>}, {transform_indices = @transform_3, window_bounds = array<i64: 1, 16, 16, 8>}, {transform_indices = @transform_4, window_bounds = array<i64: 1, 2, 8>}]} {
    %c0 = arith.constant 0 : index
    %c0_0 = arith.constant 0 : index
    %c0_1 = arith.constant 0 : index
    %c0_2 = arith.constant 0 : index
    %0 = vector.load %arg1[%c0, %c0_0, %c0_1, %c0_2] : memref<1x16x16x4xf32, #tpu.memory_space<vmem>>, vector<1x16x16x4xf32>
    %1 = vector.shape_cast %0 : vector<1x16x16x4xf32> to vector<16x16x4xf32>
    %cst = arith.constant 0.000000e+00 : f32
    %2 = vector.broadcast %cst : f32 to vector<1x18x4xf32>
    %c0_3 = arith.constant 0 : index
    %c0_4 = arith.constant 0 : index
    %c0_5 = arith.constant 0 : index
    %3 = vector.load %arg6[%c0_3, %c0_4, %c0_5] : memref<18x18x4xf32, #tpu.memory_space<vmem>>, vector<1x18x4xf32>
    tpu.vector_store %arg6[%c0_3, %c0_4, %c0_5], %2 {strides = array<i32>} : memref<18x18x4xf32, #tpu.memory_space<vmem>>, vector<1x18x4xf32>,
    %c17 = arith.constant 17 : index
    %c0_6 = arith.constant 0 : index
    %c0_7 = arith.constant 0 : index
    %4 = vector.load %arg6[%c17, %c0_6, %c0_7] : memref<18x18x4xf32, #tpu.memory_space<vmem>>, vector<1x18x4xf32>
    tpu.vector_store %arg6[%c17, %c0_6, %c0_7], %2 {strides = array<i32>} : memref<18x18x4xf32, #tpu.memory_space<vmem>>, vector<1x18x4xf32>,
    %cst_8 = arith.constant 0.000000e+00 : f32
    %5 = vector.broadcast %cst_8 : f32 to vector<18x1x4xf32>
    %c0_9 = arith.constant 0 : index
    %c0_10 = arith.constant 0 : index
    %c0_11 = arith.constant 0 : index
    %6 = vector.load %arg6[%c0_9, %c0_10, %c0_11] : memref<18x18x4xf32, #tpu.memory_space<vmem>>, vector<18x1x4xf32>
    tpu.vector_store %arg6[%c0_9, %c0_10, %c0_11], %5 {strides = array<i32>} : memref<18x18x4xf32, #tpu.memory_space<vmem>>, vector<18x1x4xf32>,
    %c0_12 = arith.constant 0 : index
    %c17_13 = arith.constant 17 : index
    %c0_14 = arith.constant 0 : index
    %7 = vector.load %arg6[%c0_12, %c17_13, %c0_14] : memref<18x18x4xf32, #tpu.memory_space<vmem>>, vector<18x1x4xf32>
    tpu.vector_store %arg6[%c0_12, %c17_13, %c0_14], %5 {strides = array<i32>} : memref<18x18x4xf32, #tpu.memory_space<vmem>>, vector<18x1x4xf32>,
    %c1 = arith.constant 1 : index
    %c1_15 = arith.constant 1 : index
    %c0_16 = arith.constant 0 : index
    %8 = vector.load %arg6[%c1, %c1_15, %c0_16] : memref<18x18x4xf32, #tpu.memory_space<vmem>>, vector<16x16x4xf32>
    tpu.vector_store %arg6[%c1, %c1_15, %c0_16], %1 {strides = array<i32>} : memref<18x18x4xf32, #tpu.memory_space<vmem>>, vector<16x16x4xf32>,
    %c0_17 = arith.constant 0 : index
    %c0_18 = arith.constant 0 : index
    %c0_19 = arith.constant 0 : index
    %9 = vector.load %arg6[%c0_17, %c0_18, %c0_19] : memref<18x18x4xf32, #tpu.memory_space<vmem>>, vector<16x16x4xf32>
    %10 = vector.shape_cast %9 : vector<16x16x4xf32> to vector<256x4xf32>
    %c0_20 = arith.constant 0 : index
    %c0_21 = arith.constant 0 : index
    %c0_22 = arith.constant 0 : index
    %11 = vector.load %arg2[%c0_20, %c0_21, %c0_22] : memref<9x4x8xf32, #tpu.memory_space<vmem>>, vector<1x4x8xf32>
    %12 = vector.shape_cast %11 : vector<1x4x8xf32> to vector<4x8xf32>
    %cst_23 = arith.constant dense<0.000000e+00> : vector<256x8xf32>
    %13 = tpu.matmul %10, %12, %cst_23 {dimension_numbers = #tpu.dot_dimension_numbers<[1], [0], [0], [1], [0, 0, 1, 1], [], []>} : vector<256x4xf32>, vector<4x8xf32>, vector<256x8xf32> -> vector<256x8xf32>
    %c0_24 = arith.constant 0 : index
    %c1_25 = arith.constant 1 : index
    %c0_26 = arith.constant 0 : index
    %14 = vector.load %arg6[%c0_24, %c1_25, %c0_26] : memref<18x18x4xf32, #tpu.memory_space<vmem>>, vector<16x16x4xf32>
    %15 = vector.shape_cast %14 : vector<16x16x4xf32> to vector<256x4xf32>
    %c1_27 = arith.constant 1 : index
    %c0_28 = arith.constant 0 : index
    %c0_29 = arith.constant 0 : index
    %16 = vector.load %arg2[%c1_27, %c0_28, %c0_29] : memref<9x4x8xf32, #tpu.memory_space<vmem>>, vector<1x4x8xf32>
    %17 = vector.shape_cast %16 : vector<1x4x8xf32> to vector<4x8xf32>
    %cst_30 = arith.constant dense<0.000000e+00> : vector<256x8xf32>
    %18 = tpu.matmul %15, %17, %cst_30 {dimension_numbers = #tpu.dot_dimension_numbers<[1], [0], [0], [1], [0, 0, 1, 1], [], []>} : vector<256x4xf32>, vector<4x8xf32>, vector<256x8xf32> -> vector<256x8xf32>
    %19 = arith.addf %13, %18 : vector<256x8xf32>
    %c0_31 = arith.constant 0 : index
    %c2 = arith.constant 2 : index
    %c0_32 = arith.constant 0 : index
    %20 = vector.load %arg6[%c0_31, %c2, %c0_32] : memref<18x18x4xf32, #tpu.memory_space<vmem>>, vector<16x16x4xf32>
    %21 = vector.shape_cast %20 : vector<16x16x4xf32> to vector<256x4xf32>
    %c2_33 = arith.constant 2 : index
    %c0_34 = arith.constant 0 : index
    %c0_35 = arith.constant 0 : index
    %22 = vector.load %arg2[%c2_33, %c0_34, %c0_35] : memref<9x4x8xf32, #tpu.memory_space<vmem>>, vector<1x4x8xf32>
    %23 = vector.shape_cast %22 : vector<1x4x8xf32> to vector<4x8xf32>
    %cst_36 = arith.constant dense<0.000000e+00> : vector<256x8xf32>
    %24 = tpu.matmul %21, %23, %cst_36 {dimension_numbers = #tpu.dot_dimension_numbers<[1], [0], [0], [1], [0, 0, 1, 1], [], []>} : vector<256x4xf32>, vector<4x8xf32>, vector<256x8xf32> -> vector<256x8xf32>
    %25 = arith.addf %19, %24 : vector<256x8xf32>
    %c1_37 = arith.constant 1 : index
    %c0_38 = arith.constant 0 : index
    %c0_39 = arith.constant 0 : index
    %26 = vector.load %arg6[%c1_37, %c0_38, %c0_39] : memref<18x18x4xf32, #tpu.memory_space<vmem>>, vector<16x16x4xf32>
    %27 = vector.shape_cast %26 : vector<16x16x4xf32> to vector<256x4xf32>
    %c3 = arith.constant 3 : index
    %c0_40 = arith.constant 0 : index
    %c0_41 = arith.constant 0 : index
    %28 = vector.load %arg2[%c3, %c0_40, %c0_41] : memref<9x4x8xf32, #tpu.memory_space<vmem>>, vector<1x4x8xf32>
    %29 = vector.shape_cast %28 : vector<1x4x8xf32> to vector<4x8xf32>
    %cst_42 = arith.constant dense<0.000000e+00> : vector<256x8xf32>
    %30 = tpu.matmul %27, %29, %cst_42 {dimension_numbers = #tpu.dot_dimension_numbers<[1], [0], [0], [1], [0, 0, 1, 1], [], []>} : vector<256x4xf32>, vector<4x8xf32>, vector<256x8xf32> -> vector<256x8xf32>
    %31 = arith.addf %25, %30 : vector<256x8xf32>
    %c1_43 = arith.constant 1 : index
    %c1_44 = arith.constant 1 : index
    %c0_45 = arith.constant 0 : index
    %32 = vector.load %arg6[%c1_43, %c1_44, %c0_45] : memref<18x18x4xf32, #tpu.memory_space<vmem>>, vector<16x16x4xf32>
    %33 = vector.shape_cast %32 : vector<16x16x4xf32> to vector<256x4xf32>
    %c4 = arith.constant 4 : index
    %c0_46 = arith.constant 0 : index
    %c0_47 = arith.constant 0 : index
    %34 = vector.load %arg2[%c4, %c0_46, %c0_47] : memref<9x4x8xf32, #tpu.memory_space<vmem>>, vector<1x4x8xf32>
    %35 = vector.shape_cast %34 : vector<1x4x8xf32> to vector<4x8xf32>
    %cst_48 = arith.constant dense<0.000000e+00> : vector<256x8xf32>
    %36 = tpu.matmul %33, %35, %cst_48 {dimension_numbers = #tpu.dot_dimension_numbers<[1], [0], [0], [1], [0, 0, 1, 1], [], []>} : vector<256x4xf32>, vector<4x8xf32>, vector<256x8xf32> -> vector<256x8xf32>
    %37 = arith.addf %31, %36 : vector<256x8xf32>
    %c1_49 = arith.constant 1 : index
    %c2_50 = arith.constant 2 : index
    %c0_51 = arith.constant 0 : index
    %38 = vector.load %arg6[%c1_49, %c2_50, %c0_51] : memref<18x18x4xf32, #tpu.memory_space<vmem>>, vector<16x16x4xf32>
    %39 = vector.shape_cast %38 : vector<16x16x4xf32> to vector<256x4xf32>
    %c5 = arith.constant 5 : index
    %c0_52 = arith.constant 0 : index
    %c0_53 = arith.constant 0 : index
    %40 = vector.load %arg2[%c5, %c0_52, %c0_53] : memref<9x4x8xf32, #tpu.memory_space<vmem>>, vector<1x4x8xf32>
    %41 = vector.shape_cast %40 : vector<1x4x8xf32> to vector<4x8xf32>
    %cst_54 = arith.constant dense<0.000000e+00> : vector<256x8xf32>
    %42 = tpu.matmul %39, %41, %cst_54 {dimension_numbers = #tpu.dot_dimension_numbers<[1], [0], [0], [1], [0, 0, 1, 1], [], []>} : vector<256x4xf32>, vector<4x8xf32>, vector<256x8xf32> -> vector<256x8xf32>
    %43 = arith.addf %37, %42 : vector<256x8xf32>
    %c2_55 = arith.constant 2 : index
    %c0_56 = arith.constant 0 : index
    %c0_57 = arith.constant 0 : index
    %44 = vector.load %arg6[%c2_55, %c0_56, %c0_57] : memref<18x18x4xf32, #tpu.memory_space<vmem>>, vector<16x16x4xf32>
    %45 = vector.shape_cast %44 : vector<16x16x4xf32> to vector<256x4xf32>
    %c6 = arith.constant 6 : index
    %c0_58 = arith.constant 0 : index
    %c0_59 = arith.constant 0 : index
    %46 = vector.load %arg2[%c6, %c0_58, %c0_59] : memref<9x4x8xf32, #tpu.memory_space<vmem>>, vector<1x4x8xf32>
    %47 = vector.shape_cast %46 : vector<1x4x8xf32> to vector<4x8xf32>
    %cst_60 = arith.constant dense<0.000000e+00> : vector<256x8xf32>
    %48 = tpu.matmul %45, %47, %cst_60 {dimension_numbers = #tpu.dot_dimension_numbers<[1], [0], [0], [1], [0, 0, 1, 1], [], []>} : vector<256x4xf32>, vector<4x8xf32>, vector<256x8xf32> -> vector<256x8xf32>
    %49 = arith.addf %43, %48 : vector<256x8xf32>
    %c2_61 = arith.constant 2 : index
    %c1_62 = arith.constant 1 : index
    %c0_63 = arith.constant 0 : index
    %50 = vector.load %arg6[%c2_61, %c1_62, %c0_63] : memref<18x18x4xf32, #tpu.memory_space<vmem>>, vector<16x16x4xf32>
    %51 = vector.shape_cast %50 : vector<16x16x4xf32> to vector<256x4xf32>
    %c7 = arith.constant 7 : index
    %c0_64 = arith.constant 0 : index
    %c0_65 = arith.constant 0 : index
    %52 = vector.load %arg2[%c7, %c0_64, %c0_65] : memref<9x4x8xf32, #tpu.memory_space<vmem>>, vector<1x4x8xf32>
    %53 = vector.shape_cast %52 : vector<1x4x8xf32> to vector<4x8xf32>
    %cst_66 = arith.constant dense<0.000000e+00> : vector<256x8xf32>
    %54 = tpu.matmul %51, %53, %cst_66 {dimension_numbers = #tpu.dot_dimension_numbers<[1], [0], [0], [1], [0, 0, 1, 1], [], []>} : vector<256x4xf32>, vector<4x8xf32>, vector<256x8xf32> -> vector<256x8xf32>
    %55 = arith.addf %49, %54 : vector<256x8xf32>
    %c2_67 = arith.constant 2 : index
    %c2_68 = arith.constant 2 : index
    %c0_69 = arith.constant 0 : index
    %56 = vector.load %arg6[%c2_67, %c2_68, %c0_69] : memref<18x18x4xf32, #tpu.memory_space<vmem>>, vector<16x16x4xf32>
    %57 = vector.shape_cast %56 : vector<16x16x4xf32> to vector<256x4xf32>
    %c8 = arith.constant 8 : index
    %c0_70 = arith.constant 0 : index
    %c0_71 = arith.constant 0 : index
    %58 = vector.load %arg2[%c8, %c0_70, %c0_71] : memref<9x4x8xf32, #tpu.memory_space<vmem>>, vector<1x4x8xf32>
    %59 = vector.shape_cast %58 : vector<1x4x8xf32> to vector<4x8xf32>
    %cst_72 = arith.constant dense<0.000000e+00> : vector<256x8xf32>
    %60 = tpu.matmul %57, %59, %cst_72 {dimension_numbers = #tpu.dot_dimension_numbers<[1], [0], [0], [1], [0, 0, 1, 1], [], []>} : vector<256x4xf32>, vector<4x8xf32>, vector<256x8xf32> -> vector<256x8xf32>
    %61 = arith.addf %55, %60 : vector<256x8xf32>
    %c0_73 = arith.constant 0 : index
    %c0_74 = arith.constant 0 : index
    %62 = vector.load %arg3[%c0_73, %c0_74] : memref<1x8xf32, #tpu.memory_space<vmem>>, vector<1x8xf32>
    %63 = vector.broadcast %62 : vector<1x8xf32> to vector<256x8xf32>
    %64 = arith.addf %61, %63 : vector<256x8xf32>
    %65 = vector.shape_cast %64 : vector<256x8xf32> to vector<1x16x16x8xf32>
    %c0_75 = arith.constant 0 : index
    %c0_76 = arith.constant 0 : index
    %c0_77 = arith.constant 0 : index
    %c0_78 = arith.constant 0 : index
    %66 = vector.load %arg4[%c0_75, %c0_76, %c0_77, %c0_78] : memref<1x16x16x8xf32, #tpu.memory_space<vmem>>, vector<1x16x16x8xf32>
    tpu.vector_store %arg4[%c0_75, %c0_76, %c0_77, %c0_78], %65 {strides = array<i32>} : memref<1x16x16x8xf32, #tpu.memory_space<vmem>>, vector<1x16x16x8xf32>,
    %cst_79 = arith.constant dense<0.000000e+00> : vector<8xf32>
    %67 = vector.multi_reduction <add>, %64, %cst_79 [0] : vector<256x8xf32> to vector<8xf32>
    %68 = vector.shape_cast %67 : vector<8xf32> to vector<1x8xf32>
    %cst_80 = arith.constant 2.560000e+02 : f32
    %69 = vector.broadcast %cst_80 : f32 to vector<1x8xf32>
    %70 = arith.divf %68, %69 : vector<1x8xf32>
    %71 = vector.broadcast %70 : vector<1x8xf32> to vector<256x8xf32>
    %72 = arith.subf %64, %71 : vector<256x8xf32>
    %73 = arith.mulf %72, %72 : vector<256x8xf32>
    %cst_81 = arith.constant dense<0.000000e+00> : vector<8xf32>
    %74 = vector.multi_reduction <add>, %73, %cst_81 [0] : vector<256x8xf32> to vector<8xf32>
    %75 = vector.shape_cast %74 : vector<8xf32> to vector<1x8xf32>
    %76 = tpu.concatenate %70, %75 in 0 : vector<1x8xf32>, vector<1x8xf32> -> vector<2x8xf32>
    %77 = vector.shape_cast %76 : vector<2x8xf32> to vector<1x2x8xf32>
    %c0_82 = arith.constant 0 : index
    %c0_83 = arith.constant 0 : index
    %c0_84 = arith.constant 0 : index
    %78 = vector.load %arg5[%c0_82, %c0_83, %c0_84] : memref<1x2x8xf32, #tpu.memory_space<vmem>>, vector<1x2x8xf32>
    tpu.vector_store %arg5[%c0_82, %c0_83, %c0_84], %77 {strides = array<i32>} : memref<1x2x8xf32, #tpu.memory_space<vmem>>, vector<1x2x8xf32>,
    return
  }
  func.func @transform_0(%arg0: i32) -> (i32, i32, i32, i32) {
    %c0_i32 = arith.constant 0 : i32
    %c0_i32_0 = arith.constant 0 : i32
    %c0_i32_1 = arith.constant 0 : i32
    %c0_i32_2 = arith.constant 0 : i32
    return %arg0, %c0_i32, %c0_i32_0, %c0_i32_1 : i32, i32, i32, i32
  }
  func.func @transform_1(%arg0: i32) -> (i32, i32, i32) {
    %c0_i32 = arith.constant 0 : i32
    %c0_i32_0 = arith.constant 0 : i32
    %c0_i32_1 = arith.constant 0 : i32
    %c0_i32_2 = arith.constant 0 : i32
    return %c0_i32, %c0_i32_0, %c0_i32_1 : i32, i32, i32
  }
  func.func @transform_2(%arg0: i32) -> (i32, i32) {
    %c0_i32 = arith.constant 0 : i32
    %c0_i32_0 = arith.constant 0 : i32
    %c0_i32_1 = arith.constant 0 : i32
    return %c0_i32, %c0_i32_0 : i32, i32
  }
  func.func @transform_3(%arg0: i32) -> (i32, i32, i32, i32) {
    %c0_i32 = arith.constant 0 : i32
    %c0_i32_0 = arith.constant 0 : i32
    %c0_i32_1 = arith.constant 0 : i32
    %c0_i32_2 = arith.constant 0 : i32
    return %arg0, %c0_i32, %c0_i32_0, %c0_i32_1 : i32, i32, i32, i32
  }
  func.func @transform_4(%arg0: i32) -> (i32, i32, i32) {
    %c0_i32 = arith.constant 0 : i32
    %c0_i32_0 = arith.constant 0 : i32
    %c0_i32_1 = arith.constant 0 : i32
    return %arg0, %c0_i32, %c0_i32_0 : i32, i32, i32
  }
}

module attributes {stable_mosaic.version = 11 : i64} {
  func.func @_bn_relu_conv_stats_kernel(%arg0: i32, %arg1: memref<1x16x16x8xf32, #tpu.memory_space<vmem>>, %arg2: memref<1x8xf32, #tpu.memory_space<vmem>>, %arg3: memref<1x8xf32, #tpu.memory_space<vmem>>, %arg4: memref<9x8x8xf32, #tpu.memory_space<vmem>>, %arg5: memref<1x8xf32, #tpu.memory_space<vmem>>, %arg6: memref<1x16x16x8xf32, #tpu.memory_space<vmem>>, %arg7: memref<1x2x8xf32, #tpu.memory_space<vmem>>, %arg8: memref<18x18x8xf32, #tpu.memory_space<vmem>>) attributes {dimension_semantics = [#tpu.dimension_semantics<parallel>], iteration_bounds = array<i64: 2>, scalar_prefetch = 0 : i64, scratch_operands = 1 : i64, tpu.core_type = #tpu.core_type<tc>, window_params = [{transform_indices = @transform_0, window_bounds = array<i64: 1, 16, 16, 8>}, {pipeline_mode = #tpu.pipeline_mode<synchronous>, transform_indices = @transform_1, window_bounds = array<i64: 1, 8>}, {pipeline_mode = #tpu.pipeline_mode<synchronous>, transform_indices = @transform_2, window_bounds = array<i64: 1, 8>}, {pipeline_mode = #tpu.pipeline_mode<synchronous>, transform_indices = @transform_3, window_bounds = array<i64: 9, 8, 8>}, {pipeline_mode = #tpu.pipeline_mode<synchronous>, transform_indices = @transform_4, window_bounds = array<i64: 1, 8>}, {transform_indices = @transform_5, window_bounds = array<i64: 1, 16, 16, 8>}, {transform_indices = @transform_6, window_bounds = array<i64: 1, 2, 8>}]} {
    %c0 = arith.constant 0 : index
    %c0_0 = arith.constant 0 : index
    %c0_1 = arith.constant 0 : index
    %c0_2 = arith.constant 0 : index
    %0 = vector.load %arg1[%c0, %c0_0, %c0_1, %c0_2] : memref<1x16x16x8xf32, #tpu.memory_space<vmem>>, vector<1x16x16x8xf32>
    %1 = vector.shape_cast %0 : vector<1x16x16x8xf32> to vector<16x16x8xf32>
    %c0_3 = arith.constant 0 : index
    %c0_4 = arith.constant 0 : index
    %2 = vector.load %arg2[%c0_3, %c0_4] : memref<1x8xf32, #tpu.memory_space<vmem>>, vector<1x8xf32>
    %3 = vector.shape_cast %2 : vector<1x8xf32> to vector<1x1x8xf32>
    %4 = vector.broadcast %3 : vector<1x1x8xf32> to vector<16x16x8xf32>
    %5 = arith.mulf %1, %4 : vector<16x16x8xf32>
    %c0_5 = arith.constant 0 : index
    %c0_6 = arith.constant 0 : index
    %6 = vector.load %arg3[%c0_5, %c0_6] : memref<1x8xf32, #tpu.memory_space<vmem>>, vector<1x8xf32>
    %7 = vector.shape_cast %6 : vector<1x8xf32> to vector<1x1x8xf32>
    %8 = vector.broadcast %7 : vector<1x1x8xf32> to vector<16x16x8xf32>
    %9 = arith.addf %5, %8 : vector<16x16x8xf32>
    %cst = arith.constant 0.000000e+00 : f32
    %10 = vector.broadcast %cst : f32 to vector<16x16x8xf32>
    %11 = arith.maximumf %9, %10 : vector<16x16x8xf32>
    %cst_7 = arith.constant 0.000000e+00 : f32
    %12 = vector.broadcast %cst_7 : f32 to vector<1x18x8xf32>
    %c0_8 = arith.constant 0 : index
    %c0_9 = arith.constant 0 : index
    %c0_10 = arith.constant 0 : index
    %13 = vector.load %arg8[%c0_8, %c0_9, %c0_10] : memref<18x18x8xf32, #tpu.memory_space<vmem>>, vector<1x18x8xf32>
    tpu.vector_store %arg8[%c0_8, %c0_9, %c0_10], %12 {strides = array<i32>} : memref<18x18x8xf32, #tpu.memory_space<vmem>>, vector<1x18x8xf32>,
    %c17 = arith.constant 17 : index
    %c0_11 = arith.constant 0 : index
    %c0_12 = arith.constant 0 : index
    %14 = vector.load %arg8[%c17, %c0_11, %c0_12] : memref<18x18x8xf32, #tpu.memory_space<vmem>>, vector<1x18x8xf32>
    tpu.vector_store %arg8[%c17, %c0_11, %c0_12], %12 {strides = array<i32>} : memref<18x18x8xf32, #tpu.memory_space<vmem>>, vector<1x18x8xf32>,
    %cst_13 = arith.constant 0.000000e+00 : f32
    %15 = vector.broadcast %cst_13 : f32 to vector<18x1x8xf32>
    %c0_14 = arith.constant 0 : index
    %c0_15 = arith.constant 0 : index
    %c0_16 = arith.constant 0 : index
    %16 = vector.load %arg8[%c0_14, %c0_15, %c0_16] : memref<18x18x8xf32, #tpu.memory_space<vmem>>, vector<18x1x8xf32>
    tpu.vector_store %arg8[%c0_14, %c0_15, %c0_16], %15 {strides = array<i32>} : memref<18x18x8xf32, #tpu.memory_space<vmem>>, vector<18x1x8xf32>,
    %c0_17 = arith.constant 0 : index
    %c17_18 = arith.constant 17 : index
    %c0_19 = arith.constant 0 : index
    %17 = vector.load %arg8[%c0_17, %c17_18, %c0_19] : memref<18x18x8xf32, #tpu.memory_space<vmem>>, vector<18x1x8xf32>
    tpu.vector_store %arg8[%c0_17, %c17_18, %c0_19], %15 {strides = array<i32>} : memref<18x18x8xf32, #tpu.memory_space<vmem>>, vector<18x1x8xf32>,
    %c1 = arith.constant 1 : index
    %c1_20 = arith.constant 1 : index
    %c0_21 = arith.constant 0 : index
    %18 = vector.load %arg8[%c1, %c1_20, %c0_21] : memref<18x18x8xf32, #tpu.memory_space<vmem>>, vector<16x16x8xf32>
    tpu.vector_store %arg8[%c1, %c1_20, %c0_21], %11 {strides = array<i32>} : memref<18x18x8xf32, #tpu.memory_space<vmem>>, vector<16x16x8xf32>,
    %c0_22 = arith.constant 0 : index
    %c0_23 = arith.constant 0 : index
    %c0_24 = arith.constant 0 : index
    %19 = vector.load %arg8[%c0_22, %c0_23, %c0_24] : memref<18x18x8xf32, #tpu.memory_space<vmem>>, vector<16x16x8xf32>
    %20 = vector.shape_cast %19 : vector<16x16x8xf32> to vector<256x8xf32>
    %c0_25 = arith.constant 0 : index
    %c0_26 = arith.constant 0 : index
    %c0_27 = arith.constant 0 : index
    %21 = vector.load %arg4[%c0_25, %c0_26, %c0_27] : memref<9x8x8xf32, #tpu.memory_space<vmem>>, vector<1x8x8xf32>
    %22 = vector.shape_cast %21 : vector<1x8x8xf32> to vector<8x8xf32>
    %cst_28 = arith.constant dense<0.000000e+00> : vector<256x8xf32>
    %23 = tpu.matmul %20, %22, %cst_28 {dimension_numbers = #tpu.dot_dimension_numbers<[1], [0], [0], [1], [0, 0, 1, 1], [], []>} : vector<256x8xf32>, vector<8x8xf32>, vector<256x8xf32> -> vector<256x8xf32>
    %c0_29 = arith.constant 0 : index
    %c1_30 = arith.constant 1 : index
    %c0_31 = arith.constant 0 : index
    %24 = vector.load %arg8[%c0_29, %c1_30, %c0_31] : memref<18x18x8xf32, #tpu.memory_space<vmem>>, vector<16x16x8xf32>
    %25 = vector.shape_cast %24 : vector<16x16x8xf32> to vector<256x8xf32>
    %c1_32 = arith.constant 1 : index
    %c0_33 = arith.constant 0 : index
    %c0_34 = arith.constant 0 : index
    %26 = vector.load %arg4[%c1_32, %c0_33, %c0_34] : memref<9x8x8xf32, #tpu.memory_space<vmem>>, vector<1x8x8xf32>
    %27 = vector.shape_cast %26 : vector<1x8x8xf32> to vector<8x8xf32>
    %cst_35 = arith.constant dense<0.000000e+00> : vector<256x8xf32>
    %28 = tpu.matmul %25, %27, %cst_35 {dimension_numbers = #tpu.dot_dimension_numbers<[1], [0], [0], [1], [0, 0, 1, 1], [], []>} : vector<256x8xf32>, vector<8x8xf32>, vector<256x8xf32> -> vector<256x8xf32>
    %29 = arith.addf %23, %28 : vector<256x8xf32>
    %c0_36 = arith.constant 0 : index
    %c2 = arith.constant 2 : index
    %c0_37 = arith.constant 0 : index
    %30 = vector.load %arg8[%c0_36, %c2, %c0_37] : memref<18x18x8xf32, #tpu.memory_space<vmem>>, vector<16x16x8xf32>
    %31 = vector.shape_cast %30 : vector<16x16x8xf32> to vector<256x8xf32>
    %c2_38 = arith.constant 2 : index
    %c0_39 = arith.constant 0 : index
    %c0_40 = arith.constant 0 : index
    %32 = vector.load %arg4[%c2_38, %c0_39, %c0_40] : memref<9x8x8xf32, #tpu.memory_space<vmem>>, vector<1x8x8xf32>
    %33 = vector.shape_cast %32 : vector<1x8x8xf32> to vector<8x8xf32>
    %cst_41 = arith.constant dense<0.000000e+00> : vector<256x8xf32>
    %34 = tpu.matmul %31, %33, %cst_41 {dimension_numbers = #tpu.dot_dimension_numbers<[1], [0], [0], [1], [0, 0, 1, 1], [], []>} : vector<256x8xf32>, vector<8x8xf32>, vector<256x8xf32> -> vector<256x8xf32>
    %35 = arith.addf %29, %34 : vector<256x8xf32>
    %c1_42 = arith.constant 1 : index
    %c0_43 = arith.constant 0 : index
    %c0_44 = arith.constant 0 : index
    %36 = vector.load %arg8[%c1_42, %c0_43, %c0_44] : memref<18x18x8xf32, #tpu.memory_space<vmem>>, vector<16x16x8xf32>
    %37 = vector.shape_cast %36 : vector<16x16x8xf32> to vector<256x8xf32>
    %c3 = arith.constant 3 : index
    %c0_45 = arith.constant 0 : index
    %c0_46 = arith.constant 0 : index
    %38 = vector.load %arg4[%c3, %c0_45, %c0_46] : memref<9x8x8xf32, #tpu.memory_space<vmem>>, vector<1x8x8xf32>
    %39 = vector.shape_cast %38 : vector<1x8x8xf32> to vector<8x8xf32>
    %cst_47 = arith.constant dense<0.000000e+00> : vector<256x8xf32>
    %40 = tpu.matmul %37, %39, %cst_47 {dimension_numbers = #tpu.dot_dimension_numbers<[1], [0], [0], [1], [0, 0, 1, 1], [], []>} : vector<256x8xf32>, vector<8x8xf32>, vector<256x8xf32> -> vector<256x8xf32>
    %41 = arith.addf %35, %40 : vector<256x8xf32>
    %c1_48 = arith.constant 1 : index
    %c1_49 = arith.constant 1 : index
    %c0_50 = arith.constant 0 : index
    %42 = vector.load %arg8[%c1_48, %c1_49, %c0_50] : memref<18x18x8xf32, #tpu.memory_space<vmem>>, vector<16x16x8xf32>
    %43 = vector.shape_cast %42 : vector<16x16x8xf32> to vector<256x8xf32>
    %c4 = arith.constant 4 : index
    %c0_51 = arith.constant 0 : index
    %c0_52 = arith.constant 0 : index
    %44 = vector.load %arg4[%c4, %c0_51, %c0_52] : memref<9x8x8xf32, #tpu.memory_space<vmem>>, vector<1x8x8xf32>
    %45 = vector.shape_cast %44 : vector<1x8x8xf32> to vector<8x8xf32>
    %cst_53 = arith.constant dense<0.000000e+00> : vector<256x8xf32>
    %46 = tpu.matmul %43, %45, %cst_53 {dimension_numbers = #tpu.dot_dimension_numbers<[1], [0], [0], [1], [0, 0, 1, 1], [], []>} : vector<256x8xf32>, vector<8x8xf32>, vector<256x8xf32> -> vector<256x8xf32>
    %47 = arith.addf %41, %46 : vector<256x8xf32>
    %c1_54 = arith.constant 1 : index
    %c2_55 = arith.constant 2 : index
    %c0_56 = arith.constant 0 : index
    %48 = vector.load %arg8[%c1_54, %c2_55, %c0_56] : memref<18x18x8xf32, #tpu.memory_space<vmem>>, vector<16x16x8xf32>
    %49 = vector.shape_cast %48 : vector<16x16x8xf32> to vector<256x8xf32>
    %c5 = arith.constant 5 : index
    %c0_57 = arith.constant 0 : index
    %c0_58 = arith.constant 0 : index
    %50 = vector.load %arg4[%c5, %c0_57, %c0_58] : memref<9x8x8xf32, #tpu.memory_space<vmem>>, vector<1x8x8xf32>
    %51 = vector.shape_cast %50 : vector<1x8x8xf32> to vector<8x8xf32>
    %cst_59 = arith.constant dense<0.000000e+00> : vector<256x8xf32>
    %52 = tpu.matmul %49, %51, %cst_59 {dimension_numbers = #tpu.dot_dimension_numbers<[1], [0], [0], [1], [0, 0, 1, 1], [], []>} : vector<256x8xf32>, vector<8x8xf32>, vector<256x8xf32> -> vector<256x8xf32>
    %53 = arith.addf %47, %52 : vector<256x8xf32>
    %c2_60 = arith.constant 2 : index
    %c0_61 = arith.constant 0 : index
    %c0_62 = arith.constant 0 : index
    %54 = vector.load %arg8[%c2_60, %c0_61, %c0_62] : memref<18x18x8xf32, #tpu.memory_space<vmem>>, vector<16x16x8xf32>
    %55 = vector.shape_cast %54 : vector<16x16x8xf32> to vector<256x8xf32>
    %c6 = arith.constant 6 : index
    %c0_63 = arith.constant 0 : index
    %c0_64 = arith.constant 0 : index
    %56 = vector.load %arg4[%c6, %c0_63, %c0_64] : memref<9x8x8xf32, #tpu.memory_space<vmem>>, vector<1x8x8xf32>
    %57 = vector.shape_cast %56 : vector<1x8x8xf32> to vector<8x8xf32>
    %cst_65 = arith.constant dense<0.000000e+00> : vector<256x8xf32>
    %58 = tpu.matmul %55, %57, %cst_65 {dimension_numbers = #tpu.dot_dimension_numbers<[1], [0], [0], [1], [0, 0, 1, 1], [], []>} : vector<256x8xf32>, vector<8x8xf32>, vector<256x8xf32> -> vector<256x8xf32>
    %59 = arith.addf %53, %58 : vector<256x8xf32>
    %c2_66 = arith.constant 2 : index
    %c1_67 = arith.constant 1 : index
    %c0_68 = arith.constant 0 : index
    %60 = vector.load %arg8[%c2_66, %c1_67, %c0_68] : memref<18x18x8xf32, #tpu.memory_space<vmem>>, vector<16x16x8xf32>
    %61 = vector.shape_cast %60 : vector<16x16x8xf32> to vector<256x8xf32>
    %c7 = arith.constant 7 : index
    %c0_69 = arith.constant 0 : index
    %c0_70 = arith.constant 0 : index
    %62 = vector.load %arg4[%c7, %c0_69, %c0_70] : memref<9x8x8xf32, #tpu.memory_space<vmem>>, vector<1x8x8xf32>
    %63 = vector.shape_cast %62 : vector<1x8x8xf32> to vector<8x8xf32>
    %cst_71 = arith.constant dense<0.000000e+00> : vector<256x8xf32>
    %64 = tpu.matmul %61, %63, %cst_71 {dimension_numbers = #tpu.dot_dimension_numbers<[1], [0], [0], [1], [0, 0, 1, 1], [], []>} : vector<256x8xf32>, vector<8x8xf32>, vector<256x8xf32> -> vector<256x8xf32>
    %65 = arith.addf %59, %64 : vector<256x8xf32>
    %c2_72 = arith.constant 2 : index
    %c2_73 = arith.constant 2 : index
    %c0_74 = arith.constant 0 : index
    %66 = vector.load %arg8[%c2_72, %c2_73, %c0_74] : memref<18x18x8xf32, #tpu.memory_space<vmem>>, vector<16x16x8xf32>
    %67 = vector.shape_cast %66 : vector<16x16x8xf32> to vector<256x8xf32>
    %c8 = arith.constant 8 : index
    %c0_75 = arith.constant 0 : index
    %c0_76 = arith.constant 0 : index
    %68 = vector.load %arg4[%c8, %c0_75, %c0_76] : memref<9x8x8xf32, #tpu.memory_space<vmem>>, vector<1x8x8xf32>
    %69 = vector.shape_cast %68 : vector<1x8x8xf32> to vector<8x8xf32>
    %cst_77 = arith.constant dense<0.000000e+00> : vector<256x8xf32>
    %70 = tpu.matmul %67, %69, %cst_77 {dimension_numbers = #tpu.dot_dimension_numbers<[1], [0], [0], [1], [0, 0, 1, 1], [], []>} : vector<256x8xf32>, vector<8x8xf32>, vector<256x8xf32> -> vector<256x8xf32>
    %71 = arith.addf %65, %70 : vector<256x8xf32>
    %c0_78 = arith.constant 0 : index
    %c0_79 = arith.constant 0 : index
    %72 = vector.load %arg5[%c0_78, %c0_79] : memref<1x8xf32, #tpu.memory_space<vmem>>, vector<1x8xf32>
    %73 = vector.broadcast %72 : vector<1x8xf32> to vector<256x8xf32>
    %74 = arith.addf %71, %73 : vector<256x8xf32>
    %75 = vector.shape_cast %74 : vector<256x8xf32> to vector<1x16x16x8xf32>
    %c0_80 = arith.constant 0 : index
    %c0_81 = arith.constant 0 : index
    %c0_82 = arith.constant 0 : index
    %c0_83 = arith.constant 0 : index
    %76 = vector.load %arg6[%c0_80, %c0_81, %c0_82, %c0_83] : memref<1x16x16x8xf32, #tpu.memory_space<vmem>>, vector<1x16x16x8xf32>
    tpu.vector_store %arg6[%c0_80, %c0_81, %c0_82, %c0_83], %75 {strides = array<i32>} : memref<1x16x16x8xf32, #tpu.memory_space<vmem>>, vector<1x16x16x8xf32>,
    %cst_84 = arith.constant dense<0.000000e+00> : vector<8xf32>
    %77 = vector.multi_reduction <add>, %74, %cst_84 [0] : vector<256x8xf32> to vector<8xf32>
    %78 = vector.shape_cast %77 : vector<8xf32> to vector<1x8xf32>
    %cst_85 = arith.constant 2.560000e+02 : f32
    %79 = vector.broadcast %cst_85 : f32 to vector<1x8xf32>
    %80 = arith.divf %78, %79 : vector<1x8xf32>
    %81 = vector.broadcast %80 : vector<1x8xf32> to vector<256x8xf32>
    %82 = arith.subf %74, %81 : vector<256x8xf32>
    %83 = arith.mulf %82, %82 : vector<256x8xf32>
    %cst_86 = arith.constant dense<0.000000e+00> : vector<8xf32>
    %84 = vector.multi_reduction <add>, %83, %cst_86 [0] : vector<256x8xf32> to vector<8xf32>
    %85 = vector.shape_cast %84 : vector<8xf32> to vector<1x8xf32>
    %86 = tpu.concatenate %80, %85 in 0 : vector<1x8xf32>, vector<1x8xf32> -> vector<2x8xf32>
    %87 = vector.shape_cast %86 : vector<2x8xf32> to vector<1x2x8xf32>
    %c0_87 = arith.constant 0 : index
    %c0_88 = arith.constant 0 : index
    %c0_89 = arith.constant 0 : index
    %88 = vector.load %arg7[%c0_87, %c0_88, %c0_89] : memref<1x2x8xf32, #tpu.memory_space<vmem>>, vector<1x2x8xf32>
    tpu.vector_store %arg7[%c0_87, %c0_88, %c0_89], %87 {strides = array<i32>} : memref<1x2x8xf32, #tpu.memory_space<vmem>>, vector<1x2x8xf32>,
    return
  }
  func.func @transform_0(%arg0: i32) -> (i32, i32, i32, i32) {
    %c0_i32 = arith.constant 0 : i32
    %c0_i32_0 = arith.constant 0 : i32
    %c0_i32_1 = arith.constant 0 : i32
    %c0_i32_2 = arith.constant 0 : i32
    return %arg0, %c0_i32, %c0_i32_0, %c0_i32_1 : i32, i32, i32, i32
  }
  func.func @transform_1(%arg0: i32) -> (i32, i32) {
    %c0_i32 = arith.constant 0 : i32
    %c0_i32_0 = arith.constant 0 : i32
    %c0_i32_1 = arith.constant 0 : i32
    return %c0_i32, %c0_i32_0 : i32, i32
  }
  func.func @transform_2(%arg0: i32) -> (i32, i32) {
    %c0_i32 = arith.constant 0 : i32
    %c0_i32_0 = arith.constant 0 : i32
    %c0_i32_1 = arith.constant 0 : i32
    return %c0_i32, %c0_i32_0 : i32, i32
  }
  func.func @transform_3(%arg0: i32) -> (i32, i32, i32) {
    %c0_i32 = arith.constant 0 : i32
    %c0_i32_0 = arith.constant 0 : i32
    %c0_i32_1 = arith.constant 0 : i32
    %c0_i32_2 = arith.constant 0 : i32
    return %c0_i32, %c0_i32_0, %c0_i32_1 : i32, i32, i32
  }
  func.func @transform_4(%arg0: i32) -> (i32, i32) {
    %c0_i32 = arith.constant 0 : i32
    %c0_i32_0 = arith.constant 0 : i32
    %c0_i32_1 = arith.constant 0 : i32
    return %c0_i32, %c0_i32_0 : i32, i32
  }
  func.func @transform_5(%arg0: i32) -> (i32, i32, i32, i32) {
    %c0_i32 = arith.constant 0 : i32
    %c0_i32_0 = arith.constant 0 : i32
    %c0_i32_1 = arith.constant 0 : i32
    %c0_i32_2 = arith.constant 0 : i32
    return %arg0, %c0_i32, %c0_i32_0, %c0_i32_1 : i32, i32, i32, i32
  }
  func.func @transform_6(%arg0: i32) -> (i32, i32, i32) {
    %c0_i32 = arith.constant 0 : i32
    %c0_i32_0 = arith.constant 0 : i32
    %c0_i32_1 = arith.constant 0 : i32
    return %arg0, %c0_i32, %c0_i32_0 : i32, i32, i32
  }
}

module attributes {stable_mosaic.version = 11 : i64} {
  func.func @_bn_relu_kernel(%arg0: i32, %arg1: memref<1x16x16x8xf32, #tpu.memory_space<vmem>>, %arg2: memref<1x8xf32, #tpu.memory_space<vmem>>, %arg3: memref<1x8xf32, #tpu.memory_space<vmem>>, %arg4: memref<1x16x16x8xf32, #tpu.memory_space<vmem>>) attributes {dimension_semantics = [#tpu.dimension_semantics<parallel>], iteration_bounds = array<i64: 2>, scalar_prefetch = 0 : i64, scratch_operands = 0 : i64, tpu.core_type = #tpu.core_type<tc>, window_params = [{transform_indices = @transform_0, window_bounds = array<i64: 1, 16, 16, 8>}, {pipeline_mode = #tpu.pipeline_mode<synchronous>, transform_indices = @transform_1, window_bounds = array<i64: 1, 8>}, {pipeline_mode = #tpu.pipeline_mode<synchronous>, transform_indices = @transform_2, window_bounds = array<i64: 1, 8>}, {transform_indices = @transform_3, window_bounds = array<i64: 1, 16, 16, 8>}]} {
    %c0 = arith.constant 0 : index
    %c0_0 = arith.constant 0 : index
    %c0_1 = arith.constant 0 : index
    %c0_2 = arith.constant 0 : index
    %0 = vector.load %arg1[%c0, %c0_0, %c0_1, %c0_2] : memref<1x16x16x8xf32, #tpu.memory_space<vmem>>, vector<1x16x16x8xf32>
    %c0_3 = arith.constant 0 : index
    %c0_4 = arith.constant 0 : index
    %1 = vector.load %arg2[%c0_3, %c0_4] : memref<1x8xf32, #tpu.memory_space<vmem>>, vector<1x8xf32>
    %2 = vector.shape_cast %1 : vector<1x8xf32> to vector<1x1x1x8xf32>
    %3 = vector.broadcast %2 : vector<1x1x1x8xf32> to vector<1x16x16x8xf32>
    %4 = arith.mulf %0, %3 : vector<1x16x16x8xf32>
    %c0_5 = arith.constant 0 : index
    %c0_6 = arith.constant 0 : index
    %5 = vector.load %arg3[%c0_5, %c0_6] : memref<1x8xf32, #tpu.memory_space<vmem>>, vector<1x8xf32>
    %6 = vector.shape_cast %5 : vector<1x8xf32> to vector<1x1x1x8xf32>
    %7 = vector.broadcast %6 : vector<1x1x1x8xf32> to vector<1x16x16x8xf32>
    %8 = arith.addf %4, %7 : vector<1x16x16x8xf32>
    %cst = arith.constant 0.000000e+00 : f32
    %9 = vector.broadcast %cst : f32 to vector<1x16x16x8xf32>
    %10 = arith.maximumf %8, %9 : vector<1x16x16x8xf32>
    %c0_7 = arith.constant 0 : index
    %c0_8 = arith.constant 0 : index
    %c0_9 = arith.constant 0 : index
    %c0_10 = arith.constant 0 : index
    %11 = vector.load %arg4[%c0_7, %c0_8, %c0_9, %c0_10] : memref<1x16x16x8xf32, #tpu.memory_space<vmem>>, vector<1x16x16x8xf32>
    tpu.vector_store %arg4[%c0_7, %c0_8, %c0_9, %c0_10], %10 {strides = array<i32>} : memref<1x16x16x8xf32, #tpu.memory_space<vmem>>, vector<1x16x16x8xf32>,
    return
  }
  func.func @transform_0(%arg0: i32) -> (i32, i32, i32, i32) {
    %c0_i32 = arith.constant 0 : i32
    %c0_i32_0 = arith.constant 0 : i32
    %c0_i32_1 = arith.constant 0 : i32
    %c0_i32_2 = arith.constant 0 : i32
    return %arg0, %c0_i32, %c0_i32_0, %c0_i32_1 : i32, i32, i32, i32
  }
  func.func @transform_1(%arg0: i32) -> (i32, i32) {
    %c0_i32 = arith.constant 0 : i32
    %c0_i32_0 = arith.constant 0 : i32
    %c0_i32_1 = arith.constant 0 : i32
    return %c0_i32, %c0_i32_0 : i32, i32
  }
  func.func @transform_2(%arg0: i32) -> (i32, i32) {
    %c0_i32 = arith.constant 0 : i32
    %c0_i32_0 = arith.constant 0 : i32
    %c0_i32_1 = arith.constant 0 : i32
    return %c0_i32, %c0_i32_0 : i32, i32
  }
  func.func @transform_3(%arg0: i32) -> (i32, i32, i32, i32) {
    %c0_i32 = arith.constant 0 : i32
    %c0_i32_0 = arith.constant 0 : i32
    %c0_i32_1 = arith.constant 0 : i32
    %c0_i32_2 = arith.constant 0 : i32
    return %arg0, %c0_i32, %c0_i32_0, %c0_i32_1 : i32, i32, i32, i32
  }
}

</mosaic_0001>

<llo_original>
// kernel: conv_block_forward.5
$region0: #{conv_block_forward.5}
  #allocation0 [shape = 'u32[]', space=smem, size = 0x4, offset = 0x4, fixed_abs, tag = 'smem constant byte address 0x4 - core index']
  #allocation1 [shape = 'u32[144,128]{1,0:T(1,128)}', space=vmem, size = 0x12000, scoped, tag = 'internal scratch']
  %s0 = inlined_call_operand.vmem [shape: f32[2,16,16,8], index: 0, kind: input, shape index: {}]
  %s1 = inlined_call_operand.vmem [shape: f32[1,8], index: 1, kind: input, shape index: {}]
  %s2 = inlined_call_operand.vmem [shape: f32[1,8], index: 2, kind: input, shape index: {}]
  %s3 = inlined_call_operand.vmem [shape: f32[2,16,16,8], index: 3, kind: output, shape index: {}]
  %s4 = sld [smem:[#allocation0]]
  $region45: #{conv_block_forward.5} parent=0
    _
  %s6 = ssub.s32 1, %s4
  %s7 = scalar_select 0, %s6, %s4
  loop: start=0, step=1, limit=4
  $region2: #{conv_block_forward.5} parent=0 // loop_pre_header
    _
  $region3: #{conv_block_forward.5} parent=0 // loop_header
    %s9 = sphi 0, %s13
    %p10 = scmp.ge.s32.totalorder %s9, 4
    %s19 = sphi 0, %s21
    %s22 = sphi 0, %s19
    %s23 = sphi 0, %s22
    %s39 = sphi 0, %s23
    %s43 = sphi 0, %s43
    %s45 = sphi 0, %s43
    %s46 = sphi 0, %s45
    %s60 = sphi 0, %s46
    %s64 = sphi 0, %s64
    %s66 = sphi 0, %s64
    %s67 = sphi 0, %s66
    %s81 = sphi 0, %s67
    %s87 = sphi 0, %s89
    %s90 = sphi 0, %s87
    %s91 = sphi 0, %s90
    %s107 = sphi 0, %s91
  $region4: #{conv_block_forward.5} parent=0 // loop_header_branch
    %12 = sbr.rel (%p10) target = $region8
  $region5: #{conv_block_forward.5} parent=0 // loop_body
    %s14 = ssub.s32 %s9, 1
    %s15 = ssub.s32 %s9, 2
    %s16 = sadd.s32 %s9, 1
    %s17 = ssub.s32 %s9, %s16
    %p18 = scmp.eq.s32.totalorder %s17, 0
    %s20 = sadd.s32 %s19, 1
    %s21 = scalar_select %p18, %s19, %s20
    %p24 = pneg %p18
    %p25 = scmp.eq.s32.totalorder %s9, 1
    %p26 = por %p24, %p25
    %p27 = scmp.ne.s32.totalorder %s19, %s22
    %p28 = scmp.eq.s32.totalorder %s9, 0
    %p29 = por %p27, %p28
    %p30 = scmp.ne.s32.totalorder %s19, %s22
    %p31 = scmp.eq.s32.totalorder %s14, 1
    %p32 = por %p30, %p31
    %p33 = scmp.ne.s32.totalorder %s22, %s23
    %p34 = scmp.eq.s32.totalorder %s14, 0
    %p35 = por %p33, %p34
    %p36 = scmp.ne.s32.totalorder %s22, %s23
    %p37 = scmp.eq.s32.totalorder %s15, 1
    %p38 = por %p36, %p37
    %p40 = scmp.ne.s32.totalorder %s23, %s39
    %p41 = scmp.eq.s32.totalorder %s15, 0
    %p42 = por %p40, %p41
    %s44 = sadd.s32 %s43, 1
    %p47 = scmp.eq.s32.totalorder %s9, 1
    %p48 = scmp.ne.s32.totalorder %s43, %s45
    %p49 = scmp.eq.s32.totalorder %s9, 0
    %p50 = por %p48, %p49
    %p51 = scmp.ne.s32.totalorder %s43, %s45
    %p52 = scmp.eq.s32.totalorder %s14, 1
    %p53 = por %p51, %p52
    %p54 = scmp.ne.s32.totalorder %s45, %s46
    %p55 = scmp.eq.s32.totalorder %s14, 0
    %p56 = por %p54, %p55
    %p57 = scmp.ne.s32.totalorder %s45, %s46
    %p58 = scmp.eq.s32.totalorder %s15, 1
    %p59 = por %p57, %p58
    %p61 = scmp.ne.s32.totalorder %s46, %s60
    %p62 = scmp.eq.s32.totalorder %s15, 0
    %p63 = por %p61, %p62
    %s65 = sadd.s32 %s64, 1
    %p68 = scmp.eq.s32.totalorder %s9, 1
    %p69 = scmp.ne.s32.totalorder %s64, %s66
    %p70 = scmp.eq.s32.totalorder %s9, 0
    %p71 = por %p69, %p70
    %p72 = scmp.ne.s32.totalorder %s64, %s66
    %p73 = scmp.eq.s32.totalorder %s14, 1
    %p74 = por %p72, %p73
    %p75 = scmp.ne.s32.totalorder %s66, %s67
    %p76 = scmp.eq.s32.totalorder %s14, 0
    %p77 = por %p75, %p76
    %p78 = scmp.ne.s32.totalorder %s66, %s67
    %p79 = scmp.eq.s32.totalorder %s15, 1
    %p80 = por %p78, %p79
    %p82 = scmp.ne.s32.totalorder %s67, %s81
    %p83 = scmp.eq.s32.totalorder %s15, 0
    %p84 = por %p82, %p83
    %s85 = ssub.s32 %s9, %s16
    %p86 = scmp.eq.s32.totalorder %s85, 0
    %s88 = sadd.s32 %s87, 1
    %s89 = scalar_select %p86, %s87, %s88
    %p92 = pneg %p86
    %p93 = scmp.eq.s32.totalorder %s9, 1
    %p94 = por %p92, %p93
    %p95 = scmp.ne.s32.totalorder %s87, %s90
    %p96 = scmp.eq.s32.totalorder %s9, 0
    %p97 = por %p95, %p96
    %p98 = scmp.ne.s32.totalorder %s87, %s90
    %p99 = scmp.eq.s32.totalorder %s14, 1
    %p100 = por %p98, %p99
    %p101 = scmp.ne.s32.totalorder %s90, %s91
    %p102 = scmp.eq.s32.totalorder %s14, 0
    %p103 = por %p101, %p102
    %p104 = scmp.ne.s32.totalorder %s90, %s91
    %p105 = scmp.eq.s32.totalorder %s15, 1
    %p106 = por %p104, %p105
    %p108 = scmp.ne.s32.totalorder %s91, %s107
    %p109 = scmp.eq.s32.totalorder %s15, 0
    %p110 = por %p108, %p109
    %p111 = scmp.le.s32.totalorder 1, %s9
    %p112 = scmp.lt.s32.totalorder %s9, 3
    %p113 = pnand %p111, %p112
    %p114 = pneg %p113
    // Predicated region
    $region9: #{conv_block_forward.5} parent=5 // pred_check
      _
    $region10: #{conv_block_forward.5} parent=5 // pred_check_branch
      %116 = sbr.rel (%p113) target = $region12
    $region11: #{conv_block_forward.5} parent=5 // pred_region
      %s117 = ssub.s32 %s9, 1
      // Predicated region
      $region13: #{conv_block_forward.5} parent=11 // pred_check
        %p118 = pneg %p56
      $region14: #{conv_block_forward.5} parent=11 // pred_check_branch
        %120 = sbr.rel (%p118) target = $region16
      $region15: #{conv_block_forward.5} parent=11 // pred_region
        _
      $region16: #{conv_block_forward.5} parent=11 // pred_fallthru
        _
      // Predicated region
      $region17: #{conv_block_forward.5} parent=11 // pred_check
        %p121 = pneg %p77
      $region18: #{conv_block_forward.5} parent=11 // pred_check_branch
        %123 = sbr.rel (%p121) target = $region20
      $region19: #{conv_block_forward.5} parent=11 // pred_region
        _
      $region20: #{conv_block_forward.5} parent=11 // pred_fallthru
        _
    $region12: #{conv_block_forward.5} parent=5 // pred_fallthru
      _
    %p124 = scmp.lt.s32.totalorder %s9, 2
    // Predicated region
    $region21: #{conv_block_forward.5} parent=5 // pred_check
      %p125 = pneg %p124
    $region22: #{conv_block_forward.5} parent=5 // pred_check_branch
      %127 = sbr.rel (%p125) target = $region24
    $region23: #{conv_block_forward.5} parent=5 // pred_region
      // Predicated region
      $region25: #{conv_block_forward.5} parent=23 // pred_check
        %p128 = pneg %p29
      $region26: #{conv_block_forward.5} parent=23 // pred_check_branch
        %130 = sbr.rel (%p128) target = $region28
      $region27: #{conv_block_forward.5} parent=23 // pred_region
        %p131 = scmp.lt.s32.totalorder %s9, 1
        %s132 = scalar_select %p131, %s9, 1
        %s133 = smul.addr %s132, 32
        %s134 = smul.addr %s133, 8
        %s135 = scalar_lea.vmem %s0, %s134
      $region28: #{conv_block_forward.5} parent=23 // pred_fallthru
        _
    $region24: #{conv_block_forward.5} parent=5 // pred_fallthru
      _
    %p136 = scmp.le.s32.totalorder 1, %s9
    %p137 = scmp.lt.s32.totalorder %s9, 3
    %p138 = pnand %p136, %p137
    %p139 = pneg %p138
    // Predicated region
    $region29: #{conv_block_forward.5} parent=5 // pred_check
      _
    $region30: #{conv_block_forward.5} parent=5 // pred_check_branch
      %141 = sbr.rel (%p138) target = $region32
    $region31: #{conv_block_forward.5} parent=5 // pred_region
      %s142 = ssub.s32 %s9, 1
      %p143 = scmp.lt.s32.totalorder %s14, 1
      %s144 = scalar_select %p143, %s14, 1
      %s145 = smul.addr %s144, 32
      %s146 = smul.addr %s145, 8
      %s147 = scalar_lea.vmem %s0, %s146
      %p148 = pneg %p35
      %p149 = pneg %p32
      %p150 = pneg %p56
      %p151 = pneg %p53
      %p152 = pneg %p77
      %p153 = pneg %p74
      %p154 = pneg %p103
      %p155 = pneg %p100
      %p156 = scmp.lt.s32.totalorder %s14, 1
      %s157 = scalar_select %p156, %s14, 1
      %s158 = smul.addr %s157, 32
      %s159 = smul.addr %s158, 8
      %s160 = scalar_lea.vmem %s3, %s159
      %p161 = scmp.lt.s32.totalorder %s14, 1
      %s162 = scalar_select %p161, %s14, 1
      %s163 = smul.addr %s162, 32
      %s164 = smul.addr %s163, 8
      %s165 = scalar_lea.vmem %s0, %s164
      %p166 = scmp.lt.s32.totalorder %s14, 1
      %s167 = scalar_select %p166, %s14, 1
      %s168 = smul.addr %s167, 32
      %s169 = smul.addr %s168, 8
      %s170 = scalar_lea.vmem %s3, %s169
      %v171 = vld [vmem:[%s165] sm:$0xff]
      %v172 = vld [vmem:[%s165 + $0x8] sm:$0xff]
      %v173 = vld [vmem:[%s165 + $0x10] sm:$0xff]
      %v174 = vld [vmem:[%s165 + $0x18] sm:$0xff]
      %v175 = vld [vmem:[%s165 + $0x20] sm:$0xff]
      %v176 = vld [vmem:[%s165 + $0x28] sm:$0xff]
      %v177 = vld [vmem:[%s165 + $0x30] sm:$0xff]
      %v178 = vld [vmem:[%s165 + $0x38] sm:$0xff]
      %v179 = vld [vmem:[%s165 + $0x40] sm:$0xff]
      %v180 = vld [vmem:[%s165 + $0x48] sm:$0xff]
      %v181 = vld [vmem:[%s165 + $0x50] sm:$0xff]
      %v182 = vld [vmem:[%s165 + $0x58] sm:$0xff]
      %v183 = vld [vmem:[%s165 + $0x60] sm:$0xff]
      %v184 = vld [vmem:[%s165 + $0x68] sm:$0xff]
      %v185 = vld [vmem:[%s165 + $0x70] sm:$0xff]
      %v186 = vld [vmem:[%s165 + $0x78] sm:$0xff]
      %v187 = vld [vmem:[%s165 + $0x80] sm:$0xff]
      %v188 = vld [vmem:[%s165 + $0x88] sm:$0xff]
      %v189 = vld [vmem:[%s165 + $0x90] sm:$0xff]
      %v190 = vld [vmem:[%s165 + $0x98] sm:$0xff]
      %v191 = vld [vmem:[%s165 + $0xa0] sm:$0xff]
      %v192 = vld [vmem:[%s165 + $0xa8] sm:$0xff]
      %v193 = vld [vmem:[%s165 + $0xb0] sm:$0xff]
      %v194 = vld [vmem:[%s165 + $0xb8] sm:$0xff]
      %v195 = vld [vmem:[%s165 + $0xc0] sm:$0xff]
      %v196 = vld [vmem:[%s165 + $0xc8] sm:$0xff]
      %v197 = vld [vmem:[%s165 + $0xd0] sm:$0xff]
      %v198 = vld [vmem:[%s165 + $0xd8] sm:$0xff]
      %v199 = vld [vmem:[%s165 + $0xe0] sm:$0xff]
      %v200 = vld [vmem:[%s165 + $0xe8] sm:$0xff]
      %v201 = vld [vmem:[%s165 + $0xf0] sm:$0xff]
      %v202 = vld [vmem:[%s165 + $0xf8] sm:$0xff]
      %v203 = vld [vmem:[%s1] sm:$0x1]
      %v205 = vlaneseq
      %v206 = vshrl.u32 %v205, 7
      %v207 = vsub.s32 0, %v206
      %v208 = vrot.slane %v203, %v207
      %v210 = vmul.f32 %v171, %v208
      %v211 = vmul.f32 %v172, %v208
      %v212 = vmul.f32 %v173, %v208
      %v213 = vmul.f32 %v174, %v208
      %v214 = vmul.f32 %v175, %v208
      %v215 = vmul.f32 %v176, %v208
      %v216 = vmul.f32 %v177, %v208
      %v217 = vmul.f32 %v178, %v208
      %v218 = vmul.f32 %v179, %v208
      %v219 = vmul.f32 %v180, %v208
      %v220 = vmul.f32 %v181, %v208
      %v221 = vmul.f32 %v182, %v208
      %v222 = vmul.f32 %v183, %v208
      %v223 = vmul.f32 %v184, %v208
      %v224 = vmul.f32 %v185, %v208
      %v225 = vmul.f32 %v186, %v208
      %v226 = vmul.f32 %v187, %v208
      %v227 = vmul.f32 %v188, %v208
      %v228 = vmul.f32 %v189, %v208
      %v229 = vmul.f32 %v190, %v208
      %v230 = vmul.f32 %v191, %v208
      %v231 = vmul.f32 %v192, %v208
      %v232 = vmul.f32 %v193, %v208
      %v233 = vmul.f32 %v194, %v208
      %v234 = vmul.f32 %v195, %v208
      %v235 = vmul.f32 %v196, %v208
      %v236 = vmul.f32 %v197, %v208
      %v237 = vmul.f32 %v198, %v208
      %v238 = vmul.f32 %v199, %v208
      %v239 = vmul.f32 %v200, %v208
      %v240 = vmul.f32 %v201, %v208
      %v241 = vmul.f32 %v202, %v208
      %v242 = vld [vmem:[%s2] sm:$0x1]
      %v244 = vlaneseq
      %v245 = vshrl.u32 %v244, 7
      %v246 = vsub.s32 0, %v245
      %v247 = vrot.slane %v242, %v246
      %v249 = vadd.f32 %v210, %v247
      %v250 = vadd.f32 %v211, %v247
      %v251 = vadd.f32 %v212, %v247
      %v252 = vadd.f32 %v213, %v247
      %v253 = vadd.f32 %v214, %v247
      %v254 = vadd.f32 %v215, %v247
      %v255 = vadd.f32 %v216, %v247
      %v256 = vadd.f32 %v217, %v247
      %v257 = vadd.f32 %v218, %v247
      %v258 = vadd.f32 %v219, %v247
      %v259 = vadd.f32 %v220, %v247
      %v260 = vadd.f32 %v221, %v247
      %v261 = vadd.f32 %v222, %v247
      %v262 = vadd.f32 %v223, %v247
      %v263 = vadd.f32 %v224, %v247
      %v264 = vadd.f32 %v225, %v247
      %v265 = vadd.f32 %v226, %v247
      %v266 = vadd.f32 %v227, %v247
      %v267 = vadd.f32 %v228, %v247
      %v268 = vadd.f32 %v229, %v247
      %v269 = vadd.f32 %v230, %v247
      %v270 = vadd.f32 %v231, %v247
      %v271 = vadd.f32 %v232, %v247
      %v272 = vadd.f32 %v233, %v247
      %v273 = vadd.f32 %v234, %v247
      %v274 = vadd.f32 %v235, %v247
      %v275 = vadd.f32 %v236, %v247
      %v276 = vadd.f32 %v237, %v247
      %v277 = vadd.f32 %v238, %v247
      %v278 = vadd.f32 %v239, %v247
      %v279 = vadd.f32 %v240, %v247
      %v280 = vadd.f32 %v241, %v247
      %v281 = vmax.f32 %v249, 0.0
      %v282 = vmax.f32 %v250, 0.0
      %v283 = vmax.f32 %v251, 0.0
      %v284 = vmax.f32 %v252, 0.0
      %v285 = vmax.f32 %v253, 0.0
      %v286 = vmax.f32 %v254, 0.0
      %v287 = vmax.f32 %v255, 0.0
      %v288 = vmax.f32 %v256, 0.0
      %v289 = vmax.f32 %v257, 0.0
      %v290 = vmax.f32 %v258, 0.0
      %v291 = vmax.f32 %v259, 0.0
      %v292 = vmax.f32 %v260, 0.0
      %v293 = vmax.f32 %v261, 0.0
      %v294 = vmax.f32 %v262, 0.0
      %v295 = vmax.f32 %v263, 0.0
      %v296 = vmax.f32 %v264, 0.0
      %v297 = vmax.f32 %v265, 0.0
      %v298 = vmax.f32 %v266, 0.0
      %v299 = vmax.f32 %v267, 0.0
      %v300 = vmax.f32 %v268, 0.0
      %v301 = vmax.f32 %v269, 0.0
      %v302 = vmax.f32 %v270, 0.0
      %v303 = vmax.f32 %v271, 0.0
      %v304 = vmax.f32 %v272, 0.0
      %v305 = vmax.f32 %v273, 0.0
      %v306 = vmax.f32 %v274, 0.0
      %v307 = vmax.f32 %v275, 0.0
      %v308 = vmax.f32 %v276, 0.0
      %v309 = vmax.f32 %v277, 0.0
      %v310 = vmax.f32 %v278, 0.0
      %v311 = vmax.f32 %v279, 0.0
      %v312 = vmax.f32 %v280, 0.0
      %vm313 = vcmask 64512
      %314 = vst.msk [vmem:[%s170] sm:$0xff] %vm313, %v281
      %315 = vst.msk [vmem:[%s170 + $0x8] sm:$0xff] %vm313, %v282
      %316 = vst.msk [vmem:[%s170 + $0x10] sm:$0xff] %vm313, %v283
      %317 = vst.msk [vmem:[%s170 + $0x18] sm:$0xff] %vm313, %v284
      %318 = vst.msk [vmem:[%s170 + $0x20] sm:$0xff] %vm313, %v285
      %319 = vst.msk [vmem:[%s170 + $0x28] sm:$0xff] %vm313, %v286
      %320 = vst.msk [vmem:[%s170 + $0x30] sm:$0xff] %vm313, %v287
      %321 = vst.msk [vmem:[%s170 + $0x38] sm:$0xff] %vm313, %v288
      %322 = vst.msk [vmem:[%s170 + $0x40] sm:$0xff] %vm313, %v289
      %323 = vst.msk [vmem:[%s170 + $0x48] sm:$0xff] %vm313, %v290
      %324 = vst.msk [vmem:[%s170 + $0x50] sm:$0xff] %vm313, %v291
      %325 = vst.msk [vmem:[%s170 + $0x58] sm:$0xff] %vm313, %v292
      %326 = vst.msk [vmem:[%s170 + $0x60] sm:$0xff] %vm313, %v293
      %327 = vst.msk [vmem:[%s170 + $0x68] sm:$0xff] %vm313, %v294
      %328 = vst.msk [vmem:[%s170 + $0x70] sm:$0xff] %vm313, %v295
      %329 = vst.msk [vmem:[%s170 + $0x78] sm:$0xff] %vm313, %v296
      %330 = vst.msk [vmem:[%s170 + $0x80] sm:$0xff] %vm313, %v297
      %331 = vst.msk [vmem:[%s170 + $0x88] sm:$0xff] %vm313, %v298
      %332 = vst.msk [vmem:[%s170 + $0x90] sm:$0xff] %vm313, %v299
      %333 = vst.msk [vmem:[%s170 + $0x98] sm:$0xff] %vm313, %v300
      %334 = vst.msk [vmem:[%s170 + $0xa0] sm:$0xff] %vm313, %v301
      %335 = vst.msk [vmem:[%s170 + $0xa8] sm:$0xff] %vm313, %v302
      %336 = vst.msk [vmem:[%s170 + $0xb0] sm:$0xff] %vm313, %v303
      %337 = vst.msk [vmem:[%s170 + $0xb8] sm:$0xff] %vm313, %v304
      %338 = vst.msk [vmem:[%s170 + $0xc0] sm:$0xff] %vm313, %v305
      %339 = vst.msk [vmem:[%s170 + $0xc8] sm:$0xff] %vm313, %v306
      %340 = vst.msk [vmem:[%s170 + $0xd0] sm:$0xff] %vm313, %v307
      %341 = vst.msk [vmem:[%s170 + $0xd8] sm:$0xff] %vm313, %v308
      %342 = vst.msk [vmem:[%s170 + $0xe0] sm:$0xff] %vm313, %v309
      %343 = vst.msk [vmem:[%s170 + $0xe8] sm:$0xff] %vm313, %v310
      %344 = vst.msk [vmem:[%s170 + $0xf0] sm:$0xff] %vm313, %v311
      %345 = vst.msk [vmem:[%s170 + $0xf8] sm:$0xff] %vm313, %v312
      %p346 = scmp.lt.s32.totalorder %s14, 1
      %s347 = scalar_select %p346, %s14, 1
      %s348 = smul.addr %s347, 32
      %s349 = smul.addr %s348, 8
      %s350 = scalar_lea.vmem %s3, %s349
      // Predicated region
      $region33: #{conv_block_forward.5} parent=31 // pred_check
        %p351 = pneg %p100
      $region34: #{conv_block_forward.5} parent=31 // pred_check_branch
        %353 = sbr.rel (%p351) target = $region36
      $region35: #{conv_block_forward.5} parent=31 // pred_region
        _
      $region36: #{conv_block_forward.5} parent=31 // pred_fallthru
        _
    $region32: #{conv_block_forward.5} parent=5 // pred_fallthru
      _
    %p354 = scmp.le.s32.totalorder 2, %s9
    // Predicated region
    $region37: #{conv_block_forward.5} parent=5 // pred_check
      %p355 = pneg %p354
    $region38: #{conv_block_forward.5} parent=5 // pred_check_branch
      %357 = sbr.rel (%p355) target = $region40
    $region39: #{conv_block_forward.5} parent=5 // pred_region
      %s358 = ssub.s32 %s9, 2
      // Predicated region
      $region41: #{conv_block_forward.5} parent=39 // pred_check
        %p359 = pneg %p106
      $region42: #{conv_block_forward.5} parent=39 // pred_check_branch
        %361 = sbr.rel (%p359) target = $region44
      $region43: #{conv_block_forward.5} parent=39 // pred_region
        %p362 = scmp.lt.s32.totalorder %s15, 1
        %s363 = scalar_select %p362, %s15, 1
        %s364 = smul.addr %s363, 32
        %s365 = smul.addr %s364, 8
        %s366 = scalar_lea.vmem %s3, %s365
      $region44: #{conv_block_forward.5} parent=39 // pred_fallthru
        _
    $region40: #{conv_block_forward.5} parent=5 // pred_fallthru
      _
  $region6: #{conv_block_forward.5} parent=0 // loop_footer
    %s13 = sadd.s32 1, %s9
  $region7: #{conv_block_forward.5} parent=0 // loop_footer_branch
    %8 = sbr.rel target = $region3
  $region8: #{conv_block_forward.5} parent=0 // loop_exit
    _

// kernel: conv_block_forward.3
$region0: #{conv_block_forward.3}
  #allocation0 [shape = 'u32[]', space=smem, size = 0x4, offset = 0x4, fixed_abs, tag = 'smem constant byte address 0x4 - core index']
  #allocation1 [shape = 'u32[144,128]{1,0:T(1,128)}', space=vmem, size = 0x12000, scoped, tag = 'internal scratch']
  #allocation2 [shape = 'f32[18,18,4]{2,1,0:T(8,128)}', space=vmem, size = 0x36000, scoped, tag = 'scratch operand']
  %s0 = inlined_call_operand.vmem [shape: f32[2,16,16,4], index: 0, kind: input, shape index: {}]
  %s1 = inlined_call_operand.vmem [shape: f32[9,4,8], index: 1, kind: input, shape index: {}]
  %s2 = inlined_call_operand.vmem [shape: f32[1,8], index: 2, kind: input, shape index: {}]
  %s3 = inlined_call_operand.vmem [shape: f32[2,16,16,8], index: 3, kind: output, shape index: {0}]
  %s4 = inlined_call_operand.vmem [shape: f32[2,2,8], index: 4, kind: output, shape index: {1}]
  %5 = xla_tuple %s3, %s4
  %s6 = sld [smem:[#allocation0]]
  $region53: #{conv_block_forward.3} parent=0
    _
  %s8 = ssub.s32 1, %s6
  %s9 = scalar_select 0, %s8, %s6
  loop: start=0, step=1, limit=4
  $region2: #{conv_block_forward.3} parent=0 // loop_pre_header
    _
  $region3: #{conv_block_forward.3} parent=0 // loop_header
    %s11 = sphi 0, %s15
    %p12 = scmp.ge.s32.totalorder %s11, 4
    %s21 = sphi 0, %s23
    %s24 = sphi 0, %s21
    %s25 = sphi 0, %s24
    %s41 = sphi 0, %s25
    %s45 = sphi 0, %s45
    %s47 = sphi 0, %s45
    %s48 = sphi 0, %s47
    %s62 = sphi 0, %s48
    %s66 = sphi 0, %s66
    %s68 = sphi 0, %s66
    %s69 = sphi 0, %s68
    %s83 = sphi 0, %s69
    %s89 = sphi 0, %s91
    %s92 = sphi 0, %s89
    %s93 = sphi 0, %s92
    %s109 = sphi 0, %s93
    %s115 = sphi 0, %s117
    %s118 = sphi 0, %s115
    %s119 = sphi 0, %s118
    %s135 = sphi 0, %s119
  $region4: #{conv_block_forward.3} parent=0 // loop_header_branch
    %14 = sbr.rel (%p12) target = $region8
  $region5: #{conv_block_forward.3} parent=0 // loop_body
    %s16 = ssub.s32 %s11, 1
    %s17 = ssub.s32 %s11, 2
    %s18 = sadd.s32 %s11, 1
    %s19 = ssub.s32 %s11, %s18
    %p20 = scmp.eq.s32.totalorder %s19, 0
    %s22 = sadd.s32 %s21, 1
    %s23 = scalar_select %p20, %s21, %s22
    %p26 = pneg %p20
    %p27 = scmp.eq.s32.totalorder %s11, 1
    %p28 = por %p26, %p27
    %p29 = scmp.ne.s32.totalorder %s21, %s24
    %p30 = scmp.eq.s32.totalorder %s11, 0
    %p31 = por %p29, %p30
    %p32 = scmp.ne.s32.totalorder %s21, %s24
    %p33 = scmp.eq.s32.totalorder %s16, 1
    %p34 = por %p32, %p33
    %p35 = scmp.ne.s32.totalorder %s24, %s25
    %p36 = scmp.eq.s32.totalorder %s16, 0
    %p37 = por %p35, %p36
    %p38 = scmp.ne.s32.totalorder %s24, %s25
    %p39 = scmp.eq.s32.totalorder %s17, 1
    %p40 = por %p38, %p39
    %p42 = scmp.ne.s32.totalorder %s25, %s41
    %p43 = scmp.eq.s32.totalorder %s17, 0
    %p44 = por %p42, %p43
    %s46 = sadd.s32 %s45, 1
    %p49 = scmp.eq.s32.totalorder %s11, 1
    %p50 = scmp.ne.s32.totalorder %s45, %s47
    %p51 = scmp.eq.s32.totalorder %s11, 0
    %p52 = por %p50, %p51
    %p53 = scmp.ne.s32.totalorder %s45, %s47
    %p54 = scmp.eq.s32.totalorder %s16, 1
    %p55 = por %p53, %p54
    %p56 = scmp.ne.s32.totalorder %s47, %s48
    %p57 = scmp.eq.s32.totalorder %s16, 0
    %p58 = por %p56, %p57
    %p59 = scmp.ne.s32.totalorder %s47, %s48
    %p60 = scmp.eq.s32.totalorder %s17, 1
    %p61 = por %p59, %p60
    %p63 = scmp.ne.s32.totalorder %s48, %s62
    %p64 = scmp.eq.s32.totalorder %s17, 0
    %p65 = por %p63, %p64
    %s67 = sadd.s32 %s66, 1
    %p70 = scmp.eq.s32.totalorder %s11, 1
    %p71 = scmp.ne.s32.totalorder %s66, %s68
    %p72 = scmp.eq.s32.totalorder %s11, 0
    %p73 = por %p71, %p72
    %p74 = scmp.ne.s32.totalorder %s66, %s68
    %p75 = scmp.eq.s32.totalorder %s16, 1
    %p76 = por %p74, %p75
    %p77 = scmp.ne.s32.totalorder %s68, %s69
    %p78 = scmp.eq.s32.totalorder %s16, 0
    %p79 = por %p77, %p78
    %p80 = scmp.ne.s32.totalorder %s68, %s69
    %p81 = scmp.eq.s32.totalorder %s17, 1
    %p82 = por %p80, %p81
    %p84 = scmp.ne.s32.totalorder %s69, %s83
    %p85 = scmp.eq.s32.totalorder %s17, 0
    %p86 = por %p84, %p85
    %s87 = ssub.s32 %s11, %s18
    %p88 = scmp.eq.s32.totalorder %s87, 0
    %s90 = sadd.s32 %s89, 1
    %s91 = scalar_select %p88, %s89, %s90
    %p94 = pneg %p88
    %p95 = scmp.eq.s32.totalorder %s11, 1
    %p96 = por %p94, %p95
    %p97 = scmp.ne.s32.totalorder %s89, %s92
    %p98 = scmp.eq.s32.totalorder %s11, 0
    %p99 = por %p97, %p98
    %p100 = scmp.ne.s32.totalorder %s89, %s92
    %p101 = scmp.eq.s32.totalorder %s16, 1
    %p102 = por %p100, %p101
    %p103 = scmp.ne.s32.totalorder %s92, %s93
    %p104 = scmp.eq.s32.totalorder %s16, 0
    %p105 = por %p103, %p104
    %p106 = scmp.ne.s32.totalorder %s92, %s93
    %p107 = scmp.eq.s32.totalorder %s17, 1
    %p108 = por %p106, %p107
    %p110 = scmp.ne.s32.totalorder %s93, %s109
    %p111 = scmp.eq.s32.totalorder %s17, 0
    %p112 = por %p110, %p111
    %s113 = ssub.s32 %s11, %s18
    %p114 = scmp.eq.s32.totalorder %s113, 0
    %s116 = sadd.s32 %s115, 1
    %s117 = scalar_select %p114, %s115, %s116
    %p120 = pneg %p114
    %p121 = scmp.eq.s32.totalorder %s11, 1
    %p122 = por %p120, %p121
    %p123 = scmp.ne.s32.totalorder %s115, %s118
    %p124 = scmp.eq.s32.totalorder %s11, 0
    %p125 = por %p123, %p124
    %p126 = scmp.ne.s32.totalorder %s115, %s118
    %p127 = scmp.eq.s32.totalorder %s16, 1
    %p128 = por %p126, %p127
    %p129 = scmp.ne.s32.totalorder %s118, %s119
    %p130 = scmp.eq.s32.totalorder %s16, 0
    %p131 = por %p129, %p130
    %p132 = scmp.ne.s32.totalorder %s118, %s119
    %p133 = scmp.eq.s32.totalorder %s17, 1
    %p134 = por %p132, %p133
    %p136 = scmp.ne.s32.totalorder %s119, %s135
    %p137 = scmp.eq.s32.totalorder %s17, 0
    %p138 = por %p136, %p137
    %p139 = scmp.le.s32.totalorder 1, %s11
    %p140 = scmp.lt.s32.totalorder %s11, 3
    %p141 = pnand %p139, %p140
    %p142 = pneg %p141
    // Predicated region
    $region9: #{conv_block_forward.3} parent=5 // pred_check
      _
    $region10: #{conv_block_forward.3} parent=5 // pred_check_branch
      %144 = sbr.rel (%p141) target = $region12
    $region11: #{conv_block_forward.3} parent=5 // pred_region
      %s145 = ssub.s32 %s11, 1
      // Predicated region
      $region13: #{conv_block_forward.3} parent=11 // pred_check
        %p146 = pneg %p58
      $region14: #{conv_block_forward.3} parent=11 // pred_check_branch
        %148 = sbr.rel (%p146) target = $region16
      $region15: #{conv_block_forward.3} parent=11 // pred_region
        _
      $region16: #{conv_block_forward.3} parent=11 // pred_fallthru
        _
      // Predicated region
      $region17: #{conv_block_forward.3} parent=11 // pred_check
        %p149 = pneg %p79
      $region18: #{conv_block_forward.3} parent=11 // pred_check_branch
        %151 = sbr.rel (%p149) target = $region20
      $region19: #{conv_block_forward.3} parent=11 // pred_region
        _
      $region20: #{conv_block_forward.3} parent=11 // pred_fallthru
        _
    $region12: #{conv_block_forward.3} parent=5 // pred_fallthru
      _
    %p152 = scmp.lt.s32.totalorder %s11, 2
    // Predicated region
    $region21: #{conv_block_forward.3} parent=5 // pred_check
      %p153 = pneg %p152
    $region22: #{conv_block_forward.3} parent=5 // pred_check_branch
      %155 = sbr.rel (%p153) target = $region24
    $region23: #{conv_block_forward.3} parent=5 // pred_region
      // Predicated region
      $region25: #{conv_block_forward.3} parent=23 // pred_check
        %p156 = pneg %p31
      $region26: #{conv_block_forward.3} parent=23 // pred_check_branch
        %158 = sbr.rel (%p156) target = $region28
      $region27: #{conv_block_forward.3} parent=23 // pred_region
        %p159 = scmp.lt.s32.totalorder %s11, 1
        %s160 = scalar_select %p159, %s11, 1
        %s161 = smul.addr %s160, 32
        %s162 = smul.addr %s161, 8
        %s163 = scalar_lea.vmem %s0, %s162
      $region28: #{conv_block_forward.3} parent=23 // pred_fallthru
        _
    $region24: #{conv_block_forward.3} parent=5 // pred_fallthru
      _
    %p164 = scmp.le.s32.totalorder 1, %s11
    %p165 = scmp.lt.s32.totalorder %s11, 3
    %p166 = pnand %p164, %p165
    %p167 = pneg %p166
    // Predicated region
    $region29: #{conv_block_forward.3} parent=5 // pred_check
      _
    $region30: #{conv_block_forward.3} parent=5 // pred_check_branch
      %169 = sbr.rel (%p166) target = $region32
    $region31: #{conv_block_forward.3} parent=5 // pred_region
      %s170 = ssub.s32 %s11, 1
      %p171 = scmp.lt.s32.totalorder %s16, 1
      %s172 = scalar_select %p171, %s16, 1
      %s173 = smul.addr %s172, 32
      %s174 = smul.addr %s173, 8
      %s175 = scalar_lea.vmem %s0, %s174
      %p176 = pneg %p37
      %p177 = pneg %p34
      %p178 = pneg %p58
      %p179 = pneg %p55
      %p180 = pneg %p79
      %p181 = pneg %p76
      %p182 = pneg %p105
      %p183 = pneg %p102
      %p184 = scmp.lt.s32.totalorder %s16, 1
      %s185 = scalar_select %p184, %s16, 1
      %s186 = smul.addr %s185, 32
      %s187 = smul.addr %s186, 8
      %s188 = scalar_lea.vmem %s3, %s187
      %p189 = pneg %p131
      %p190 = pneg %p128
      %p191 = scmp.lt.s32.totalorder %s16, 1
      %s192 = scalar_select %p191, %s16, 1
      %s193 = smul.addr %s192, 2
      %s194 = scalar_lea.vmem %s4, %s193
      %p195 = scmp.lt.s32.totalorder %s16, 1
      %s196 = scalar_select %p195, %s16, 1
      %s197 = smul.addr %s196, 32
      %s198 = smul.addr %s197, 8
      %s199 = scalar_lea.vmem %s0, %s198
      %p200 = scmp.lt.s32.totalorder %s16, 1
      %s201 = scalar_select %p200, %s16, 1
      %s202 = smul.addr %s201, 32
      %s203 = smul.addr %s202, 8
      %s204 = scalar_lea.vmem %s3, %s203
      %p205 = scmp.lt.s32.totalorder %s16, 1
      %s206 = scalar_select %p205, %s16, 1
      %s207 = smul.addr %s206, 2
      %s208 = scalar_lea.vmem %s4, %s207
      %v209 = vld [vmem:[%s199] sm:$0xff]
      %v210 = vld [vmem:[%s199 + $0x8] sm:$0xff]
      %v211 = vld [vmem:[%s199 + $0x10] sm:$0xff]
      %v212 = vld [vmem:[%s199 + $0x18] sm:$0xff]
      %v213 = vld [vmem:[%s199 + $0x20] sm:$0xff]
      %v214 = vld [vmem:[%s199 + $0x28] sm:$0xff]
      %v215 = vld [vmem:[%s199 + $0x30] sm:$0xff]
      %v216 = vld [vmem:[%s199 + $0x38] sm:$0xff]
      %v217 = vld [vmem:[%s199 + $0x40] sm:$0xff]
      %v218 = vld [vmem:[%s199 + $0x48] sm:$0xff]
      %v219 = vld [vmem:[%s199 + $0x50] sm:$0xff]
      %v220 = vld [vmem:[%s199 + $0x58] sm:$0xff]
      %v221 = vld [vmem:[%s199 + $0x60] sm:$0xff]
      %v222 = vld [vmem:[%s199 + $0x68] sm:$0xff]
      %v223 = vld [vmem:[%s199 + $0x70] sm:$0xff]
      %v224 = vld [vmem:[%s199 + $0x78] sm:$0xff]
      %v225 = vld [vmem:[%s199 + $0x80] sm:$0xff]
      %v226 = vld [vmem:[%s199 + $0x88] sm:$0xff]
      %v227 = vld [vmem:[%s199 + $0x90] sm:$0xff]
      %v228 = vld [vmem:[%s199 + $0x98] sm:$0xff]
      %v229 = vld [vmem:[%s199 + $0xa0] sm:$0xff]
      %v230 = vld [vmem:[%s199 + $0xa8] sm:$0xff]
      %v231 = vld [vmem:[%s199 + $0xb0] sm:$0xff]
      %v232 = vld [vmem:[%s199 + $0xb8] sm:$0xff]
      %v233 = vld [vmem:[%s199 + $0xc0] sm:$0xff]
      %v234 = vld [vmem:[%s199 + $0xc8] sm:$0xff]
      %v235 = vld [vmem:[%s199 + $0xd0] sm:$0xff]
      %v236 = vld [vmem:[%s199 + $0xd8] sm:$0xff]
      %v237 = vld [vmem:[%s199 + $0xe0] sm:$0xff]
      %v238 = vld [vmem:[%s199 + $0xe8] sm:$0xff]
      %v239 = vld [vmem:[%s199 + $0xf0] sm:$0xff]
      %v240 = vld [vmem:[%s199 + $0xf8] sm:$0xff]
      %vm241 = vcmask 31744
      %242 = vst.msk [vmem:[#allocation2] sm:$0xff] %vm241, 0.0
      %243 = vst.msk [vmem:[#allocation2 + $0x8] sm:$0xff] %vm241, 0.0
      %vm244 = vcmask 25600
      %245 = vst.msk [vmem:[#allocation2 + $0x10] sm:$0x3] %vm244, 0.0
      %s246 = scalar_lea.vmem [#allocation2], 408
      %247 = vst.msk [vmem:[%s246] sm:$0xff] %vm241, 0.0
      %248 = vst.msk [vmem:[%s246 + $0x8] sm:$0xff] %vm241, 0.0
      %249 = vst.msk [vmem:[%s246 + $0x10] sm:$0x3] %vm244, 0.0
      %vm250 = vcmask 24576
      %251 = vst.msk [vmem:[#allocation2] sm:$0x1] %vm250, 0.0
      %252 = vst.msk [vmem:[#allocation2 + $0x18] sm:$0x1] %vm250, 0.0
      %253 = vst.msk [vmem:[#allocation2 + $0x30] sm:$0x1] %vm250, 0.0
      %254 = vst.msk [vmem:[#allocation2 + $0x48] sm:$0x1] %vm250, 0.0
      %255 = vst.msk [vmem:[#allocation2 + $0x60] sm:$0x1] %vm250, 0.0
      %256 = vst.msk [vmem:[#allocation2 + $0x78] sm:$0x1] %vm250, 0.0
      %257 = vst.msk [vmem:[#allocation2 + $0x90] sm:$0x1] %vm250, 0.0
      %258 = vst.msk [vmem:[#allocation2 + $0xa8] sm:$0x1] %vm250, 0.0
      %259 = vst.msk [vmem:[#allocation2 + $0xc0] sm:$0x1] %vm250, 0.0
      %260 = vst.msk [vmem:[#allocation2 + $0xd8] sm:$0x1] %vm250, 0.0
      %261 = vst.msk [vmem:[#allocation2 + $0xf0] sm:$0x1] %vm250, 0.0
      %262 = vst.msk [vmem:[#allocation2 + $0x108] sm:$0x1] %vm250, 0.0
      %263 = vst.msk [vmem:[#allocation2 + $0x120] sm:$0x1] %vm250, 0.0
      %264 = vst.msk [vmem:[#allocation2 + $0x138] sm:$0x1] %vm250, 0.0
      %265 = vst.msk [vmem:[#allocation2 + $0x150] sm:$0x1] %vm250, 0.0
      %266 = vst.msk [vmem:[#allocation2 + $0x168] sm:$0x1] %vm250, 0.0
      %267 = vst.msk [vmem:[#allocation2 + $0x180] sm:$0x1] %vm250, 0.0
      %268 = vst.msk [vmem:[#allocation2 + $0x198] sm:$0x1] %vm250, 0.0
      %269 = vst.msk [vmem:[#allocation2 + $0x11] sm:$0x1] %vm250, 0.0
      %270 = vst.msk [vmem:[#allocation2 + $0x29] sm:$0x1] %vm250, 0.0
      %271 = vst.msk [vmem:[#allocation2 + $0x41] sm:$0x1] %vm250, 0.0
      %272 = vst.msk [vmem:[#allocation2 + $0x59] sm:$0x1] %vm250, 0.0
      %273 = vst.msk [vmem:[#allocation2 + $0x71] sm:$0x1] %vm250, 0.0
      %274 = vst.msk [vmem:[#allocation2 + $0x89] sm:$0x1] %vm250, 0.0
      %275 = vst.msk [vmem:[#allocation2 + $0xa1] sm:$0x1] %vm250, 0.0
      %276 = vst.msk [vmem:[#allocation2 + $0xb9] sm:$0x1] %vm250, 0.0
      %277 = vst.msk [vmem:[#allocation2 + $0xd1] sm:$0x1] %vm250, 0.0
      %278 = vst.msk [vmem:[#allocation2 + $0xe9] sm:$0x1] %vm250, 0.0
      %279 = vst.msk [vmem:[#allocation2 + $0x101] sm:$0x1] %vm250, 0.0
      %280 = vst.msk [vmem:[#allocation2 + $0x119] sm:$0x1] %vm250, 0.0
      %281 = vst.msk [vmem:[#allocation2 + $0x131] sm:$0x1] %vm250, 0.0
      %282 = vst.msk [vmem:[#allocation2 + $0x149] sm:$0x1] %vm250, 0.0
      %283 = vst.msk [vmem:[#allocation2 + $0x161] sm:$0x1] %vm250, 0.0
      %284 = vst.msk [vmem:[#allocation2 + $0x179] sm:$0x1] %vm250, 0.0
      %285 = vst.msk [vmem:[#allocation2 + $0x191] sm:$0x1] %vm250, 0.0
      %286 = vst.msk [vmem:[#allocation2 + $0x1a9] sm:$0x1] %vm250, 0.0
      %s287 = scalar_lea.vmem [#allocation2], 24
      %288 = vst.msk [vmem:[%s287 + $0x1] sm:$0xff] %vm241, %v209
      %289 = vst.msk [vmem:[%s287 + $0x9] sm:$0xff] %vm241, %v210
      %290 = vst.msk [vmem:[%s287 + $0x19] sm:$0xff] %vm241, %v211
      %291 = vst.msk [vmem:[%s287 + $0x21] sm:$0xff] %vm241, %v212
      %292 = vst.msk [vmem:[%s287 + $0x31] sm:$0xff] %vm241, %v213
      %293 = vst.msk [vmem:[%s287 + $0x39] sm:$0xff] %vm241, %v214
      %294 = vst.msk [vmem:[%s287 + $0x49] sm:$0xff] %vm241, %v215
      %295 = vst.msk [vmem:[%s287 + $0x51] sm:$0xff] %vm241, %v216
      %296 = vst.msk [vmem:[%s287 + $0x61] sm:$0xff] %vm241, %v217
      %297 = vst.msk [vmem:[%s287 + $0x69] sm:$0xff] %vm241, %v218
      %298 = vst.msk [vmem:[%s287 + $0x79] sm:$0xff] %vm241, %v219
      %299 = vst.msk [vmem:[%s287 + $0x81] sm:$0xff] %vm241, %v220
      %300 = vst.msk [vmem:[%s287 + $0x91] sm:$0xff] %vm241, %v221
      %301 = vst.msk [vmem:[%s287 + $0x99] sm:$0xff] %vm241, %v222
      %302 = vst.msk [vmem:[%s287 + $0xa9] sm:$0xff] %vm241, %v223
      %303 = vst.msk [vmem:[%s287 + $0xb1] sm:$0xff] %vm241, %v224
      %304 = vst.msk [vmem:[%s287 + $0xc1] sm:$0xff] %vm241, %v225
      %305 = vst.msk [vmem:[%s287 + $0xc9] sm:$0xff] %vm241, %v226
      %306 = vst.msk [vmem:[%s287 + $0xd9] sm:$0xff] %vm241, %v227
      %307 = vst.msk [vmem:[%s287 + $0xe1] sm:$0xff] %vm241, %v228
      %308 = vst.msk [vmem:[%s287 + $0xf1] sm:$0xff] %vm241, %v229
      %309 = vst.msk [vmem:[%s287 + $0xf9] sm:$0xff] %vm241, %v230
      %310 = vst.msk [vmem:[%s287 + $0x109] sm:$0xff] %vm241, %v231
      %311 = vst.msk [vmem:[%s287 + $0x111] sm:$0xff] %vm241, %v232
      %312 = vst.msk [vmem:[%s287 + $0x121] sm:$0xff] %vm241, %v233
      %313 = vst.msk [vmem:[%s287 + $0x129] sm:$0xff] %vm241, %v234
      %314 = vst.msk [vmem:[%s287 + $0x139] sm:$0xff] %vm241, %v235
      %315 = vst.msk [vmem:[%s287 + $0x141] sm:$0xff] %vm241, %v236
      %316 = vst.msk [vmem:[%s287 + $0x151] sm:$0xff] %vm241, %v237
      %317 = vst.msk [vmem:[%s287 + $0x159] sm:$0xff] %vm241, %v238
      %318 = vst.msk [vmem:[%s287 + $0x169] sm:$0xff] %vm241, %v239
      %319 = vst.msk [vmem:[%s287 + $0x171] sm:$0xff] %vm241, %v240
      %v320 = vld [vmem:[#allocation2] sm:$0xff]
      %v321 = vld [vmem:[#allocation2 + $0x8] sm:$0xff]
      %v322 = vld [vmem:[#allocation2 + $0x18] sm:$0xff]
      %v323 = vld [vmem:[#allocation2 + $0x20] sm:$0xff]
      %v324 = vld [vmem:[#allocation2 + $0x30] sm:$0xff]
      %v325 = vld [vmem:[#allocation2 + $0x38] sm:$0xff]
      %v326 = vld [vmem:[#allocation2 + $0x48] sm:$0xff]
      %v327 = vld [vmem:[#allocation2 + $0x50] sm:$0xff]
      %v328 = vld [vmem:[#allocation2 + $0x60] sm:$0xff]
      %v329 = vld [vmem:[#allocation2 + $0x68] sm:$0xff]
      %v330 = vld [vmem:[#allocation2 + $0x78] sm:$0xff]
      %v331 = vld [vmem:[#allocation2 + $0x80] sm:$0xff]
      %v332 = vld [vmem:[#allocation2 + $0x90] sm:$0xff]
      %v333 = vld [vmem:[#allocation2 + $0x98] sm:$0xff]
      %v334 = vld [vmem:[#allocation2 + $0xa8] sm:$0xff]
      %v335 = vld [vmem:[#allocation2 + $0xb0] sm:$0xff]
      %v336 = vld [vmem:[#allocation2 + $0xc0] sm:$0xff]
      %v337 = vld [vmem:[#allocation2 + $0xc8] sm:$0xff]
      %v338 = vld [vmem:[#allocation2 + $0xd8] sm:$0xff]
      %v339 = vld [vmem:[#allocation2 + $0xe0] sm:$0xff]
      %v340 = vld [vmem:[#allocation2 + $0xf0] sm:$0xff]
      %v341 = vld [vmem:[#allocation2 + $0xf8] sm:$0xff]
      %v342 = vld [vmem:[#allocation2 + $0x108] sm:$0xff]
      %v343 = vld [vmem:[#allocation2 + $0x110] sm:$0xff]
      %v344 = vld [vmem:[#allocation2 + $0x120] sm:$0xff]
      %v345 = vld [vmem:[#allocation2 + $0x128] sm:$0xff]
      %v346 = vld [vmem:[#allocation2 + $0x138] sm:$0xff]
      %v347 = vld [vmem:[#allocation2 + $0x140] sm:$0xff]
      %v348 = vld [vmem:[#allocation2 + $0x150] sm:$0xff]
      %v349 = vld [vmem:[#allocation2 + $0x158] sm:$0xff]
      %v350 = vld [vmem:[#allocation2 + $0x168] sm:$0xff]
      %v351 = vld [vmem:[#allocation2 + $0x170] sm:$0xff]
      %v352 = vld [vmem:[%s1] sm:$0xf]
      %v353 = vld [vmem:[#allocation2 + $0x1] sm:$0xff]
      %v354 = vld [vmem:[#allocation2 + $0x9] sm:$0xff]
      %v355 = vld [vmem:[#allocation2 + $0x19] sm:$0xff]
      %v356 = vld [vmem:[#allocation2 + $0x21] sm:$0xff]
      %v357 = vld [vmem:[#allocation2 + $0x31] sm:$0xff]
      %v358 = vld [vmem:[#allocation2 + $0x39] sm:$0xff]
      %v359 = vld [vmem:[#allocation2 + $0x49] sm:$0xff]
      %v360 = vld [vmem:[#allocation2 + $0x51] sm:$0xff]
      %v361 = vld [vmem:[#allocation2 + $0x61] sm:$0xff]
      %v362 = vld [vmem:[#allocation2 + $0x69] sm:$0xff]
      %v363 = vld [vmem:[#allocation2 + $0x79] sm:$0xff]
      %v364 = vld [vmem:[#allocation2 + $0x81] sm:$0xff]
      %v365 = vld [vmem:[#allocation2 + $0x91] sm:$0xff]
      %v366 = vld [vmem:[#allocation2 + $0x99] sm:$0xff]
      %v367 = vld [vmem:[#allocation2 + $0xa9] sm:$0xff]
      %v368 = vld [vmem:[#allocation2 + $0xb1] sm:$0xff]
      %v369 = vld [vmem:[#allocation2 + $0xc1] sm:$0xff]
      %v370 = vld [vmem:[#allocation2 + $0xc9] sm:$0xff]
      %v371 = vld [vmem:[#allocation2 + $0xd9] sm:$0xff]
      %v372 = vld [vmem:[#allocation2 + $0xe1] sm:$0xff]
      %v373 = vld [vmem:[#allocation2 + $0xf1] sm:$0xff]
      %v374 = vld [vmem:[#allocation2 + $0xf9] sm:$0xff]
      %v375 = vld [vmem:[#allocation2 + $0x109] sm:$0xff]
      %v376 = vld [vmem:[#allocation2 + $0x111] sm:$0xff]
      %v377 = vld [vmem:[#allocation2 + $0x121] sm:$0xff]
      %v378 = vld [vmem:[#allocation2 + $0x129] sm:$0xff]
      %v379 = vld [vmem:[#allocation2 + $0x139] sm:$0xff]
      %v380 = vld [vmem:[#allocation2 + $0x141] sm:$0xff]
      %v381 = vld [vmem:[#allocation2 + $0x151] sm:$0xff]
      %v382 = vld [vmem:[#allocation2 + $0x159] sm:$0xff]
      %v383 = vld [vmem:[#allocation2 + $0x169] sm:$0xff]
      %v384 = vld [vmem:[#allocation2 + $0x171] sm:$0xff]
      %s385 = scalar_lea.vmem %s1, 4
      %v386 = vld [vmem:[%s385] sm:$0xf]
      %v388 = vsel %vm241, %v353, 0
      %v391 = vsel %vm241, %v354, 0
      %v394 = vsel %vm241, %v355, 0
      %v397 = vsel %vm241, %v356, 0
      %v400 = vsel %vm241, %v357, 0
      %v403 = vsel %vm241, %v358, 0
      %v406 = vsel %vm241, %v359, 0
      %v409 = vsel %vm241, %v360, 0
      %v412 = vsel %vm241, %v361, 0
      %v415 = vsel %vm241, %v362, 0
      %v418 = vsel %vm241, %v363, 0
      %v421 = vsel %vm241, %v364, 0
      %v424 = vsel %vm241, %v365, 0
      %v427 = vsel %vm241, %v366, 0
      %v430 = vsel %vm241, %v367, 0
      %v433 = vsel %vm241, %v368, 0
      %v436 = vsel %vm241, %v369, 0
      %v439 = vsel %vm241, %v370, 0
      %v442 = vsel %vm241, %v371, 0
      %v445 = vsel %vm241, %v372, 0
      %v448 = vsel %vm241, %v373, 0
      %v451 = vsel %vm241, %v374, 0
      %v454 = vsel %vm241, %v375, 0
      %v457 = vsel %vm241, %v376, 0
      %v460 = vsel %vm241, %v377, 0
      %v463 = vsel %vm241, %v378, 0
      %v466 = vsel %vm241, %v379, 0
      %v469 = vsel %vm241, %v380, 0
      %v472 = vsel %vm241, %v381, 0
      %v475 = vsel %vm241, %v382, 0
      %v478 = vsel %vm241, %v383, 0
      %v481 = vsel %vm241, %v384, 0
      %vm483 = vcmask 1043456
      %v485 = vsel %vm483, %v386, 0
      %487 = vmatprep.subr.mxu0 0.0
      %488 = vmatpush1.msra.mxu0 %v485
      %489 = vmatprep.subr.mxu0 0.0
      %490 = vmatpush1.msra.mxu0 0.0
      %491 = vmatprep.subr.mxu0 0.0
      %492 = vmatpush1.msra.mxu0 0.0
      %493 = vmatprep.subr.mxu0 0.0
      %494 = vmatpush1.msra.mxu0 0.0
      %495 = vmatprep.subr.mxu0 0.0
      %496 = vmatpush1.msra.mxu0 0.0
      %497 = vmatprep.subr.mxu0 0.0
      %498 = vmatpush1.msra.mxu0 0.0
      %499 = vmatprep.subr.mxu0 0.0
      %500 = vmatpush1.msra.mxu0 0.0
      %501 = vmatprep.subr.mxu0 0.0
      %502 = vmatpush1.msra.mxu0 0.0
      %503 = vmatprep.subr.mxu0 0.0
      %504 = vmatpush1.msra.mxu0 0.0
      %505 = vmatprep.subr.mxu0 0.0
      %506 = vmatpush1.msra.mxu0 0.0
      %507 = vmatprep.subr.mxu0 0.0
      %508 = vmatpush1.msra.mxu0 0.0
      %509 = vmatprep.subr.mxu0 0.0
      %510 = vmatpush1.msra.mxu0 0.0
      %511 = vmatprep.subr.mxu0 0.0
      %512 = vmatpush1.msra.mxu0 0.0
      %513 = vmatprep.subr.mxu0 0.0
      %514 = vmatpush1.msra.mxu0 0.0
      %515 = vmatprep.subr.mxu0 0.0
      %516 = vmatpush1.msra.mxu0 0.0
      %517 = vmatprep.subr.mxu0 0.0
      %518 = vmatpush1.msra.mxu0 0.0
      %519 = vmatprep.subr.mxu0 0.0
      %520 = vmatpush1.msra.mxu0 0.0
      %521 = vmatprep.subr.mxu0 0.0
      %522 = vmatpush1.msra.mxu0 0.0
      %523 = vmatprep.subr.mxu0 0.0
      %524 = vmatpush1.msra.mxu0 0.0
      %525 = vmatprep.subr.mxu0 0.0
      %526 = vmatpush1.msra.mxu0 0.0
      %527 = vmatprep.subr.mxu0 0.0
      %528 = vmatpush1.msra.mxu0 0.0
      %529 = vmatprep.subr.mxu0 0.0
      %530 = vmatpush1.msra.mxu0 0.0
      %531 = vmatprep.subr.mxu0 0.0
      %532 = vmatpush1.msra.mxu0 0.0
      %533 = vmatprep.subr.mxu0 0.0
      %534 = vmatpush1.msra.mxu0 0.0
      %535 = vmatprep.subr.mxu0 0.0
      %536 = vmatpush1.msra.mxu0 0.0
      %537 = vmatprep.subr.mxu0 0.0
      %538 = vmatpush1.msra.mxu0 0.0
      %539 = vmatprep.subr.mxu0 0.0
      %540 = vmatpush1.msra.mxu0 0.0
      %541 = vmatprep.subr.mxu0 0.0
      %542 = vmatpush1.msra.mxu0 0.0
      %543 = vmatprep.subr.mxu0 0.0
      %544 = vmatpush1.msra.mxu0 0.0
      %545 = vmatprep.subr.mxu0 0.0
      %546 = vmatpush1.msra.mxu0 0.0
      %547 = vmatprep.subr.mxu0 0.0
      %548 = vmatpush1.msra.mxu0 0.0
      %549 = vmatprep.subr.mxu0 0.0
      %550 = vmatpush1.msra.mxu0 0.0
      %551 = vmatprep.mubr.f32.mxu0 0.0
      %552 = vmatmul.mubr.f32.gmra.mrb[0].mxu0 %v388
      %v553 = vpop.f32.mrb[0].mxu0
      %v554 = vadd.f32 0.0, %v553
      %v555 = vpop.f32.mrb[0].mxu0
      %556 = vmatprep.mubr.f32.mxu0 0.0
      %557 = vmatmul.mubr.f32.gmra.mrb[0].mxu0 %v391
      %v558 = vpop.f32.mrb[0].mxu0
      %v559 = vadd.f32 0.0, %v558
      %v560 = vpop.f32.mrb[0].mxu0
      %561 = vmatprep.mubr.f32.mxu0 0.0
      %562 = vmatmul.mubr.f32.gmra.mrb[0].mxu0 %v394
      %v563 = vpop.f32.mrb[0].mxu0
      %v564 = vadd.f32 0.0, %v563
      %v565 = vpop.f32.mrb[0].mxu0
      %566 = vmatprep.mubr.f32.mxu0 0.0
      %567 = vmatmul.mubr.f32.gmra.mrb[0].mxu0 %v397
      %v568 = vpop.f32.mrb[0].mxu0
      %v569 = vadd.f32 0.0, %v568
      %v570 = vpop.f32.mrb[0].mxu0
      %571 = vmatprep.mubr.f32.mxu0 0.0
      %572 = vmatmul.mubr.f32.gmra.mrb[0].mxu0 %v400
      %v573 = vpop.f32.mrb[0].mxu0
      %v574 = vadd.f32 0.0, %v573
      %v575 = vpop.f32.mrb[0].mxu0
      %576 = vmatprep.mubr.f32.mxu0 0.0
      %577 = vmatmul.mubr.f32.gmra.mrb[0].mxu0 %v403
      %v578 = vpop.f32.mrb[0].mxu0
      %v579 = vadd.f32 0.0, %v578
      %v580 = vpop.f32.mrb[0].mxu0
      %581 = vmatprep.mubr.f32.mxu0 0.0
      %582 = vmatmul.mubr.f32.gmra.mrb[0].mxu0 %v406
      %v583 = vpop.f32.mrb[0].mxu0
      %v584 = vadd.f32 0.0, %v583
      %v585 = vpop.f32.mrb[0].mxu0
      %586 = vmatprep.mubr.f32.mxu0 0.0
      %587 = vmatmul.mubr.f32.gmra.mrb[0].mxu0 %v409
      %v588 = vpop.f32.mrb[0].mxu0
      %v589 = vadd.f32 0.0, %v588
      %v590 = vpop.f32.mrb[0].mxu0
      %591 = vmatprep.mubr.f32.mxu0 0.0
      %592 = vmatmul.mubr.f32.gmra.mrb[0].mxu0 %v412
      %v593 = vpop.f32.mrb[0].mxu0
      %v594 = vadd.f32 0.0, %v593
      %v595 = vpop.f32.mrb[0].mxu0
      %596 = vmatprep.mubr.f32.mxu0 0.0
      %597 = vmatmul.mubr.f32.gmra.mrb[0].mxu0 %v415
      %v598 = vpop.f32.mrb[0].mxu0
      %v599 = vadd.f32 0.0, %v598
      %v600 = vpop.f32.mrb[0].mxu0
      %601 = vmatprep.mubr.f32.mxu0 0.0
      %602 = vmatmul.mubr.f32.gmra.mrb[0].mxu0 %v418
      %v603 = vpop.f32.mrb[0].mxu0
      %v604 = vadd.f32 0.0, %v603
      %v605 = vpop.f32.mrb[0].mxu0
      %606 = vmatprep.mubr.f32.mxu0 0.0
      %607 = vmatmul.mubr.f32.gmra.mrb[0].mxu0 %v421
      %v608 = vpop.f32.mrb[0].mxu0
      %v609 = vadd.f32 0.0, %v608
      %v610 = vpop.f32.mrb[0].mxu0
      %611 = vmatprep.mubr.f32.mxu0 0.0
      %612 = vmatmul.mubr.f32.gmra.mrb[0].mxu0 %v424
      %v613 = vpop.f32.mrb[0].mxu0
      %v614 = vadd.f32 0.0, %v613
      %v615 = vpop.f32.mrb[0].mxu0
      %616 = vmatprep.mubr.f32.mxu0 0.0
      %617 = vmatmul.mubr.f32.gmra.mrb[0].mxu0 %v427
      %v618 = vpop.f32.mrb[0].mxu0
      %v619 = vadd.f32 0.0, %v618
      %v620 = vpop.f32.mrb[0].mxu0
      %621 = vmatprep.mubr.f32.mxu0 0.0
      %622 = vmatmul.mubr.f32.gmra.mrb[0].mxu0 %v430
      %v623 = vpop.f32.mrb[0].mxu0
      %v624 = vadd.f32 0.0, %v623
      %v625 = vpop.f32.mrb[0].mxu0
      %626 = vmatprep.mubr.f32.mxu0 0.0
      %627 = vmatmul.mubr.f32.gmra.mrb[0].mxu0 %v433
      %v628 = vpop.f32.mrb[0].mxu0
      %v629 = vadd.f32 0.0, %v628
      %v630 = vpop.f32.mrb[0].mxu0
      %631 = vmatprep.mubr.f32.mxu0 0.0
      %632 = vmatmul.mubr.f32.gmra.mrb[0].mxu0 %v436
      %v633 = vpop.f32.mrb[0].mxu0
      %v634 = vadd.f32 0.0, %v633
      %v635 = vpop.f32.mrb[0].mxu0
      %636 = vmatprep.mubr.f32.mxu0 0.0
      %637 = vmatmul.mubr.f32.gmra.mrb[0].mxu0 %v439
      %v638 = vpop.f32.mrb[0].mxu0
      %v639 = vadd.f32 0.0, %v638
      %v640 = vpop.f32.mrb[0].mxu0
      %641 = vmatprep.mubr.f32.mxu0 0.0
      %642 = vmatmul.mubr.f32.gmra.mrb[0].mxu0 %v442
      %v643 = vpop.f32.mrb[0].mxu0
      %v644 = vadd.f32 0.0, %v643
      %v645 = vpop.f32.mrb[0].mxu0
      %646 = vmatprep.mubr.f32.mxu0 0.0
      %647 = vmatmul.mubr.f32.gmra.mrb[0].mxu0 %v445
      %v648 = vpop.f32.mrb[0].mxu0
      %v649 = vadd.f32 0.0, %v648
      %v650 = vpop.f32.mrb[0].mxu0
      %651 = vmatprep.mubr.f32.mxu0 0.0
      %652 = vmatmul.mubr.f32.gmra.mrb[0].mxu0 %v448
      %v653 = vpop.f32.mrb[0].mxu0
      %v654 = vadd.f32 0.0, %v653
      %v655 = vpop.f32.mrb[0].mxu0
      %656 = vmatprep.mubr.f32.mxu0 0.0
      %657 = vmatmul.mubr.f32.gmra.mrb[0].mxu0 %v451
      %v658 = vpop.f32.mrb[0].mxu0
      %v659 = vadd.f32 0.0, %v658
      %v660 = vpop.f32.mrb[0].mxu0
      %661 = vmatprep.mubr.f32.mxu0 0.0
      %662 = vmatmul.mubr.f32.gmra.mrb[0].mxu0 %v454
      %v663 = vpop.f32.mrb[0].mxu0
      %v664 = vadd.f32 0.0, %v663
      %v665 = vpop.f32.mrb[0].mxu0
      %666 = vmatprep.mubr.f32.mxu0 0.0
      %667 = vmatmul.mubr.f32.gmra.mrb[0].mxu0 %v457
      %v668 = vpop.f32.mrb[0].mxu0
      %v669 = vadd.f32 0.0, %v668
      %v670 = vpop.f32.mrb[0].mxu0
      %671 = vmatprep.mubr.f32.mxu0 0.0
      %672 = vmatmul.mubr.f32.gmra.mrb[0].mxu0 %v460
      %v673 = vpop.f32.mrb[0].mxu0
      %v674 = vadd.f32 0.0, %v673
      %v675 = vpop.f32.mrb[0].mxu0
      %676 = vmatprep.mubr.f32.mxu0 0.0
      %677 = vmatmul.mubr.f32.gmra.mrb[0].mxu0 %v463
      %v678 = vpop.f32.mrb[0].mxu0
      %v679 = vadd.f32 0.0, %v678
      %v680 = vpop.f32.mrb[0].mxu0
      %681 = vmatprep.mubr.f32.mxu0 0.0
      %682 = vmatmul.mubr.f32.gmra.mrb[0].mxu0 %v466
      %v683 = vpop.f32.mrb[0].mxu0
      %v684 = vadd.f32 0.0, %v683
      %v685 = vpop.f32.mrb[0].mxu0
      %686 = vmatprep.mubr.f32.mxu0 0.0
      %687 = vmatmul.mubr.f32.gmra.mrb[0].mxu0 %v469
      %v688 = vpop.f32.mrb[0].mxu0
      %v689 = vadd.f32 0.0, %v688
      %v690 = vpop.f32.mrb[0].mxu0
      %691 = vmatprep.mubr.f32.mxu0 0.0
      %692 = vmatmul.mubr.f32.gmra.mrb[0].mxu0 %v472
      %v693 = vpop.f32.mrb[0].mxu0
      %v694 = vadd.f32 0.0, %v693
      %v695 = vpop.f32.mrb[0].mxu0
      %696 = vmatprep.mubr.f32.mxu0 0.0
      %697 = vmatmul.mubr.f32.gmra.mrb[0].mxu0 %v475
      %v698 = vpop.f32.mrb[0].mxu0
      %v699 = vadd.f32 0.0, %v698
      %v700 = vpop.f32.mrb[0].mxu0
      %701 = vmatprep.mubr.f32.mxu0 0.0
      %702 = vmatmul.mubr.f32.gmra.mrb[0].mxu0 %v478
      %v703 = vpop.f32.mrb[0].mxu0
      %v704 = vadd.f32 0.0, %v703
      %v705 = vpop.f32.mrb[0].mxu0
      %706 = vmatprep.mubr.f32.mxu0 0.0
      %707 = vmatmul.mubr.f32.gmra.mrb[0].mxu0 %v481
      %v708 = vpop.f32.mrb[0].mxu0
      %v709 = vadd.f32 0.0, %v708
      %v710 = vpop.f32.mrb[0].mxu0
      %711 = vdwg.mxu0
      %v713 = vsel %vm241, %v320, 0
      %v716 = vsel %vm241, %v321, 0
      %v719 = vsel %vm241, %v322, 0
      %v722 = vsel %vm241, %v323, 0
      %v725 = vsel %vm241, %v324, 0
      %v728 = vsel %vm241, %v325, 0
      %v731 = vsel %vm241, %v326, 0
      %v734 = vsel %vm241, %v327, 0
      %v737 = vsel %vm241, %v328, 0
      %v740 = vsel %vm241, %v329, 0
      %v743 = vsel %vm241, %v330, 0
      %v746 = vsel %vm241, %v331, 0
      %v749 = vsel %vm241, %v332, 0
      %v752 = vsel %vm241, %v333, 0
      %v755 = vsel %vm241, %v334, 0
      %v758 = vsel %vm241, %v335, 0
      %v761 = vsel %vm241, %v336, 0
      %v764 = vsel %vm241, %v337, 0
      %v767 = vsel %vm241, %v338, 0
      %v770 = vsel %vm241, %v339, 0
      %v773 = vsel %vm241, %v340, 0
      %v776 = vsel %vm241, %v341, 0
      %v779 = vsel %vm241, %v342, 0
      %v782 = vsel %vm241, %v343, 0
      %v785 = vsel %vm241, %v344, 0
      %v788 = vsel %vm241, %v345, 0
      %v791 = vsel %vm241, %v346, 0
      %v794 = vsel %vm241, %v347, 0
      %v797 = vsel %vm241, %v348, 0
      %v800 = vsel %vm241, %v349, 0
      %v803 = vsel %vm241, %v350, 0
      %v806 = vsel %vm241, %v351, 0
      %v809 = vsel %vm483, %v352, 0
      %811 = vmatprep.subr.mxu0 0.0
      %812 = vmatpush1.msra.mxu0 %v809
      %813 = vmatprep.subr.mxu0 0.0
      %814 = vmatpush1.msra.mxu0 0.0
      %815 = vmatprep.subr.mxu0 0.0
      %816 = vmatpush1.msra.mxu0 0.0
      %817 = vmatprep.subr.mxu0 0.0
      %818 = vmatpush1.msra.mxu0 0.0
      %819 = vmatprep.subr.mxu0 0.0
      %820 = vmatpush1.msra.mxu0 0.0
      %821 = vmatprep.subr.mxu0 0.0
      %822 = vmatpush1.msra.mxu0 0.0
      %823 = vmatprep.subr.mxu0 0.0
      %824 = vmatpush1.msra.mxu0 0.0
      %825 = vmatprep.subr.mxu0 0.0
      %826 = vmatpush1.msra.mxu0 0.0
      %827 = vmatprep.subr.mxu0 0.0
      %828 = vmatpush1.msra.mxu0 0.0
      %829 = vmatprep.subr.mxu0 0.0
      %830 = vmatpush1.msra.mxu0 0.0
      %831 = vmatprep.subr.mxu0 0.0
      %832 = vmatpush1.msra.mxu0 0.0
      %833 = vmatprep.subr.mxu0 0.0
      %834 = vmatpush1.msra.mxu0 0.0
      %835 = vmatprep.subr.mxu0 0.0
      %836 = vmatpush1.msra.mxu0 0.0
      %837 = vmatprep.subr.mxu0 0.0
      %838 = vmatpush1.msra.mxu0 0.0
      %839 = vmatprep.subr.mxu0 0.0
      %840 = vmatpush1.msra.mxu0 0.0
      %841 = vmatprep.subr.mxu0 0.0
      %842 = vmatpush1.msra.mxu0 0.0
      %843 = vmatprep.subr.mxu0 0.0
      %844 = vmatpush1.msra.mxu0 0.0
      %845 = vmatprep.subr.mxu0 0.0
      %846 = vmatpush1.msra.mxu0 0.0
      %847 = vmatprep.subr.mxu0 0.0
      %848 = vmatpush1.msra.mxu0 0.0
      %849 = vmatprep.subr.mxu0 0.0
      %850 = vmatpush1.msra.mxu0 0.0
      %851 = vmatprep.subr.mxu0 0.0
      %852 = vmatpush1.msra.mxu0 0.0
      %853 = vmatprep.subr.mxu0 0.0
      %854 = vmatpush1.msra.mxu0 0.0
      %855 = vmatprep.subr.mxu0 0.0
      %856 = vmatpush1.msra.mxu0 0.0
      %857 = vmatprep.subr.mxu0 0.0
      %858 = vmatpush1.msra.mxu0 0.0
      %859 = vmatprep.subr.mxu0 0.0
      %860 = vmatpush1.msra.mxu0 0.0
      %861 = vmatprep.subr.mxu0 0.0
      %862 = vmatpush1.msra.mxu0 0.0
      %863 = vmatprep.subr.mxu0 0.0
      %864 = vmatpush1.msra.mxu0 0.0
      %865 = vmatprep.subr.mxu0 0.0
      %866 = vmatpush1.msra.mxu0 0.0
      %867 = vmatprep.subr.mxu0 0.0
      %868 = vmatpush1.msra.mxu0 0.0
      %869 = vmatprep.subr.mxu0 0.0
      %870 = vmatpush1.msra.mxu0 0.0
      %871 = vmatprep.subr.mxu0 0.0
      %872 = vmatpush1.msra.mxu0 0.0
      %873 = vmatprep.subr.mxu0 0.0
      %874 = vmatpush1.msra.mxu0 0.0
      %875 = vmatprep.mubr.f32.mxu0 0.0
      %876 = vmatmul.mubr.f32.gmra.mrb[0].mxu0 %v713
      %v877 = vpop.f32.mrb[0].mxu0
      %v878 = vadd.f32 %v554, %v877
      %v879 = vpop.f32.mrb[0].mxu0
      %880 = vmatprep.mubr.f32.mxu0 0.0
      %881 = vmatmul.mubr.f32.gmra.mrb[0].mxu0 %v716
      %v882 = vpop.f32.mrb[0].mxu0
      %v883 = vadd.f32 %v559, %v882
      %v884 = vpop.f32.mrb[0].mxu0
      %885 = vmatprep.mubr.f32.mxu0 0.0
      %886 = vmatmul.mubr.f32.gmra.mrb[0].mxu0 %v719
      %v887 = vpop.f32.mrb[0].mxu0
      %v888 = vadd.f32 %v564, %v887
      %v889 = vpop.f32.mrb[0].mxu0
      %890 = vmatprep.mubr.f32.mxu0 0.0
      %891 = vmatmul.mubr.f32.gmra.mrb[0].mxu0 %v722
      %v892 = vpop.f32.mrb[0].mxu0
      %v893 = vadd.f32 %v569, %v892
      %v894 = vpop.f32.mrb[0].mxu0
      %895 = vmatprep.mubr.f32.mxu0 0.0
      %896 = vmatmul.mubr.f32.gmra.mrb[0].mxu0 %v725
      %v897 = vpop.f32.mrb[0].mxu0
      %v898 = vadd.f32 %v574, %v897
      %v899 = vpop.f32.mrb[0].mxu0
      %900 = vmatprep.mubr.f32.mxu0 0.0
      %901 = vmatmul.mubr.f32.gmra.mrb[0].mxu0 %v728
      %v902 = vpop.f32.mrb[0].mxu0
      %v903 = vadd.f32 %v579, %v902
      %v904 = vpop.f32.mrb[0].mxu0
      %905 = vmatprep.mubr.f32.mxu0 0.0
      %906 = vmatmul.mubr.f32.gmra.mrb[0].mxu0 %v731
      %v907 = vpop.f32.mrb[0].mxu0
      %v908 = vadd.f32 %v584, %v907
      %v909 = vpop.f32.mrb[0].mxu0
      %910 = vmatprep.mubr.f32.mxu0 0.0
      %911 = vmatmul.mubr.f32.gmra.mrb[0].mxu0 %v734
      %v912 = vpop.f32.mrb[0].mxu0
      %v913 = vadd.f32 %v589, %v912
      %v914 = vpop.f32.mrb[0].mxu0
      %915 = vmatprep.mubr.f32.mxu0 0.0
      %916 = vmatmul.mubr.f32.gmra.mrb[0].mxu0 %v737
      %v917 = vpop.f32.mrb[0].mxu0
      %v918 = vadd.f32 %v594, %v917
      %v919 = vpop.f32.mrb[0].mxu0
      %920 = vmatprep.mubr.f32.mxu0 0.0
      %921 = vmatmul.mubr.f32.gmra.mrb[0].mxu0 %v740
      %v922 = vpop.f32.mrb[0].mxu0
      %v923 = vadd.f32 %v599, %v922
      %v924 = vpop.f32.mrb[0].mxu0
      %925 = vmatprep.mubr.f32.mxu0 0.0
      %926 = vmatmul.mubr.f32.gmra.mrb[0].mxu0 %v743
      %v927 = vpop.f32.mrb[0].mxu0
      %v928 = vadd.f32 %v604, %v927
      %v929 = vpop.f32.mrb[0].mxu0
      %930 = vmatprep.mubr.f32.mxu0 0.0
      %931 = vmatmul.mubr.f32.gmra.mrb[0].mxu0 %v746
      %v932 = vpop.f32.mrb[0].mxu0
      %v933 = vadd.f32 %v609, %v932
      %v934 = vpop.f32.mrb[0].mxu0
      %935 = vmatprep.mubr.f32.mxu0 0.0
      %936 = vmatmul.mubr.f32.gmra.mrb[0].mxu0 %v749
      %v937 = vpop.f32.mrb[0].mxu0
      %v938 = vadd.f32 %v614, %v937
      %v939 = vpop.f32.mrb[0].mxu0
      %940 = vmatprep.mubr.f32.mxu0 0.0
      %941 = vmatmul.mubr.f32.gmra.mrb[0].mxu0 %v752
      %v942 = vpop.f32.mrb[0].mxu0
      %v943 = vadd.f32 %v619, %v942
      %v944 = vpop.f32.mrb[0].mxu0
      %945 = vmatprep.mubr.f32.mxu0 0.0
      %946 = vmatmul.mubr.f32.gmra.mrb[0].mxu0 %v755
      %v947 = vpop.f32.mrb[0].mxu0
      %v948 = vadd.f32 %v624, %v947
      %v949 = vpop.f32.mrb[0].mxu0
      %950 = vmatprep.mubr.f32.mxu0 0.0
      %951 = vmatmul.mubr.f32.gmra.mrb[0].mxu0 %v758
      %v952 = vpop.f32.mrb[0].mxu0
      %v953 = vadd.f32 %v629, %v952
      %v954 = vpop.f32.mrb[0].mxu0
      %955 = vmatprep.mubr.f32.mxu0 0.0
      %956 = vmatmul.mubr.f32.gmra.mrb[0].mxu0 %v761
      %v957 = vpop.f32.mrb[0].mxu0
      %v958 = vadd.f32 %v634, %v957
      %v959 = vpop.f32.mrb[0].mxu0
      %960 = vmatprep.mubr.f32.mxu0 0.0
      %961 = vmatmul.mubr.f32.gmra.mrb[0].mxu0 %v764
      %v962 = vpop.f32.mrb[0].mxu0
      %v963 = vadd.f32 %v639, %v962
      %v964 = vpop.f32.mrb[0].mxu0
      %965 = vmatprep.mubr.f32.mxu0 0.0
      %966 = vmatmul.mubr.f32.gmra.mrb[0].mxu0 %v767
      %v967 = vpop.f32.mrb[0].mxu0
      %v968 = vadd.f32 %v644, %v967
      %v969 = vpop.f32.mrb[0].mxu0
      %970 = vmatprep.mubr.f32.mxu0 0.0
      %971 = vmatmul.mubr.f32.gmra.mrb[0].mxu0 %v770
      %v972 = vpop.f32.mrb[0].mxu0
      %v973 = vadd.f32 %v649, %v972
      %v974 = vpop.f32.mrb[0].mxu0
      %975 = vmatprep.mubr.f32.mxu0 0.0
      %976 = vmatmul.mubr.f32.gmra.mrb[0].mxu0 %v773
      %v977 = vpop.f32.mrb[0].mxu0
      %v978 = vadd.f32 %v654, %v977
      %v979 = vpop.f32.mrb[0].mxu0
      %980 = vmatprep.mubr.f32.mxu0 0.0
      %981 = vmatmul.mubr.f32.gmra.mrb[0].mxu0 %v776
      %v982 = vpop.f32.mrb[0].mxu0
      %v983 = vadd.f32 %v659, %v982
      %v984 = vpop.f32.mrb[0].mxu0
      %985 = vmatprep.mubr.f32.mxu0 0.0
      %986 = vmatmul.mubr.f32.gmra.mrb[0].mxu0 %v779
      %v987 = vpop.f32.mrb[0].mxu0
      %v988 = vadd.f32 %v664, %v987
      %v989 = vpop.f32.mrb[0].mxu0
      %990 = vmatprep.mubr.f32.mxu0 0.0
      %991 = vmatmul.mubr.f32.gmra.mrb[0].mxu0 %v782
      %v992 = vpop.f32.mrb[0].mxu0
      %v993 = vadd.f32 %v669, %v992
      %v994 = vpop.f32.mrb[0].mxu0
      %995 = vmatprep.mubr.f32.mxu0 0.0
      %996 = vmatmul.mubr.f32.gmra.mrb[0].mxu0 %v785
      %v997 = vpop.f32.mrb[0].mxu0
      %v998 = vadd.f32 %v674, %v997
      %v999 = vpop.f32.mrb[0].mxu0
      %1000 = vmatprep.mubr.f32.mxu0 0.0
      %1001 = vmatmul.mubr.f32.gmra.mrb[0].mxu0 %v788
      %v1002 = vpop.f32.mrb[0].mxu0
      %v1003 = vadd.f32 %v679, %v1002
      %v1004 = vpop.f32.mrb[0].mxu0
      %1005 = vmatprep.mubr.f32.mxu0 0.0
      %1006 = vmatmul.mubr.f32.gmra.mrb[0].mxu0 %v791
      %v1007 = vpop.f32.mrb[0].mxu0
      %v1008 = vadd.f32 %v684, %v1007
      %v1009 = vpop.f32.mrb[0].mxu0
      %1010 = vmatprep.mubr.f32.mxu0 0.0
      %1011 = vmatmul.mubr.f32.gmra.mrb[0].mxu0 %v794
      %v1012 = vpop.f32.mrb[0].mxu0
      %v1013 = vadd.f32 %v689, %v1012
      %v1014 = vpop.f32.mrb[0].mxu0
      %1015 = vmatprep.mubr.f32.mxu0 0.0
      %1016 = vmatmul.mubr.f32.gmra.mrb[0].mxu0 %v797
      %v1017 = vpop.f32.mrb[0].mxu0
      %v1018 = vadd.f32 %v694, %v1017
      %v1019 = vpop.f32.mrb[0].mxu0
      %1020 = vmatprep.mubr.f32.mxu0 0.0
      %1021 = vmatmul.mubr.f32.gmra.mrb[0].mxu0 %v800
      %v1022 = vpop.f32.mrb[0].mxu0
      %v1023 = vadd.f32 %v699, %v1022
      %v1024 = vpop.f32.mrb[0].mxu0
      %1025 = vmatprep.mubr.f32.mxu0 0.0
      %1026 = vmatmul.mubr.f32.gmra.mrb[0].mxu0 %v803
      %v1027 = vpop.f32.mrb[0].mxu0
      %v1028 = vadd.f32 %v704, %v1027
      %v1029 = vpop.f32.mrb[0].mxu0
      %1030 = vmatprep.mubr.f32.mxu0 0.0
      %1031 = vmatmul.mubr.f32.gmra.mrb[0].mxu0 %v806
      %v1032 = vpop.f32.mrb[0].mxu0
      %v1033 = vadd.f32 %v709, %v1032
      %v1034 = vpop.f32.mrb[0].mxu0
      %1035 = vdwg.mxu0
      %v1036 = vld [vmem:[#allocation2 + $0x2] sm:$0xff]
      %v1037 = vld [vmem:[#allocation2 + $0xa] sm:$0xff]
      %v1038 = vld [vmem:[#allocation2 + $0x1a] sm:$0xff]
      %v1039 = vld [vmem:[#allocation2 + $0x22] sm:$0xff]
      %v1040 = vld [vmem:[#allocation2 + $0x32] sm:$0xff]
      %v1041 = vld [vmem:[#allocation2 + $0x3a] sm:$0xff]
      %v1042 = vld [vmem:[#allocation2 + $0x4a] sm:$0xff]
      %v1043 = vld [vmem:[#allocation2 + $0x52] sm:$0xff]
      %v1044 = vld [vmem:[#allocation2 + $0x62] sm:$0xff]
      %v1045 = vld [vmem:[#allocation2 + $0x6a] sm:$0xff]
      %v1046 = vld [vmem:[#allocation2 + $0x7a] sm:$0xff]
      %v1047 = vld [vmem:[#allocation2 + $0x82] sm:$0xff]
      %v1048 = vld [vmem:[#allocation2 + $0x92] sm:$0xff]
      %v1049 = vld [vmem:[#allocation2 + $0x9a] sm:$0xff]
      %v1050 = vld [vmem:[#allocation2 + $0xaa] sm:$0xff]
      %v1051 = vld [vmem:[#allocation2 + $0xb2] sm:$0xff]
      %v1052 = vld [vmem:[#allocation2 + $0xc2] sm:$0xff]
      %v1053 = vld [vmem:[#allocation2 + $0xca] sm:$0xff]
      %v1054 = vld [vmem:[#allocation2 + $0xda] sm:$0xff]
      %v1055 = vld [vmem:[#allocation2 + $0xe2] sm:$0xff]
      %v1056 = vld [vmem:[#allocation2 + $0xf2] sm:$0xff]
      %v1057 = vld [vmem:[#allocation2 + $0xfa] sm:$0xff]
      %v1058 = vld [vmem:[#allocation2 + $0x10a] sm:$0xff]
      %v1059 = vld [vmem:[#allocation2 + $0x112] sm:$0xff]
      %v1060 = vld [vmem:[#allocation2 + $0x122] sm:$0xff]
      %v1061 = vld [vmem:[#allocation2 + $0x12a] sm:$0xff]
      %v1062 = vld [vmem:[#allocation2 + $0x13a] sm:$0xff]
      %v1063 = vld [vmem:[#allocation2 + $0x142] sm:$0xff]
      %v1064 = vld [vmem:[#allocation2 + $0x152] sm:$0xff]
      %v1065 = vld [vmem:[#allocation2 + $0x15a] sm:$0xff]
      %v1066 = vld [vmem:[#allocation2 + $0x16a] sm:$0xff]
      %v1067 = vld [vmem:[#allocation2 + $0x172] sm:$0xff]
      %s1068 = scalar_lea.vmem %s1, 8
      %v1069 = vld [vmem:[%s1068] sm:$0xf]
      %v1071 = vsel %vm241, %v1036, 0
      %v1074 = vsel %vm241, %v1037, 0
      %v1077 = vsel %vm241, %v1038, 0
      %v1080 = vsel %vm241, %v1039, 0
      %v1083 = vsel %vm241, %v1040, 0
      %v1086 = vsel %vm241, %v1041, 0
      %v1089 = vsel %vm241, %v1042, 0
      %v1092 = vsel %vm241, %v1043, 0
      %v1095 = vsel %vm241, %v1044, 0
      %v1098 = vsel %vm241, %v1045, 0
      %v1101 = vsel %vm241, %v1046, 0
      %v1104 = vsel %vm241, %v1047, 0
      %v1107 = vsel %vm241, %v1048, 0
      %v1110 = vsel %vm241, %v1049, 0
      %v1113 = vsel %vm241, %v1050, 0
      %v1116 = vsel %vm241, %v1051, 0
      %v1119 = vsel %vm241, %v1052, 0
      %v1122 = vsel %vm241, %v1053, 0
      %v1125 = vsel %vm241, %v1054, 0
      %v1128 = vsel %vm241, %v1055, 0
      %v1131 = vsel %vm241, %v1056, 0
      %v1134 = vsel %vm241, %v1057, 0
      %v1137 = vsel %vm241, %v1058, 0
      %v1140 = vsel %vm241, %v1059, 0
      %v1143 = vsel %vm241, %v1060, 0
      %v1146 = vsel %vm241, %v1061, 0
      %v1149 = vsel %vm241, %v1062, 0
      %v1152 = vsel %vm241, %v1063, 0
      %v1155 = vsel %vm241, %v1064, 0
      %v1158 = vsel %vm241, %v1065, 0
      %v1161 = vsel %vm241, %v1066, 0
      %v1164 = vsel %vm241, %v1067, 0
      %v1167 = vsel %vm483, %v1069, 0
      %1169 = vmatprep.subr.mxu0 0.0
      %1170 = vmatpush1.msra.mxu0 %v1167
      %1171 = vmatprep.subr.mxu0 0.0
      %1172 = vmatpush1.msra.mxu0 0.0
      %1173 = vmatprep.subr.mxu0 0.0
      %1174 = vmatpush1.msra.mxu0 0.0
      %1175 = vmatprep.subr.mxu0 0.0
      %1176 = vmatpush1.msra.mxu0 0.0
      %1177 = vmatprep.subr.mxu0 0.0
      %1178 = vmatpush1.msra.mxu0 0.0
      %1179 = vmatprep.subr.mxu0 0.0
      %1180 = vmatpush1.msra.mxu0 0.0
      %1181 = vmatprep.subr.mxu0 0.0
      %1182 = vmatpush1.msra.mxu0 0.0
      %1183 = vmatprep.subr.mxu0 0.0
      %1184 = vmatpush1.msra.mxu0 0.0
      %1185 = vmatprep.subr.mxu0 0.0
      %1186 = vmatpush1.msra.mxu0 0.0
      %1187 = vmatprep.subr.mxu0 0.0
      %1188 = vmatpush1.msra.mxu0 0.0
      %1189 = vmatprep.subr.mxu0 0.0
      %1190 = vmatpush1.msra.mxu0 0.0
      %1191 = vmatprep.subr.mxu0 0.0
      %1192 = vmatpush1.msra.mxu0 0.0
      %1193 = vmatprep.subr.mxu0 0.0
      %1194 = vmatpush1.msra.mxu0 0.0
      %1195 = vmatprep.subr.mxu0 0.0
      %1196 = vmatpush1.msra.mxu0 0.0
      %1197 = vmatprep.subr.mxu0 0.0
      %1198 = vmatpush1.msra.mxu0 0.0
      %1199 = vmatprep.subr.mxu0 0.0
      %1200 = vmatpush1.msra.mxu0 0.0
      %1201 = vmatprep.subr.mxu0 0.0
      %1202 = vmatpush1.msra.mxu0 0.0
      %1203 = vmatprep.subr.mxu0 0.0
      %1204 = vmatpush1.msra.mxu0 0.0
      %1205 = vmatprep.subr.mxu0 0.0
      %1206 = vmatpush1.msra.mxu0 0.0
      %1207 = vmatprep.subr.mxu0 0.0
      %1208 = vmatpush1.msra.mxu0 0.0
      %1209 = vmatprep.subr.mxu0 0.0
      %1210 = vmatpush1.msra.mxu0 0.0
      %1211 = vmatprep.subr.mxu0 0.0
      %1212 = vmatpush1.msra.mxu0 0.0
      %1213 = vmatprep.subr.mxu0 0.0
      %1214 = vmatpush1.msra.mxu0 0.0
      %1215 = vmatprep.subr.mxu0 0.0
      %1216 = vmatpush1.msra.mxu0 0.0
      %1217 = vmatprep.subr.mxu0 0.0
      %1218 = vmatpush1.msra.mxu0 0.0
      %1219 = vmatprep.subr.mxu0 0.0
      %1220 = vmatpush1.msra.mxu0 0.0
      %1221 = vmatprep.subr.mxu0 0.0
      %1222 = vmatpush1.msra.mxu0 0.0
      %1223 = vmatprep.subr.mxu0 0.0
      %1224 = vmatpush1.msra.mxu0 0.0
      %1225 = vmatprep.subr.mxu0 0.0
      %1226 = vmatpush1.msra.mxu0 0.0
      %1227 = vmatprep.subr.mxu0 0.0
      %1228 = vmatpush1.msra.mxu0 0.0
      %1229 = vmatprep.subr.mxu0 0.0
      %1230 = vmatpush1.msra.mxu0 0.0
      %1231 = vmatprep.subr.mxu0 0.0
      %1232 = vmatpush1.msra.mxu0 0.0
      %1233 = vmatprep.mubr.f32.mxu0 0.0
      %1234 = vmatmul.mubr.f32.gmra.mrb[0].mxu0 %v1071
      %v1235 = vpop.f32.mrb[0].mxu0
      %v1236 = vadd.f32 0.0, %v1235
      %v1237 = vpop.f32.mrb[0].mxu0
      %1238 = vmatprep.mubr.f32.mxu0 0.0
      %1239 = vmatmul.mubr.f32.gmra.mrb[0].mxu0 %v1074
      %v1240 = vpop.f32.mrb[0].mxu0
      %v1241 = vadd.f32 0.0, %v1240
      %v1242 = vpop.f32.mrb[0].mxu0
      %1243 = vmatprep.mubr.f32.mxu0 0.0
      %1244 = vmatmul.mubr.f32.gmra.mrb[0].mxu0 %v1077
      %v1245 = vpop.f32.mrb[0].mxu0
      %v1246 = vadd.f32 0.0, %v1245
      %v1247 = vpop.f32.mrb[0].mxu0
      %1248 = vmatprep.mubr.f32.mxu0 0.0
      %1249 = vmatmul.mubr.f32.gmra.mrb[0].mxu0 %v1080
      %v1250 = vpop.f32.mrb[0].mxu0
      %v1251 = vadd.f32 0.0, %v1250
      %v1252 = vpop.f32.mrb[0].mxu0
      %1253 = vmatprep.mubr.f32.mxu0 0.0
      %1254 = vmatmul.mubr.f32.gmra.mrb[0].mxu0 %v1083
      %v1255 = vpop.f32.mrb[0].mxu0
      %v1256 = vadd.f32 0.0, %v1255
      %v1257 = vpop.f32.mrb[0].mxu0
      %1258 = vmatprep.mubr.f32.mxu0 0.0
      %1259 = vmatmul.mubr.f32.gmra.mrb[0].mxu0 %v1086
      %v1260 = vpop.f32.mrb[0].mxu0
      %v1261 = vadd.f32 0.0, %v1260
      %v1262 = vpop.f32.mrb[0].mxu0
      %1263 = vmatprep.mubr.f32.mxu0 0.0
      %1264 = vmatmul.mubr.f32.gmra.mrb[0].mxu0 %v1089
      %v1265 = vpop.f32.mrb[0].mxu0
      %v1266 = vadd.f32 0.0, %v1265
      %v1267 = vpop.f32.mrb[0].mxu0
      %1268 = vmatprep.mubr.f32.mxu0 0.0
      %1269 = vmatmul.mubr.f32.gmra.mrb[0].mxu0 %v1092
      %v1270 = vpop.f32.mrb[0].mxu0
      %v1271 = vadd.f32 0.0, %v1270
      %v1272 = vpop.f32.mrb[0].mxu0
      %1273 = vmatprep.mubr.f32.mxu0 0.0
      %1274 = vmatmul.mubr.f32.gmra.mrb[0].mxu0 %v1095
      %v1275 = vpop.f32.mrb[0].mxu0
      %v1276 = vadd.f32 0.0, %v1275
      %v1277 = vpop.f32.mrb[0].mxu0
      %1278 = vmatprep.mubr.f32.mxu0 0.0
      %1279 = vmatmul.mubr.f32.gmra.mrb[0].mxu0 %v1098
      %v1280 = vpop.f32.mrb[0].mxu0
      %v1281 = vadd.f32 0.0, %v1280
      %v1282 = vpop.f32.mrb[0].mxu0
      %1283 = vmatprep.mubr.f32.mxu0 0.0
      %1284 = vmatmul.mubr.f32.gmra.mrb[0].mxu0 %v1101
      %v1285 = vpop.f32.mrb[0].mxu0
      %v1286 = vadd.f32 0.0, %v1285
      %v1287 = vpop.f32.mrb[0].mxu0
      %1288 = vmatprep.mubr.f32.mxu0 0.0
      %1289 = vmatmul.mubr.f32.gmra.mrb[0].mxu0 %v1104
      %v1290 = vpop.f32.mrb[0].mxu0
      %v1291 = vadd.f32 0.0, %v1290
      %v1292 = vpop.f32.mrb[0].mxu0
      %1293 = vmatprep.mubr.f32.mxu0 0.0
      %1294 = vmatmul.mubr.f32.gmra.mrb[0].mxu0 %v1107
      %v1295 = vpop.f32.mrb[0].mxu0
      %v1296 = vadd.f32 0.0, %v1295
      %v1297 = vpop.f32.mrb[0].mxu0
      %1298 = vmatprep.mubr.f32.mxu0 0.0
      %1299 = vmatmul.mubr.f32.gmra.mrb[0].mxu0 %v1110
      %v1300 = vpop.f32.mrb[0].mxu0
      %v1301 = vadd.f32 0.0, %v1300
      %v1302 = vpop.f32.mrb[0].mxu0
      %1303 = vmatprep.mubr.f32.mxu0 0.0
      %1304 = vmatmul.mubr.f32.gmra.mrb[0].mxu0 %v1113
      %v1305 = vpop.f32.mrb[0].mxu0
      %v1306 = vadd.f32 0.0, %v1305
      %v1307 = vpop.f32.mrb[0].mxu0
      %1308 = vmatprep.mubr.f32.mxu0 0.0
      %1309 = vmatmul.mubr.f32.gmra.mrb[0].mxu0 %v1116
      %v1310 = vpop.f32.mrb[0].mxu0
      %v1311 = vadd.f32 0.0, %v1310
      %v1312 = vpop.f32.mrb[0].mxu0
      %1313 = vmatprep.mubr.f32.mxu0 0.0
      %1314 = vmatmul.mubr.f32.gmra.mrb[0].mxu0 %v1119
      %v1315 = vpop.f32.mrb[0].mxu0
      %v1316 = vadd.f32 0.0, %v1315
      %v1317 = vpop.f32.mrb[0].mxu0
      %1318 = vmatprep.mubr.f32.mxu0 0.0
      %1319 = vmatmul.mubr.f32.gmra.mrb[0].mxu0 %v1122
      %v1320 = vpop.f32.mrb[0].mxu0
      %v1321 = vadd.f32 0.0, %v1320
      %v1322 = vpop.f32.mrb[0].mxu0
      %1323 = vmatprep.mubr.f32.mxu0 0.0
      %1324 = vmatmul.mubr.f32.gmra.mrb[0].mxu0 %v1125
      %v1325 = vpop.f32.mrb[0].mxu0
      %v1326 = vadd.f32 0.0, %v1325
      %v1327 = vpop.f32.mrb[0].mxu0
      %1328 = vmatprep.mubr.f32.mxu0 0.0
      %1329 = vmatmul.mubr.f32.gmra.mrb[0].mxu0 %v1128
      %v1330 = vpop.f32.mrb[0].mxu0
      %v1331 = vadd.f32 0.0, %v1330
      %v1332 = vpop.f32.mrb[0].mxu0
      %1333 = vmatprep.mubr.f32.mxu0 0.0
      %1334 = vmatmul.mubr.f32.gmra.mrb[0].mxu0 %v1131
      %v1335 = vpop.f32.mrb[0].mxu0
      %v1336 = vadd.f32 0.0, %v1335
      %v1337 = vpop.f32.mrb[0].mxu0
      %1338 = vmatprep.mubr.f32.mxu0 0.0
      %1339 = vmatmul.mubr.f32.gmra.mrb[0].mxu0 %v1134
      %v1340 = vpop.f32.mrb[0].mxu0
      %v1341 = vadd.f32 0.0, %v1340
      %v1342 = vpop.f32.mrb[0].mxu0
      %1343 = vmatprep.mubr.f32.mxu0 0.0
      %1344 = vmatmul.mubr.f32.gmra.mrb[0].mxu0 %v1137
      %v1345 = vpop.f32.mrb[0].mxu0
      %v1346 = vadd.f32 0.0, %v1345
      %v1347 = vpop.f32.mrb[0].mxu0
      %1348 = vmatprep.mubr.f32.mxu0 0.0
      %1349 = vmatmul.mubr.f32.gmra.mrb[0].mxu0 %v1140
      %v1350 = vpop.f32.mrb[0].mxu0
      %v1351 = vadd.f32 0.0, %v1350
      %v1352 = vpop.f32.mrb[0].mxu0
      %1353 = vmatprep.mubr.f32.mxu0 0.0
      %1354 = vmatmul.mubr.f32.gmra.mrb[0].mxu0 %v1143
      %v1355 = vpop.f32.mrb[0].mxu0
      %v1356 = vadd.f32 0.0, %v1355
      %v1357 = vpop.f32.mrb[0].mxu0
      %1358 = vmatprep.mubr.f32.mxu0 0.0
      %1359 = vmatmul.mubr.f32.gmra.mrb[0].mxu0 %v1146
      %v1360 = vpop.f32.mrb[0].mxu0
      %v1361 = vadd.f32 0.0, %v1360
      %v1362 = vpop.f32.mrb[0].mxu0
      %1363 = vmatprep.mubr.f32.mxu0 0.0
      %1364 = vmatmul.mubr.f32.gmra.mrb[0].mxu0 %v1149
      %v1365 = vpop.f32.mrb[0].mxu0
      %v1366 = vadd.f32 0.0, %v1365
      %v1367 = vpop.f32.mrb[0].mxu0
      %1368 = vmatprep.mubr.f32.mxu0 0.0
      %1369 = vmatmul.mubr.f32.gmra.mrb[0].mxu0 %v1152
      %v1370 = vpop.f32.mrb[0].mxu0
      %v1371 = vadd.f32 0.0, %v1370
      %v1372 = vpop.f32.mrb[0].mxu0
      %1373 = vmatprep.mubr.f32.mxu0 0.0
      %1374 = vmatmul.mubr.f32.gmra.mrb[0].mxu0 %v1155
      %v1375 = vpop.f32.mrb[0].mxu0
      %v1376 = vadd.f32 0.0, %v1375
      %v1377 = vpop.f32.mrb[0].mxu0
      %1378 = vmatprep.mubr.f32.mxu0 0.0
      %1379 = vmatmul.mubr.f32.gmra.mrb[0].mxu0 %v1158
      %v1380 = vpop.f32.mrb[0].mxu0
      %v1381 = vadd.f32 0.0, %v1380
      %v1382 = vpop.f32.mrb[0].mxu0
      %1383 = vmatprep.mubr.f32.mxu0 0.0
      %1384 = vmatmul.mubr.f32.gmra.mrb[0].mxu0 %v1161
      %v1385 = vpop.f32.mrb[0].mxu0
      %v1386 = vadd.f32 0.0, %v1385
      %v1387 = vpop.f32.mrb[0].mxu0
      %1388 = vmatprep.mubr.f32.mxu0 0.0
      %1389 = vmatmul.mubr.f32.gmra.mrb[0].mxu0 %v1164
      %v1390 = vpop.f32.mrb[0].mxu0
      %v1391 = vadd.f32 0.0, %v1390
      %v1392 = vpop.f32.mrb[0].mxu0
      %1393 = vdwg.mxu0
      %v1394 = vadd.f32 %v878, %v1236
      %v1395 = vadd.f32 %v883, %v1241
      %v1396 = vadd.f32 %v888, %v1246
      %v1397 = vadd.f32 %v893, %v1251
      %v1398 = vadd.f32 %v898, %v1256
      %v1399 = vadd.f32 %v903, %v1261
      %v1400 = vadd.f32 %v908, %v1266
      %v1401 = vadd.f32 %v913, %v1271
      %v1402 = vadd.f32 %v918, %v1276
      %v1403 = vadd.f32 %v923, %v1281
      %v1404 = vadd.f32 %v928, %v1286
      %v1405 = vadd.f32 %v933, %v1291
      %v1406 = vadd.f32 %v938, %v1296
      %v1407 = vadd.f32 %v943, %v1301
      %v1408 = vadd.f32 %v948, %v1306
      %v1409 = vadd.f32 %v953, %v1311
      %v1410 = vadd.f32 %v958, %v1316
      %v1411 = vadd.f32 %v963, %v1321
      %v1412 = vadd.f32 %v968, %v1326
      %v1413 = vadd.f32 %v973, %v1331
      %v1414 = vadd.f32 %v978, %v1336
      %v1415 = vadd.f32 %v983, %v1341
      %v1416 = vadd.f32 %v988, %v1346
      %v1417 = vadd.f32 %v993, %v1351
      %v1418 = vadd.f32 %v998, %v1356
      %v1419 = vadd.f32 %v1003, %v1361
      %v1420 = vadd.f32 %v1008, %v1366
      %v1421 = vadd.f32 %v1013, %v1371
      %v1422 = vadd.f32 %v1018, %v1376
      %v1423 = vadd.f32 %v1023, %v1381
      %v1424 = vadd.f32 %v1028, %v1386
      %v1425 = vadd.f32 %v1033, %v1391
      %v1426 = vld [vmem:[%s287] sm:$0xff]
      %v1427 = vld [vmem:[%s287 + $0x8] sm:$0xff]
      %v1428 = vld [vmem:[%s287 + $0x18] sm:$0xff]
      %v1429 = vld [vmem:[%s287 + $0x20] sm:$0xff]
      %v1430 = vld [vmem:[%s287 + $0x30] sm:$0xff]
      %v1431 = vld [vmem:[%s287 + $0x38] sm:$0xff]
      %v1432 = vld [vmem:[%s287 + $0x48] sm:$0xff]
      %v1433 = vld [vmem:[%s287 + $0x50] sm:$0xff]
      %v1434 = vld [vmem:[%s287 + $0x60] sm:$0xff]
      %v1435 = vld [vmem:[%s287 + $0x68] sm:$0xff]
      %v1436 = vld [vmem:[%s287 + $0x78] sm:$0xff]
      %v1437 = vld [vmem:[%s287 + $0x80] sm:$0xff]
      %v1438 = vld [vmem:[%s287 + $0x90] sm:$0xff]
      %v1439 = vld [vmem:[%s287 + $0x98] sm:$0xff]
      %v1440 = vld [vmem:[%s287 + $0xa8] sm:$0xff]
      %v1441 = vld [vmem:[%s287 + $0xb0] sm:$0xff]
      %v1442 = vld [vmem:[%s287 + $0xc0] sm:$0xff]
      %v1443 = vld [vmem:[%s287 + $0xc8] sm:$0xff]
      %v1444 = vld [vmem:[%s287 + $0xd8] sm:$0xff]
      %v1445 = vld [vmem:[%s287 + $0xe0] sm:$0xff]
      %v1446 = vld [vmem:[%s287 + $0xf0] sm:$0xff]
      %v1447 = vld [vmem:[%s287 + $0xf8] sm:$0xff]
      %v1448 = vld [vmem:[%s287 + $0x108] sm:$0xff]
      %v1449 = vld [vmem:[%s287 + $0x110] sm:$0xff]
      %v1450 = vld [vmem:[%s287 + $0x120] sm:$0xff]
      %v1451 = vld [vmem:[%s287 + $0x128] sm:$0xff]
      %v1452 = vld [vmem:[%s287 + $0x138] sm:$0xff]
      %v1453 = vld [vmem:[%s287 + $0x140] sm:$0xff]
      %v1454 = vld [vmem:[%s287 + $0x150] sm:$0xff]
      %v1455 = vld [vmem:[%s287 + $0x158] sm:$0xff]
      %v1456 = vld [vmem:[%s287 + $0x168] sm:$0xff]
      %v1457 = vld [vmem:[%s287 + $0x170] sm:$0xff]
      %s1458 = scalar_lea.vmem %s1, 12
      %v1459 = vld [vmem:[%s1458] sm:$0xf]
      %v1461 = vsel %vm241, %v1426, 0
      %v1464 = vsel %vm241, %v1427, 0
      %v1467 = vsel %vm241, %v1428, 0
      %v1470 = vsel %vm241, %v1429, 0
      %v1473 = vsel %vm241, %v1430, 0
      %v1476 = vsel %vm241, %v1431, 0
      %v1479 = vsel %vm241, %v1432, 0
      %v1482 = vsel %vm241, %v1433, 0
      %v1485 = vsel %vm241, %v1434, 0
      %v1488 = vsel %vm241, %v1435, 0
      %v1491 = vsel %vm241, %v1436, 0
      %v1494 = vsel %vm241, %v1437, 0
      %v1497 = vsel %vm241, %v1438, 0
      %v1500 = vsel %vm241, %v1439, 0
      %v1503 = vsel %vm241, %v1440, 0
      %v1506 = vsel %vm241, %v1441, 0
      %v1509 = vsel %vm241, %v1442, 0
      %v1512 = vsel %vm241, %v1443, 0
      %v1515 = vsel %vm241, %v1444, 0
      %v1518 = vsel %vm241, %v1445, 0
      %v1521 = vsel %vm241, %v1446, 0
      %v1524 = vsel %vm241, %v1447, 0
      %v1527 = vsel %vm241, %v1448, 0
      %v1530 = vsel %vm241, %v1449, 0
      %v1533 = vsel %vm241, %v1450, 0
      %v1536 = vsel %vm241, %v1451, 0
      %v1539 = vsel %vm241, %v1452, 0
      %v1542 = vsel %vm241, %v1453, 0
      %v1545 = vsel %vm241, %v1454, 0
      %v1548 = vsel %vm241, %v1455, 0
      %v1551 = vsel %vm241, %v1456, 0
      %v1554 = vsel %vm241, %v1457, 0
      %v1557 = vsel %vm483, %v1459, 0
      %1559 = vmatprep.subr.mxu0 0.0
      %1560 = vmatpush1.msra.mxu0 %v1557
      %1561 = vmatprep.subr.mxu0 0.0
      %1562 = vmatpush1.msra.mxu0 0.0
      %1563 = vmatprep.subr.mxu0 0.0
      %1564 = vmatpush1.msra.mxu0 0.0
      %1565 = vmatprep.subr.mxu0 0.0
      %1566 = vmatpush1.msra.mxu0 0.0
      %1567 = vmatprep.subr.mxu0 0.0
      %1568 = vmatpush1.msra.mxu0 0.0
      %1569 = vmatprep.subr.mxu0 0.0
      %1570 = vmatpush1.msra.mxu0 0.0
      %1571 = vmatprep.subr.mxu0 0.0
      %1572 = vmatpush1.msra.mxu0 0.0
      %1573 = vmatprep.subr.mxu0 0.0
      %1574 = vmatpush1.msra.mxu0 0.0
      %1575 = vmatprep.subr.mxu0 0.0
      %1576 = vmatpush1.msra.mxu0 0.0
      %1577 = vmatprep.subr.mxu0 0.0
      %1578 = vmatpush1.msra.mxu0 0.0
      %1579 = vmatprep.subr.mxu0 0.0
      %1580 = vmatpush1.msra.mxu0 0.0
      %1581 = vmatprep.subr.mxu0 0.0
      %1582 = vmatpush1.msra.mxu0 0.0
      %1583 = vmatprep.subr.mxu0 0.0
      %1584 = vmatpush1.msra.mxu0 0.0
      %1585 = vmatprep.subr.mxu0 0.0
      %1586 = vmatpush1.msra.mxu0 0.0
      %1587 = vmatprep.subr.mxu0 0.0
      %1588 = vmatpush1.msra.mxu0 0.0
      %1589 = vmatprep.subr.mxu0 0.0
      %1590 = vmatpush1.msra.mxu0 0.0
      %1591 = vmatprep.subr.mxu0 0.0
      %1592 = vmatpush1.msra.mxu0 0.0
      %1593 = vmatprep.subr.mxu0 0.0
      %1594 = vmatpush1.msra.mxu0 0.0
      %1595 = vmatprep.subr.mxu0 0.0
      %1596 = vmatpush1.msra.mxu0 0.0
      %1597 = vmatprep.subr.mxu0 0.0
      %1598 = vmatpush1.msra.mxu0 0.0
      %1599 = vmatprep.subr.mxu0 0.0
      %1600 = vmatpush1.msra.mxu0 0.0
      %1601 = vmatprep.subr.mxu0 0.0
      %1602 = vmatpush1.msra.mxu0 0.0
      %1603 = vmatprep.subr.mxu0 0.0
      %1604 = vmatpush1.msra.mxu0 0.0
      %1605 = vmatprep.subr.mxu0 0.0
      %1606 = vmatpush1.msra.mxu0 0.0
      %1607 = vmatprep.subr.mxu0 0.0
      %1608 = vmatpush1.msra.mxu0 0.0
      %1609 = vmatprep.subr.mxu0 0.0
      %1610 = vmatpush1.msra.mxu0 0.0
      %1611 = vmatprep.subr.mxu0 0.0
      %1612 = vmatpush1.msra.mxu0 0.0
      %1613 = vmatprep.subr.mxu0 0.0
      %1614 = vmatpush1.msra.mxu0 0.0
      %1615 = vmatprep.subr.mxu0 0.0
      %1616 = vmatpush1.msra.mxu0 0.0
      %1617 = vmatprep.subr.mxu0 0.0
      %1618 = vmatpush1.msra.mxu0 0.0
      %1619 = vmatprep.subr.mxu0 0.0
      %1620 = vmatpush1.msra.mxu0 0.0
      %1621 = vmatprep.subr.mxu0 0.0
      %1622 = vmatpush1.msra.mxu0 0.0
      %1623 = vmatprep.mubr.f32.mxu0 0.0
      %1624 = vmatmul.mubr.f32.gmra.mrb[0].mxu0 %v1461
      %v1625 = vpop.f32.mrb[0].mxu0
      %v1626 = vadd.f32 0.0, %v1625
      %v1627 = vpop.f32.mrb[0].mxu0
      %1628 = vmatprep.mubr.f32.mxu0 0.0
      %1629 = vmatmul.mubr.f32.gmra.mrb[0].mxu0 %v1464
      %v1630 = vpop.f32.mrb[0].mxu0
      %v1631 = vadd.f32 0.0, %v1630
      %v1632 = vpop.f32.mrb[0].mxu0
      %1633 = vmatprep.mubr.f32.mxu0 0.0
      %1634 = vmatmul.mubr.f32.gmra.mrb[0].mxu0 %v1467
      %v1635 = vpop.f32.mrb[0].mxu0
      %v1636 = vadd.f32 0.0, %v1635
      %v1637 = vpop.f32.mrb[0].mxu0
      %1638 = vmatprep.mubr.f32.mxu0 0.0
      %1639 = vmatmul.mubr.f32.gmra.mrb[0].mxu0 %v1470
      %v1640 = vpop.f32.mrb[0].mxu0
      %v1641 = vadd.f32 0.0, %v1640
      %v1642 = vpop.f32.mrb[0].mxu0
      %1643 = vmatprep.mubr.f32.mxu0 0.0
      %1644 = vmatmul.mubr.f32.gmra.mrb[0].mxu0 %v1473
      %v1645 = vpop.f32.mrb[0].mxu0
      %v1646 = vadd.f32 0.0, %v1645
      %v1647 = vpop.f32.mrb[0].mxu0
      %1648 = vmatprep.mubr.f32.mxu0 0.0
      %1649 = vmatmul.mubr.f32.gmra.mrb[0].mxu0 %v1476
      %v1650 = vpop.f32.mrb[0].mxu0
      %v1651 = vadd.f32 0.0, %v1650
      %v1652 = vpop.f32.mrb[0].mxu0
      %1653 = vmatprep.mubr.f32.mxu0 0.0
      %1654 = vmatmul.mubr.f32.gmra.mrb[0].mxu0 %v1479
      %v1655 = vpop.f32.mrb[0].mxu0
      %v1656 = vadd.f32 0.0, %v1655
      %v1657 = vpop.f32.mrb[0].mxu0
      %1658 = vmatprep.mubr.f32.mxu0 0.0
      %1659 = vmatmul.mubr.f32.gmra.mrb[0].mxu0 %v1482
      %v1660 = vpop.f32.mrb[0].mxu0
      %v1661 = vadd.f32 0.0, %v1660
      %v1662 = vpop.f32.mrb[0].mxu0
      %1663 = vmatprep.mubr.f32.mxu0 0.0
      %1664 = vmatmul.mubr.f32.gmra.mrb[0].mxu0 %v1485
      %v1665 = vpop.f32.mrb[0].mxu0
      %v1666 = vadd.f32 0.0, %v1665
      %v1667 = vpop.f32.mrb[0].mxu0
      %1668 = vmatprep.mubr.f32.mxu0 0.0
      %1669 = vmatmul.mubr.f32.gmra.mrb[0].mxu0 %v1488
      %v1670 = vpop.f32.mrb[0].mxu0
      %v1671 = vadd.f32 0.0, %v1670
      %v1672 = vpop.f32.mrb[0].mxu0
      %1673 = vmatprep.mubr.f32.mxu0 0.0
      %1674 = vmatmul.mubr.f32.gmra.mrb[0].mxu0 %v1491
      %v1675 = vpop.f32.mrb[0].mxu0
      %v1676 = vadd.f32 0.0, %v1675
      %v1677 = vpop.f32.mrb[0].mxu0
      %1678 = vmatprep.mubr.f32.mxu0 0.0
      %1679 = vmatmul.mubr.f32.gmra.mrb[0].mxu0 %v1494
      %v1680 = vpop.f32.mrb[0].mxu0
      %v1681 = vadd.f32 0.0, %v1680
      %v1682 = vpop.f32.mrb[0].mxu0
      %1683 = vmatprep.mubr.f32.mxu0 0.0
      %1684 = vmatmul.mubr.f32.gmra.mrb[0].mxu0 %v1497
      %v1685 = vpop.f32.mrb[0].mxu0
      %v1686 = vadd.f32 0.0, %v1685
      %v1687 = vpop.f32.mrb[0].mxu0
      %1688 = vmatprep.mubr.f32.mxu0 0.0
      %1689 = vmatmul.mubr.f32.gmra.mrb[0].mxu0 %v1500
      %v1690 = vpop.f32.mrb[0].mxu0
      %v1691 = vadd.f32 0.0, %v1690
      %v1692 = vpop.f32.mrb[0].mxu0
      %1693 = vmatprep.mubr.f32.mxu0 0.0
      %1694 = vmatmul.mubr.f32.gmra.mrb[0].mxu0 %v1503
      %v1695 = vpop.f32.mrb[0].mxu0
      %v1696 = vadd.f32 0.0, %v1695
      %v1697 = vpop.f32.mrb[0].mxu0
      %1698 = vmatprep.mubr.f32.mxu0 0.0
      %1699 = vmatmul.mubr.f32.gmra.mrb[0].mxu0 %v1506
      %v1700 = vpop.f32.mrb[0].mxu0
      %v1701 = vadd.f32 0.0, %v1700
      %v1702 = vpop.f32.mrb[0].mxu0
      %1703 = vmatprep.mubr.f32.mxu0 0.0
      %1704 = vmatmul.mubr.f32.gmra.mrb[0].mxu0 %v1509
      %v1705 = vpop.f32.mrb[0].mxu0
      %v1706 = vadd.f32 0.0, %v1705
      %v1707 = vpop.f32.mrb[0].mxu0
      %1708 = vmatprep.mubr.f32.mxu0 0.0
      %1709 = vmatmul.mubr.f32.gmra.mrb[0].mxu0 %v1512
      %v1710 = vpop.f32.mrb[0].mxu0
      %v1711 = vadd.f32 0.0, %v1710
      %v1712 = vpop.f32.mrb[0].mxu0
      %1713 = vmatprep.mubr.f32.mxu0 0.0
      %1714 = vmatmul.mubr.f32.gmra.mrb[0].mxu0 %v1515
      %v1715 = vpop.f32.mrb[0].mxu0
      %v1716 = vadd.f32 0.0, %v1715
      %v1717 = vpop.f32.mrb[0].mxu0
      %1718 = vmatprep.mubr.f32.mxu0 0.0
      %1719 = vmatmul.mubr.f32.gmra.mrb[0].mxu0 %v1518
      %v1720 = vpop.f32.mrb[0].mxu0
      %v1721 = vadd.f32 0.0, %v1720
      %v1722 = vpop.f32.mrb[0].mxu0
      %1723 = vmatprep.mubr.f32.mxu0 0.0
      %1724 = vmatmul.mubr.f32.gmra.mrb[0].mxu0 %v1521
      %v1725 = vpop.f32.mrb[0].mxu0
      %v1726 = vadd.f32 0.0, %v1725
      %v1727 = vpop.f32.mrb[0].mxu0
      %1728 = vmatprep.mubr.f32.mxu0 0.0
      %1729 = vmatmul.mubr.f32.gmra.mrb[0].mxu0 %v1524
      %v1730 = vpop.f32.mrb[0].mxu0
      %v1731 = vadd.f32 0.0, %v1730
      %v1732 = vpop.f32.mrb[0].mxu0
      %1733 = vmatprep.mubr.f32.mxu0 0.0
      %1734 = vmatmul.mubr.f32.gmra.mrb[0].mxu0 %v1527
      %v1735 = vpop.f32.mrb[0].mxu0
      %v1736 = vadd.f32 0.0, %v1735
      %v1737 = vpop.f32.mrb[0].mxu0
      %1738 = vmatprep.mubr.f32.mxu0 0.0
      %1739 = vmatmul.mubr.f32.gmra.mrb[0].mxu0 %v1530
      %v1740 = vpop.f32.mrb[0].mxu0
      %v1741 = vadd.f32 0.0, %v1740
      %v1742 = vpop.f32.mrb[0].mxu0
      %1743 = vmatprep.mubr.f32.mxu0 0.0
      %1744 = vmatmul.mubr.f32.gmra.mrb[0].mxu0 %v1533
      %v1745 = vpop.f32.mrb[0].mxu0
      %v1746 = vadd.f32 0.0, %v1745
      %v1747 = vpop.f32.mrb[0].mxu0
      %1748 = vmatprep.mubr.f32.mxu0 0.0
      %1749 = vmatmul.mubr.f32.gmra.mrb[0].mxu0 %v1536
      %v1750 = vpop.f32.mrb[0].mxu0
      %v1751 = vadd.f32 0.0, %v1750
      %v1752 = vpop.f32.mrb[0].mxu0
      %1753 = vmatprep.mubr.f32.mxu0 0.0
      %1754 = vmatmul.mubr.f32.gmra.mrb[0].mxu0 %v1539
      %v1755 = vpop.f32.mrb[0].mxu0
      %v1756 = vadd.f32 0.0, %v1755
      %v1757 = vpop.f32.mrb[0].mxu0
      %1758 = vmatprep.mubr.f32.mxu0 0.0
      %1759 = vmatmul.mubr.f32.gmra.mrb[0].mxu0 %v1542
      %v1760 = vpop.f32.mrb[0].mxu0
      %v1761 = vadd.f32 0.0, %v1760
      %v1762 = vpop.f32.mrb[0].mxu0
      %1763 = vmatprep.mubr.f32.mxu0 0.0
      %1764 = vmatmul.mubr.f32.gmra.mrb[0].mxu0 %v1545
      %v1765 = vpop.f32.mrb[0].mxu0
      %v1766 = vadd.f32 0.0, %v1765
      %v1767 = vpop.f32.mrb[0].mxu0
      %1768 = vmatprep.mubr.f32.mxu0 0.0
      %1769 = vmatmul.mubr.f32.gmra.mrb[0].mxu0 %v1548
      %v1770 = vpop.f32.mrb[0].mxu0
      %v1771 = vadd.f32 0.0, %v1770
      %v1772 = vpop.f32.mrb[0].mxu0
      %1773 = vmatprep.mubr.f32.mxu0 0.0
      %1774 = vmatmul.mubr.f32.gmra.mrb[0].mxu0 %v1551
      %v1775 = vpop.f32.mrb[0].mxu0
      %v1776 = vadd.f32 0.0, %v1775
      %v1777 = vpop.f32.mrb[0].mxu0
      %1778 = vmatprep.mubr.f32.mxu0 0.0
      %1779 = vmatmul.mubr.f32.gmra.mrb[0].mxu0 %v1554
      %v1780 = vpop.f32.mrb[0].mxu0
      %v1781 = vadd.f32 0.0, %v1780
      %v1782 = vpop.f32.mrb[0].mxu0
      %1783 = vdwg.mxu0
      %v1784 = vadd.f32 %v1394, %v1626
      %v1785 = vadd.f32 %v1395, %v1631
      %v1786 = vadd.f32 %v1396, %v1636
      %v1787 = vadd.f32 %v1397, %v1641
      %v1788 = vadd.f32 %v1398, %v1646
      %v1789 = vadd.f32 %v1399, %v1651
      %v1790 = vadd.f32 %v1400, %v1656
      %v1791 = vadd.f32 %v1401, %v1661
      %v1792 = vadd.f32 %v1402, %v1666
      %v1793 = vadd.f32 %v1403, %v1671
      %v1794 = vadd.f32 %v1404, %v1676
      %v1795 = vadd.f32 %v1405, %v1681
      %v1796 = vadd.f32 %v1406, %v1686
      %v1797 = vadd.f32 %v1407, %v1691
      %v1798 = vadd.f32 %v1408, %v1696
      %v1799 = vadd.f32 %v1409, %v1701
      %v1800 = vadd.f32 %v1410, %v1706
      %v1801 = vadd.f32 %v1411, %v1711
      %v1802 = vadd.f32 %v1412, %v1716
      %v1803 = vadd.f32 %v1413, %v1721
      %v1804 = vadd.f32 %v1414, %v1726
      %v1805 = vadd.f32 %v1415, %v1731
      %v1806 = vadd.f32 %v1416, %v1736
      %v1807 = vadd.f32 %v1417, %v1741
      %v1808 = vadd.f32 %v1418, %v1746
      %v1809 = vadd.f32 %v1419, %v1751
      %v1810 = vadd.f32 %v1420, %v1756
      %v1811 = vadd.f32 %v1421, %v1761
      %v1812 = vadd.f32 %v1422, %v1766
      %v1813 = vadd.f32 %v1423, %v1771
      %v1814 = vadd.f32 %v1424, %v1776
      %v1815 = vadd.f32 %v1425, %v1781
      %v1816 = vld [vmem:[%s287 + $0x1] sm:$0xff]
      %v1817 = vld [vmem:[%s287 + $0x9] sm:$0xff]
      %v1818 = vld [vmem:[%s287 + $0x19] sm:$0xff]
      %v1819 = vld [vmem:[%s287 + $0x21] sm:$0xff]
      %v1820 = vld [vmem:[%s287 + $0x31] sm:$0xff]
      %v1821 = vld [vmem:[%s287 + $0x39] sm:$0xff]
      %v1822 = vld [vmem:[%s287 + $0x49] sm:$0xff]
      %v1823 = vld [vmem:[%s287 + $0x51] sm:$0xff]
      %v1824 = vld [vmem:[%s287 + $0x61] sm:$0xff]
      %v1825 = vld [vmem:[%s287 + $0x69] sm:$0xff]
      %v1826 = vld [vmem:[%s287 + $0x79] sm:$0xff]
      %v1827 = vld [vmem:[%s287 + $0x81] sm:$0xff]
      %v1828 = vld [vmem:[%s287 + $0x91] sm:$0xff]
      %v1829 = vld [vmem:[%s287 + $0x99] sm:$0xff]
      %v1830 = vld [vmem:[%s287 + $0xa9] sm:$0xff]
      %v1831 = vld [vmem:[%s287 + $0xb1] sm:$0xff]
      %v1832 = vld [vmem:[%s287 + $0xc1] sm:$0xff]
      %v1833 = vld [vmem:[%s287 + $0xc9] sm:$0xff]
      %v1834 = vld [vmem:[%s287 + $0xd9] sm:$0xff]
      %v1835 = vld [vmem:[%s287 + $0xe1] sm:$0xff]
      %v1836 = vld [vmem:[%s287 + $0xf1] sm:$0xff]
      %v1837 = vld [vmem:[%s287 + $0xf9] sm:$0xff]
      %v1838 = vld [vmem:[%s287 + $0x109] sm:$0xff]
      %v1839 = vld [vmem:[%s287 + $0x111] sm:$0xff]
      %v1840 = vld [vmem:[%s287 + $0x121] sm:$0xff]
      %v1841 = vld [vmem:[%s287 + $0x129] sm:$0xff]
      %v1842 = vld [vmem:[%s287 + $0x139] sm:$0xff]
      %v1843 = vld [vmem:[%s287 + $0x141] sm:$0xff]
      %v1844 = vld [vmem:[%s287 + $0x151] sm:$0xff]
      %v1845 = vld [vmem:[%s287 + $0x159] sm:$0xff]
      %v1846 = vld [vmem:[%s287 + $0x169] sm:$0xff]
      %v1847 = vld [vmem:[%s287 + $0x171] sm:$0xff]
      %s1848 = scalar_lea.vmem %s1, 16
      %v1849 = vld [vmem:[%s1848] sm:$0xf]
      %v1851 = vsel %vm241, %v1816, 0
      %v1854 = vsel %vm241, %v1817, 0
      %v1857 = vsel %vm241, %v1818, 0
      %v1860 = vsel %vm241, %v1819, 0
      %v1863 = vsel %vm241, %v1820, 0
      %v1866 = vsel %vm241, %v1821, 0
      %v1869 = vsel %vm241, %v1822, 0
      %v1872 = vsel %vm241, %v1823, 0
      %v1875 = vsel %vm241, %v1824, 0
      %v1878 = vsel %vm241, %v1825, 0
      %v1881 = vsel %vm241, %v1826, 0
      %v1884 = vsel %vm241, %v1827, 0
      %v1887 = vsel %vm241, %v1828, 0
      %v1890 = vsel %vm241, %v1829, 0
      %v1893 = vsel %vm241, %v1830, 0
      %v1896 = vsel %vm241, %v1831, 0
      %v1899 = vsel %vm241, %v1832, 0
      %v1902 = vsel %vm241, %v1833, 0
      %v1905 = vsel %vm241, %v1834, 0
      %v1908 = vsel %vm241, %v1835, 0
      %v1911 = vsel %vm241, %v1836, 0
      %v1914 = vsel %vm241, %v1837, 0
      %v1917 = vsel %vm241, %v1838, 0
      %v1920 = vsel %vm241, %v1839, 0
      %v1923 = vsel %vm241, %v1840, 0
      %v1926 = vsel %vm241, %v1841, 0
      %v1929 = vsel %vm241, %v1842, 0
      %v1932 = vsel %vm241, %v1843, 0
      %v1935 = vsel %vm241, %v1844, 0
      %v1938 = vsel %vm241, %v1845, 0
      %v1941 = vsel %vm241, %v1846, 0
      %v1944 = vsel %vm241, %v1847, 0
      %v1947 = vsel %vm483, %v1849, 0
      %1949 = vmatprep.subr.mxu0 0.0
      %1950 = vmatpush1.msra.mxu0 %v1947
      %1951 = vmatprep.subr.mxu0 0.0
      %1952 = vmatpush1.msra.mxu0 0.0
      %1953 = vmatprep.subr.mxu0 0.0
      %1954 = vmatpush1.msra.mxu0 0.0
      %1955 = vmatprep.subr.mxu0 0.0
      %1956 = vmatpush1.msra.mxu0 0.0
      %1957 = vmatprep.subr.mxu0 0.0
      %1958 = vmatpush1.msra.mxu0 0.0
      %1959 = vmatprep.subr.mxu0 0.0
      %1960 = vmatpush1.msra.mxu0 0.0
      %1961 = vmatprep.subr.mxu0 0.0
      %1962 = vmatpush1.msra.mxu0 0.0
      %1963 = vmatprep.subr.mxu0 0.0
      %1964 = vmatpush1.msra.mxu0 0.0
      %1965 = vmatprep.subr.mxu0 0.0
      %1966 = vmatpush1.msra.mxu0 0.0
      %1967 = vmatprep.subr.mxu0 0.0
      %1968 = vmatpush1.msra.mxu0 0.0
      %1969 = vmatprep.subr.mxu0 0.0
      %1970 = vmatpush1.msra.mxu0 0.0
      %1971 = vmatprep.subr.mxu0 0.0
      %1972 = vmatpush1.msra.mxu0 0.0
      %1973 = vmatprep.subr.mxu0 0.0
      %1974 = vmatpush1.msra.mxu0 0.0
      %1975 = vmatprep.subr.mxu0 0.0
      %1976 = vmatpush1.msra.mxu0 0.0
      %1977 = vmatprep.subr.mxu0 0.0
      %1978 = vmatpush1.msra.mxu0 0.0
      %1979 = vmatprep.subr.mxu0 0.0
      %1980 = vmatpush1.msra.mxu0 0.0
      %1981 = vmatprep.subr.mxu0 0.0
      %1982 = vmatpush1.msra.mxu0 0.0
      %1983 = vmatprep.subr.mxu0 0.0
      %1984 = vmatpush1.msra.mxu0 0.0
      %1985 = vmatprep.subr.mxu0 0.0
      %1986 = vmatpush1.msra.mxu0 0.0
      %1987 = vmatprep.subr.mxu0 0.0
      %1988 = vmatpush1.msra.mxu0 0.0
      %1989 = vmatprep.subr.mxu0 0.0
      %1990 = vmatpush1.msra.mxu0 0.0
      %1991 = vmatprep.subr.mxu0 0.0
      %1992 = vmatpush1.msra.mxu0 0.0
      %1993 = vmatprep.subr.mxu0 0.0
      %1994 = vmatpush1.msra.mxu0 0.0
      %1995 = vmatprep.subr.mxu0 0.0
      %1996 = vmatpush1.msra.mxu0 0.0
      %1997 = vmatprep.subr.mxu0 0.0
      %1998 = vmatpush1.msra.mxu0 0.0
      %1999 = vmatprep.subr.mxu0 0.0
      %2000 = vmatpush1.msra.mxu0 0.0
      %2001 = vmatprep.subr.mxu0 0.0
      %2002 = vmatpush1.msra.mxu0 0.0
      %2003 = vmatprep.subr.mxu0 0.0
      %2004 = vmatpush1.msra.mxu0 0.0
      %2005 = vmatprep.subr.mxu0 0.0
      %2006 = vmatpush1.msra.mxu0 0.0
      %2007 = vmatprep.subr.mxu0 0.0
      %2008 = vmatpush1.msra.mxu0 0.0
      %2009 = vmatprep.subr.mxu0 0.0
      %2010 = vmatpush1.msra.mxu0 0.0
      %2011 = vmatprep.subr.mxu0 0.0
      %2012 = vmatpush1.msra.mxu0 0.0
      %2013 = vmatprep.mubr.f32.mxu0 0.0
      %2014 = vmatmul.mubr.f32.gmra.mrb[0].mxu0 %v1851
      %v2015 = vpop.f32.mrb[0].mxu0
      %v2016 = vadd.f32 0.0, %v2015
      %v2017 = vpop.f32.mrb[0].mxu0
      %2018 = vmatprep.mubr.f32.mxu0 0.0
      %2019 = vmatmul.mubr.f32.gmra.mrb[0].mxu0 %v1854
      %v2020 = vpop.f32.mrb[0].mxu0
      %v2021 = vadd.f32 0.0, %v2020
      %v2022 = vpop.f32.mrb[0].mxu0
      %2023 = vmatprep.mubr.f32.mxu0 0.0
      %2024 = vmatmul.mubr.f32.gmra.mrb[0].mxu0 %v1857
      %v2025 = vpop.f32.mrb[0].mxu0
      %v2026 = vadd.f32 0.0, %v2025
      %v2027 = vpop.f32.mrb[0].mxu0
      %2028 = vmatprep.mubr.f32.mxu0 0.0
      %2029 = vmatmul.mubr.f32.gmra.mrb[0].mxu0 %v1860
      %v2030 = vpop.f32.mrb[0].mxu0
      %v2031 = vadd.f32 0.0, %v2030
      %v2032 = vpop.f32.mrb[0].mxu0
      %2033 = vmatprep.mubr.f32.mxu0 0.0
      %2034 = vmatmul.mubr.f32.gmra.mrb[0].mxu0 %v1863
      %v2035 = vpop.f32.mrb[0].mxu0
      %v2036 = vadd.f32 0.0, %v2035
      %v2037 = vpop.f32.mrb[0].mxu0
      %2038 = vmatprep.mubr.f32.mxu0 0.0
      %2039 = vmatmul.mubr.f32.gmra.mrb[0].mxu0 %v1866
      %v2040 = vpop.f32.mrb[0].mxu0
      %v2041 = vadd.f32 0.0, %v2040
      %v2042 = vpop.f32.mrb[0].mxu0
      %2043 = vmatprep.mubr.f32.mxu0 0.0
      %2044 = vmatmul.mubr.f32.gmra.mrb[0].mxu0 %v1869
      %v2045 = vpop.f32.mrb[0].mxu0
      %v2046 = vadd.f32 0.0, %v2045
      %v2047 = vpop.f32.mrb[0].mxu0
      %2048 = vmatprep.mubr.f32.mxu0 0.0
      %2049 = vmatmul.mubr.f32.gmra.mrb[0].mxu0 %v1872
      %v2050 = vpop.f32.mrb[0].mxu0
      %v2051 = vadd.f32 0.0, %v2050
      %v2052 = vpop.f32.mrb[0].mxu0
      %2053 = vmatprep.mubr.f32.mxu0 0.0
      %2054 = vmatmul.mubr.f32.gmra.mrb[0].mxu0 %v1875
      %v2055 = vpop.f32.mrb[0].mxu0
      %v2056 = vadd.f32 0.0, %v2055
      %v2057 = vpop.f32.mrb[0].mxu0
      %2058 = vmatprep.mubr.f32.mxu0 0.0
      %2059 = vmatmul.mubr.f32.gmra.mrb[0].mxu0 %v1878
      %v2060 = vpop.f32.mrb[0].mxu0
      %v2061 = vadd.f32 0.0, %v2060
      %v2062 = vpop.f32.mrb[0].mxu0
      %2063 = vmatprep.mubr.f32.mxu0 0.0
      %2064 = vmatmul.mubr.f32.gmra.mrb[0].mxu0 %v1881
      %v2065 = vpop.f32.mrb[0].mxu0
      %v2066 = vadd.f32 0.0, %v2065
      %v2067 = vpop.f32.mrb[0].mxu0
      %2068 = vmatprep.mubr.f32.mxu0 0.0
      %2069 = vmatmul.mubr.f32.gmra.mrb[0].mxu0 %v1884
      %v2070 = vpop.f32.mrb[0].mxu0
      %v2071 = vadd.f32 0.0, %v2070
      %v2072 = vpop.f32.mrb[0].mxu0
      %2073 = vmatprep.mubr.f32.mxu0 0.0
      %2074 = vmatmul.mubr.f32.gmra.mrb[0].mxu0 %v1887
      %v2075 = vpop.f32.mrb[0].mxu0
      %v2076 = vadd.f32 0.0, %v2075
      %v2077 = vpop.f32.mrb[0].mxu0
      %2078 = vmatprep.mubr.f32.mxu0 0.0
      %2079 = vmatmul.mubr.f32.gmra.mrb[0].mxu0 %v1890
      %v2080 = vpop.f32.mrb[0].mxu0
      %v2081 = vadd.f32 0.0, %v2080
      %v2082 = vpop.f32.mrb[0].mxu0
      %2083 = vmatprep.mubr.f32.mxu0 0.0
      %2084 = vmatmul.mubr.f32.gmra.mrb[0].mxu0 %v1893
      %v2085 = vpop.f32.mrb[0].mxu0
      %v2086 = vadd.f32 0.0, %v2085
      %v2087 = vpop.f32.mrb[0].mxu0
      %2088 = vmatprep.mubr.f32.mxu0 0.0
      %2089 = vmatmul.mubr.f32.gmra.mrb[0].mxu0 %v1896
      %v2090 = vpop.f32.mrb[0].mxu0
      %v2091 = vadd.f32 0.0, %v2090
      %v2092 = vpop.f32.mrb[0].mxu0
      %2093 = vmatprep.mubr.f32.mxu0 0.0
      %2094 = vmatmul.mubr.f32.gmra.mrb[0].mxu0 %v1899
      %v2095 = vpop.f32.mrb[0].mxu0
      %v2096 = vadd.f32 0.0, %v2095
      %v2097 = vpop.f32.mrb[0].mxu0
      %2098 = vmatprep.mubr.f32.mxu0 0.0
      %2099 = vmatmul.mubr.f32.gmra.mrb[0].mxu0 %v1902
      %v2100 = vpop.f32.mrb[0].mxu0
      %v2101 = vadd.f32 0.0, %v2100
      %v2102 = vpop.f32.mrb[0].mxu0
      %2103 = vmatprep.mubr.f32.mxu0 0.0
      %2104 = vmatmul.mubr.f32.gmra.mrb[0].mxu0 %v1905
      %v2105 = vpop.f32.mrb[0].mxu0
      %v2106 = vadd.f32 0.0, %v2105
      %v2107 = vpop.f32.mrb[0].mxu0
      %2108 = vmatprep.mubr.f32.mxu0 0.0
      %2109 = vmatmul.mubr.f32.gmra.mrb[0].mxu0 %v1908
      %v2110 = vpop.f32.mrb[0].mxu0
      %v2111 = vadd.f32 0.0, %v2110
      %v2112 = vpop.f32.mrb[0].mxu0
      %2113 = vmatprep.mubr.f32.mxu0 0.0
      %2114 = vmatmul.mubr.f32.gmra.mrb[0].mxu0 %v1911
      %v2115 = vpop.f32.mrb[0].mxu0
      %v2116 = vadd.f32 0.0, %v2115
      %v2117 = vpop.f32.mrb[0].mxu0
      %2118 = vmatprep.mubr.f32.mxu0 0.0
      %2119 = vmatmul.mubr.f32.gmra.mrb[0].mxu0 %v1914
      %v2120 = vpop.f32.mrb[0].mxu0
      %v2121 = vadd.f32 0.0, %v2120
      %v2122 = vpop.f32.mrb[0].mxu0
      %2123 = vmatprep.mubr.f32.mxu0 0.0
      %2124 = vmatmul.mubr.f32.gmra.mrb[0].mxu0 %v1917
      %v2125 = vpop.f32.mrb[0].mxu0
      %v2126 = vadd.f32 0.0, %v2125
      %v2127 = vpop.f32.mrb[0].mxu0
      %2128 = vmatprep.mubr.f32.mxu0 0.0
      %2129 = vmatmul.mubr.f32.gmra.mrb[0].mxu0 %v1920
      %v2130 = vpop.f32.mrb[0].mxu0
      %v2131 = vadd.f32 0.0, %v2130
      %v2132 = vpop.f32.mrb[0].mxu0
      %2133 = vmatprep.mubr.f32.mxu0 0.0
      %2134 = vmatmul.mubr.f32.gmra.mrb[0].mxu0 %v1923
      %v2135 = vpop.f32.mrb[0].mxu0
      %v2136 = vadd.f32 0.0, %v2135
      %v2137 = vpop.f32.mrb[0].mxu0
      %2138 = vmatprep.mubr.f32.mxu0 0.0
      %2139 = vmatmul.mubr.f32.gmra.mrb[0].mxu0 %v1926
      %v2140 = vpop.f32.mrb[0].mxu0
      %v2141 = vadd.f32 0.0, %v2140
      %v2142 = vpop.f32.mrb[0].mxu0
      %2143 = vmatprep.mubr.f32.mxu0 0.0
      %2144 = vmatmul.mubr.f32.gmra.mrb[0].mxu0 %v1929
      %v2145 = vpop.f32.mrb[0].mxu0
      %v2146 = vadd.f32 0.0, %v2145
      %v2147 = vpop.f32.mrb[0].mxu0
      %2148 = vmatprep.mubr.f32.mxu0 0.0
      %2149 = vmatmul.mubr.f32.gmra.mrb[0].mxu0 %v1932
      %v2150 = vpop.f32.mrb[0].mxu0
      %v2151 = vadd.f32 0.0, %v2150
      %v2152 = vpop.f32.mrb[0].mxu0
      %2153 = vmatprep.mubr.f32.mxu0 0.0
      %2154 = vmatmul.mubr.f32.gmra.mrb[0].mxu0 %v1935
      %v2155 = vpop.f32.mrb[0].mxu0
      %v2156 = vadd.f32 0.0, %v2155
      %v2157 = vpop.f32.mrb[0].mxu0
      %2158 = vmatprep.mubr.f32.mxu0 0.0
      %2159 = vmatmul.mubr.f32.gmra.mrb[0].mxu0 %v1938
      %v2160 = vpop.f32.mrb[0].mxu0
      %v2161 = vadd.f32 0.0, %v2160
      %v2162 = vpop.f32.mrb[0].mxu0
      %2163 = vmatprep.mubr.f32.mxu0 0.0
      %2164 = vmatmul.mubr.f32.gmra.mrb[0].mxu0 %v1941
      %v2165 = vpop.f32.mrb[0].mxu0
      %v2166 = vadd.f32 0.0, %v2165
      %v2167 = vpop.f32.mrb[0].mxu0
      %2168 = vmatprep.mubr.f32.mxu0 0.0
      %2169 = vmatmul.mubr.f32.gmra.mrb[0].mxu0 %v1944
      %v2170 = vpop.f32.mrb[0].mxu0
      %v2171 = vadd.f32 0.0, %v2170
      %v2172 = vpop.f32.mrb[0].mxu0
      %2173 = vdwg.mxu0
      %v2174 = vadd.f32 %v1784, %v2016
      %v2175 = vadd.f32 %v1785, %v2021
      %v2176 = vadd.f32 %v1786, %v2026
      %v2177 = vadd.f32 %v1787, %v2031
      %v2178 = vadd.f32 %v1788, %v2036
      %v2179 = vadd.f32 %v1789, %v2041
      %v2180 = vadd.f32 %v1790, %v2046
      %v2181 = vadd.f32 %v1791, %v2051
      %v2182 = vadd.f32 %v1792, %v2056
      %v2183 = vadd.f32 %v1793, %v2061
      %v2184 = vadd.f32 %v1794, %v2066
      %v2185 = vadd.f32 %v1795, %v2071
      %v2186 = vadd.f32 %v1796, %v2076
      %v2187 = vadd.f32 %v1797, %v2081
      %v2188 = vadd.f32 %v1798, %v2086
      %v2189 = vadd.f32 %v1799, %v2091
      %v2190 = vadd.f32 %v1800, %v2096
      %v2191 = vadd.f32 %v1801, %v2101
      %v2192 = vadd.f32 %v1802, %v2106
      %v2193 = vadd.f32 %v1803, %v2111
      %v2194 = vadd.f32 %v1804, %v2116
      %v2195 = vadd.f32 %v1805, %v2121
      %v2196 = vadd.f32 %v1806, %v2126
      %v2197 = vadd.f32 %v1807, %v2131
      %v2198 = vadd.f32 %v1808, %v2136
      %v2199 = vadd.f32 %v1809, %v2141
      %v2200 = vadd.f32 %v1810, %v2146
      %v2201 = vadd.f32 %v1811, %v2151
      %v2202 = vadd.f32 %v1812, %v2156
      %v2203 = vadd.f32 %v1813, %v2161
      %v2204 = vadd.f32 %v1814, %v2166
      %v2205 = vadd.f32 %v1815, %v2171
      %v2206 = vld [vmem:[%s287 + $0x2] sm:$0xff]
      %v2207 = vld [vmem:[%s287 + $0xa] sm:$0xff]
      %v2208 = vld [vmem:[%s287 + $0x1a] sm:$0xff]
      %v2209 = vld [vmem:[%s287 + $0x22] sm:$0xff]
      %v2210 = vld [vmem:[%s287 + $0x32] sm:$0xff]
      %v2211 = vld [vmem:[%s287 + $0x3a] sm:$0xff]
      %v2212 = vld [vmem:[%s287 + $0x4a] sm:$0xff]
      %v2213 = vld [vmem:[%s287 + $0x52] sm:$0xff]
      %v2214 = vld [vmem:[%s287 + $0x62] sm:$0xff]
      %v2215 = vld [vmem:[%s287 + $0x6a] sm:$0xff]
      %v2216 = vld [vmem:[%s287 + $0x7a] sm:$0xff]
      %v2217 = vld [vmem:[%s287 + $0x82] sm:$0xff]
      %v2218 = vld [vmem:[%s287 + $0x92] sm:$0xff]
      %v2219 = vld [vmem:[%s287 + $0x9a] sm:$0xff]
      %v2220 = vld [vmem:[%s287 + $0xaa] sm:$0xff]
      %v2221 = vld [vmem:[%s287 + $0xb2] sm:$0xff]
      %v2222 = vld [vmem:[%s287 + $0xc2] sm:$0xff]
      %v2223 = vld [vmem:[%s287 + $0xca] sm:$0xff]
      %v2224 = vld [vmem:[%s287 + $0xda] sm:$0xff]
      %v2225 = vld [vmem:[%s287 + $0xe2] sm:$0xff]
      %v2226 = vld [vmem:[%s287 + $0xf2] sm:$0xff]
      %v2227 = vld [vmem:[%s287 + $0xfa] sm:$0xff]
      %v2228 = vld [vmem:[%s287 + $0x10a] sm:$0xff]
      %v2229 = vld [vmem:[%s287 + $0x112] sm:$0xff]
      %v2230 = vld [vmem:[%s287 + $0x122] sm:$0xff]
      %v2231 = vld [vmem:[%s287 + $0x12a] sm:$0xff]
      %v2232 = vld [vmem:[%s287 + $0x13a] sm:$0xff]
      %v2233 = vld [vmem:[%s287 + $0x142] sm:$0xff]
      %v2234 = vld [vmem:[%s287 + $0x152] sm:$0xff]
      %v2235 = vld [vmem:[%s287 + $0x15a] sm:$0xff]
      %v2236 = vld [vmem:[%s287 + $0x16a] sm:$0xff]
      %v2237 = vld [vmem:[%s287 + $0x172] sm:$0xff]
      %s2238 = scalar_lea.vmem %s1, 20
      %v2239 = vld [vmem:[%s2238] sm:$0xf]
      %v2241 = vsel %vm241, %v2206, 0
      %v2244 = vsel %vm241, %v2207, 0
      %v2247 = vsel %vm241, %v2208, 0
      %v2250 = vsel %vm241, %v2209, 0
      %v2253 = vsel %vm241, %v2210, 0
      %v2256 = vsel %vm241, %v2211, 0
      %v2259 = vsel %vm241, %v2212, 0
      %v2262 = vsel %vm241, %v2213, 0
      %v2265 = vsel %vm241, %v2214, 0
      %v2268 = vsel %vm241, %v2215, 0
      %v2271 = vsel %vm241, %v2216, 0
      %v2274 = vsel %vm241, %v2217, 0
      %v2277 = vsel %vm241, %v2218, 0
      %v2280 = vsel %vm241, %v2219, 0
      %v2283 = vsel %vm241, %v2220, 0
      %v2286 = vsel %vm241, %v2221, 0
      %v2289 = vsel %vm241, %v2222, 0
      %v2292 = vsel %vm241, %v2223, 0
      %v2295 = vsel %vm241, %v2224, 0
      %v2298 = vsel %vm241, %v2225, 0
      %v2301 = vsel %vm241, %v2226, 0
      %v2304 = vsel %vm241, %v2227, 0
      %v2307 = vsel %vm241, %v2228, 0
      %v2310 = vsel %vm241, %v2229, 0
      %v2313 = vsel %vm241, %v2230, 0
      %v2316 = vsel %vm241, %v2231, 0
      %v2319 = vsel %vm241, %v2232, 0
      %v2322 = vsel %vm241, %v2233, 0
      %v2325 = vsel %vm241, %v2234, 0
      %v2328 = vsel %vm241, %v2235, 0
      %v2331 = vsel %vm241, %v2236, 0
      %v2334 = vsel %vm241, %v2237, 0
      %v2337 = vsel %vm483, %v2239, 0
      %2339 = vmatprep.subr.mxu0 0.0
      %2340 = vmatpush1.msra.mxu0 %v2337
      %2341 = vmatprep.subr.mxu0 0.0
      %2342 = vmatpush1.msra.mxu0 0.0
      %2343 = vmatprep.subr.mxu0 0.0
      %2344 = vmatpush1.msra.mxu0 0.0
      %2345 = vmatprep.subr.mxu0 0.0
      %2346 = vmatpush1.msra.mxu0 0.0
      %2347 = vmatprep.subr.mxu0 0.0
      %2348 = vmatpush1.msra.mxu0 0.0
      %2349 = vmatprep.subr.mxu0 0.0
      %2350 = vmatpush1.msra.mxu0 0.0
      %2351 = vmatprep.subr.mxu0 0.0
      %2352 = vmatpush1.msra.mxu0 0.0
      %2353 = vmatprep.subr.mxu0 0.0
      %2354 = vmatpush1.msra.mxu0 0.0
      %2355 = vmatprep.subr.mxu0 0.0
      %2356 = vmatpush1.msra.mxu0 0.0
      %2357 = vmatprep.subr.mxu0 0.0
      %2358 = vmatpush1.msra.mxu0 0.0
      %2359 = vmatprep.subr.mxu0 0.0
      %2360 = vmatpush1.msra.mxu0 0.0
      %2361 = vmatprep.subr.mxu0 0.0
      %2362 = vmatpush1.msra.mxu0 0.0
      %2363 = vmatprep.subr.mxu0 0.0
      %2364 = vmatpush1.msra.mxu0 0.0
      %2365 = vmatprep.subr.mxu0 0.0
      %2366 = vmatpush1.msra.mxu0 0.0
      %2367 = vmatprep.subr.mxu0 0.0
      %2368 = vmatpush1.msra.mxu0 0.0
      %2369 = vmatprep.subr.mxu0 0.0
      %2370 = vmatpush1.msra.mxu0 0.0
      %2371 = vmatprep.subr.mxu0 0.0
      %2372 = vmatpush1.msra.mxu0 0.0
      %2373 = vmatprep.subr.mxu0 0.0
      %2374 = vmatpush1.msra.mxu0 0.0
      %2375 = vmatprep.subr.mxu0 0.0
      %2376 = vmatpush1.msra.mxu0 0.0
      %2377 = vmatprep.subr.mxu0 0.0
      %2378 = vmatpush1.msra.mxu0 0.0
      %2379 = vmatprep.subr.mxu0 0.0
      %2380 = vmatpush1.msra.mxu0 0.0
      %2381 = vmatprep.subr.mxu0 0.0
      %2382 = vmatpush1.msra.mxu0 0.0
      %2383 = vmatprep.subr.mxu0 0.0
      %2384 = vmatpush1.msra.mxu0 0.0
      %2385 = vmatprep.subr.mxu0 0.0
      %2386 = vmatpush1.msra.mxu0 0.0
      %2387 = vmatprep.subr.mxu0 0.0
      %2388 = vmatpush1.msra.mxu0 0.0
      %2389 = vmatprep.subr.mxu0 0.0
      %2390 = vmatpush1.msra.mxu0 0.0
      %2391 = vmatprep.subr.mxu0 0.0
      %2392 = vmatpush1.msra.mxu0 0.0
      %2393 = vmatprep.subr.mxu0 0.0
      %2394 = vmatpush1.msra.mxu0 0.0
      %2395 = vmatprep.subr.mxu0 0.0
      %2396 = vmatpush1.msra.mxu0 0.0
      %2397 = vmatprep.subr.mxu0 0.0
      %2398 = vmatpush1.msra.mxu0 0.0
      %2399 = vmatprep.subr.mxu0 0.0
      %2400 = vmatpush1.msra.mxu0 0.0
      %2401 = vmatprep.subr.mxu0 0.0
      %2402 = vmatpush1.msra.mxu0 0.0
      %2403 = vmatprep.mubr.f32.mxu0 0.0
      %2404 = vmatmul.mubr.f32.gmra.mrb[0].mxu0 %v2241
      %v2405 = vpop.f32.mrb[0].mxu0
      %v2406 = vadd.f32 0.0, %v2405
      %v2407 = vpop.f32.mrb[0].mxu0
      %2408 = vmatprep.mubr.f32.mxu0 0.0
      %2409 = vmatmul.mubr.f32.gmra.mrb[0].mxu0 %v2244
      %v2410 = vpop.f32.mrb[0].mxu0
      %v2411 = vadd.f32 0.0, %v2410
      %v2412 = vpop.f32.mrb[0].mxu0
      %2413 = vmatprep.mubr.f32.mxu0 0.0
      %2414 = vmatmul.mubr.f32.gmra.mrb[0].mxu0 %v2247
      %v2415 = vpop.f32.mrb[0].mxu0
      %v2416 = vadd.f32 0.0, %v2415
      %v2417 = vpop.f32.mrb[0].mxu0
      %2418 = vmatprep.mubr.f32.mxu0 0.0
      %2419 = vmatmul.mubr.f32.gmra.mrb[0].mxu0 %v2250
      %v2420 = vpop.f32.mrb[0].mxu0
      %v2421 = vadd.f32 0.0, %v2420
      %v2422 = vpop.f32.mrb[0].mxu0
      %2423 = vmatprep.mubr.f32.mxu0 0.0
      %2424 = vmatmul.mubr.f32.gmra.mrb[0].mxu0 %v2253
      %v2425 = vpop.f32.mrb[0].mxu0
      %v2426 = vadd.f32 0.0, %v2425
      %v2427 = vpop.f32.mrb[0].mxu0
      %2428 = vmatprep.mubr.f32.mxu0 0.0
      %2429 = vmatmul.mubr.f32.gmra.mrb[0].mxu0 %v2256
      %v2430 = vpop.f32.mrb[0].mxu0
      %v2431 = vadd.f32 0.0, %v2430
      %v2432 = vpop.f32.mrb[0].mxu0
      %2433 = vmatprep.mubr.f32.mxu0 0.0
      %2434 = vmatmul.mubr.f32.gmra.mrb[0].mxu0 %v2259
      %v2435 = vpop.f32.mrb[0].mxu0
      %v2436 = vadd.f32 0.0, %v2435
      %v2437 = vpop.f32.mrb[0].mxu0
      %2438 = vmatprep.mubr.f32.mxu0 0.0
      %2439 = vmatmul.mubr.f32.gmra.mrb[0].mxu0 %v2262
      %v2440 = vpop.f32.mrb[0].mxu0
      %v2441 = vadd.f32 0.0, %v2440
      %v2442 = vpop.f32.mrb[0].mxu0
      %2443 = vmatprep.mubr.f32.mxu0 0.0
      %2444 = vmatmul.mubr.f32.gmra.mrb[0].mxu0 %v2265
      %v2445 = vpop.f32.mrb[0].mxu0
      %v2446 = vadd.f32 0.0, %v2445
      %v2447 = vpop.f32.mrb[0].mxu0
      %2448 = vmatprep.mubr.f32.mxu0 0.0
      %2449 = vmatmul.mubr.f32.gmra.mrb[0].mxu0 %v2268
      %v2450 = vpop.f32.mrb[0].mxu0
      %v2451 = vadd.f32 0.0, %v2450
      %v2452 = vpop.f32.mrb[0].mxu0
      %2453 = vmatprep.mubr.f32.mxu0 0.0
      %2454 = vmatmul.mubr.f32.gmra.mrb[0].mxu0 %v2271
      %v2455 = vpop.f32.mrb[0].mxu0
      %v2456 = vadd.f32 0.0, %v2455
      %v2457 = vpop.f32.mrb[0].mxu0
      %2458 = vmatprep.mubr.f32.mxu0 0.0
      %2459 = vmatmul.mubr.f32.gmra.mrb[0].mxu0 %v2274
      %v2460 = vpop.f32.mrb[0].mxu0
      %v2461 = vadd.f32 0.0, %v2460
      %v2462 = vpop.f32.mrb[0].mxu0
      %2463 = vmatprep.mubr.f32.mxu0 0.0
      %2464 = vmatmul.mubr.f32.gmra.mrb[0].mxu0 %v2277
      %v2465 = vpop.f32.mrb[0].mxu0
      %v2466 = vadd.f32 0.0, %v2465
      %v2467 = vpop.f32.mrb[0].mxu0
      %2468 = vmatprep.mubr.f32.mxu0 0.0
      %2469 = vmatmul.mubr.f32.gmra.mrb[0].mxu0 %v2280
      %v2470 = vpop.f32.mrb[0].mxu0
      %v2471 = vadd.f32 0.0, %v2470
      %v2472 = vpop.f32.mrb[0].mxu0
      %2473 = vmatprep.mubr.f32.mxu0 0.0
      %2474 = vmatmul.mubr.f32.gmra.mrb[0].mxu0 %v2283
      %v2475 = vpop.f32.mrb[0].mxu0
      %v2476 = vadd.f32 0.0, %v2475
      %v2477 = vpop.f32.mrb[0].mxu0
      %2478 = vmatprep.mubr.f32.mxu0 0.0
      %2479 = vmatmul.mubr.f32.gmra.mrb[0].mxu0 %v2286
      %v2480 = vpop.f32.mrb[0].mxu0
      %v2481 = vadd.f32 0.0, %v2480
      %v2482 = vpop.f32.mrb[0].mxu0
      %2483 = vmatprep.mubr.f32.mxu0 0.0
      %2484 = vmatmul.mubr.f32.gmra.mrb[0].mxu0 %v2289
      %v2485 = vpop.f32.mrb[0].mxu0
      %v2486 = vadd.f32 0.0, %v2485
      %v2487 = vpop.f32.mrb[0].mxu0
      %2488 = vmatprep.mubr.f32.mxu0 0.0
      %2489 = vmatmul.mubr.f32.gmra.mrb[0].mxu0 %v2292
      %v2490 = vpop.f32.mrb[0].mxu0
      %v2491 = vadd.f32 0.0, %v2490
      %v2492 = vpop.f32.mrb[0].mxu0
      %2493 = vmatprep.mubr.f32.mxu0 0.0
      %2494 = vmatmul.mubr.f32.gmra.mrb[0].mxu0 %v2295
      %v2495 = vpop.f32.mrb[0].mxu0
      %v2496 = vadd.f32 0.0, %v2495
      %v2497 = vpop.f32.mrb[0].mxu0
      %2498 = vmatprep.mubr.f32.mxu0 0.0
      %2499 = vmatmul.mubr.f32.gmra.mrb[0].mxu0 %v2298
      %v2500 = vpop.f32.mrb[0].mxu0
      %v2501 = vadd.f32 0.0, %v2500
      %v2502 = vpop.f32.mrb[0].mxu0
      %2503 = vmatprep.mubr.f32.mxu0 0.0
      %2504 = vmatmul.mubr.f32.gmra.mrb[0].mxu0 %v2301
      %v2505 = vpop.f32.mrb[0].mxu0
      %v2506 = vadd.f32 0.0, %v2505
      %v2507 = vpop.f32.mrb[0].mxu0
      %2508 = vmatprep.mubr.f32.mxu0 0.0
      %2509 = vmatmul.mubr.f32.gmra.mrb[0].mxu0 %v2304
      %v2510 = vpop.f32.mrb[0].mxu0
      %v2511 = vadd.f32 0.0, %v2510
      %v2512 = vpop.f32.mrb[0].mxu0
      %2513 = vmatprep.mubr.f32.mxu0 0.0
      %2514 = vmatmul.mubr.f32.gmra.mrb[0].mxu0 %v2307
      %v2515 = vpop.f32.mrb[0].mxu0
      %v2516 = vadd.f32 0.0, %v2515
      %v2517 = vpop.f32.mrb[0].mxu0
      %2518 = vmatprep.mubr.f32.mxu0 0.0
      %2519 = vmatmul.mubr.f32.gmra.mrb[0].mxu0 %v2310
      %v2520 = vpop.f32.mrb[0].mxu0
      %v2521 = vadd.f32 0.0, %v2520
      %v2522 = vpop.f32.mrb[0].mxu0
      %2523 = vmatprep.mubr.f32.mxu0 0.0
      %2524 = vmatmul.mubr.f32.gmra.mrb[0].mxu0 %v2313
      %v2525 = vpop.f32.mrb[0].mxu0
      %v2526 = vadd.f32 0.0, %v2525
      %v2527 = vpop.f32.mrb[0].mxu0
      %2528 = vmatprep.mubr.f32.mxu0 0.0
      %2529 = vmatmul.mubr.f32.gmra.mrb[0].mxu0 %v2316
      %v2530 = vpop.f32.mrb[0].mxu0
      %v2531 = vadd.f32 0.0, %v2530
      %v2532 = vpop.f32.mrb[0].mxu0
      %2533 = vmatprep.mubr.f32.mxu0 0.0
      %2534 = vmatmul.mubr.f32.gmra.mrb[0].mxu0 %v2319
      %v2535 = vpop.f32.mrb[0].mxu0
      %v2536 = vadd.f32 0.0, %v2535
      %v2537 = vpop.f32.mrb[0].mxu0
      %2538 = vmatprep.mubr.f32.mxu0 0.0
      %2539 = vmatmul.mubr.f32.gmra.mrb[0].mxu0 %v2322
      %v2540 = vpop.f32.mrb[0].mxu0
      %v2541 = vadd.f32 0.0, %v2540
      %v2542 = vpop.f32.mrb[0].mxu0
      %2543 = vmatprep.mubr.f32.mxu0 0.0
      %2544 = vmatmul.mubr.f32.gmra.mrb[0].mxu0 %v2325
      %v2545 = vpop.f32.mrb[0].mxu0
      %v2546 = vadd.f32 0.0, %v2545
      %v2547 = vpop.f32.mrb[0].mxu0
      %2548 = vmatprep.mubr.f32.mxu0 0.0
      %2549 = vmatmul.mubr.f32.gmra.mrb[0].mxu0 %v2328
      %v2550 = vpop.f32.mrb[0].mxu0
      %v2551 = vadd.f32 0.0, %v2550
      %v2552 = vpop.f32.mrb[0].mxu0
      %2553 = vmatprep.mubr.f32.mxu0 0.0
      %2554 = vmatmul.mubr.f32.gmra.mrb[0].mxu0 %v2331
      %v2555 = vpop.f32.mrb[0].mxu0
      %v2556 = vadd.f32 0.0, %v2555
      %v2557 = vpop.f32.mrb[0].mxu0
      %2558 = vmatprep.mubr.f32.mxu0 0.0
      %2559 = vmatmul.mubr.f32.gmra.mrb[0].mxu0 %v2334
      %v2560 = vpop.f32.mrb[0].mxu0
      %v2561 = vadd.f32 0.0, %v2560
      %v2562 = vpop.f32.mrb[0].mxu0
      %2563 = vdwg.mxu0
      %v2564 = vadd.f32 %v2174, %v2406
      %v2565 = vadd.f32 %v2175, %v2411
      %v2566 = vadd.f32 %v2176, %v2416
      %v2567 = vadd.f32 %v2177, %v2421
      %v2568 = vadd.f32 %v2178, %v2426
      %v2569 = vadd.f32 %v2179, %v2431
      %v2570 = vadd.f32 %v2180, %v2436
      %v2571 = vadd.f32 %v2181, %v2441
      %v2572 = vadd.f32 %v2182, %v2446
      %v2573 = vadd.f32 %v2183, %v2451
      %v2574 = vadd.f32 %v2184, %v2456
      %v2575 = vadd.f32 %v2185, %v2461
      %v2576 = vadd.f32 %v2186, %v2466
      %v2577 = vadd.f32 %v2187, %v2471
      %v2578 = vadd.f32 %v2188, %v2476
      %v2579 = vadd.f32 %v2189, %v2481
      %v2580 = vadd.f32 %v2190, %v2486
      %v2581 = vadd.f32 %v2191, %v2491
      %v2582 = vadd.f32 %v2192, %v2496
      %v2583 = vadd.f32 %v2193, %v2501
      %v2584 = vadd.f32 %v2194, %v2506
      %v2585 = vadd.f32 %v2195, %v2511
      %v2586 = vadd.f32 %v2196, %v2516
      %v2587 = vadd.f32 %v2197, %v2521
      %v2588 = vadd.f32 %v2198, %v2526
      %v2589 = vadd.f32 %v2199, %v2531
      %v2590 = vadd.f32 %v2200, %v2536
      %v2591 = vadd.f32 %v2201, %v2541
      %v2592 = vadd.f32 %v2202, %v2546
      %v2593 = vadd.f32 %v2203, %v2551
      %v2594 = vadd.f32 %v2204, %v2556
      %v2595 = vadd.f32 %v2205, %v2561
      %s2596 = scalar_lea.vmem [#allocation2], 48
      %v2597 = vld [vmem:[%s2596] sm:$0xff]
      %v2598 = vld [vmem:[%s2596 + $0x8] sm:$0xff]
      %v2599 = vld [vmem:[%s2596 + $0x18] sm:$0xff]
      %v2600 = vld [vmem:[%s2596 + $0x20] sm:$0xff]
      %v2601 = vld [vmem:[%s2596 + $0x30] sm:$0xff]
      %v2602 = vld [vmem:[%s2596 + $0x38] sm:$0xff]
      %v2603 = vld [vmem:[%s2596 + $0x48] sm:$0xff]
      %v2604 = vld [vmem:[%s2596 + $0x50] sm:$0xff]
      %v2605 = vld [vmem:[%s2596 + $0x60] sm:$0xff]
      %v2606 = vld [vmem:[%s2596 + $0x68] sm:$0xff]
      %v2607 = vld [vmem:[%s2596 + $0x78] sm:$0xff]
      %v2608 = vld [vmem:[%s2596 + $0x80] sm:$0xff]
      %v2609 = vld [vmem:[%s2596 + $0x90] sm:$0xff]
      %v2610 = vld [vmem:[%s2596 + $0x98] sm:$0xff]
      %v2611 = vld [vmem:[%s2596 + $0xa8] sm:$0xff]
      %v2612 = vld [vmem:[%s2596 + $0xb0] sm:$0xff]
      %v2613 = vld [vmem:[%s2596 + $0xc0] sm:$0xff]
      %v2614 = vld [vmem:[%s2596 + $0xc8] sm:$0xff]
      %v2615 = vld [vmem:[%s2596 + $0xd8] sm:$0xff]
      %v2616 = vld [vmem:[%s2596 + $0xe0] sm:$0xff]
      %v2617 = vld [vmem:[%s2596 + $0xf0] sm:$0xff]
      %v2618 = vld [vmem:[%s2596 + $0xf8] sm:$0xff]
      %v2619 = vld [vmem:[%s2596 + $0x108] sm:$0xff]
      %v2620 = vld [vmem:[%s2596 + $0x110] sm:$0xff]
      %v2621 = vld [vmem:[%s2596 + $0x120] sm:$0xff]
      %v2622 = vld [vmem:[%s2596 + $0x128] sm:$0xff]
      %v2623 = vld [vmem:[%s2596 + $0x138] sm:$0xff]
      %v2624 = vld [vmem:[%s2596 + $0x140] sm:$0xff]
      %v2625 = vld [vmem:[%s2596 + $0x150] sm:$0xff]
      %v2626 = vld [vmem:[%s2596 + $0x158] sm:$0xff]
      %v2627 = vld [vmem:[%s2596 + $0x168] sm:$0xff]
      %v2628 = vld [vmem:[%s2596 + $0x170] sm:$0xff]
      %s2629 = scalar_lea.vmem %s1, 24
      %v2630 = vld [vmem:[%s2629] sm:$0xf]
      %v2632 = vsel %vm241, %v2597, 0
      %v2635 = vsel %vm241, %v2598, 0
      %v2638 = vsel %vm241, %v2599, 0
      %v2641 = vsel %vm241, %v2600, 0
      %v2644 = vsel %vm241, %v2601, 0
      %v2647 = vsel %vm241, %v2602, 0
      %v2650 = vsel %vm241, %v2603, 0
      %v2653 = vsel %vm241, %v2604, 0
      %v2656 = vsel %vm241, %v2605, 0
      %v2659 = vsel %vm241, %v2606, 0
      %v2662 = vsel %vm241, %v2607, 0
      %v2665 = vsel %vm241, %v2608, 0
      %v2668 = vsel %vm241, %v2609, 0
      %v2671 = vsel %vm241, %v2610, 0
      %v2674 = vsel %vm241, %v2611, 0
      %v2677 = vsel %vm241, %v2612, 0
      %v2680 = vsel %vm241, %v2613, 0
      %v2683 = vsel %vm241, %v2614, 0
      %v2686 = vsel %vm241, %v2615, 0
      %v2689 = vsel %vm241, %v2616, 0
      %v2692 = vsel %vm241, %v2617, 0
      %v2695 = vsel %vm241, %v2618, 0
      %v2698 = vsel %vm241, %v2619, 0
      %v2701 = vsel %vm241, %v2620, 0
      %v2704 = vsel %vm241, %v2621, 0
      %v2707 = vsel %vm241, %v2622, 0
      %v2710 = vsel %vm241, %v2623, 0
      %v2713 = vsel %vm241, %v2624, 0
      %v2716 = vsel %vm241, %v2625, 0
      %v2719 = vsel %vm241, %v2626, 0
      %v2722 = vsel %vm241, %v2627, 0
      %v2725 = vsel %vm241, %v2628, 0
      %v2728 = vsel %vm483, %v2630, 0
      %2730 = vmatprep.subr.mxu0 0.0
      %2731 = vmatpush1.msra.mxu0 %v2728
      %2732 = vmatprep.subr.mxu0 0.0
      %2733 = vmatpush1.msra.mxu0 0.0
      %2734 = vmatprep.subr.mxu0 0.0
      %2735 = vmatpush1.msra.mxu0 0.0
      %2736 = vmatprep.subr.mxu0 0.0
      %2737 = vmatpush1.msra.mxu0 0.0
      %2738 = vmatprep.subr.mxu0 0.0
      %2739 = vmatpush1.msra.mxu0 0.0
      %2740 = vmatprep.subr.mxu0 0.0
      %2741 = vmatpush1.msra.mxu0 0.0
      %2742 = vmatprep.subr.mxu0 0.0
      %2743 = vmatpush1.msra.mxu0 0.0
      %2744 = vmatprep.subr.mxu0 0.0
      %2745 = vmatpush1.msra.mxu0 0.0
      %2746 = vmatprep.subr.mxu0 0.0
      %2747 = vmatpush1.msra.mxu0 0.0
      %2748 = vmatprep.subr.mxu0 0.0
      %2749 = vmatpush1.msra.mxu0 0.0
      %2750 = vmatprep.subr.mxu0 0.0
      %2751 = vmatpush1.msra.mxu0 0.0
      %2752 = vmatprep.subr.mxu0 0.0
      %2753 = vmatpush1.msra.mxu0 0.0
      %2754 = vmatprep.subr.mxu0 0.0
      %2755 = vmatpush1.msra.mxu0 0.0
      %2756 = vmatprep.subr.mxu0 0.0
      %2757 = vmatpush1.msra.mxu0 0.0
      %2758 = vmatprep.subr.mxu0 0.0
      %2759 = vmatpush1.msra.mxu0 0.0
      %2760 = vmatprep.subr.mxu0 0.0
      %2761 = vmatpush1.msra.mxu0 0.0
      %2762 = vmatprep.subr.mxu0 0.0
      %2763 = vmatpush1.msra.mxu0 0.0
      %2764 = vmatprep.subr.mxu0 0.0
      %2765 = vmatpush1.msra.mxu0 0.0
      %2766 = vmatprep.subr.mxu0 0.0
      %2767 = vmatpush1.msra.mxu0 0.0
      %2768 = vmatprep.subr.mxu0 0.0
      %2769 = vmatpush1.msra.mxu0 0.0
      %2770 = vmatprep.subr.mxu0 0.0
      %2771 = vmatpush1.msra.mxu0 0.0
      %2772 = vmatprep.subr.mxu0 0.0
      %2773 = vmatpush1.msra.mxu0 0.0
      %2774 = vmatprep.subr.mxu0 0.0
      %2775 = vmatpush1.msra.mxu0 0.0
      %2776 = vmatprep.subr.mxu0 0.0
      %2777 = vmatpush1.msra.mxu0 0.0
      %2778 = vmatprep.subr.mxu0 0.0
      %2779 = vmatpush1.msra.mxu0 0.0
      %2780 = vmatprep.subr.mxu0 0.0
      %2781 = vmatpush1.msra.mxu0 0.0
      %2782 = vmatprep.subr.mxu0 0.0
      %2783 = vmatpush1.msra.mxu0 0.0
      %2784 = vmatprep.subr.mxu0 0.0
      %2785 = vmatpush1.msra.mxu0 0.0
      %2786 = vmatprep.subr.mxu0 0.0
      %2787 = vmatpush1.msra.mxu0 0.0
      %2788 = vmatprep.subr.mxu0 0.0
      %2789 = vmatpush1.msra.mxu0 0.0
      %2790 = vmatprep.subr.mxu0 0.0
      %2791 = vmatpush1.msra.mxu0 0.0
      %2792 = vmatprep.subr.mxu0 0.0
      %2793 = vmatpush1.msra.mxu0 0.0
      %2794 = vmatprep.mubr.f32.mxu0 0.0
      %2795 = vmatmul.mubr.f32.gmra.mrb[0].mxu0 %v2632
      %v2796 = vpop.f32.mrb[0].mxu0
      %v2797 = vadd.f32 0.0, %v2796
      %v2798 = vpop.f32.mrb[0].mxu0
      %2799 = vmatprep.mubr.f32.mxu0 0.0
      %2800 = vmatmul.mubr.f32.gmra.mrb[0].mxu0 %v2635
      %v2801 = vpop.f32.mrb[0].mxu0
      %v2802 = vadd.f32 0.0, %v2801
      %v2803 = vpop.f32.mrb[0].mxu0
      %2804 = vmatprep.mubr.f32.mxu0 0.0
      %2805 = vmatmul.mubr.f32.gmra.mrb[0].mxu0 %v2638
      %v2806 = vpop.f32.mrb[0].mxu0
      %v2807 = vadd.f32 0.0, %v2806
      %v2808 = vpop.f32.mrb[0].mxu0
      %2809 = vmatprep.mubr.f32.mxu0 0.0
      %2810 = vmatmul.mubr.f32.gmra.mrb[0].mxu0 %v2641
      %v2811 = vpop.f32.mrb[0].mxu0
      %v2812 = vadd.f32 0.0, %v2811
      %v2813 = vpop.f32.mrb[0].mxu0
      %2814 = vmatprep.mubr.f32.mxu0 0.0
      %2815 = vmatmul.mubr.f32.gmra.mrb[0].mxu0 %v2644
      %v2816 = vpop.f32.mrb[0].mxu0
      %v2817 = vadd.f32 0.0, %v2816
      %v2818 = vpop.f32.mrb[0].mxu0
      %2819 = vmatprep.mubr.f32.mxu0 0.0
      %2820 = vmatmul.mubr.f32.gmra.mrb[0].mxu0 %v2647
      %v2821 = vpop.f32.mrb[0].mxu0
      %v2822 = vadd.f32 0.0, %v2821
      %v2823 = vpop.f32.mrb[0].mxu0
      %2824 = vmatprep.mubr.f32.mxu0 0.0
      %2825 = vmatmul.mubr.f32.gmra.mrb[0].mxu0 %v2650
      %v2826 = vpop.f32.mrb[0].mxu0
      %v2827 = vadd.f32 0.0, %v2826
      %v2828 = vpop.f32.mrb[0].mxu0
      %2829 = vmatprep.mubr.f32.mxu0 0.0
      %2830 = vmatmul.mubr.f32.gmra.mrb[0].mxu0 %v2653
      %v2831 = vpop.f32.mrb[0].mxu0
      %v2832 = vadd.f32 0.0, %v2831
      %v2833 = vpop.f32.mrb[0].mxu0
      %2834 = vmatprep.mubr.f32.mxu0 0.0
      %2835 = vmatmul.mubr.f32.gmra.mrb[0].mxu0 %v2656
      %v2836 = vpop.f32.mrb[0].mxu0
      %v2837 = vadd.f32 0.0, %v2836
      %v2838 = vpop.f32.mrb[0].mxu0
      %2839 = vmatprep.mubr.f32.mxu0 0.0
      %2840 = vmatmul.mubr.f32.gmra.mrb[0].mxu0 %v2659
      %v2841 = vpop.f32.mrb[0].mxu0
      %v2842 = vadd.f32 0.0, %v2841
      %v2843 = vpop.f32.mrb[0].mxu0
      %2844 = vmatprep.mubr.f32.mxu0 0.0
      %2845 = vmatmul.mubr.f32.gmra.mrb[0].mxu0 %v2662
      %v2846 = vpop.f32.mrb[0].mxu0
      %v2847 = vadd.f32 0.0, %v2846
      %v2848 = vpop.f32.mrb[0].mxu0
      %2849 = vmatprep.mubr.f32.mxu0 0.0
      %2850 = vmatmul.mubr.f32.gmra.mrb[0].mxu0 %v2665
      %v2851 = vpop.f32.mrb[0].mxu0
      %v2852 = vadd.f32 0.0, %v2851
      %v2853 = vpop.f32.mrb[0].mxu0
      %2854 = vmatprep.mubr.f32.mxu0 0.0
      %2855 = vmatmul.mubr.f32.gmra.mrb[0].mxu0 %v2668
      %v2856 = vpop.f32.mrb[0].mxu0
      %v2857 = vadd.f32 0.0, %v2856
      %v2858 = vpop.f32.mrb[0].mxu0
      %2859 = vmatprep.mubr.f32.mxu0 0.0
      %2860 = vmatmul.mubr.f32.gmra.mrb[0].mxu0 %v2671
      %v2861 = vpop.f32.mrb[0].mxu0
      %v2862 = vadd.f32 0.0, %v2861
      %v2863 = vpop.f32.mrb[0].mxu0
      %2864 = vmatprep.mubr.f32.mxu0 0.0
      %2865 = vmatmul.mubr.f32.gmra.mrb[0].mxu0 %v2674
      %v2866 = vpop.f32.mrb[0].mxu0
      %v2867 = vadd.f32 0.0, %v2866
      %v2868 = vpop.f32.mrb[0].mxu0
      %2869 = vmatprep.mubr.f32.mxu0 0.0
      %2870 = vmatmul.mubr.f32.gmra.mrb[0].mxu0 %v2677
      %v2871 = vpop.f32.mrb[0].mxu0
      %v2872 = vadd.f32 0.0, %v2871
      %v2873 = vpop.f32.mrb[0].mxu0
      %2874 = vmatprep.mubr.f32.mxu0 0.0
      %2875 = vmatmul.mubr.f32.gmra.mrb[0].mxu0 %v2680
      %v2876 = vpop.f32.mrb[0].mxu0
      %v2877 = vadd.f32 0.0, %v2876
      %v2878 = vpop.f32.mrb[0].mxu0
      %2879 = vmatprep.mubr.f32.mxu0 0.0
      %2880 = vmatmul.mubr.f32.gmra.mrb[0].mxu0 %v2683
      %v2881 = vpop.f32.mrb[0].mxu0
      %v2882 = vadd.f32 0.0, %v2881
      %v2883 = vpop.f32.mrb[0].mxu0
      %2884 = vmatprep.mubr.f32.mxu0 0.0
      %2885 = vmatmul.mubr.f32.gmra.mrb[0].mxu0 %v2686
      %v2886 = vpop.f32.mrb[0].mxu0
      %v2887 = vadd.f32 0.0, %v2886
      %v2888 = vpop.f32.mrb[0].mxu0
      %2889 = vmatprep.mubr.f32.mxu0 0.0
      %2890 = vmatmul.mubr.f32.gmra.mrb[0].mxu0 %v2689
      %v2891 = vpop.f32.mrb[0].mxu0
      %v2892 = vadd.f32 0.0, %v2891
      %v2893 = vpop.f32.mrb[0].mxu0
      %2894 = vmatprep.mubr.f32.mxu0 0.0
      %2895 = vmatmul.mubr.f32.gmra.mrb[0].mxu0 %v2692
      %v2896 = vpop.f32.mrb[0].mxu0
      %v2897 = vadd.f32 0.0, %v2896
      %v2898 = vpop.f32.mrb[0].mxu0
      %2899 = vmatprep.mubr.f32.mxu0 0.0
      %2900 = vmatmul.mubr.f32.gmra.mrb[0].mxu0 %v2695
      %v2901 = vpop.f32.mrb[0].mxu0
      %v2902 = vadd.f32 0.0, %v2901
      %v2903 = vpop.f32.mrb[0].mxu0
      %2904 = vmatprep.mubr.f32.mxu0 0.0
      %2905 = vmatmul.mubr.f32.gmra.mrb[0].mxu0 %v2698
      %v2906 = vpop.f32.mrb[0].mxu0
      %v2907 = vadd.f32 0.0, %v2906
      %v2908 = vpop.f32.mrb[0].mxu0
      %2909 = vmatprep.mubr.f32.mxu0 0.0
      %2910 = vmatmul.mubr.f32.gmra.mrb[0].mxu0 %v2701
      %v2911 = vpop.f32.mrb[0].mxu0
      %v2912 = vadd.f32 0.0, %v2911
      %v2913 = vpop.f32.mrb[0].mxu0
      %2914 = vmatprep.mubr.f32.mxu0 0.0
      %2915 = vmatmul.mubr.f32.gmra.mrb[0].mxu0 %v2704
      %v2916 = vpop.f32.mrb[0].mxu0
      %v2917 = vadd.f32 0.0, %v2916
      %v2918 = vpop.f32.mrb[0].mxu0
      %2919 = vmatprep.mubr.f32.mxu0 0.0
      %2920 = vmatmul.mubr.f32.gmra.mrb[0].mxu0 %v2707
      %v2921 = vpop.f32.mrb[0].mxu0
      %v2922 = vadd.f32 0.0, %v2921
      %v2923 = vpop.f32.mrb[0].mxu0
      %2924 = vmatprep.mubr.f32.mxu0 0.0
      %2925 = vmatmul.mubr.f32.gmra.mrb[0].mxu0 %v2710
      %v2926 = vpop.f32.mrb[0].mxu0
      %v2927 = vadd.f32 0.0, %v2926
      %v2928 = vpop.f32.mrb[0].mxu0
      %2929 = vmatprep.mubr.f32.mxu0 0.0
      %2930 = vmatmul.mubr.f32.gmra.mrb[0].mxu0 %v2713
      %v2931 = vpop.f32.mrb[0].mxu0
      %v2932 = vadd.f32 0.0, %v2931
      %v2933 = vpop.f32.mrb[0].mxu0
      %2934 = vmatprep.mubr.f32.mxu0 0.0
      %2935 = vmatmul.mubr.f32.gmra.mrb[0].mxu0 %v2716
      %v2936 = vpop.f32.mrb[0].mxu0
      %v2937 = vadd.f32 0.0, %v2936
      %v2938 = vpop.f32.mrb[0].mxu0
      %2939 = vmatprep.mubr.f32.mxu0 0.0
      %2940 = vmatmul.mubr.f32.gmra.mrb[0].mxu0 %v2719
      %v2941 = vpop.f32.mrb[0].mxu0
      %v2942 = vadd.f32 0.0, %v2941
      %v2943 = vpop.f32.mrb[0].mxu0
      %2944 = vmatprep.mubr.f32.mxu0 0.0
      %2945 = vmatmul.mubr.f32.gmra.mrb[0].mxu0 %v2722
      %v2946 = vpop.f32.mrb[0].mxu0
      %v2947 = vadd.f32 0.0, %v2946
      %v2948 = vpop.f32.mrb[0].mxu0
      %2949 = vmatprep.mubr.f32.mxu0 0.0
      %2950 = vmatmul.mubr.f32.gmra.mrb[0].mxu0 %v2725
      %v2951 = vpop.f32.mrb[0].mxu0
      %v2952 = vadd.f32 0.0, %v2951
      %v2953 = vpop.f32.mrb[0].mxu0
      %2954 = vdwg.mxu0
      %v2955 = vadd.f32 %v2564, %v2797
      %v2956 = vadd.f32 %v2565, %v2802
      %v2957 = vadd.f32 %v2566, %v2807
      %v2958 = vadd.f32 %v2567, %v2812
      %v2959 = vadd.f32 %v2568, %v2817
      %v2960 = vadd.f32 %v2569, %v2822
      %v2961 = vadd.f32 %v2570, %v2827
      %v2962 = vadd.f32 %v2571, %v2832
      %v2963 = vadd.f32 %v2572, %v2837
      %v2964 = vadd.f32 %v2573, %v2842
      %v2965 = vadd.f32 %v2574, %v2847
      %v2966 = vadd.f32 %v2575, %v2852
      %v2967 = vadd.f32 %v2576, %v2857
      %v2968 = vadd.f32 %v2577, %v2862
      %v2969 = vadd.f32 %v2578, %v2867
      %v2970 = vadd.f32 %v2579, %v2872
      %v2971 = vadd.f32 %v2580, %v2877
      %v2972 = vadd.f32 %v2581, %v2882
      %v2973 = vadd.f32 %v2582, %v2887
      %v2974 = vadd.f32 %v2583, %v2892
      %v2975 = vadd.f32 %v2584, %v2897
      %v2976 = vadd.f32 %v2585, %v2902
      %v2977 = vadd.f32 %v2586, %v2907
      %v2978 = vadd.f32 %v2587, %v2912
      %v2979 = vadd.f32 %v2588, %v2917
      %v2980 = vadd.f32 %v2589, %v2922
      %v2981 = vadd.f32 %v2590, %v2927
      %v2982 = vadd.f32 %v2591, %v2932
      %v2983 = vadd.f32 %v2592, %v2937
      %v2984 = vadd.f32 %v2593, %v2942
      %v2985 = vadd.f32 %v2594, %v2947
      %v2986 = vadd.f32 %v2595, %v2952
      %v2987 = vld [vmem:[%s2596 + $0x1] sm:$0xff]
      %v2988 = vld [vmem:[%s2596 + $0x9] sm:$0xff]
      %v2989 = vld [vmem:[%s2596 + $0x19] sm:$0xff]
      %v2990 = vld [vmem:[%s2596 + $0x21] sm:$0xff]
      %v2991 = vld [vmem:[%s2596 + $0x31] sm:$0xff]
      %v2992 = vld [vmem:[%s2596 + $0x39] sm:$0xff]
      %v2993 = vld [vmem:[%s2596 + $0x49] sm:$0xff]
      %v2994 = vld [vmem:[%s2596 + $0x51] sm:$0xff]
      %v2995 = vld [vmem:[%s2596 + $0x61] sm:$0xff]
      %v2996 = vld [vmem:[%s2596 + $0x69] sm:$0xff]
      %v2997 = vld [vmem:[%s2596 + $0x79] sm:$0xff]
      %v2998 = vld [vmem:[%s2596 + $0x81] sm:$0xff]
      %v2999 = vld [vmem:[%s2596 + $0x91] sm:$0xff]
      %v3000 = vld [vmem:[%s2596 + $0x99] sm:$0xff]
      %v3001 = vld [vmem:[%s2596 + $0xa9] sm:$0xff]
      %v3002 = vld [vmem:[%s2596 + $0xb1] sm:$0xff]
      %v3003 = vld [vmem:[%s2596 + $0xc1] sm:$0xff]
      %v3004 = vld [vmem:[%s2596 + $0xc9] sm:$0xff]
      %v3005 = vld [vmem:[%s2596 + $0xd9] sm:$0xff]
      %v3006 = vld [vmem:[%s2596 + $0xe1] sm:$0xff]
      %v3007 = vld [vmem:[%s2596 + $0xf1] sm:$0xff]
      %v3008 = vld [vmem:[%s2596 + $0xf9] sm:$0xff]
      %v3009 = vld [vmem:[%s2596 + $0x109] sm:$0xff]
      %v3010 = vld [vmem:[%s2596 + $0x111] sm:$0xff]
      %v3011 = vld [vmem:[%s2596 + $0x121] sm:$0xff]
      %v3012 = vld [vmem:[%s2596 + $0x129] sm:$0xff]
      %v3013 = vld [vmem:[%s2596 + $0x139] sm:$0xff]
      %v3014 = vld [vmem:[%s2596 + $0x141] sm:$0xff]
      %v3015 = vld [vmem:[%s2596 + $0x151] sm:$0xff]
      %v3016 = vld [vmem:[%s2596 + $0x159] sm:$0xff]
      %v3017 = vld [vmem:[%s2596 + $0x169] sm:$0xff]
      %v3018 = vld [vmem:[%s2596 + $0x171] sm:$0xff]
      %s3019 = scalar_lea.vmem %s1, 28
      %v3020 = vld [vmem:[%s3019] sm:$0xf]
      %v3022 = vsel %vm241, %v2987, 0
      %v3025 = vsel %vm241, %v2988, 0
      %v3028 = vsel %vm241, %v2989, 0
      %v3031 = vsel %vm241, %v2990, 0
      %v3034 = vsel %vm241, %v2991, 0
      %v3037 = vsel %vm241, %v2992, 0
      %v3040 = vsel %vm241, %v2993, 0
      %v3043 = vsel %vm241, %v2994, 0
      %v3046 = vsel %vm241, %v2995, 0
      %v3049 = vsel %vm241, %v2996, 0
      %v3052 = vsel %vm241, %v2997, 0
      %v3055 = vsel %vm241, %v2998, 0
      %v3058 = vsel %vm241, %v2999, 0
      %v3061 = vsel %vm241, %v3000, 0
      %v3064 = vsel %vm241, %v3001, 0
      %v3067 = vsel %vm241, %v3002, 0
      %v3070 = vsel %vm241, %v3003, 0
      %v3073 = vsel %vm241, %v3004, 0
      %v3076 = vsel %vm241, %v3005, 0
      %v3079 = vsel %vm241, %v3006, 0
      %v3082 = vsel %vm241, %v3007, 0
      %v3085 = vsel %vm241, %v3008, 0
      %v3088 = vsel %vm241, %v3009, 0
      %v3091 = vsel %vm241, %v3010, 0
      %v3094 = vsel %vm241, %v3011, 0
      %v3097 = vsel %vm241, %v3012, 0
      %v3100 = vsel %vm241, %v3013, 0
      %v3103 = vsel %vm241, %v3014, 0
      %v3106 = vsel %vm241, %v3015, 0
      %v3109 = vsel %vm241, %v3016, 0
      %v3112 = vsel %vm241, %v3017, 0
      %v3115 = vsel %vm241, %v3018, 0
      %v3118 = vsel %vm483, %v3020, 0
      %3120 = vmatprep.subr.mxu0 0.0
      %3121 = vmatpush1.msra.mxu0 %v3118
      %3122 = vmatprep.subr.mxu0 0.0
      %3123 = vmatpush1.msra.mxu0 0.0
      %3124 = vmatprep.subr.mxu0 0.0
      %3125 = vmatpush1.msra.mxu0 0.0
      %3126 = vmatprep.subr.mxu0 0.0
      %3127 = vmatpush1.msra.mxu0 0.0
      %3128 = vmatprep.subr.mxu0 0.0
      %3129 = vmatpush1.msra.mxu0 0.0
      %3130 = vmatprep.subr.mxu0 0.0
      %3131 = vmatpush1.msra.mxu0 0.0
      %3132 = vmatprep.subr.mxu0 0.0
      %3133 = vmatpush1.msra.mxu0 0.0
      %3134 = vmatprep.subr.mxu0 0.0
      %3135 = vmatpush1.msra.mxu0 0.0
      %3136 = vmatprep.subr.mxu0 0.0
      %3137 = vmatpush1.msra.mxu0 0.0
      %3138 = vmatprep.subr.mxu0 0.0
      %3139 = vmatpush1.msra.mxu0 0.0
      %3140 = vmatprep.subr.mxu0 0.0
      %3141 = vmatpush1.msra.mxu0 0.0
      %3142 = vmatprep.subr.mxu0 0.0
      %3143 = vmatpush1.msra.mxu0 0.0
      %3144 = vmatprep.subr.mxu0 0.0
      %3145 = vmatpush1.msra.mxu0 0.0
      %3146 = vmatprep.subr.mxu0 0.0
      %3147 = vmatpush1.msra.mxu0 0.0
      %3148 = vmatprep.subr.mxu0 0.0
      %3149 = vmatpush1.msra.mxu0 0.0
      %3150 = vmatprep.subr.mxu0 0.0
      %3151 = vmatpush1.msra.mxu0 0.0
      %3152 = vmatprep.subr.mxu0 0.0
      %3153 = vmatpush1.msra.mxu0 0.0
      %3154 = vmatprep.subr.mxu0 0.0
      %3155 = vmatpush1.msra.mxu0 0.0
      %3156 = vmatprep.subr.mxu0 0.0
      %3157 = vmatpush1.msra.mxu0 0.0
      %3158 = vmatprep.subr.mxu0 0.0
      %3159 = vmatpush1.msra.mxu0 0.0
      %3160 = vmatprep.subr.mxu0 0.0
      %3161 = vmatpush1.msra.mxu0 0.0
      %3162 = vmatprep.subr.mxu0 0.0
      %3163 = vmatpush1.msra.mxu0 0.0
      %3164 = vmatprep.subr.mxu0 0.0
      %3165 = vmatpush1.msra.mxu0 0.0
      %3166 = vmatprep.subr.mxu0 0.0
      %3167 = vmatpush1.msra.mxu0 0.0
      %3168 = vmatprep.subr.mxu0 0.0
      %3169 = vmatpush1.msra.mxu0 0.0
      %3170 = vmatprep.subr.mxu0 0.0
      %3171 = vmatpush1.msra.mxu0 0.0
      %3172 = vmatprep.subr.mxu0 0.0
      %3173 = vmatpush1.msra.mxu0 0.0
      %3174 = vmatprep.subr.mxu0 0.0
      %3175 = vmatpush1.msra.mxu0 0.0
      %3176 = vmatprep.subr.mxu0 0.0
      %3177 = vmatpush1.msra.mxu0 0.0
      %3178 = vmatprep.subr.mxu0 0.0
      %3179 = vmatpush1.msra.mxu0 0.0
      %3180 = vmatprep.subr.mxu0 0.0
      %3181 = vmatpush1.msra.mxu0 0.0
      %3182 = vmatprep.subr.mxu0 0.0
      %3183 = vmatpush1.msra.mxu0 0.0
      %3184 = vmatprep.mubr.f32.mxu0 0.0
      %3185 = vmatmul.mubr.f32.gmra.mrb[0].mxu0 %v3022
      %v3186 = vpop.f32.mrb[0].mxu0
      %v3187 = vadd.f32 0.0, %v3186
      %v3188 = vpop.f32.mrb[0].mxu0
      %3189 = vmatprep.mubr.f32.mxu0 0.0
      %3190 = vmatmul.mubr.f32.gmra.mrb[0].mxu0 %v3025
      %v3191 = vpop.f32.mrb[0].mxu0
      %v3192 = vadd.f32 0.0, %v3191
      %v3193 = vpop.f32.mrb[0].mxu0
      %3194 = vmatprep.mubr.f32.mxu0 0.0
      %3195 = vmatmul.mubr.f32.gmra.mrb[0].mxu0 %v3028
      %v3196 = vpop.f32.mrb[0].mxu0
      %v3197 = vadd.f32 0.0, %v3196
      %v3198 = vpop.f32.mrb[0].mxu0
      %3199 = vmatprep.mubr.f32.mxu0 0.0
      %3200 = vmatmul.mubr.f32.gmra.mrb[0].mxu0 %v3031
      %v3201 = vpop.f32.mrb[0].mxu0
      %v3202 = vadd.f32 0.0, %v3201
      %v3203 = vpop.f32.mrb[0].mxu0
      %3204 = vmatprep.mubr.f32.mxu0 0.0
      %3205 = vmatmul.mubr.f32.gmra.mrb[0].mxu0 %v3034
      %v3206 = vpop.f32.mrb[0].mxu0
      %v3207 = vadd.f32 0.0, %v3206
      %v3208 = vpop.f32.mrb[0].mxu0
      %3209 = vmatprep.mubr.f32.mxu0 0.0
      %3210 = vmatmul.mubr.f32.gmra.mrb[0].mxu0 %v3037
      %v3211 = vpop.f32.mrb[0].mxu0
      %v3212 = vadd.f32 0.0, %v3211
      %v3213 = vpop.f32.mrb[0].mxu0
      %3214 = vmatprep.mubr.f32.mxu0 0.0
      %3215 = vmatmul.mubr.f32.gmra.mrb[0].mxu0 %v3040
      %v3216 = vpop.f32.mrb[0].mxu0
      %v3217 = vadd.f32 0.0, %v3216
      %v3218 = vpop.f32.mrb[0].mxu0
      %3219 = vmatprep.mubr.f32.mxu0 0.0
      %3220 = vmatmul.mubr.f32.gmra.mrb[0].mxu0 %v3043
      %v3221 = vpop.f32.mrb[0].mxu0
      %v3222 = vadd.f32 0.0, %v3221
      %v3223 = vpop.f32.mrb[0].mxu0
      %3224 = vmatprep.mubr.f32.mxu0 0.0
      %3225 = vmatmul.mubr.f32.gmra.mrb[0].mxu0 %v3046
      %v3226 = vpop.f32.mrb[0].mxu0
      %v3227 = vadd.f32 0.0, %v3226
      %v3228 = vpop.f32.mrb[0].mxu0
      %3229 = vmatprep.mubr.f32.mxu0 0.0
      %3230 = vmatmul.mubr.f32.gmra.mrb[0].mxu0 %v3049
      %v3231 = vpop.f32.mrb[0].mxu0
      %v3232 = vadd.f32 0.0, %v3231
      %v3233 = vpop.f32.mrb[0].mxu0
      %3234 = vmatprep.mubr.f32.mxu0 0.0
      %3235 = vmatmul.mubr.f32.gmra.mrb[0].mxu0 %v3052
      %v3236 = vpop.f32.mrb[0].mxu0
      %v3237 = vadd.f32 0.0, %v3236
      %v3238 = vpop.f32.mrb[0].mxu0
      %3239 = vmatprep.mubr.f32.mxu0 0.0
      %3240 = vmatmul.mubr.f32.gmra.mrb[0].mxu0 %v3055
      %v3241 = vpop.f32.mrb[0].mxu0
      %v3242 = vadd.f32 0.0, %v3241
      %v3243 = vpop.f32.mrb[0].mxu0
      %3244 = vmatprep.mubr.f32.mxu0 0.0
      %3245 = vmatmul.mubr.f32.gmra.mrb[0].mxu0 %v3058
      %v3246 = vpop.f32.mrb[0].mxu0
      %v3247 = vadd.f32 0.0, %v3246
      %v3248 = vpop.f32.mrb[0].mxu0
      %3249 = vmatprep.mubr.f32.mxu0 0.0
      %3250 = vmatmul.mubr.f32.gmra.mrb[0].mxu0 %v3061
      %v3251 = vpop.f32.mrb[0].mxu0
      %v3252 = vadd.f32 0.0, %v3251
      %v3253 = vpop.f32.mrb[0].mxu0
      %3254 = vmatprep.mubr.f32.mxu0 0.0
      %3255 = vmatmul.mubr.f32.gmra.mrb[0].mxu0 %v3064
      %v3256 = vpop.f32.mrb[0].mxu0
      %v3257 = vadd.f32 0.0, %v3256
      %v3258 = vpop.f32.mrb[0].mxu0
      %3259 = vmatprep.mubr.f32.mxu0 0.0
      %3260 = vmatmul.mubr.f32.gmra.mrb[0].mxu0 %v3067
      %v3261 = vpop.f32.mrb[0].mxu0
      %v3262 = vadd.f32 0.0, %v3261
      %v3263 = vpop.f32.mrb[0].mxu0
      %3264 = vmatprep.mubr.f32.mxu0 0.0
      %3265 = vmatmul.mubr.f32.gmra.mrb[0].mxu0 %v3070
      %v3266 = vpop.f32.mrb[0].mxu0
      %v3267 = vadd.f32 0.0, %v3266
      %v3268 = vpop.f32.mrb[0].mxu0
      %3269 = vmatprep.mubr.f32.mxu0 0.0
      %3270 = vmatmul.mubr.f32.gmra.mrb[0].mxu0 %v3073
      %v3271 = vpop.f32.mrb[0].mxu0
      %v3272 = vadd.f32 0.0, %v3271
      %v3273 = vpop.f32.mrb[0].mxu0
      %3274 = vmatprep.mubr.f32.mxu0 0.0
      %3275 = vmatmul.mubr.f32.gmra.mrb[0].mxu0 %v3076
      %v3276 = vpop.f32.mrb[0].mxu0
      %v3277 = vadd.f32 0.0, %v3276
      %v3278 = vpop.f32.mrb[0].mxu0
      %3279 = vmatprep.mubr.f32.mxu0 0.0
      %3280 = vmatmul.mubr.f32.gmra.mrb[0].mxu0 %v3079
      %v3281 = vpop.f32.mrb[0].mxu0
      %v3282 = vadd.f32 0.0, %v3281
      %v3283 = vpop.f32.mrb[0].mxu0
      %3284 = vmatprep.mubr.f32.mxu0 0.0
      %3285 = vmatmul.mubr.f32.gmra.mrb[0].mxu0 %v3082
      %v3286 = vpop.f32.mrb[0].mxu0
      %v3287 = vadd.f32 0.0, %v3286
      %v3288 = vpop.f32.mrb[0].mxu0
      %3289 = vmatprep.mubr.f32.mxu0 0.0
      %3290 = vmatmul.mubr.f32.gmra.mrb[0].mxu0 %v3085
      %v3291 = vpop.f32.mrb[0].mxu0
      %v3292 = vadd.f32 0.0, %v3291
      %v3293 = vpop.f32.mrb[0].mxu0
      %3294 = vmatprep.mubr.f32.mxu0 0.0
      %3295 = vmatmul.mubr.f32.gmra.mrb[0].mxu0 %v3088
      %v3296 = vpop.f32.mrb[0].mxu0
      %v3297 = vadd.f32 0.0, %v3296
      %v3298 = vpop.f32.mrb[0].mxu0
      %3299 = vmatprep.mubr.f32.mxu0 0.0
      %3300 = vmatmul.mubr.f32.gmra.mrb[0].mxu0 %v3091
      %v3301 = vpop.f32.mrb[0].mxu0
      %v3302 = vadd.f32 0.0, %v3301
      %v3303 = vpop.f32.mrb[0].mxu0
      %3304 = vmatprep.mubr.f32.mxu0 0.0
      %3305 = vmatmul.mubr.f32.gmra.mrb[0].mxu0 %v3094
      %v3306 = vpop.f32.mrb[0].mxu0
      %v3307 = vadd.f32 0.0, %v3306
      %v3308 = vpop.f32.mrb[0].mxu0
      %3309 = vmatprep.mubr.f32.mxu0 0.0
      %3310 = vmatmul.mubr.f32.gmra.mrb[0].mxu0 %v3097
      %v3311 = vpop.f32.mrb[0].mxu0
      %v3312 = vadd.f32 0.0, %v3311
      %v3313 = vpop.f32.mrb[0].mxu0
      %3314 = vmatprep.mubr.f32.mxu0 0.0
      %3315 = vmatmul.mubr.f32.gmra.mrb[0].mxu0 %v3100
      %v3316 = vpop.f32.mrb[0].mxu0
      %v3317 = vadd.f32 0.0, %v3316
      %v3318 = vpop.f32.mrb[0].mxu0
      %3319 = vmatprep.mubr.f32.mxu0 0.0
      %3320 = vmatmul.mubr.f32.gmra.mrb[0].mxu0 %v3103
      %v3321 = vpop.f32.mrb[0].mxu0
      %v3322 = vadd.f32 0.0, %v3321
      %v3323 = vpop.f32.mrb[0].mxu0
      %3324 = vmatprep.mubr.f32.mxu0 0.0
      %3325 = vmatmul.mubr.f32.gmra.mrb[0].mxu0 %v3106
      %v3326 = vpop.f32.mrb[0].mxu0
      %v3327 = vadd.f32 0.0, %v3326
      %v3328 = vpop.f32.mrb[0].mxu0
      %3329 = vmatprep.mubr.f32.mxu0 0.0
      %3330 = vmatmul.mubr.f32.gmra.mrb[0].mxu0 %v3109
      %v3331 = vpop.f32.mrb[0].mxu0
      %v3332 = vadd.f32 0.0, %v3331
      %v3333 = vpop.f32.mrb[0].mxu0
      %3334 = vmatprep.mubr.f32.mxu0 0.0
      %3335 = vmatmul.mubr.f32.gmra.mrb[0].mxu0 %v3112
      %v3336 = vpop.f32.mrb[0].mxu0
      %v3337 = vadd.f32 0.0, %v3336
      %v3338 = vpop.f32.mrb[0].mxu0
      %3339 = vmatprep.mubr.f32.mxu0 0.0
      %3340 = vmatmul.mubr.f32.gmra.mrb[0].mxu0 %v3115
      %v3341 = vpop.f32.mrb[0].mxu0
      %v3342 = vadd.f32 0.0, %v3341
      %v3343 = vpop.f32.mrb[0].mxu0
      %3344 = vdwg.mxu0
      %v3345 = vadd.f32 %v2955, %v3187
      %v3346 = vadd.f32 %v2956, %v3192
      %v3347 = vadd.f32 %v2957, %v3197
      %v3348 = vadd.f32 %v2958, %v3202
      %v3349 = vadd.f32 %v2959, %v3207
      %v3350 = vadd.f32 %v2960, %v3212
      %v3351 = vadd.f32 %v2961, %v3217
      %v3352 = vadd.f32 %v2962, %v3222
      %v3353 = vadd.f32 %v2963, %v3227
      %v3354 = vadd.f32 %v2964, %v3232
      %v3355 = vadd.f32 %v2965, %v3237
      %v3356 = vadd.f32 %v2966, %v3242
      %v3357 = vadd.f32 %v2967, %v3247
      %v3358 = vadd.f32 %v2968, %v3252
      %v3359 = vadd.f32 %v2969, %v3257
      %v3360 = vadd.f32 %v2970, %v3262
      %v3361 = vadd.f32 %v2971, %v3267
      %v3362 = vadd.f32 %v2972, %v3272
      %v3363 = vadd.f32 %v2973, %v3277
      %v3364 = vadd.f32 %v2974, %v3282
      %v3365 = vadd.f32 %v2975, %v3287
      %v3366 = vadd.f32 %v2976, %v3292
      %v3367 = vadd.f32 %v2977, %v3297
      %v3368 = vadd.f32 %v2978, %v3302
      %v3369 = vadd.f32 %v2979, %v3307
      %v3370 = vadd.f32 %v2980, %v3312
      %v3371 = vadd.f32 %v2981, %v3317
      %v3372 = vadd.f32 %v2982, %v3322
      %v3373 = vadd.f32 %v2983, %v3327
      %v3374 = vadd.f32 %v2984, %v3332
      %v3375 = vadd.f32 %v2985, %v3337
      %v3376 = vadd.f32 %v2986, %v3342
      %v3377 = vld [vmem:[%s2596 + $0x2] sm:$0xff]
      %v3378 = vld [vmem:[%s2596 + $0xa] sm:$0xff]
      %v3379 = vld [vmem:[%s2596 + $0x1a] sm:$0xff]
      %v3380 = vld [vmem:[%s2596 + $0x22] sm:$0xff]
      %v3381 = vld [vmem:[%s2596 + $0x32] sm:$0xff]
      %v3382 = vld [vmem:[%s2596 + $0x3a] sm:$0xff]
      %v3383 = vld [vmem:[%s2596 + $0x4a] sm:$0xff]
      %v3384 = vld [vmem:[%s2596 + $0x52] sm:$0xff]
      %v3385 = vld [vmem:[%s2596 + $0x62] sm:$0xff]
      %v3386 = vld [vmem:[%s2596 + $0x6a] sm:$0xff]
      %v3387 = vld [vmem:[%s2596 + $0x7a] sm:$0xff]
      %v3388 = vld [vmem:[%s2596 + $0x82] sm:$0xff]
      %v3389 = vld [vmem:[%s2596 + $0x92] sm:$0xff]
      %v3390 = vld [vmem:[%s2596 + $0x9a] sm:$0xff]
      %v3391 = vld [vmem:[%s2596 + $0xaa] sm:$0xff]
      %v3392 = vld [vmem:[%s2596 + $0xb2] sm:$0xff]
      %v3393 = vld [vmem:[%s2596 + $0xc2] sm:$0xff]
      %v3394 = vld [vmem:[%s2596 + $0xca] sm:$0xff]
      %v3395 = vld [vmem:[%s2596 + $0xda] sm:$0xff]
      %v3396 = vld [vmem:[%s2596 + $0xe2] sm:$0xff]
      %v3397 = vld [vmem:[%s2596 + $0xf2] sm:$0xff]
      %v3398 = vld [vmem:[%s2596 + $0xfa] sm:$0xff]
      %v3399 = vld [vmem:[%s2596 + $0x10a] sm:$0xff]
      %v3400 = vld [vmem:[%s2596 + $0x112] sm:$0xff]
      %v3401 = vld [vmem:[%s2596 + $0x122] sm:$0xff]
      %v3402 = vld [vmem:[%s2596 + $0x12a] sm:$0xff]
      %v3403 = vld [vmem:[%s2596 + $0x13a] sm:$0xff]
      %v3404 = vld [vmem:[%s2596 + $0x142] sm:$0xff]
      %v3405 = vld [vmem:[%s2596 + $0x152] sm:$0xff]
      %v3406 = vld [vmem:[%s2596 + $0x15a] sm:$0xff]
      %v3407 = vld [vmem:[%s2596 + $0x16a] sm:$0xff]
      %v3408 = vld [vmem:[%s2596 + $0x172] sm:$0xff]
      %s3409 = scalar_lea.vmem %s1, 32
      %v3410 = vld [vmem:[%s3409] sm:$0xf]
      %v3412 = vsel %vm241, %v3377, 0
      %v3415 = vsel %vm241, %v3378, 0
      %v3418 = vsel %vm241, %v3379, 0
      %v3421 = vsel %vm241, %v3380, 0
      %v3424 = vsel %vm241, %v3381, 0
      %v3427 = vsel %vm241, %v3382, 0
      %v3430 = vsel %vm241, %v3383, 0
      %v3433 = vsel %vm241, %v3384, 0
      %v3436 = vsel %vm241, %v3385, 0
      %v3439 = vsel %vm241, %v3386, 0
      %v3442 = vsel %vm241, %v3387, 0
      %v3445 = vsel %vm241, %v3388, 0
      %v3448 = vsel %vm241, %v3389, 0
      %v3451 = vsel %vm241, %v3390, 0
      %v3454 = vsel %vm241, %v3391, 0
      %v3457 = vsel %vm241, %v3392, 0
      %v3460 = vsel %vm241, %v3393, 0
      %v3463 = vsel %vm241, %v3394, 0
      %v3466 = vsel %vm241, %v3395, 0
      %v3469 = vsel %vm241, %v3396, 0
      %v3472 = vsel %vm241, %v3397, 0
      %v3475 = vsel %vm241, %v3398, 0
      %v3478 = vsel %vm241, %v3399, 0
      %v3481 = vsel %vm241, %v3400, 0
      %v3484 = vsel %vm241, %v3401, 0
      %v3487 = vsel %vm241, %v3402, 0
      %v3490 = vsel %vm241, %v3403, 0
      %v3493 = vsel %vm241, %v3404, 0
      %v3496 = vsel %vm241, %v3405, 0
      %v3499 = vsel %vm241, %v3406, 0
      %v3502 = vsel %vm241, %v3407, 0
      %v3505 = vsel %vm241, %v3408, 0
      %v3508 = vsel %vm483, %v3410, 0
      %3510 = vmatprep.subr.mxu0 0.0
      %3511 = vmatpush1.msra.mxu0 %v3508
      %3512 = vmatprep.subr.mxu0 0.0
      %3513 = vmatpush1.msra.mxu0 0.0
      %3514 = vmatprep.subr.mxu0 0.0
      %3515 = vmatpush1.msra.mxu0 0.0
      %3516 = vmatprep.subr.mxu0 0.0
      %3517 = vmatpush1.msra.mxu0 0.0
      %3518 = vmatprep.subr.mxu0 0.0
      %3519 = vmatpush1.msra.mxu0 0.0
      %3520 = vmatprep.subr.mxu0 0.0
      %3521 = vmatpush1.msra.mxu0 0.0
      %3522 = vmatprep.subr.mxu0 0.0
      %3523 = vmatpush1.msra.mxu0 0.0
      %3524 = vmatprep.subr.mxu0 0.0
      %3525 = vmatpush1.msra.mxu0 0.0
      %3526 = vmatprep.subr.mxu0 0.0
      %3527 = vmatpush1.msra.mxu0 0.0
      %3528 = vmatprep.subr.mxu0 0.0
      %3529 = vmatpush1.msra.mxu0 0.0
      %3530 = vmatprep.subr.mxu0 0.0
      %3531 = vmatpush1.msra.mxu0 0.0
      %3532 = vmatprep.subr.mxu0 0.0
      %3533 = vmatpush1.msra.mxu0 0.0
      %3534 = vmatprep.subr.mxu0 0.0
      %3535 = vmatpush1.msra.mxu0 0.0
      %3536 = vmatprep.subr.mxu0 0.0
      %3537 = vmatpush1.msra.mxu0 0.0
      %3538 = vmatprep.subr.mxu0 0.0
      %3539 = vmatpush1.msra.mxu0 0.0
      %3540 = vmatprep.subr.mxu0 0.0
      %3541 = vmatpush1.msra.mxu0 0.0
      %3542 = vmatprep.subr.mxu0 0.0
      %3543 = vmatpush1.msra.mxu0 0.0
      %3544 = vmatprep.subr.mxu0 0.0
      %3545 = vmatpush1.msra.mxu0 0.0
      %3546 = vmatprep.subr.mxu0 0.0
      %3547 = vmatpush1.msra.mxu0 0.0
      %3548 = vmatprep.subr.mxu0 0.0
      %3549 = vmatpush1.msra.mxu0 0.0
      %3550 = vmatprep.subr.mxu0 0.0
      %3551 = vmatpush1.msra.mxu0 0.0
      %3552 = vmatprep.subr.mxu0 0.0
      %3553 = vmatpush1.msra.mxu0 0.0
      %3554 = vmatprep.subr.mxu0 0.0
      %3555 = vmatpush1.msra.mxu0 0.0
      %3556 = vmatprep.subr.mxu0 0.0
      %3557 = vmatpush1.msra.mxu0 0.0
      %3558 = vmatprep.subr.mxu0 0.0
      %3559 = vmatpush1.msra.mxu0 0.0
      %3560 = vmatprep.subr.mxu0 0.0
      %3561 = vmatpush1.msra.mxu0 0.0
      %3562 = vmatprep.subr.mxu0 0.0
      %3563 = vmatpush1.msra.mxu0 0.0
      %3564 = vmatprep.subr.mxu0 0.0
      %3565 = vmatpush1.msra.mxu0 0.0
      %3566 = vmatprep.subr.mxu0 0.0
      %3567 = vmatpush1.msra.mxu0 0.0
      %3568 = vmatprep.subr.mxu0 0.0
      %3569 = vmatpush1.msra.mxu0 0.0
      %3570 = vmatprep.subr.mxu0 0.0
      %3571 = vmatpush1.msra.mxu0 0.0
      %3572 = vmatprep.subr.mxu0 0.0
      %3573 = vmatpush1.msra.mxu0 0.0
      %3574 = vmatprep.mubr.f32.mxu0 0.0
      %3575 = vmatmul.mubr.f32.gmra.mrb[0].mxu0 %v3412
      %v3576 = vpop.f32.mrb[0].mxu0
      %v3577 = vadd.f32 0.0, %v3576
      %v3578 = vpop.f32.mrb[0].mxu0
      %3579 = vmatprep.mubr.f32.mxu0 0.0
      %3580 = vmatmul.mubr.f32.gmra.mrb[0].mxu0 %v3415
      %v3581 = vpop.f32.mrb[0].mxu0
      %v3582 = vadd.f32 0.0, %v3581
      %v3583 = vpop.f32.mrb[0].mxu0
      %3584 = vmatprep.mubr.f32.mxu0 0.0
      %3585 = vmatmul.mubr.f32.gmra.mrb[0].mxu0 %v3418
      %v3586 = vpop.f32.mrb[0].mxu0
      %v3587 = vadd.f32 0.0, %v3586
      %v3588 = vpop.f32.mrb[0].mxu0
      %3589 = vmatprep.mubr.f32.mxu0 0.0
      %3590 = vmatmul.mubr.f32.gmra.mrb[0].mxu0 %v3421
      %v3591 = vpop.f32.mrb[0].mxu0
      %v3592 = vadd.f32 0.0, %v3591
      %v3593 = vpop.f32.mrb[0].mxu0
      %3594 = vmatprep.mubr.f32.mxu0 0.0
      %3595 = vmatmul.mubr.f32.gmra.mrb[0].mxu0 %v3424
      %v3596 = vpop.f32.mrb[0].mxu0
      %v3597 = vadd.f32 0.0, %v3596
      %v3598 = vpop.f32.mrb[0].mxu0
      %3599 = vmatprep.mubr.f32.mxu0 0.0
      %3600 = vmatmul.mubr.f32.gmra.mrb[0].mxu0 %v3427
      %v3601 = vpop.f32.mrb[0].mxu0
      %v3602 = vadd.f32 0.0, %v3601
      %v3603 = vpop.f32.mrb[0].mxu0
      %3604 = vmatprep.mubr.f32.mxu0 0.0
      %3605 = vmatmul.mubr.f32.gmra.mrb[0].mxu0 %v3430
      %v3606 = vpop.f32.mrb[0].mxu0
      %v3607 = vadd.f32 0.0, %v3606
      %v3608 = vpop.f32.mrb[0].mxu0
      %3609 = vmatprep.mubr.f32.mxu0 0.0
      %3610 = vmatmul.mubr.f32.gmra.mrb[0].mxu0 %v3433
      %v3611 = vpop.f32.mrb[0].mxu0
      %v3612 = vadd.f32 0.0, %v3611
      %v3613 = vpop.f32.mrb[0].mxu0
      %3614 = vmatprep.mubr.f32.mxu0 0.0
      %3615 = vmatmul.mubr.f32.gmra.mrb[0].mxu0 %v3436
      %v3616 = vpop.f32.mrb[0].mxu0
      %v3617 = vadd.f32 0.0, %v3616
      %v3618 = vpop.f32.mrb[0].mxu0
      %3619 = vmatprep.mubr.f32.mxu0 0.0
      %3620 = vmatmul.mubr.f32.gmra.mrb[0].mxu0 %v3439
      %v3621 = vpop.f32.mrb[0].mxu0
      %v3622 = vadd.f32 0.0, %v3621
      %v3623 = vpop.f32.mrb[0].mxu0
      %3624 = vmatprep.mubr.f32.mxu0 0.0
      %3625 = vmatmul.mubr.f32.gmra.mrb[0].mxu0 %v3442
      %v3626 = vpop.f32.mrb[0].mxu0
      %v3627 = vadd.f32 0.0, %v3626
      %v3628 = vpop.f32.mrb[0].mxu0
      %3629 = vmatprep.mubr.f32.mxu0 0.0
      %3630 = vmatmul.mubr.f32.gmra.mrb[0].mxu0 %v3445
      %v3631 = vpop.f32.mrb[0].mxu0
      %v3632 = vadd.f32 0.0, %v3631
      %v3633 = vpop.f32.mrb[0].mxu0
      %3634 = vmatprep.mubr.f32.mxu0 0.0
      %3635 = vmatmul.mubr.f32.gmra.mrb[0].mxu0 %v3448
      %v3636 = vpop.f32.mrb[0].mxu0
      %v3637 = vadd.f32 0.0, %v3636
      %v3638 = vpop.f32.mrb[0].mxu0
      %3639 = vmatprep.mubr.f32.mxu0 0.0
      %3640 = vmatmul.mubr.f32.gmra.mrb[0].mxu0 %v3451
      %v3641 = vpop.f32.mrb[0].mxu0
      %v3642 = vadd.f32 0.0, %v3641
      %v3643 = vpop.f32.mrb[0].mxu0
      %3644 = vmatprep.mubr.f32.mxu0 0.0
      %3645 = vmatmul.mubr.f32.gmra.mrb[0].mxu0 %v3454
      %v3646 = vpop.f32.mrb[0].mxu0
      %v3647 = vadd.f32 0.0, %v3646
      %v3648 = vpop.f32.mrb[0].mxu0
      %3649 = vmatprep.mubr.f32.mxu0 0.0
      %3650 = vmatmul.mubr.f32.gmra.mrb[0].mxu0 %v3457
      %v3651 = vpop.f32.mrb[0].mxu0
      %v3652 = vadd.f32 0.0, %v3651
      %v3653 = vpop.f32.mrb[0].mxu0
      %3654 = vmatprep.mubr.f32.mxu0 0.0
      %3655 = vmatmul.mubr.f32.gmra.mrb[0].mxu0 %v3460
      %v3656 = vpop.f32.mrb[0].mxu0
      %v3657 = vadd.f32 0.0, %v3656
      %v3658 = vpop.f32.mrb[0].mxu0
      %3659 = vmatprep.mubr.f32.mxu0 0.0
      %3660 = vmatmul.mubr.f32.gmra.mrb[0].mxu0 %v3463
      %v3661 = vpop.f32.mrb[0].mxu0
      %v3662 = vadd.f32 0.0, %v3661
      %v3663 = vpop.f32.mrb[0].mxu0
      %3664 = vmatprep.mubr.f32.mxu0 0.0
      %3665 = vmatmul.mubr.f32.gmra.mrb[0].mxu0 %v3466
      %v3666 = vpop.f32.mrb[0].mxu0
      %v3667 = vadd.f32 0.0, %v3666
      %v3668 = vpop.f32.mrb[0].mxu0
      %3669 = vmatprep.mubr.f32.mxu0 0.0
      %3670 = vmatmul.mubr.f32.gmra.mrb[0].mxu0 %v3469
      %v3671 = vpop.f32.mrb[0].mxu0
      %v3672 = vadd.f32 0.0, %v3671
      %v3673 = vpop.f32.mrb[0].mxu0
      %3674 = vmatprep.mubr.f32.mxu0 0.0
      %3675 = vmatmul.mubr.f32.gmra.mrb[0].mxu0 %v3472
      %v3676 = vpop.f32.mrb[0].mxu0
      %v3677 = vadd.f32 0.0, %v3676
      %v3678 = vpop.f32.mrb[0].mxu0
      %3679 = vmatprep.mubr.f32.mxu0 0.0
      %3680 = vmatmul.mubr.f32.gmra.mrb[0].mxu0 %v3475
      %v3681 = vpop.f32.mrb[0].mxu0
      %v3682 = vadd.f32 0.0, %v3681
      %v3683 = vpop.f32.mrb[0].mxu0
      %3684 = vmatprep.mubr.f32.mxu0 0.0
      %3685 = vmatmul.mubr.f32.gmra.mrb[0].mxu0 %v3478
      %v3686 = vpop.f32.mrb[0].mxu0
      %v3687 = vadd.f32 0.0, %v3686
      %v3688 = vpop.f32.mrb[0].mxu0
      %3689 = vmatprep.mubr.f32.mxu0 0.0
      %3690 = vmatmul.mubr.f32.gmra.mrb[0].mxu0 %v3481
      %v3691 = vpop.f32.mrb[0].mxu0
      %v3692 = vadd.f32 0.0, %v3691
      %v3693 = vpop.f32.mrb[0].mxu0
      %3694 = vmatprep.mubr.f32.mxu0 0.0
      %3695 = vmatmul.mubr.f32.gmra.mrb[0].mxu0 %v3484
      %v3696 = vpop.f32.mrb[0].mxu0
      %v3697 = vadd.f32 0.0, %v3696
      %v3698 = vpop.f32.mrb[0].mxu0
      %3699 = vmatprep.mubr.f32.mxu0 0.0
      %3700 = vmatmul.mubr.f32.gmra.mrb[0].mxu0 %v3487
      %v3701 = vpop.f32.mrb[0].mxu0
      %v3702 = vadd.f32 0.0, %v3701
      %v3703 = vpop.f32.mrb[0].mxu0
      %3704 = vmatprep.mubr.f32.mxu0 0.0
      %3705 = vmatmul.mubr.f32.gmra.mrb[0].mxu0 %v3490
      %v3706 = vpop.f32.mrb[0].mxu0
      %v3707 = vadd.f32 0.0, %v3706
      %v3708 = vpop.f32.mrb[0].mxu0
      %3709 = vmatprep.mubr.f32.mxu0 0.0
      %3710 = vmatmul.mubr.f32.gmra.mrb[0].mxu0 %v3493
      %v3711 = vpop.f32.mrb[0].mxu0
      %v3712 = vadd.f32 0.0, %v3711
      %v3713 = vpop.f32.mrb[0].mxu0
      %3714 = vmatprep.mubr.f32.mxu0 0.0
      %3715 = vmatmul.mubr.f32.gmra.mrb[0].mxu0 %v3496
      %v3716 = vpop.f32.mrb[0].mxu0
      %v3717 = vadd.f32 0.0, %v3716
      %v3718 = vpop.f32.mrb[0].mxu0
      %3719 = vmatprep.mubr.f32.mxu0 0.0
      %3720 = vmatmul.mubr.f32.gmra.mrb[0].mxu0 %v3499
      %v3721 = vpop.f32.mrb[0].mxu0
      %v3722 = vadd.f32 0.0, %v3721
      %v3723 = vpop.f32.mrb[0].mxu0
      %3724 = vmatprep.mubr.f32.mxu0 0.0
      %3725 = vmatmul.mubr.f32.gmra.mrb[0].mxu0 %v3502
      %v3726 = vpop.f32.mrb[0].mxu0
      %v3727 = vadd.f32 0.0, %v3726
      %v3728 = vpop.f32.mrb[0].mxu0
      %3729 = vmatprep.mubr.f32.mxu0 0.0
      %3730 = vmatmul.mubr.f32.gmra.mrb[0].mxu0 %v3505
      %v3731 = vpop.f32.mrb[0].mxu0
      %v3732 = vadd.f32 0.0, %v3731
      %v3733 = vpop.f32.mrb[0].mxu0
      %3734 = vdwg.mxu0
      %v3735 = vadd.f32 %v3345, %v3577
      %v3736 = vadd.f32 %v3346, %v3582
      %v3737 = vadd.f32 %v3347, %v3587
      %v3738 = vadd.f32 %v3348, %v3592
      %v3739 = vadd.f32 %v3349, %v3597
      %v3740 = vadd.f32 %v3350, %v3602
      %v3741 = vadd.f32 %v3351, %v3607
      %v3742 = vadd.f32 %v3352, %v3612
      %v3743 = vadd.f32 %v3353, %v3617
      %v3744 = vadd.f32 %v3354, %v3622
      %v3745 = vadd.f32 %v3355, %v3627
      %v3746 = vadd.f32 %v3356, %v3632
      %v3747 = vadd.f32 %v3357, %v3637
      %v3748 = vadd.f32 %v3358, %v3642
      %v3749 = vadd.f32 %v3359, %v3647
      %v3750 = vadd.f32 %v3360, %v3652
      %v3751 = vadd.f32 %v3361, %v3657
      %v3752 = vadd.f32 %v3362, %v3662
      %v3753 = vadd.f32 %v3363, %v3667
      %v3754 = vadd.f32 %v3364, %v3672
      %v3755 = vadd.f32 %v3365, %v3677
      %v3756 = vadd.f32 %v3366, %v3682
      %v3757 = vadd.f32 %v3367, %v3687
      %v3758 = vadd.f32 %v3368, %v3692
      %v3759 = vadd.f32 %v3369, %v3697
      %v3760 = vadd.f32 %v3370, %v3702
      %v3761 = vadd.f32 %v3371, %v3707
      %v3762 = vadd.f32 %v3372, %v3712
      %v3763 = vadd.f32 %v3373, %v3717
      %v3764 = vadd.f32 %v3374, %v3722
      %v3765 = vadd.f32 %v3375, %v3727
      %v3766 = vadd.f32 %v3376, %v3732
      %v3767 = vld [vmem:[%s2] sm:$0x1]
      %v3769 = vlaneseq
      %v3770 = vshrl.u32 %v3769, 7
      %v3771 = vsub.s32 0, %v3770
      %v3772 = vrot.slane %v3767, %v3771
      %v3774 = vadd.f32 %v3735, %v3772
      %v3775 = vadd.f32 %v3736, %v3772
      %v3776 = vadd.f32 %v3737, %v3772
      %v3777 = vadd.f32 %v3738, %v3772
      %v3778 = vadd.f32 %v3739, %v3772
      %v3779 = vadd.f32 %v3740, %v3772
      %v3780 = vadd.f32 %v3741, %v3772
      %v3781 = vadd.f32 %v3742, %v3772
      %v3782 = vadd.f32 %v3743, %v3772
      %v3783 = vadd.f32 %v3744, %v3772
      %v3784 = vadd.f32 %v3745, %v3772
      %v3785 = vadd.f32 %v3746, %v3772
      %v3786 = vadd.f32 %v3747, %v3772
      %v3787 = vadd.f32 %v3748, %v3772
      %v3788 = vadd.f32 %v3749, %v3772
      %v3789 = vadd.f32 %v3750, %v3772
      %v3790 = vadd.f32 %v3751, %v3772
      %v3791 = vadd.f32 %v3752, %v3772
      %v3792 = vadd.f32 %v3753, %v3772
      %v3793 = vadd.f32 %v3754, %v3772
      %v3794 = vadd.f32 %v3755, %v3772
      %v3795 = vadd.f32 %v3756, %v3772
      %v3796 = vadd.f32 %v3757, %v3772
      %v3797 = vadd.f32 %v3758, %v3772
      %v3798 = vadd.f32 %v3759, %v3772
      %v3799 = vadd.f32 %v3760, %v3772
      %v3800 = vadd.f32 %v3761, %v3772
      %v3801 = vadd.f32 %v3762, %v3772
      %v3802 = vadd.f32 %v3763, %v3772
      %v3803 = vadd.f32 %v3764, %v3772
      %v3804 = vadd.f32 %v3765, %v3772
      %v3805 = vadd.f32 %v3766, %v3772
      %vm3806 = vcmask 64512
      %3807 = vst.msk [vmem:[%s204] sm:$0xff] %vm3806, %v3774
      %3808 = vst.msk [vmem:[%s204 + $0x8] sm:$0xff] %vm3806, %v3775
      %3809 = vst.msk [vmem:[%s204 + $0x10] sm:$0xff] %vm3806, %v3776
      %3810 = vst.msk [vmem:[%s204 + $0x18] sm:$0xff] %vm3806, %v3777
      %3811 = vst.msk [vmem:[%s204 + $0x20] sm:$0xff] %vm3806, %v3778
      %3812 = vst.msk [vmem:[%s204 + $0x28] sm:$0xff] %vm3806, %v3779
      %3813 = vst.msk [vmem:[%s204 + $0x30] sm:$0xff] %vm3806, %v3780
      %3814 = vst.msk [vmem:[%s204 + $0x38] sm:$0xff] %vm3806, %v3781
      %3815 = vst.msk [vmem:[%s204 + $0x40] sm:$0xff] %vm3806, %v3782
      %3816 = vst.msk [vmem:[%s204 + $0x48] sm:$0xff] %vm3806, %v3783
      %3817 = vst.msk [vmem:[%s204 + $0x50] sm:$0xff] %vm3806, %v3784
      %3818 = vst.msk [vmem:[%s204 + $0x58] sm:$0xff] %vm3806, %v3785
      %3819 = vst.msk [vmem:[%s204 + $0x60] sm:$0xff] %vm3806, %v3786
      %3820 = vst.msk [vmem:[%s204 + $0x68] sm:$0xff] %vm3806, %v3787
      %3821 = vst.msk [vmem:[%s204 + $0x70] sm:$0xff] %vm3806, %v3788
      %3822 = vst.msk [vmem:[%s204 + $0x78] sm:$0xff] %vm3806, %v3789
      %3823 = vst.msk [vmem:[%s204 + $0x80] sm:$0xff] %vm3806, %v3790
      %3824 = vst.msk [vmem:[%s204 + $0x88] sm:$0xff] %vm3806, %v3791
      %3825 = vst.msk [vmem:[%s204 + $0x90] sm:$0xff] %vm3806, %v3792
      %3826 = vst.msk [vmem:[%s204 + $0x98] sm:$0xff] %vm3806, %v3793
      %3827 = vst.msk [vmem:[%s204 + $0xa0] sm:$0xff] %vm3806, %v3794
      %3828 = vst.msk [vmem:[%s204 + $0xa8] sm:$0xff] %vm3806, %v3795
      %3829 = vst.msk [vmem:[%s204 + $0xb0] sm:$0xff] %vm3806, %v3796
      %3830 = vst.msk [vmem:[%s204 + $0xb8] sm:$0xff] %vm3806, %v3797
      %3831 = vst.msk [vmem:[%s204 + $0xc0] sm:$0xff] %vm3806, %v3798
      %3832 = vst.msk [vmem:[%s204 + $0xc8] sm:$0xff] %vm3806, %v3799
      %3833 = vst.msk [vmem:[%s204 + $0xd0] sm:$0xff] %vm3806, %v3800
      %3834 = vst.msk [vmem:[%s204 + $0xd8] sm:$0xff] %vm3806, %v3801
      %3835 = vst.msk [vmem:[%s204 + $0xe0] sm:$0xff] %vm3806, %v3802
      %3836 = vst.msk [vmem:[%s204 + $0xe8] sm:$0xff] %vm3806, %v3803
      %3837 = vst.msk [vmem:[%s204 + $0xf0] sm:$0xff] %vm3806, %v3804
      %3838 = vst.msk [vmem:[%s204 + $0xf8] sm:$0xff] %vm3806, %v3805
      %v3839 = vsel %vm3806, %v3774, 0.0
      %v3840 = vsel %vm3806, %v3775, 0.0
      %v3841 = vadd.f32 %v3839, %v3840
      %v3842 = vsel %vm3806, %v3776, 0.0
      %v3843 = vadd.f32 %v3841, %v3842
      %v3844 = vsel %vm3806, %v3777, 0.0
      %v3845 = vadd.f32 %v3843, %v3844
      %v3846 = vsel %vm3806, %v3778, 0.0
      %v3847 = vadd.f32 %v3845, %v3846
      %v3848 = vsel %vm3806, %v3779, 0.0
      %v3849 = vadd.f32 %v3847, %v3848
      %v3850 = vsel %vm3806, %v3780, 0.0
      %v3851 = vadd.f32 %v3849, %v3850
      %v3852 = vsel %vm3806, %v3781, 0.0
      %v3853 = vadd.f32 %v3851, %v3852
      %v3854 = vsel %vm3806, %v3782, 0.0
      %v3855 = vadd.f32 %v3853, %v3854
      %v3856 = vsel %vm3806, %v3783, 0.0
      %v3857 = vadd.f32 %v3855, %v3856
      %v3858 = vsel %vm3806, %v3784, 0.0
      %v3859 = vadd.f32 %v3857, %v3858
      %v3860 = vsel %vm3806, %v3785, 0.0
      %v3861 = vadd.f32 %v3859, %v3860
      %v3862 = vsel %vm3806, %v3786, 0.0
      %v3863 = vadd.f32 %v3861, %v3862
      %v3864 = vsel %vm3806, %v3787, 0.0
      %v3865 = vadd.f32 %v3863, %v3864
      %v3866 = vsel %vm3806, %v3788, 0.0
      %v3867 = vadd.f32 %v3865, %v3866
      %v3868 = vsel %vm3806, %v3789, 0.0
      %v3869 = vadd.f32 %v3867, %v3868
      %v3870 = vsel %vm3806, %v3790, 0.0
      %v3871 = vadd.f32 %v3869, %v3870
      %v3872 = vsel %vm3806, %v3791, 0.0
      %v3873 = vadd.f32 %v3871, %v3872
      %v3874 = vsel %vm3806, %v3792, 0.0
      %v3875 = vadd.f32 %v3873, %v3874
      %v3876 = vsel %vm3806, %v3793, 0.0
      %v3877 = vadd.f32 %v3875, %v3876
      %v3878 = vsel %vm3806, %v3794, 0.0
      %v3879 = vadd.f32 %v3877, %v3878
      %v3880 = vsel %vm3806, %v3795, 0.0
      %v3881 = vadd.f32 %v3879, %v3880
      %v3882 = vsel %vm3806, %v3796, 0.0
      %v3883 = vadd.f32 %v3881, %v3882
      %v3884 = vsel %vm3806, %v3797, 0.0
      %v3885 = vadd.f32 %v3883, %v3884
      %v3886 = vsel %vm3806, %v3798, 0.0
      %v3887 = vadd.f32 %v3885, %v3886
      %v3888 = vsel %vm3806, %v3799, 0.0
      %v3889 = vadd.f32 %v3887, %v3888
      %v3890 = vsel %vm3806, %v3800, 0.0
      %v3891 = vadd.f32 %v3889, %v3890
      %v3892 = vsel %vm3806, %v3801, 0.0
      %v3893 = vadd.f32 %v3891, %v3892
      %v3894 = vsel %vm3806, %v3802, 0.0
      %v3895 = vadd.f32 %v3893, %v3894
      %v3896 = vsel %vm3806, %v3803, 0.0
      %v3897 = vadd.f32 %v3895, %v3896
      %v3898 = vsel %vm3806, %v3804, 0.0
      %v3899 = vadd.f32 %v3897, %v3898
      %v3900 = vsel %vm3806, %v3805, 0.0
      %v3901 = vadd.f32 %v3899, %v3900
      %v3902 = vrot.slane %v3901, 4
      %v3903 = vadd.f32 %v3901, %v3902
      %v3904 = vrot.slane %v3903, 2
      %v3905 = vadd.f32 %v3903, %v3904
      %v3906 = vrot.slane %v3905, 1
      %v3907 = vadd.f32 %v3905, %v3906
      %v3908 = vrcp.pop 256.0
      %v3909 = vmul.f32 %v3907, %v3908
      %v3910 = vsub.f32 %v3774, %v3909
      %v3911 = vsub.f32 %v3775, %v3909
      %v3912 = vsub.f32 %v3776, %v3909
      %v3913 = vsub.f32 %v3777, %v3909
      %v3914 = vsub.f32 %v3778, %v3909
      %v3915 = vsub.f32 %v3779, %v3909
      %v3916 = vsub.f32 %v3780, %v3909
      %v3917 = vsub.f32 %v3781, %v3909
      %v3918 = vsub.f32 %v3782, %v3909
      %v3919 = vsub.f32 %v3783, %v3909
      %v3920 = vsub.f32 %v3784, %v3909
      %v3921 = vsub.f32 %v3785, %v3909
      %v3922 = vsub.f32 %v3786, %v3909
      %v3923 = vsub.f32 %v3787, %v3909
      %v3924 = vsub.f32 %v3788, %v3909
      %v3925 = vsub.f32 %v3789, %v3909
      %v3926 = vsub.f32 %v3790, %v3909
      %v3927 = vsub.f32 %v3791, %v3909
      %v3928 = vsub.f32 %v3792, %v3909
      %v3929 = vsub.f32 %v3793, %v3909
      %v3930 = vsub.f32 %v3794, %v3909
      %v3931 = vsub.f32 %v3795, %v3909
      %v3932 = vsub.f32 %v3796, %v3909
      %v3933 = vsub.f32 %v3797, %v3909
      %v3934 = vsub.f32 %v3798, %v3909
      %v3935 = vsub.f32 %v3799, %v3909
      %v3936 = vsub.f32 %v3800, %v3909
      %v3937 = vsub.f32 %v3801, %v3909
      %v3938 = vsub.f32 %v3802, %v3909
      %v3939 = vsub.f32 %v3803, %v3909
      %v3940 = vsub.f32 %v3804, %v3909
      %v3941 = vsub.f32 %v3805, %v3909
      %v3942 = vmul.f32 %v3910, %v3910
      %v3943 = vmul.f32 %v3911, %v3911
      %v3944 = vmul.f32 %v3912, %v3912
      %v3945 = vmul.f32 %v3913, %v3913
      %v3946 = vmul.f32 %v3914, %v3914
      %v3947 = vmul.f32 %v3915, %v3915
      %v3948 = vmul.f32 %v3916, %v3916
      %v3949 = vmul.f32 %v3917, %v3917
      %v3950 = vmul.f32 %v3918, %v3918
      %v3951 = vmul.f32 %v3919, %v3919
      %v3952 = vmul.f32 %v3920, %v3920
      %v3953 = vmul.f32 %v3921, %v3921
      %v3954 = vmul.f32 %v3922, %v3922
      %v3955 = vmul.f32 %v3923, %v3923
      %v3956 = vmul.f32 %v3924, %v3924
      %v3957 = vmul.f32 %v3925, %v3925
      %v3958 = vmul.f32 %v3926, %v3926
      %v3959 = vmul.f32 %v3927, %v3927
      %v3960 = vmul.f32 %v3928, %v3928
      %v3961 = vmul.f32 %v3929, %v3929
      %v3962 = vmul.f32 %v3930, %v3930
      %v3963 = vmul.f32 %v3931, %v3931
      %v3964 = vmul.f32 %v3932, %v3932
      %v3965 = vmul.f32 %v3933, %v3933
      %v3966 = vmul.f32 %v3934, %v3934
      %v3967 = vmul.f32 %v3935, %v3935
      %v3968 = vmul.f32 %v3936, %v3936
      %v3969 = vmul.f32 %v3937, %v3937
      %v3970 = vmul.f32 %v3938, %v3938
      %v3971 = vmul.f32 %v3939, %v3939
      %v3972 = vmul.f32 %v3940, %v3940
      %v3973 = vmul.f32 %v3941, %v3941
      %v3974 = vsel %vm3806, %v3942, 0.0
      %v3975 = vsel %vm3806, %v3943, 0.0
      %v3976 = vadd.f32 %v3974, %v3975
      %v3977 = vsel %vm3806, %v3944, 0.0
      %v3978 = vadd.f32 %v3976, %v3977
      %v3979 = vsel %vm3806, %v3945, 0.0
      %v3980 = vadd.f32 %v3978, %v3979
      %v3981 = vsel %vm3806, %v3946, 0.0
      %v3982 = vadd.f32 %v3980, %v3981
      %v3983 = vsel %vm3806, %v3947, 0.0
      %v3984 = vadd.f32 %v3982, %v3983
      %v3985 = vsel %vm3806, %v3948, 0.0
      %v3986 = vadd.f32 %v3984, %v3985
      %v3987 = vsel %vm3806, %v3949, 0.0
      %v3988 = vadd.f32 %v3986, %v3987
      %v3989 = vsel %vm3806, %v3950, 0.0
      %v3990 = vadd.f32 %v3988, %v3989
      %v3991 = vsel %vm3806, %v3951, 0.0
      %v3992 = vadd.f32 %v3990, %v3991
      %v3993 = vsel %vm3806, %v3952, 0.0
      %v3994 = vadd.f32 %v3992, %v3993
      %v3995 = vsel %vm3806, %v3953, 0.0
      %v3996 = vadd.f32 %v3994, %v3995
      %v3997 = vsel %vm3806, %v3954, 0.0
      %v3998 = vadd.f32 %v3996, %v3997
      %v3999 = vsel %vm3806, %v3955, 0.0
      %v4000 = vadd.f32 %v3998, %v3999
      %v4001 = vsel %vm3806, %v3956, 0.0
      %v4002 = vadd.f32 %v4000, %v4001
      %v4003 = vsel %vm3806, %v3957, 0.0
      %v4004 = vadd.f32 %v4002, %v4003
      %v4005 = vsel %vm3806, %v3958, 0.0
      %v4006 = vadd.f32 %v4004, %v4005
      %v4007 = vsel %vm3806, %v3959, 0.0
      %v4008 = vadd.f32 %v4006, %v4007
      %v4009 = vsel %vm3806, %v3960, 0.0
      %v4010 = vadd.f32 %v4008, %v4009
      %v4011 = vsel %vm3806, %v3961, 0.0
      %v4012 = vadd.f32 %v4010, %v4011
      %v4013 = vsel %vm3806, %v3962, 0.0
      %v4014 = vadd.f32 %v4012, %v4013
      %v4015 = vsel %vm3806, %v3963, 0.0
      %v4016 = vadd.f32 %v4014, %v4015
      %v4017 = vsel %vm3806, %v3964, 0.0
      %v4018 = vadd.f32 %v4016, %v4017
      %v4019 = vsel %vm3806, %v3965, 0.0
      %v4020 = vadd.f32 %v4018, %v4019
      %v4021 = vsel %vm3806, %v3966, 0.0
      %v4022 = vadd.f32 %v4020, %v4021
      %v4023 = vsel %vm3806, %v3967, 0.0
      %v4024 = vadd.f32 %v4022, %v4023
      %v4025 = vsel %vm3806, %v3968, 0.0
      %v4026 = vadd.f32 %v4024, %v4025
      %v4027 = vsel %vm3806, %v3969, 0.0
      %v4028 = vadd.f32 %v4026, %v4027
      %v4029 = vsel %vm3806, %v3970, 0.0
      %v4030 = vadd.f32 %v4028, %v4029
      %v4031 = vsel %vm3806, %v3971, 0.0
      %v4032 = vadd.f32 %v4030, %v4031
      %v4033 = vsel %vm3806, %v3972, 0.0
      %v4034 = vadd.f32 %v4032, %v4033
      %v4035 = vsel %vm3806, %v3973, 0.0
      %v4036 = vadd.f32 %v4034, %v4035
      %v4037 = vrot.slane %v4036, 4
      %v4038 = vadd.f32 %v4036, %v4037
      %v4039 = vrot.slane %v4038, 2
      %v4040 = vadd.f32 %v4038, %v4039
      %v4041 = vrot.slane %v4040, 1
      %v4042 = vadd.f32 %v4040, %v4041
      %vm4043 = vcmask 1040384
      %v4044 = vsel %vm4043, %v3909, %v4042
      %vm4045 = vcmask 58368
      %4046 = vst.msk [vmem:[%s208] sm:$0x3] %vm4045, %v4044
      %p4047 = scmp.lt.s32.totalorder %s16, 1
      %s4048 = scalar_select %p4047, %s16, 1
      %s4049 = smul.addr %s4048, 32
      %s4050 = smul.addr %s4049, 8
      %s4051 = scalar_lea.vmem %s3, %s4050
      %p4052 = scmp.lt.s32.totalorder %s16, 1
      %s4053 = scalar_select %p4052, %s16, 1
      %s4054 = smul.addr %s4053, 2
      %s4055 = scalar_lea.vmem %s4, %s4054
      // Predicated region
      $region33: #{conv_block_forward.3} parent=31 // pred_check
        %p4056 = pneg %p102
      $region34: #{conv_block_forward.3} parent=31 // pred_check_branch
        %4058 = sbr.rel (%p4056) target = $region36
      $region35: #{conv_block_forward.3} parent=31 // pred_region
        _
      $region36: #{conv_block_forward.3} parent=31 // pred_fallthru
        _
      // Predicated region
      $region37: #{conv_block_forward.3} parent=31 // pred_check
        %p4059 = pneg %p128
      $region38: #{conv_block_forward.3} parent=31 // pred_check_branch
        %4061 = sbr.rel (%p4059) target = $region40
      $region39: #{conv_block_forward.3} parent=31 // pred_region
        _
      $region40: #{conv_block_forward.3} parent=31 // pred_fallthru
        _
    $region32: #{conv_block_forward.3} parent=5 // pred_fallthru
      _
    %p4062 = scmp.le.s32.totalorder 2, %s11
    // Predicated region
    $region41: #{conv_block_forward.3} parent=5 // pred_check
      %p4063 = pneg %p4062
    $region42: #{conv_block_forward.3} parent=5 // pred_check_branch
      %4065 = sbr.rel (%p4063) target = $region44
    $region43: #{conv_block_forward.3} parent=5 // pred_region
      %s4066 = ssub.s32 %s11, 2
      // Predicated region
      $region45: #{conv_block_forward.3} parent=43 // pred_check
        %p4067 = pneg %p108
      $region46: #{conv_block_forward.3} parent=43 // pred_check_branch
        %4069 = sbr.rel (%p4067) target = $region48
      $region47: #{conv_block_forward.3} parent=43 // pred_region
        %p4070 = scmp.lt.s32.totalorder %s17, 1
        %s4071 = scalar_select %p4070, %s17, 1
        %s4072 = smul.addr %s4071, 32
        %s4073 = smul.addr %s4072, 8
        %s4074 = scalar_lea.vmem %s3, %s4073
      $region48: #{conv_block_forward.3} parent=43 // pred_fallthru
        _
      // Predicated region
      $region49: #{conv_block_forward.3} parent=43 // pred_check
        %p4075 = pneg %p134
      $region50: #{conv_block_forward.3} parent=43 // pred_check_branch
        %4077 = sbr.rel (%p4075) target = $region52
      $region51: #{conv_block_forward.3} parent=43 // pred_region
        %p4078 = scmp.lt.s32.totalorder %s17, 1
        %s4079 = scalar_select %p4078, %s17, 1
        %s4080 = smul.addr %s4079, 2
        %s4081 = scalar_lea.vmem %s4, %s4080
      $region52: #{conv_block_forward.3} parent=43 // pred_fallthru
        _
    $region44: #{conv_block_forward.3} parent=5 // pred_fallthru
      _
  $region6: #{conv_block_forward.3} parent=0 // loop_footer
    %s15 = sadd.s32 1, %s11
  $region7: #{conv_block_forward.3} parent=0 // loop_footer_branch
    %10 = sbr.rel target = $region3
  $region8: #{conv_block_forward.3} parent=0 // loop_exit
    _

// kernel: conv_block_forward.4
$region0: #{conv_block_forward.4}
  #allocation0 [shape = 'u32[]', space=smem, size = 0x4, offset = 0x4, fixed_abs, tag = 'smem constant byte address 0x4 - core index']
  #allocation1 [shape = 'u32[144,128]{1,0:T(1,128)}', space=vmem, size = 0x12000, scoped, tag = 'internal scratch']
  #allocation2 [shape = 'f32[18,18,8]{2,1,0:T(8,128)}', space=vmem, size = 0x36000, scoped, tag = 'scratch operand']
  %s0 = inlined_call_operand.vmem [shape: f32[2,16,16,8], index: 0, kind: input, shape index: {}]
  %s1 = inlined_call_operand.vmem [shape: f32[1,8], index: 1, kind: input, shape index: {}]
  %s2 = inlined_call_operand.vmem [shape: f32[1,8], index: 2, kind: input, shape index: {}]
  %s3 = inlined_call_operand.vmem [shape: f32[9,8,8], index: 3, kind: input, shape index: {}]
  %s4 = inlined_call_operand.vmem [shape: f32[1,8], index: 4, kind: input, shape index: {}]
  %s5 = inlined_call_operand.vmem [shape: f32[2,16,16,8], index: 5, kind: output, shape index: {0}]
  %s6 = inlined_call_operand.vmem [shape: f32[2,2,8], index: 6, kind: output, shape index: {1}]
  %7 = xla_tuple %s5, %s6
  %s8 = sld [smem:[#allocation0]]
  $region61: #{conv_block_forward.4} parent=0
    _
  %s10 = ssub.s32 1, %s8
  %s11 = scalar_select 0, %s10, %s8
  loop: start=0, step=1, limit=4
  $region2: #{conv_block_forward.4} parent=0 // loop_pre_header
    _
  $region3: #{conv_block_forward.4} parent=0 // loop_header
    %s13 = sphi 0, %s17
    %p14 = scmp.ge.s32.totalorder %s13, 4
    %s23 = sphi 0, %s25
    %s26 = sphi 0, %s23
    %s27 = sphi 0, %s26
    %s43 = sphi 0, %s27
    %s47 = sphi 0, %s47
    %s49 = sphi 0, %s47
    %s50 = sphi 0, %s49
    %s64 = sphi 0, %s50
    %s68 = sphi 0, %s68
    %s70 = sphi 0, %s68
    %s71 = sphi 0, %s70
    %s85 = sphi 0, %s71
    %s89 = sphi 0, %s89
    %s91 = sphi 0, %s89
    %s92 = sphi 0, %s91
    %s106 = sphi 0, %s92
    %s110 = sphi 0, %s110
    %s112 = sphi 0, %s110
    %s113 = sphi 0, %s112
    %s127 = sphi 0, %s113
    %s133 = sphi 0, %s135
    %s136 = sphi 0, %s133
    %s137 = sphi 0, %s136
    %s153 = sphi 0, %s137
    %s159 = sphi 0, %s161
    %s162 = sphi 0, %s159
    %s163 = sphi 0, %s162
    %s179 = sphi 0, %s163
  $region4: #{conv_block_forward.4} parent=0 // loop_header_branch
    %16 = sbr.rel (%p14) target = $region8
  $region5: #{conv_block_forward.4} parent=0 // loop_body
    %s18 = ssub.s32 %s13, 1
    %s19 = ssub.s32 %s13, 2
    %s20 = sadd.s32 %s13, 1
    %s21 = ssub.s32 %s13, %s20
    %p22 = scmp.eq.s32.totalorder %s21, 0
    %s24 = sadd.s32 %s23, 1
    %s25 = scalar_select %p22, %s23, %s24
    %p28 = pneg %p22
    %p29 = scmp.eq.s32.totalorder %s13, 1
    %p30 = por %p28, %p29
    %p31 = scmp.ne.s32.totalorder %s23, %s26
    %p32 = scmp.eq.s32.totalorder %s13, 0
    %p33 = por %p31, %p32
    %p34 = scmp.ne.s32.totalorder %s23, %s26
    %p35 = scmp.eq.s32.totalorder %s18, 1
    %p36 = por %p34, %p35
    %p37 = scmp.ne.s32.totalorder %s26, %s27
    %p38 = scmp.eq.s32.totalorder %s18, 0
    %p39 = por %p37, %p38
    %p40 = scmp.ne.s32.totalorder %s26, %s27
    %p41 = scmp.eq.s32.totalorder %s19, 1
    %p42 = por %p40, %p41
    %p44 = scmp.ne.s32.totalorder %s27, %s43
    %p45 = scmp.eq.s32.totalorder %s19, 0
    %p46 = por %p44, %p45
    %s48 = sadd.s32 %s47, 1
    %p51 = scmp.eq.s32.totalorder %s13, 1
    %p52 = scmp.ne.s32.totalorder %s47, %s49
    %p53 = scmp.eq.s32.totalorder %s13, 0
    %p54 = por %p52, %p53
    %p55 = scmp.ne.s32.totalorder %s47, %s49
    %p56 = scmp.eq.s32.totalorder %s18, 1
    %p57 = por %p55, %p56
    %p58 = scmp.ne.s32.totalorder %s49, %s50
    %p59 = scmp.eq.s32.totalorder %s18, 0
    %p60 = por %p58, %p59
    %p61 = scmp.ne.s32.totalorder %s49, %s50
    %p62 = scmp.eq.s32.totalorder %s19, 1
    %p63 = por %p61, %p62
    %p65 = scmp.ne.s32.totalorder %s50, %s64
    %p66 = scmp.eq.s32.totalorder %s19, 0
    %p67 = por %p65, %p66
    %s69 = sadd.s32 %s68, 1
    %p72 = scmp.eq.s32.totalorder %s13, 1
    %p73 = scmp.ne.s32.totalorder %s68, %s70
    %p74 = scmp.eq.s32.totalorder %s13, 0
    %p75 = por %p73, %p74
    %p76 = scmp.ne.s32.totalorder %s68, %s70
    %p77 = scmp.eq.s32.totalorder %s18, 1
    %p78 = por %p76, %p77
    %p79 = scmp.ne.s32.totalorder %s70, %s71
    %p80 = scmp.eq.s32.totalorder %s18, 0
    %p81 = por %p79, %p80
    %p82 = scmp.ne.s32.totalorder %s70, %s71
    %p83 = scmp.eq.s32.totalorder %s19, 1
    %p84 = por %p82, %p83
    %p86 = scmp.ne.s32.totalorder %s71, %s85
    %p87 = scmp.eq.s32.totalorder %s19, 0
    %p88 = por %p86, %p87
    %s90 = sadd.s32 %s89, 1
    %p93 = scmp.eq.s32.totalorder %s13, 1
    %p94 = scmp.ne.s32.totalorder %s89, %s91
    %p95 = scmp.eq.s32.totalorder %s13, 0
    %p96 = por %p94, %p95
    %p97 = scmp.ne.s32.totalorder %s89, %s91
    %p98 = scmp.eq.s32.totalorder %s18, 1
    %p99 = por %p97, %p98
    %p100 = scmp.ne.s32.totalorder %s91, %s92
    %p101 = scmp.eq.s32.totalorder %s18, 0
    %p102 = por %p100, %p101
    %p103 = scmp.ne.s32.totalorder %s91, %s92
    %p104 = scmp.eq.s32.totalorder %s19, 1
    %p105 = por %p103, %p104
    %p107 = scmp.ne.s32.totalorder %s92, %s106
    %p108 = scmp.eq.s32.totalorder %s19, 0
    %p109 = por %p107, %p108
    %s111 = sadd.s32 %s110, 1
    %p114 = scmp.eq.s32.totalorder %s13, 1
    %p115 = scmp.ne.s32.totalorder %s110, %s112
    %p116 = scmp.eq.s32.totalorder %s13, 0
    %p117 = por %p115, %p116
    %p118 = scmp.ne.s32.totalorder %s110, %s112
    %p119 = scmp.eq.s32.totalorder %s18, 1
    %p120 = por %p118, %p119
    %p121 = scmp.ne.s32.totalorder %s112, %s113
    %p122 = scmp.eq.s32.totalorder %s18, 0
    %p123 = por %p121, %p122
    %p124 = scmp.ne.s32.totalorder %s112, %s113
    %p125 = scmp.eq.s32.totalorder %s19, 1
    %p126 = por %p124, %p125
    %p128 = scmp.ne.s32.totalorder %s113, %s127
    %p129 = scmp.eq.s32.totalorder %s19, 0
    %p130 = por %p128, %p129
    %s131 = ssub.s32 %s13, %s20
    %p132 = scmp.eq.s32.totalorder %s131, 0
    %s134 = sadd.s32 %s133, 1
    %s135 = scalar_select %p132, %s133, %s134
    %p138 = pneg %p132
    %p139 = scmp.eq.s32.totalorder %s13, 1
    %p140 = por %p138, %p139
    %p141 = scmp.ne.s32.totalorder %s133, %s136
    %p142 = scmp.eq.s32.totalorder %s13, 0
    %p143 = por %p141, %p142
    %p144 = scmp.ne.s32.totalorder %s133, %s136
    %p145 = scmp.eq.s32.totalorder %s18, 1
    %p146 = por %p144, %p145
    %p147 = scmp.ne.s32.totalorder %s136, %s137
    %p148 = scmp.eq.s32.totalorder %s18, 0
    %p149 = por %p147, %p148
    %p150 = scmp.ne.s32.totalorder %s136, %s137
    %p151 = scmp.eq.s32.totalorder %s19, 1
    %p152 = por %p150, %p151
    %p154 = scmp.ne.s32.totalorder %s137, %s153
    %p155 = scmp.eq.s32.totalorder %s19, 0
    %p156 = por %p154, %p155
    %s157 = ssub.s32 %s13, %s20
    %p158 = scmp.eq.s32.totalorder %s157, 0
    %s160 = sadd.s32 %s159, 1
    %s161 = scalar_select %p158, %s159, %s160
    %p164 = pneg %p158
    %p165 = scmp.eq.s32.totalorder %s13, 1
    %p166 = por %p164, %p165
    %p167 = scmp.ne.s32.totalorder %s159, %s162
    %p168 = scmp.eq.s32.totalorder %s13, 0
    %p169 = por %p167, %p168
    %p170 = scmp.ne.s32.totalorder %s159, %s162
    %p171 = scmp.eq.s32.totalorder %s18, 1
    %p172 = por %p170, %p171
    %p173 = scmp.ne.s32.totalorder %s162, %s163
    %p174 = scmp.eq.s32.totalorder %s18, 0
    %p175 = por %p173, %p174
    %p176 = scmp.ne.s32.totalorder %s162, %s163
    %p177 = scmp.eq.s32.totalorder %s19, 1
    %p178 = por %p176, %p177
    %p180 = scmp.ne.s32.totalorder %s163, %s179
    %p181 = scmp.eq.s32.totalorder %s19, 0
    %p182 = por %p180, %p181
    %p183 = scmp.le.s32.totalorder 1, %s13
    %p184 = scmp.lt.s32.totalorder %s13, 3
    %p185 = pnand %p183, %p184
    %p186 = pneg %p185
    // Predicated region
    $region9: #{conv_block_forward.4} parent=5 // pred_check
      _
    $region10: #{conv_block_forward.4} parent=5 // pred_check_branch
      %188 = sbr.rel (%p185) target = $region12
    $region11: #{conv_block_forward.4} parent=5 // pred_region
      %s189 = ssub.s32 %s13, 1
      // Predicated region
      $region13: #{conv_block_forward.4} parent=11 // pred_check
        %p190 = pneg %p60
      $region14: #{conv_block_forward.4} parent=11 // pred_check_branch
        %192 = sbr.rel (%p190) target = $region16
      $region15: #{conv_block_forward.4} parent=11 // pred_region
        _
      $region16: #{conv_block_forward.4} parent=11 // pred_fallthru
        _
      // Predicated region
      $region17: #{conv_block_forward.4} parent=11 // pred_check
        %p193 = pneg %p81
      $region18: #{conv_block_forward.4} parent=11 // pred_check_branch
        %195 = sbr.rel (%p193) target = $region20
      $region19: #{conv_block_forward.4} parent=11 // pred_region
        _
      $region20: #{conv_block_forward.4} parent=11 // pred_fallthru
        _
      // Predicated region
      $region21: #{conv_block_forward.4} parent=11 // pred_check
        %p196 = pneg %p102
      $region22: #{conv_block_forward.4} parent=11 // pred_check_branch
        %198 = sbr.rel (%p196) target = $region24
      $region23: #{conv_block_forward.4} parent=11 // pred_region
        _
      $region24: #{conv_block_forward.4} parent=11 // pred_fallthru
        _
      // Predicated region
      $region25: #{conv_block_forward.4} parent=11 // pred_check
        %p199 = pneg %p123
      $region26: #{conv_block_forward.4} parent=11 // pred_check_branch
        %201 = sbr.rel (%p199) target = $region28
      $region27: #{conv_block_forward.4} parent=11 // pred_region
        _
      $region28: #{conv_block_forward.4} parent=11 // pred_fallthru
        _
    $region12: #{conv_block_forward.4} parent=5 // pred_fallthru
      _
    %p202 = scmp.lt.s32.totalorder %s13, 2
    // Predicated region
    $region29: #{conv_block_forward.4} parent=5 // pred_check
      %p203 = pneg %p202
    $region30: #{conv_block_forward.4} parent=5 // pred_check_branch
      %205 = sbr.rel (%p203) target = $region32
    $region31: #{conv_block_forward.4} parent=5 // pred_region
      // Predicated region
      $region33: #{conv_block_forward.4} parent=31 // pred_check
        %p206 = pneg %p33
      $region34: #{conv_block_forward.4} parent=31 // pred_check_branch
        %208 = sbr.rel (%p206) target = $region36
      $region35: #{conv_block_forward.4} parent=31 // pred_region
        %p209 = scmp.lt.s32.totalorder %s13, 1
        %s210 = scalar_select %p209, %s13, 1
        %s211 = smul.addr %s210, 32
        %s212 = smul.addr %s211, 8
        %s213 = scalar_lea.vmem %s0, %s212
      $region36: #{conv_block_forward.4} parent=31 // pred_fallthru
        _
    $region32: #{conv_block_forward.4} parent=5 // pred_fallthru
      _
    %p214 = scmp.le.s32.totalorder 1, %s13
    %p215 = scmp.lt.s32.totalorder %s13, 3
    %p216 = pnand %p214, %p215
    %p217 = pneg %p216
    // Predicated region
    $region37: #{conv_block_forward.4} parent=5 // pred_check
      _
    $region38: #{conv_block_forward.4} parent=5 // pred_check_branch
      %219 = sbr.rel (%p216) target = $region40
    $region39: #{conv_block_forward.4} parent=5 // pred_region
      %s220 = ssub.s32 %s13, 1
      %p221 = scmp.lt.s32.totalorder %s18, 1
      %s222 = scalar_select %p221, %s18, 1
      %s223 = smul.addr %s222, 32
      %s224 = smul.addr %s223, 8
      %s225 = scalar_lea.vmem %s0, %s224
      %p226 = pneg %p39
      %p227 = pneg %p36
      %p228 = pneg %p60
      %p229 = pneg %p57
      %p230 = pneg %p81
      %p231 = pneg %p78
      %p232 = pneg %p102
      %p233 = pneg %p99
      %p234 = pneg %p123
      %p235 = pneg %p120
      %p236 = pneg %p149
      %p237 = pneg %p146
      %p238 = scmp.lt.s32.totalorder %s18, 1
      %s239 = scalar_select %p238, %s18, 1
      %s240 = smul.addr %s239, 32
      %s241 = smul.addr %s240, 8
      %s242 = scalar_lea.vmem %s5, %s241
      %p243 = pneg %p175
      %p244 = pneg %p172
      %p245 = scmp.lt.s32.totalorder %s18, 1
      %s246 = scalar_select %p245, %s18, 1
      %s247 = smul.addr %s246, 2
      %s248 = scalar_lea.vmem %s6, %s247
      %p249 = scmp.lt.s32.totalorder %s18, 1
      %s250 = scalar_select %p249, %s18, 1
      %s251 = smul.addr %s250, 32
      %s252 = smul.addr %s251, 8
      %s253 = scalar_lea.vmem %s0, %s252
      %p254 = scmp.lt.s32.totalorder %s18, 1
      %s255 = scalar_select %p254, %s18, 1
      %s256 = smul.addr %s255, 32
      %s257 = smul.addr %s256, 8
      %s258 = scalar_lea.vmem %s5, %s257
      %p259 = scmp.lt.s32.totalorder %s18, 1
      %s260 = scalar_select %p259, %s18, 1
      %s261 = smul.addr %s260, 2
      %s262 = scalar_lea.vmem %s6, %s261
      %v263 = vld [vmem:[%s253] sm:$0xff]
      %v264 = vld [vmem:[%s253 + $0x8] sm:$0xff]
      %v265 = vld [vmem:[%s253 + $0x10] sm:$0xff]
      %v266 = vld [vmem:[%s253 + $0x18] sm:$0xff]
      %v267 = vld [vmem:[%s253 + $0x20] sm:$0xff]
      %v268 = vld [vmem:[%s253 + $0x28] sm:$0xff]
      %v269 = vld [vmem:[%s253 + $0x30] sm:$0xff]
      %v270 = vld [vmem:[%s253 + $0x38] sm:$0xff]
      %v271 = vld [vmem:[%s253 + $0x40] sm:$0xff]
      %v272 = vld [vmem:[%s253 + $0x48] sm:$0xff]
      %v273 = vld [vmem:[%s253 + $0x50] sm:$0xff]
      %v274 = vld [vmem:[%s253 + $0x58] sm:$0xff]
      %v275 = vld [vmem:[%s253 + $0x60] sm:$0xff]
      %v276 = vld [vmem:[%s253 + $0x68] sm:$0xff]
      %v277 = vld [vmem:[%s253 + $0x70] sm:$0xff]
      %v278 = vld [vmem:[%s253 + $0x78] sm:$0xff]
      %v279 = vld [vmem:[%s253 + $0x80] sm:$0xff]
      %v280 = vld [vmem:[%s253 + $0x88] sm:$0xff]
      %v281 = vld [vmem:[%s253 + $0x90] sm:$0xff]
      %v282 = vld [vmem:[%s253 + $0x98] sm:$0xff]
      %v283 = vld [vmem:[%s253 + $0xa0] sm:$0xff]
      %v284 = vld [vmem:[%s253 + $0xa8] sm:$0xff]
      %v285 = vld [vmem:[%s253 + $0xb0] sm:$0xff]
      %v286 = vld [vmem:[%s253 + $0xb8] sm:$0xff]
      %v287 = vld [vmem:[%s253 + $0xc0] sm:$0xff]
      %v288 = vld [vmem:[%s253 + $0xc8] sm:$0xff]
      %v289 = vld [vmem:[%s253 + $0xd0] sm:$0xff]
      %v290 = vld [vmem:[%s253 + $0xd8] sm:$0xff]
      %v291 = vld [vmem:[%s253 + $0xe0] sm:$0xff]
      %v292 = vld [vmem:[%s253 + $0xe8] sm:$0xff]
      %v293 = vld [vmem:[%s253 + $0xf0] sm:$0xff]
      %v294 = vld [vmem:[%s253 + $0xf8] sm:$0xff]
      %v295 = vld [vmem:[%s1] sm:$0x1]
      %v297 = vlaneseq
      %v298 = vshrl.u32 %v297, 7
      %v299 = vsub.s32 0, %v298
      %v300 = vrot.slane %v295, %v299
      %v302 = vmul.f32 %v263, %v300
      %v303 = vmul.f32 %v264, %v300
      %v304 = vmul.f32 %v265, %v300
      %v305 = vmul.f32 %v266, %v300
      %v306 = vmul.f32 %v267, %v300
      %v307 = vmul.f32 %v268, %v300
      %v308 = vmul.f32 %v269, %v300
      %v309 = vmul.f32 %v270, %v300
      %v310 = vmul.f32 %v271, %v300
      %v311 = vmul.f32 %v272, %v300
      %v312 = vmul.f32 %v273, %v300
      %v313 = vmul.f32 %v274, %v300
      %v314 = vmul.f32 %v275, %v300
      %v315 = vmul.f32 %v276, %v300
      %v316 = vmul.f32 %v277, %v300
      %v317 = vmul.f32 %v278, %v300
      %v318 = vmul.f32 %v279, %v300
      %v319 = vmul.f32 %v280, %v300
      %v320 = vmul.f32 %v281, %v300
      %v321 = vmul.f32 %v282, %v300
      %v322 = vmul.f32 %v283, %v300
      %v323 = vmul.f32 %v284, %v300
      %v324 = vmul.f32 %v285, %v300
      %v325 = vmul.f32 %v286, %v300
      %v326 = vmul.f32 %v287, %v300
      %v327 = vmul.f32 %v288, %v300
      %v328 = vmul.f32 %v289, %v300
      %v329 = vmul.f32 %v290, %v300
      %v330 = vmul.f32 %v291, %v300
      %v331 = vmul.f32 %v292, %v300
      %v332 = vmul.f32 %v293, %v300
      %v333 = vmul.f32 %v294, %v300
      %v334 = vld [vmem:[%s2] sm:$0x1]
      %v336 = vlaneseq
      %v337 = vshrl.u32 %v336, 7
      %v338 = vsub.s32 0, %v337
      %v339 = vrot.slane %v334, %v338
      %v341 = vadd.f32 %v302, %v339
      %v342 = vadd.f32 %v303, %v339
      %v343 = vadd.f32 %v304, %v339
      %v344 = vadd.f32 %v305, %v339
      %v345 = vadd.f32 %v306, %v339
      %v346 = vadd.f32 %v307, %v339
      %v347 = vadd.f32 %v308, %v339
      %v348 = vadd.f32 %v309, %v339
      %v349 = vadd.f32 %v310, %v339
      %v350 = vadd.f32 %v311, %v339
      %v351 = vadd.f32 %v312, %v339
      %v352 = vadd.f32 %v313, %v339
      %v353 = vadd.f32 %v314, %v339
      %v354 = vadd.f32 %v315, %v339
      %v355 = vadd.f32 %v316, %v339
      %v356 = vadd.f32 %v317, %v339
      %v357 = vadd.f32 %v318, %v339
      %v358 = vadd.f32 %v319, %v339
      %v359 = vadd.f32 %v320, %v339
      %v360 = vadd.f32 %v321, %v339
      %v361 = vadd.f32 %v322, %v339
      %v362 = vadd.f32 %v323, %v339
      %v363 = vadd.f32 %v324, %v339
      %v364 = vadd.f32 %v325, %v339
      %v365 = vadd.f32 %v326, %v339
      %v366 = vadd.f32 %v327, %v339
      %v367 = vadd.f32 %v328, %v339
      %v368 = vadd.f32 %v329, %v339
      %v369 = vadd.f32 %v330, %v339
      %v370 = vadd.f32 %v331, %v339
      %v371 = vadd.f32 %v332, %v339
      %v372 = vadd.f32 %v333, %v339
      %v373 = vmax.f32 %v341, 0.0
      %v374 = vmax.f32 %v342, 0.0
      %v375 = vmax.f32 %v343, 0.0
      %v376 = vmax.f32 %v344, 0.0
      %v377 = vmax.f32 %v345, 0.0
      %v378 = vmax.f32 %v346, 0.0
      %v379 = vmax.f32 %v347, 0.0
      %v380 = vmax.f32 %v348, 0.0
      %v381 = vmax.f32 %v349, 0.0
      %v382 = vmax.f32 %v350, 0.0
      %v383 = vmax.f32 %v351, 0.0
      %v384 = vmax.f32 %v352, 0.0
      %v385 = vmax.f32 %v353, 0.0
      %v386 = vmax.f32 %v354, 0.0
      %v387 = vmax.f32 %v355, 0.0
      %v388 = vmax.f32 %v356, 0.0
      %v389 = vmax.f32 %v357, 0.0
      %v390 = vmax.f32 %v358, 0.0
      %v391 = vmax.f32 %v359, 0.0
      %v392 = vmax.f32 %v360, 0.0
      %v393 = vmax.f32 %v361, 0.0
      %v394 = vmax.f32 %v362, 0.0
      %v395 = vmax.f32 %v363, 0.0
      %v396 = vmax.f32 %v364, 0.0
      %v397 = vmax.f32 %v365, 0.0
      %v398 = vmax.f32 %v366, 0.0
      %v399 = vmax.f32 %v367, 0.0
      %v400 = vmax.f32 %v368, 0.0
      %v401 = vmax.f32 %v369, 0.0
      %v402 = vmax.f32 %v370, 0.0
      %v403 = vmax.f32 %v371, 0.0
      %v404 = vmax.f32 %v372, 0.0
      %vm405 = vcmask 64512
      %406 = vst.msk [vmem:[#allocation2] sm:$0xff] %vm405, 0.0
      %407 = vst.msk [vmem:[#allocation2 + $0x8] sm:$0xff] %vm405, 0.0
      %vm408 = vcmask 58368
      %409 = vst.msk [vmem:[#allocation2 + $0x10] sm:$0x3] %vm408, 0.0
      %s410 = scalar_lea.vmem [#allocation2], 408
      %411 = vst.msk [vmem:[%s410] sm:$0xff] %vm405, 0.0
      %412 = vst.msk [vmem:[%s410 + $0x8] sm:$0xff] %vm405, 0.0
      %413 = vst.msk [vmem:[%s410 + $0x10] sm:$0x3] %vm408, 0.0
      %vm414 = vcmask 57344
      %415 = vst.msk [vmem:[#allocation2] sm:$0x1] %vm414, 0.0
      %416 = vst.msk [vmem:[#allocation2 + $0x18] sm:$0x1] %vm414, 0.0
      %417 = vst.msk [vmem:[#allocation2 + $0x30] sm:$0x1] %vm414, 0.0
      %418 = vst.msk [vmem:[#allocation2 + $0x48] sm:$0x1] %vm414, 0.0
      %419 = vst.msk [vmem:[#allocation2 + $0x60] sm:$0x1] %vm414, 0.0
      %420 = vst.msk [vmem:[#allocation2 + $0x78] sm:$0x1] %vm414, 0.0
      %421 = vst.msk [vmem:[#allocation2 + $0x90] sm:$0x1] %vm414, 0.0
      %422 = vst.msk [vmem:[#allocation2 + $0xa8] sm:$0x1] %vm414, 0.0
      %423 = vst.msk [vmem:[#allocation2 + $0xc0] sm:$0x1] %vm414, 0.0
      %424 = vst.msk [vmem:[#allocation2 + $0xd8] sm:$0x1] %vm414, 0.0
      %425 = vst.msk [vmem:[#allocation2 + $0xf0] sm:$0x1] %vm414, 0.0
      %426 = vst.msk [vmem:[#allocation2 + $0x108] sm:$0x1] %vm414, 0.0
      %427 = vst.msk [vmem:[#allocation2 + $0x120] sm:$0x1] %vm414, 0.0
      %428 = vst.msk [vmem:[#allocation2 + $0x138] sm:$0x1] %vm414, 0.0
      %429 = vst.msk [vmem:[#allocation2 + $0x150] sm:$0x1] %vm414, 0.0
      %430 = vst.msk [vmem:[#allocation2 + $0x168] sm:$0x1] %vm414, 0.0
      %431 = vst.msk [vmem:[#allocation2 + $0x180] sm:$0x1] %vm414, 0.0
      %432 = vst.msk [vmem:[#allocation2 + $0x198] sm:$0x1] %vm414, 0.0
      %433 = vst.msk [vmem:[#allocation2 + $0x11] sm:$0x1] %vm414, 0.0
      %434 = vst.msk [vmem:[#allocation2 + $0x29] sm:$0x1] %vm414, 0.0
      %435 = vst.msk [vmem:[#allocation2 + $0x41] sm:$0x1] %vm414, 0.0
      %436 = vst.msk [vmem:[#allocation2 + $0x59] sm:$0x1] %vm414, 0.0
      %437 = vst.msk [vmem:[#allocation2 + $0x71] sm:$0x1] %vm414, 0.0
      %438 = vst.msk [vmem:[#allocation2 + $0x89] sm:$0x1] %vm414, 0.0
      %439 = vst.msk [vmem:[#allocation2 + $0xa1] sm:$0x1] %vm414, 0.0
      %440 = vst.msk [vmem:[#allocation2 + $0xb9] sm:$0x1] %vm414, 0.0
      %441 = vst.msk [vmem:[#allocation2 + $0xd1] sm:$0x1] %vm414, 0.0
      %442 = vst.msk [vmem:[#allocation2 + $0xe9] sm:$0x1] %vm414, 0.0
      %443 = vst.msk [vmem:[#allocation2 + $0x101] sm:$0x1] %vm414, 0.0
      %444 = vst.msk [vmem:[#allocation2 + $0x119] sm:$0x1] %vm414, 0.0
      %445 = vst.msk [vmem:[#allocation2 + $0x131] sm:$0x1] %vm414, 0.0
      %446 = vst.msk [vmem:[#allocation2 + $0x149] sm:$0x1] %vm414, 0.0
      %447 = vst.msk [vmem:[#allocation2 + $0x161] sm:$0x1] %vm414, 0.0
      %448 = vst.msk [vmem:[#allocation2 + $0x179] sm:$0x1] %vm414, 0.0
      %449 = vst.msk [vmem:[#allocation2 + $0x191] sm:$0x1] %vm414, 0.0
      %450 = vst.msk [vmem:[#allocation2 + $0x1a9] sm:$0x1] %vm414, 0.0
      %s451 = scalar_lea.vmem [#allocation2], 24
      %452 = vst.msk [vmem:[%s451 + $0x1] sm:$0xff] %vm405, %v373
      %453 = vst.msk [vmem:[%s451 + $0x9] sm:$0xff] %vm405, %v374
      %454 = vst.msk [vmem:[%s451 + $0x19] sm:$0xff] %vm405, %v375
      %455 = vst.msk [vmem:[%s451 + $0x21] sm:$0xff] %vm405, %v376
      %456 = vst.msk [vmem:[%s451 + $0x31] sm:$0xff] %vm405, %v377
      %457 = vst.msk [vmem:[%s451 + $0x39] sm:$0xff] %vm405, %v378
      %458 = vst.msk [vmem:[%s451 + $0x49] sm:$0xff] %vm405, %v379
      %459 = vst.msk [vmem:[%s451 + $0x51] sm:$0xff] %vm405, %v380
      %460 = vst.msk [vmem:[%s451 + $0x61] sm:$0xff] %vm405, %v381
      %461 = vst.msk [vmem:[%s451 + $0x69] sm:$0xff] %vm405, %v382
      %462 = vst.msk [vmem:[%s451 + $0x79] sm:$0xff] %vm405, %v383
      %463 = vst.msk [vmem:[%s451 + $0x81] sm:$0xff] %vm405, %v384
      %464 = vst.msk [vmem:[%s451 + $0x91] sm:$0xff] %vm405, %v385
      %465 = vst.msk [vmem:[%s451 + $0x99] sm:$0xff] %vm405, %v386
      %466 = vst.msk [vmem:[%s451 + $0xa9] sm:$0xff] %vm405, %v387
      %467 = vst.msk [vmem:[%s451 + $0xb1] sm:$0xff] %vm405, %v388
      %468 = vst.msk [vmem:[%s451 + $0xc1] sm:$0xff] %vm405, %v389
      %469 = vst.msk [vmem:[%s451 + $0xc9] sm:$0xff] %vm405, %v390
      %470 = vst.msk [vmem:[%s451 + $0xd9] sm:$0xff] %vm405, %v391
      %471 = vst.msk [vmem:[%s451 + $0xe1] sm:$0xff] %vm405, %v392
      %472 = vst.msk [vmem:[%s451 + $0xf1] sm:$0xff] %vm405, %v393
      %473 = vst.msk [vmem:[%s451 + $0xf9] sm:$0xff] %vm405, %v394
      %474 = vst.msk [vmem:[%s451 + $0x109] sm:$0xff] %vm405, %v395
      %475 = vst.msk [vmem:[%s451 + $0x111] sm:$0xff] %vm405, %v396
      %476 = vst.msk [vmem:[%s451 + $0x121] sm:$0xff] %vm405, %v397
      %477 = vst.msk [vmem:[%s451 + $0x129] sm:$0xff] %vm405, %v398
      %478 = vst.msk [vmem:[%s451 + $0x139] sm:$0xff] %vm405, %v399
      %479 = vst.msk [vmem:[%s451 + $0x141] sm:$0xff] %vm405, %v400
      %480 = vst.msk [vmem:[%s451 + $0x151] sm:$0xff] %vm405, %v401
      %481 = vst.msk [vmem:[%s451 + $0x159] sm:$0xff] %vm405, %v402
      %482 = vst.msk [vmem:[%s451 + $0x169] sm:$0xff] %vm405, %v403
      %483 = vst.msk [vmem:[%s451 + $0x171] sm:$0xff] %vm405, %v404
      %v484 = vld [vmem:[#allocation2] sm:$0xff]
      %v485 = vld [vmem:[#allocation2 + $0x8] sm:$0xff]
      %v486 = vld [vmem:[#allocation2 + $0x18] sm:$0xff]
      %v487 = vld [vmem:[#allocation2 + $0x20] sm:$0xff]
      %v488 = vld [vmem:[#allocation2 + $0x30] sm:$0xff]
      %v489 = vld [vmem:[#allocation2 + $0x38] sm:$0xff]
      %v490 = vld [vmem:[#allocation2 + $0x48] sm:$0xff]
      %v491 = vld [vmem:[#allocation2 + $0x50] sm:$0xff]
      %v492 = vld [vmem:[#allocation2 + $0x60] sm:$0xff]
      %v493 = vld [vmem:[#allocation2 + $0x68] sm:$0xff]
      %v494 = vld [vmem:[#allocation2 + $0x78] sm:$0xff]
      %v495 = vld [vmem:[#allocation2 + $0x80] sm:$0xff]
      %v496 = vld [vmem:[#allocation2 + $0x90] sm:$0xff]
      %v497 = vld [vmem:[#allocation2 + $0x98] sm:$0xff]
      %v498 = vld [vmem:[#allocation2 + $0xa8] sm:$0xff]
      %v499 = vld [vmem:[#allocation2 + $0xb0] sm:$0xff]
      %v500 = vld [vmem:[#allocation2 + $0xc0] sm:$0xff]
      %v501 = vld [vmem:[#allocation2 + $0xc8] sm:$0xff]
      %v502 = vld [vmem:[#allocation2 + $0xd8] sm:$0xff]
      %v503 = vld [vmem:[#allocation2 + $0xe0] sm:$0xff]
      %v504 = vld [vmem:[#allocation2 + $0xf0] sm:$0xff]
      %v505 = vld [vmem:[#allocation2 + $0xf8] sm:$0xff]
      %v506 = vld [vmem:[#allocation2 + $0x108] sm:$0xff]
      %v507 = vld [vmem:[#allocation2 + $0x110] sm:$0xff]
      %v508 = vld [vmem:[#allocation2 + $0x120] sm:$0xff]
      %v509 = vld [vmem:[#allocation2 + $0x128] sm:$0xff]
      %v510 = vld [vmem:[#allocation2 + $0x138] sm:$0xff]
      %v511 = vld [vmem:[#allocation2 + $0x140] sm:$0xff]
      %v512 = vld [vmem:[#allocation2 + $0x150] sm:$0xff]
      %v513 = vld [vmem:[#allocation2 + $0x158] sm:$0xff]
      %v514 = vld [vmem:[#allocation2 + $0x168] sm:$0xff]
      %v515 = vld [vmem:[#allocation2 + $0x170] sm:$0xff]
      %v516 = vld [vmem:[%s3] sm:$0xff]
      %v517 = vld [vmem:[#allocation2 + $0x1] sm:$0xff]
      %v518 = vld [vmem:[#allocation2 + $0x9] sm:$0xff]
      %v519 = vld [vmem:[#allocation2 + $0x19] sm:$0xff]
      %v520 = vld [vmem:[#allocation2 + $0x21] sm:$0xff]
      %v521 = vld [vmem:[#allocation2 + $0x31] sm:$0xff]
      %v522 = vld [vmem:[#allocation2 + $0x39] sm:$0xff]
      %v523 = vld [vmem:[#allocation2 + $0x49] sm:$0xff]
      %v524 = vld [vmem:[#allocation2 + $0x51] sm:$0xff]
      %v525 = vld [vmem:[#allocation2 + $0x61] sm:$0xff]
      %v526 = vld [vmem:[#allocation2 + $0x69] sm:$0xff]
      %v527 = vld [vmem:[#allocation2 + $0x79] sm:$0xff]
      %v528 = vld [vmem:[#allocation2 + $0x81] sm:$0xff]
      %v529 = vld [vmem:[#allocation2 + $0x91] sm:$0xff]
      %v530 = vld [vmem:[#allocation2 + $0x99] sm:$0xff]
      %v531 = vld [vmem:[#allocation2 + $0xa9] sm:$0xff]
      %v532 = vld [vmem:[#allocation2 + $0xb1] sm:$0xff]
      %v533 = vld [vmem:[#allocation2 + $0xc1] sm:$0xff]
      %v534 = vld [vmem:[#allocation2 + $0xc9] sm:$0xff]
      %v535 = vld [vmem:[#allocation2 + $0xd9] sm:$0xff]
      %v536 = vld [vmem:[#allocation2 + $0xe1] sm:$0xff]
      %v537 = vld [vmem:[#allocation2 + $0xf1] sm:$0xff]
      %v538 = vld [vmem:[#allocation2 + $0xf9] sm:$0xff]
      %v539 = vld [vmem:[#allocation2 + $0x109] sm:$0xff]
      %v540 = vld [vmem:[#allocation2 + $0x111] sm:$0xff]
      %v541 = vld [vmem:[#allocation2 + $0x121] sm:$0xff]
      %v542 = vld [vmem:[#allocation2 + $0x129] sm:$0xff]
      %v543 = vld [vmem:[#allocation2 + $0x139] sm:$0xff]
      %v544 = vld [vmem:[#allocation2 + $0x141] sm:$0xff]
      %v545 = vld [vmem:[#allocation2 + $0x151] sm:$0xff]
      %v546 = vld [vmem:[#allocation2 + $0x159] sm:$0xff]
      %v547 = vld [vmem:[#allocation2 + $0x169] sm:$0xff]
      %v548 = vld [vmem:[#allocation2 + $0x171] sm:$0xff]
      %s549 = scalar_lea.vmem %s3, 8
      %v550 = vld [vmem:[%s549] sm:$0xff]
      %v552 = vsel %vm405, %v517, 0
      %v555 = vsel %vm405, %v518, 0
      %v558 = vsel %vm405, %v519, 0
      %v561 = vsel %vm405, %v520, 0
      %v564 = vsel %vm405, %v521, 0
      %v567 = vsel %vm405, %v522, 0
      %v570 = vsel %vm405, %v523, 0
      %v573 = vsel %vm405, %v524, 0
      %v576 = vsel %vm405, %v525, 0
      %v579 = vsel %vm405, %v526, 0
      %v582 = vsel %vm405, %v527, 0
      %v585 = vsel %vm405, %v528, 0
      %v588 = vsel %vm405, %v529, 0
      %v591 = vsel %vm405, %v530, 0
      %v594 = vsel %vm405, %v531, 0
      %v597 = vsel %vm405, %v532, 0
      %v600 = vsel %vm405, %v533, 0
      %v603 = vsel %vm405, %v534, 0
      %v606 = vsel %vm405, %v535, 0
      %v609 = vsel %vm405, %v536, 0
      %v612 = vsel %vm405, %v537, 0
      %v615 = vsel %vm405, %v538, 0
      %v618 = vsel %vm405, %v539, 0
      %v621 = vsel %vm405, %v540, 0
      %v624 = vsel %vm405, %v541, 0
      %v627 = vsel %vm405, %v542, 0
      %v630 = vsel %vm405, %v543, 0
      %v633 = vsel %vm405, %v544, 0
      %v636 = vsel %vm405, %v545, 0
      %v639 = vsel %vm405, %v546, 0
      %v642 = vsel %vm405, %v547, 0
      %v645 = vsel %vm405, %v548, 0
      %647 = vmatprep.subr.mxu0 0.0
      %648 = vmatpush1.msra.mxu0 %v550
      %649 = vmatprep.subr.mxu0 0.0
      %650 = vmatpush1.msra.mxu0 0.0
      %651 = vmatprep.subr.mxu0 0.0
      %652 = vmatpush1.msra.mxu0 0.0
      %653 = vmatprep.subr.mxu0 0.0
      %654 = vmatpush1.msra.mxu0 0.0
      %655 = vmatprep.subr.mxu0 0.0
      %656 = vmatpush1.msra.mxu0 0.0
      %657 = vmatprep.subr.mxu0 0.0
      %658 = vmatpush1.msra.mxu0 0.0
      %659 = vmatprep.subr.mxu0 0.0
      %660 = vmatpush1.msra.mxu0 0.0
      %661 = vmatprep.subr.mxu0 0.0
      %662 = vmatpush1.msra.mxu0 0.0
      %663 = vmatprep.subr.mxu0 0.0
      %664 = vmatpush1.msra.mxu0 0.0
      %665 = vmatprep.subr.mxu0 0.0
      %666 = vmatpush1.msra.mxu0 0.0
      %667 = vmatprep.subr.mxu0 0.0
      %668 = vmatpush1.msra.mxu0 0.0
      %669 = vmatprep.subr.mxu0 0.0
      %670 = vmatpush1.msra.mxu0 0.0
      %671 = vmatprep.subr.mxu0 0.0
      %672 = vmatpush1.msra.mxu0 0.0
      %673 = vmatprep.subr.mxu0 0.0
      %674 = vmatpush1.msra.mxu0 0.0
      %675 = vmatprep.subr.mxu0 0.0
      %676 = vmatpush1.msra.mxu0 0.0
      %677 = vmatprep.subr.mxu0 0.0
      %678 = vmatpush1.msra.mxu0 0.0
      %679 = vmatprep.subr.mxu0 0.0
      %680 = vmatpush1.msra.mxu0 0.0
      %681 = vmatprep.subr.mxu0 0.0
      %682 = vmatpush1.msra.mxu0 0.0
      %683 = vmatprep.subr.mxu0 0.0
      %684 = vmatpush1.msra.mxu0 0.0
      %685 = vmatprep.subr.mxu0 0.0
      %686 = vmatpush1.msra.mxu0 0.0
      %687 = vmatprep.subr.mxu0 0.0
      %688 = vmatpush1.msra.mxu0 0.0
      %689 = vmatprep.subr.mxu0 0.0
      %690 = vmatpush1.msra.mxu0 0.0
      %691 = vmatprep.subr.mxu0 0.0
      %692 = vmatpush1.msra.mxu0 0.0
      %693 = vmatprep.subr.mxu0 0.0
      %694 = vmatpush1.msra.mxu0 0.0
      %695 = vmatprep.subr.mxu0 0.0
      %696 = vmatpush1.msra.mxu0 0.0
      %697 = vmatprep.subr.mxu0 0.0
      %698 = vmatpush1.msra.mxu0 0.0
      %699 = vmatprep.subr.mxu0 0.0
      %700 = vmatpush1.msra.mxu0 0.0
      %701 = vmatprep.subr.mxu0 0.0
      %702 = vmatpush1.msra.mxu0 0.0
      %703 = vmatprep.subr.mxu0 0.0
      %704 = vmatpush1.msra.mxu0 0.0
      %705 = vmatprep.subr.mxu0 0.0
      %706 = vmatpush1.msra.mxu0 0.0
      %707 = vmatprep.subr.mxu0 0.0
      %708 = vmatpush1.msra.mxu0 0.0
      %709 = vmatprep.subr.mxu0 0.0
      %710 = vmatpush1.msra.mxu0 0.0
      %711 = vmatprep.mubr.f32.mxu0 0.0
      %712 = vmatmul.mubr.f32.gmra.mrb[0].mxu0 %v552
      %v713 = vpop.f32.mrb[0].mxu0
      %v714 = vadd.f32 0.0, %v713
      %v715 = vpop.f32.mrb[0].mxu0
      %716 = vmatprep.mubr.f32.mxu0 0.0
      %717 = vmatmul.mubr.f32.gmra.mrb[0].mxu0 %v555
      %v718 = vpop.f32.mrb[0].mxu0
      %v719 = vadd.f32 0.0, %v718
      %v720 = vpop.f32.mrb[0].mxu0
      %721 = vmatprep.mubr.f32.mxu0 0.0
      %722 = vmatmul.mubr.f32.gmra.mrb[0].mxu0 %v558
      %v723 = vpop.f32.mrb[0].mxu0
      %v724 = vadd.f32 0.0, %v723
      %v725 = vpop.f32.mrb[0].mxu0
      %726 = vmatprep.mubr.f32.mxu0 0.0
      %727 = vmatmul.mubr.f32.gmra.mrb[0].mxu0 %v561
      %v728 = vpop.f32.mrb[0].mxu0
      %v729 = vadd.f32 0.0, %v728
      %v730 = vpop.f32.mrb[0].mxu0
      %731 = vmatprep.mubr.f32.mxu0 0.0
      %732 = vmatmul.mubr.f32.gmra.mrb[0].mxu0 %v564
      %v733 = vpop.f32.mrb[0].mxu0
      %v734 = vadd.f32 0.0, %v733
      %v735 = vpop.f32.mrb[0].mxu0
      %736 = vmatprep.mubr.f32.mxu0 0.0
      %737 = vmatmul.mubr.f32.gmra.mrb[0].mxu0 %v567
      %v738 = vpop.f32.mrb[0].mxu0
      %v739 = vadd.f32 0.0, %v738
      %v740 = vpop.f32.mrb[0].mxu0
      %741 = vmatprep.mubr.f32.mxu0 0.0
      %742 = vmatmul.mubr.f32.gmra.mrb[0].mxu0 %v570
      %v743 = vpop.f32.mrb[0].mxu0
      %v744 = vadd.f32 0.0, %v743
      %v745 = vpop.f32.mrb[0].mxu0
      %746 = vmatprep.mubr.f32.mxu0 0.0
      %747 = vmatmul.mubr.f32.gmra.mrb[0].mxu0 %v573
      %v748 = vpop.f32.mrb[0].mxu0
      %v749 = vadd.f32 0.0, %v748
      %v750 = vpop.f32.mrb[0].mxu0
      %751 = vmatprep.mubr.f32.mxu0 0.0
      %752 = vmatmul.mubr.f32.gmra.mrb[0].mxu0 %v576
      %v753 = vpop.f32.mrb[0].mxu0
      %v754 = vadd.f32 0.0, %v753
      %v755 = vpop.f32.mrb[0].mxu0
      %756 = vmatprep.mubr.f32.mxu0 0.0
      %757 = vmatmul.mubr.f32.gmra.mrb[0].mxu0 %v579
      %v758 = vpop.f32.mrb[0].mxu0
      %v759 = vadd.f32 0.0, %v758
      %v760 = vpop.f32.mrb[0].mxu0
      %761 = vmatprep.mubr.f32.mxu0 0.0
      %762 = vmatmul.mubr.f32.gmra.mrb[0].mxu0 %v582
      %v763 = vpop.f32.mrb[0].mxu0
      %v764 = vadd.f32 0.0, %v763
      %v765 = vpop.f32.mrb[0].mxu0
      %766 = vmatprep.mubr.f32.mxu0 0.0
      %767 = vmatmul.mubr.f32.gmra.mrb[0].mxu0 %v585
      %v768 = vpop.f32.mrb[0].mxu0
      %v769 = vadd.f32 0.0, %v768
      %v770 = vpop.f32.mrb[0].mxu0
      %771 = vmatprep.mubr.f32.mxu0 0.0
      %772 = vmatmul.mubr.f32.gmra.mrb[0].mxu0 %v588
      %v773 = vpop.f32.mrb[0].mxu0
      %v774 = vadd.f32 0.0, %v773
      %v775 = vpop.f32.mrb[0].mxu0
      %776 = vmatprep.mubr.f32.mxu0 0.0
      %777 = vmatmul.mubr.f32.gmra.mrb[0].mxu0 %v591
      %v778 = vpop.f32.mrb[0].mxu0
      %v779 = vadd.f32 0.0, %v778
      %v780 = vpop.f32.mrb[0].mxu0
      %781 = vmatprep.mubr.f32.mxu0 0.0
      %782 = vmatmul.mubr.f32.gmra.mrb[0].mxu0 %v594
      %v783 = vpop.f32.mrb[0].mxu0
      %v784 = vadd.f32 0.0, %v783
      %v785 = vpop.f32.mrb[0].mxu0
      %786 = vmatprep.mubr.f32.mxu0 0.0
      %787 = vmatmul.mubr.f32.gmra.mrb[0].mxu0 %v597
      %v788 = vpop.f32.mrb[0].mxu0
      %v789 = vadd.f32 0.0, %v788
      %v790 = vpop.f32.mrb[0].mxu0
      %791 = vmatprep.mubr.f32.mxu0 0.0
      %792 = vmatmul.mubr.f32.gmra.mrb[0].mxu0 %v600
      %v793 = vpop.f32.mrb[0].mxu0
      %v794 = vadd.f32 0.0, %v793
      %v795 = vpop.f32.mrb[0].mxu0
      %796 = vmatprep.mubr.f32.mxu0 0.0
      %797 = vmatmul.mubr.f32.gmra.mrb[0].mxu0 %v603
      %v798 = vpop.f32.mrb[0].mxu0
      %v799 = vadd.f32 0.0, %v798
      %v800 = vpop.f32.mrb[0].mxu0
      %801 = vmatprep.mubr.f32.mxu0 0.0
      %802 = vmatmul.mubr.f32.gmra.mrb[0].mxu0 %v606
      %v803 = vpop.f32.mrb[0].mxu0
      %v804 = vadd.f32 0.0, %v803
      %v805 = vpop.f32.mrb[0].mxu0
      %806 = vmatprep.mubr.f32.mxu0 0.0
      %807 = vmatmul.mubr.f32.gmra.mrb[0].mxu0 %v609
      %v808 = vpop.f32.mrb[0].mxu0
      %v809 = vadd.f32 0.0, %v808
      %v810 = vpop.f32.mrb[0].mxu0
      %811 = vmatprep.mubr.f32.mxu0 0.0
      %812 = vmatmul.mubr.f32.gmra.mrb[0].mxu0 %v612
      %v813 = vpop.f32.mrb[0].mxu0
      %v814 = vadd.f32 0.0, %v813
      %v815 = vpop.f32.mrb[0].mxu0
      %816 = vmatprep.mubr.f32.mxu0 0.0
      %817 = vmatmul.mubr.f32.gmra.mrb[0].mxu0 %v615
      %v818 = vpop.f32.mrb[0].mxu0
      %v819 = vadd.f32 0.0, %v818
      %v820 = vpop.f32.mrb[0].mxu0
      %821 = vmatprep.mubr.f32.mxu0 0.0
      %822 = vmatmul.mubr.f32.gmra.mrb[0].mxu0 %v618
      %v823 = vpop.f32.mrb[0].mxu0
      %v824 = vadd.f32 0.0, %v823
      %v825 = vpop.f32.mrb[0].mxu0
      %826 = vmatprep.mubr.f32.mxu0 0.0
      %827 = vmatmul.mubr.f32.gmra.mrb[0].mxu0 %v621
      %v828 = vpop.f32.mrb[0].mxu0
      %v829 = vadd.f32 0.0, %v828
      %v830 = vpop.f32.mrb[0].mxu0
      %831 = vmatprep.mubr.f32.mxu0 0.0
      %832 = vmatmul.mubr.f32.gmra.mrb[0].mxu0 %v624
      %v833 = vpop.f32.mrb[0].mxu0
      %v834 = vadd.f32 0.0, %v833
      %v835 = vpop.f32.mrb[0].mxu0
      %836 = vmatprep.mubr.f32.mxu0 0.0
      %837 = vmatmul.mubr.f32.gmra.mrb[0].mxu0 %v627
      %v838 = vpop.f32.mrb[0].mxu0
      %v839 = vadd.f32 0.0, %v838
      %v840 = vpop.f32.mrb[0].mxu0
      %841 = vmatprep.mubr.f32.mxu0 0.0
      %842 = vmatmul.mubr.f32.gmra.mrb[0].mxu0 %v630
      %v843 = vpop.f32.mrb[0].mxu0
      %v844 = vadd.f32 0.0, %v843
      %v845 = vpop.f32.mrb[0].mxu0
      %846 = vmatprep.mubr.f32.mxu0 0.0
      %847 = vmatmul.mubr.f32.gmra.mrb[0].mxu0 %v633
      %v848 = vpop.f32.mrb[0].mxu0
      %v849 = vadd.f32 0.0, %v848
      %v850 = vpop.f32.mrb[0].mxu0
      %851 = vmatprep.mubr.f32.mxu0 0.0
      %852 = vmatmul.mubr.f32.gmra.mrb[0].mxu0 %v636
      %v853 = vpop.f32.mrb[0].mxu0
      %v854 = vadd.f32 0.0, %v853
      %v855 = vpop.f32.mrb[0].mxu0
      %856 = vmatprep.mubr.f32.mxu0 0.0
      %857 = vmatmul.mubr.f32.gmra.mrb[0].mxu0 %v639
      %v858 = vpop.f32.mrb[0].mxu0
      %v859 = vadd.f32 0.0, %v858
      %v860 = vpop.f32.mrb[0].mxu0
      %861 = vmatprep.mubr.f32.mxu0 0.0
      %862 = vmatmul.mubr.f32.gmra.mrb[0].mxu0 %v642
      %v863 = vpop.f32.mrb[0].mxu0
      %v864 = vadd.f32 0.0, %v863
      %v865 = vpop.f32.mrb[0].mxu0
      %866 = vmatprep.mubr.f32.mxu0 0.0
      %867 = vmatmul.mubr.f32.gmra.mrb[0].mxu0 %v645
      %v868 = vpop.f32.mrb[0].mxu0
      %v869 = vadd.f32 0.0, %v868
      %v870 = vpop.f32.mrb[0].mxu0
      %871 = vdwg.mxu0
      %v873 = vsel %vm405, %v484, 0
      %v876 = vsel %vm405, %v485, 0
      %v879 = vsel %vm405, %v486, 0
      %v882 = vsel %vm405, %v487, 0
      %v885 = vsel %vm405, %v488, 0
      %v888 = vsel %vm405, %v489, 0
      %v891 = vsel %vm405, %v490, 0
      %v894 = vsel %vm405, %v491, 0
      %v897 = vsel %vm405, %v492, 0
      %v900 = vsel %vm405, %v493, 0
      %v903 = vsel %vm405, %v494, 0
      %v906 = vsel %vm405, %v495, 0
      %v909 = vsel %vm405, %v496, 0
      %v912 = vsel %vm405, %v497, 0
      %v915 = vsel %vm405, %v498, 0
      %v918 = vsel %vm405, %v499, 0
      %v921 = vsel %vm405, %v500, 0
      %v924 = vsel %vm405, %v501, 0
      %v927 = vsel %vm405, %v502, 0
      %v930 = vsel %vm405, %v503, 0
      %v933 = vsel %vm405, %v504, 0
      %v936 = vsel %vm405, %v505, 0
      %v939 = vsel %vm405, %v506, 0
      %v942 = vsel %vm405, %v507, 0
      %v945 = vsel %vm405, %v508, 0
      %v948 = vsel %vm405, %v509, 0
      %v951 = vsel %vm405, %v510, 0
      %v954 = vsel %vm405, %v511, 0
      %v957 = vsel %vm405, %v512, 0
      %v960 = vsel %vm405, %v513, 0
      %v963 = vsel %vm405, %v514, 0
      %v966 = vsel %vm405, %v515, 0
      %968 = vmatprep.subr.mxu0 0.0
      %969 = vmatpush1.msra.mxu0 %v516
      %970 = vmatprep.subr.mxu0 0.0
      %971 = vmatpush1.msra.mxu0 0.0
      %972 = vmatprep.subr.mxu0 0.0
      %973 = vmatpush1.msra.mxu0 0.0
      %974 = vmatprep.subr.mxu0 0.0
      %975 = vmatpush1.msra.mxu0 0.0
      %976 = vmatprep.subr.mxu0 0.0
      %977 = vmatpush1.msra.mxu0 0.0
      %978 = vmatprep.subr.mxu0 0.0
      %979 = vmatpush1.msra.mxu0 0.0
      %980 = vmatprep.subr.mxu0 0.0
      %981 = vmatpush1.msra.mxu0 0.0
      %982 = vmatprep.subr.mxu0 0.0
      %983 = vmatpush1.msra.mxu0 0.0
      %984 = vmatprep.subr.mxu0 0.0
      %985 = vmatpush1.msra.mxu0 0.0
      %986 = vmatprep.subr.mxu0 0.0
      %987 = vmatpush1.msra.mxu0 0.0
      %988 = vmatprep.subr.mxu0 0.0
      %989 = vmatpush1.msra.mxu0 0.0
      %990 = vmatprep.subr.mxu0 0.0
      %991 = vmatpush1.msra.mxu0 0.0
      %992 = vmatprep.subr.mxu0 0.0
      %993 = vmatpush1.msra.mxu0 0.0
      %994 = vmatprep.subr.mxu0 0.0
      %995 = vmatpush1.msra.mxu0 0.0
      %996 = vmatprep.subr.mxu0 0.0
      %997 = vmatpush1.msra.mxu0 0.0
      %998 = vmatprep.subr.mxu0 0.0
      %999 = vmatpush1.msra.mxu0 0.0
      %1000 = vmatprep.subr.mxu0 0.0
      %1001 = vmatpush1.msra.mxu0 0.0
      %1002 = vmatprep.subr.mxu0 0.0
      %1003 = vmatpush1.msra.mxu0 0.0
      %1004 = vmatprep.subr.mxu0 0.0
      %1005 = vmatpush1.msra.mxu0 0.0
      %1006 = vmatprep.subr.mxu0 0.0
      %1007 = vmatpush1.msra.mxu0 0.0
      %1008 = vmatprep.subr.mxu0 0.0
      %1009 = vmatpush1.msra.mxu0 0.0
      %1010 = vmatprep.subr.mxu0 0.0
      %1011 = vmatpush1.msra.mxu0 0.0
      %1012 = vmatprep.subr.mxu0 0.0
      %1013 = vmatpush1.msra.mxu0 0.0
      %1014 = vmatprep.subr.mxu0 0.0
      %1015 = vmatpush1.msra.mxu0 0.0
      %1016 = vmatprep.subr.mxu0 0.0
      %1017 = vmatpush1.msra.mxu0 0.0
      %1018 = vmatprep.subr.mxu0 0.0
      %1019 = vmatpush1.msra.mxu0 0.0
      %1020 = vmatprep.subr.mxu0 0.0
      %1021 = vmatpush1.msra.mxu0 0.0
      %1022 = vmatprep.subr.mxu0 0.0
      %1023 = vmatpush1.msra.mxu0 0.0
      %1024 = vmatprep.subr.mxu0 0.0
      %1025 = vmatpush1.msra.mxu0 0.0
      %1026 = vmatprep.subr.mxu0 0.0
      %1027 = vmatpush1.msra.mxu0 0.0
      %1028 = vmatprep.subr.mxu0 0.0
      %1029 = vmatpush1.msra.mxu0 0.0
      %1030 = vmatprep.subr.mxu0 0.0
      %1031 = vmatpush1.msra.mxu0 0.0
      %1032 = vmatprep.mubr.f32.mxu0 0.0
      %1033 = vmatmul.mubr.f32.gmra.mrb[0].mxu0 %v873
      %v1034 = vpop.f32.mrb[0].mxu0
      %v1035 = vadd.f32 %v714, %v1034
      %v1036 = vpop.f32.mrb[0].mxu0
      %1037 = vmatprep.mubr.f32.mxu0 0.0
      %1038 = vmatmul.mubr.f32.gmra.mrb[0].mxu0 %v876
      %v1039 = vpop.f32.mrb[0].mxu0
      %v1040 = vadd.f32 %v719, %v1039
      %v1041 = vpop.f32.mrb[0].mxu0
      %1042 = vmatprep.mubr.f32.mxu0 0.0
      %1043 = vmatmul.mubr.f32.gmra.mrb[0].mxu0 %v879
      %v1044 = vpop.f32.mrb[0].mxu0
      %v1045 = vadd.f32 %v724, %v1044
      %v1046 = vpop.f32.mrb[0].mxu0
      %1047 = vmatprep.mubr.f32.mxu0 0.0
      %1048 = vmatmul.mubr.f32.gmra.mrb[0].mxu0 %v882
      %v1049 = vpop.f32.mrb[0].mxu0
      %v1050 = vadd.f32 %v729, %v1049
      %v1051 = vpop.f32.mrb[0].mxu0
      %1052 = vmatprep.mubr.f32.mxu0 0.0
      %1053 = vmatmul.mubr.f32.gmra.mrb[0].mxu0 %v885
      %v1054 = vpop.f32.mrb[0].mxu0
      %v1055 = vadd.f32 %v734, %v1054
      %v1056 = vpop.f32.mrb[0].mxu0
      %1057 = vmatprep.mubr.f32.mxu0 0.0
      %1058 = vmatmul.mubr.f32.gmra.mrb[0].mxu0 %v888
      %v1059 = vpop.f32.mrb[0].mxu0
      %v1060 = vadd.f32 %v739, %v1059
      %v1061 = vpop.f32.mrb[0].mxu0
      %1062 = vmatprep.mubr.f32.mxu0 0.0
      %1063 = vmatmul.mubr.f32.gmra.mrb[0].mxu0 %v891
      %v1064 = vpop.f32.mrb[0].mxu0
      %v1065 = vadd.f32 %v744, %v1064
      %v1066 = vpop.f32.mrb[0].mxu0
      %1067 = vmatprep.mubr.f32.mxu0 0.0
      %1068 = vmatmul.mubr.f32.gmra.mrb[0].mxu0 %v894
      %v1069 = vpop.f32.mrb[0].mxu0
      %v1070 = vadd.f32 %v749, %v1069
      %v1071 = vpop.f32.mrb[0].mxu0
      %1072 = vmatprep.mubr.f32.mxu0 0.0
      %1073 = vmatmul.mubr.f32.gmra.mrb[0].mxu0 %v897
      %v1074 = vpop.f32.mrb[0].mxu0
      %v1075 = vadd.f32 %v754, %v1074
      %v1076 = vpop.f32.mrb[0].mxu0
      %1077 = vmatprep.mubr.f32.mxu0 0.0
      %1078 = vmatmul.mubr.f32.gmra.mrb[0].mxu0 %v900
      %v1079 = vpop.f32.mrb[0].mxu0
      %v1080 = vadd.f32 %v759, %v1079
      %v1081 = vpop.f32.mrb[0].mxu0
      %1082 = vmatprep.mubr.f32.mxu0 0.0
      %1083 = vmatmul.mubr.f32.gmra.mrb[0].mxu0 %v903
      %v1084 = vpop.f32.mrb[0].mxu0
      %v1085 = vadd.f32 %v764, %v1084
      %v1086 = vpop.f32.mrb[0].mxu0
      %1087 = vmatprep.mubr.f32.mxu0 0.0
      %1088 = vmatmul.mubr.f32.gmra.mrb[0].mxu0 %v906
      %v1089 = vpop.f32.mrb[0].mxu0
      %v1090 = vadd.f32 %v769, %v1089
      %v1091 = vpop.f32.mrb[0].mxu0
      %1092 = vmatprep.mubr.f32.mxu0 0.0
      %1093 = vmatmul.mubr.f32.gmra.mrb[0].mxu0 %v909
      %v1094 = vpop.f32.mrb[0].mxu0
      %v1095 = vadd.f32 %v774, %v1094
      %v1096 = vpop.f32.mrb[0].mxu0
      %1097 = vmatprep.mubr.f32.mxu0 0.0
      %1098 = vmatmul.mubr.f32.gmra.mrb[0].mxu0 %v912
      %v1099 = vpop.f32.mrb[0].mxu0
      %v1100 = vadd.f32 %v779, %v1099
      %v1101 = vpop.f32.mrb[0].mxu0
      %1102 = vmatprep.mubr.f32.mxu0 0.0
      %1103 = vmatmul.mubr.f32.gmra.mrb[0].mxu0 %v915
      %v1104 = vpop.f32.mrb[0].mxu0
      %v1105 = vadd.f32 %v784, %v1104
      %v1106 = vpop.f32.mrb[0].mxu0
      %1107 = vmatprep.mubr.f32.mxu0 0.0
      %1108 = vmatmul.mubr.f32.gmra.mrb[0].mxu0 %v918
      %v1109 = vpop.f32.mrb[0].mxu0
      %v1110 = vadd.f32 %v789, %v1109
      %v1111 = vpop.f32.mrb[0].mxu0
      %1112 = vmatprep.mubr.f32.mxu0 0.0
      %1113 = vmatmul.mubr.f32.gmra.mrb[0].mxu0 %v921
      %v1114 = vpop.f32.mrb[0].mxu0
      %v1115 = vadd.f32 %v794, %v1114
      %v1116 = vpop.f32.mrb[0].mxu0
      %1117 = vmatprep.mubr.f32.mxu0 0.0
      %1118 = vmatmul.mubr.f32.gmra.mrb[0].mxu0 %v924
      %v1119 = vpop.f32.mrb[0].mxu0
      %v1120 = vadd.f32 %v799, %v1119
      %v1121 = vpop.f32.mrb[0].mxu0
      %1122 = vmatprep.mubr.f32.mxu0 0.0
      %1123 = vmatmul.mubr.f32.gmra.mrb[0].mxu0 %v927
      %v1124 = vpop.f32.mrb[0].mxu0
      %v1125 = vadd.f32 %v804, %v1124
      %v1126 = vpop.f32.mrb[0].mxu0
      %1127 = vmatprep.mubr.f32.mxu0 0.0
      %1128 = vmatmul.mubr.f32.gmra.mrb[0].mxu0 %v930
      %v1129 = vpop.f32.mrb[0].mxu0
      %v1130 = vadd.f32 %v809, %v1129
      %v1131 = vpop.f32.mrb[0].mxu0
      %1132 = vmatprep.mubr.f32.mxu0 0.0
      %1133 = vmatmul.mubr.f32.gmra.mrb[0].mxu0 %v933
      %v1134 = vpop.f32.mrb[0].mxu0
      %v1135 = vadd.f32 %v814, %v1134
      %v1136 = vpop.f32.mrb[0].mxu0
      %1137 = vmatprep.mubr.f32.mxu0 0.0
      %1138 = vmatmul.mubr.f32.gmra.mrb[0].mxu0 %v936
      %v1139 = vpop.f32.mrb[0].mxu0
      %v1140 = vadd.f32 %v819, %v1139
      %v1141 = vpop.f32.mrb[0].mxu0
      %1142 = vmatprep.mubr.f32.mxu0 0.0
      %1143 = vmatmul.mubr.f32.gmra.mrb[0].mxu0 %v939
      %v1144 = vpop.f32.mrb[0].mxu0
      %v1145 = vadd.f32 %v824, %v1144
      %v1146 = vpop.f32.mrb[0].mxu0
      %1147 = vmatprep.mubr.f32.mxu0 0.0
      %1148 = vmatmul.mubr.f32.gmra.mrb[0].mxu0 %v942
      %v1149 = vpop.f32.mrb[0].mxu0
      %v1150 = vadd.f32 %v829, %v1149
      %v1151 = vpop.f32.mrb[0].mxu0
      %1152 = vmatprep.mubr.f32.mxu0 0.0
      %1153 = vmatmul.mubr.f32.gmra.mrb[0].mxu0 %v945
      %v1154 = vpop.f32.mrb[0].mxu0
      %v1155 = vadd.f32 %v834, %v1154
      %v1156 = vpop.f32.mrb[0].mxu0
      %1157 = vmatprep.mubr.f32.mxu0 0.0
      %1158 = vmatmul.mubr.f32.gmra.mrb[0].mxu0 %v948
      %v1159 = vpop.f32.mrb[0].mxu0
      %v1160 = vadd.f32 %v839, %v1159
      %v1161 = vpop.f32.mrb[0].mxu0
      %1162 = vmatprep.mubr.f32.mxu0 0.0
      %1163 = vmatmul.mubr.f32.gmra.mrb[0].mxu0 %v951
      %v1164 = vpop.f32.mrb[0].mxu0
      %v1165 = vadd.f32 %v844, %v1164
      %v1166 = vpop.f32.mrb[0].mxu0
      %1167 = vmatprep.mubr.f32.mxu0 0.0
      %1168 = vmatmul.mubr.f32.gmra.mrb[0].mxu0 %v954
      %v1169 = vpop.f32.mrb[0].mxu0
      %v1170 = vadd.f32 %v849, %v1169
      %v1171 = vpop.f32.mrb[0].mxu0
      %1172 = vmatprep.mubr.f32.mxu0 0.0
      %1173 = vmatmul.mubr.f32.gmra.mrb[0].mxu0 %v957
      %v1174 = vpop.f32.mrb[0].mxu0
      %v1175 = vadd.f32 %v854, %v1174
      %v1176 = vpop.f32.mrb[0].mxu0
      %1177 = vmatprep.mubr.f32.mxu0 0.0
      %1178 = vmatmul.mubr.f32.gmra.mrb[0].mxu0 %v960
      %v1179 = vpop.f32.mrb[0].mxu0
      %v1180 = vadd.f32 %v859, %v1179
      %v1181 = vpop.f32.mrb[0].mxu0
      %1182 = vmatprep.mubr.f32.mxu0 0.0
      %1183 = vmatmul.mubr.f32.gmra.mrb[0].mxu0 %v963
      %v1184 = vpop.f32.mrb[0].mxu0
      %v1185 = vadd.f32 %v864, %v1184
      %v1186 = vpop.f32.mrb[0].mxu0
      %1187 = vmatprep.mubr.f32.mxu0 0.0
      %1188 = vmatmul.mubr.f32.gmra.mrb[0].mxu0 %v966
      %v1189 = vpop.f32.mrb[0].mxu0
      %v1190 = vadd.f32 %v869, %v1189
      %v1191 = vpop.f32.mrb[0].mxu0
      %1192 = vdwg.mxu0
      %v1193 = vld [vmem:[#allocation2 + $0x2] sm:$0xff]
      %v1194 = vld [vmem:[#allocation2 + $0xa] sm:$0xff]
      %v1195 = vld [vmem:[#allocation2 + $0x1a] sm:$0xff]
      %v1196 = vld [vmem:[#allocation2 + $0x22] sm:$0xff]
      %v1197 = vld [vmem:[#allocation2 + $0x32] sm:$0xff]
      %v1198 = vld [vmem:[#allocation2 + $0x3a] sm:$0xff]
      %v1199 = vld [vmem:[#allocation2 + $0x4a] sm:$0xff]
      %v1200 = vld [vmem:[#allocation2 + $0x52] sm:$0xff]
      %v1201 = vld [vmem:[#allocation2 + $0x62] sm:$0xff]
      %v1202 = vld [vmem:[#allocation2 + $0x6a] sm:$0xff]
      %v1203 = vld [vmem:[#allocation2 + $0x7a] sm:$0xff]
      %v1204 = vld [vmem:[#allocation2 + $0x82] sm:$0xff]
      %v1205 = vld [vmem:[#allocation2 + $0x92] sm:$0xff]
      %v1206 = vld [vmem:[#allocation2 + $0x9a] sm:$0xff]
      %v1207 = vld [vmem:[#allocation2 + $0xaa] sm:$0xff]
      %v1208 = vld [vmem:[#allocation2 + $0xb2] sm:$0xff]
      %v1209 = vld [vmem:[#allocation2 + $0xc2] sm:$0xff]
      %v1210 = vld [vmem:[#allocation2 + $0xca] sm:$0xff]
      %v1211 = vld [vmem:[#allocation2 + $0xda] sm:$0xff]
      %v1212 = vld [vmem:[#allocation2 + $0xe2] sm:$0xff]
      %v1213 = vld [vmem:[#allocation2 + $0xf2] sm:$0xff]
      %v1214 = vld [vmem:[#allocation2 + $0xfa] sm:$0xff]
      %v1215 = vld [vmem:[#allocation2 + $0x10a] sm:$0xff]
      %v1216 = vld [vmem:[#allocation2 + $0x112] sm:$0xff]
      %v1217 = vld [vmem:[#allocation2 + $0x122] sm:$0xff]
      %v1218 = vld [vmem:[#allocation2 + $0x12a] sm:$0xff]
      %v1219 = vld [vmem:[#allocation2 + $0x13a] sm:$0xff]
      %v1220 = vld [vmem:[#allocation2 + $0x142] sm:$0xff]
      %v1221 = vld [vmem:[#allocation2 + $0x152] sm:$0xff]
      %v1222 = vld [vmem:[#allocation2 + $0x15a] sm:$0xff]
      %v1223 = vld [vmem:[#allocation2 + $0x16a] sm:$0xff]
      %v1224 = vld [vmem:[#allocation2 + $0x172] sm:$0xff]
      %s1225 = scalar_lea.vmem %s3, 16
      %v1226 = vld [vmem:[%s1225] sm:$0xff]
      %v1228 = vsel %vm405, %v1193, 0
      %v1231 = vsel %vm405, %v1194, 0
      %v1234 = vsel %vm405, %v1195, 0
      %v1237 = vsel %vm405, %v1196, 0
      %v1240 = vsel %vm405, %v1197, 0
      %v1243 = vsel %vm405, %v1198, 0
      %v1246 = vsel %vm405, %v1199, 0
      %v1249 = vsel %vm405, %v1200, 0
      %v1252 = vsel %vm405, %v1201, 0
      %v1255 = vsel %vm405, %v1202, 0
      %v1258 = vsel %vm405, %v1203, 0
      %v1261 = vsel %vm405, %v1204, 0
      %v1264 = vsel %vm405, %v1205, 0
      %v1267 = vsel %vm405, %v1206, 0
      %v1270 = vsel %vm405, %v1207, 0
      %v1273 = vsel %vm405, %v1208, 0
      %v1276 = vsel %vm405, %v1209, 0
      %v1279 = vsel %vm405, %v1210, 0
      %v1282 = vsel %vm405, %v1211, 0
      %v1285 = vsel %vm405, %v1212, 0
      %v1288 = vsel %vm405, %v1213, 0
      %v1291 = vsel %vm405, %v1214, 0
      %v1294 = vsel %vm405, %v1215, 0
      %v1297 = vsel %vm405, %v1216, 0
      %v1300 = vsel %vm405, %v1217, 0
      %v1303 = vsel %vm405, %v1218, 0
      %v1306 = vsel %vm405, %v1219, 0
      %v1309 = vsel %vm405, %v1220, 0
      %v1312 = vsel %vm405, %v1221, 0
      %v1315 = vsel %vm405, %v1222, 0
      %v1318 = vsel %vm405, %v1223, 0
      %v1321 = vsel %vm405, %v1224, 0
      %1323 = vmatprep.subr.mxu0 0.0
      %1324 = vmatpush1.msra.mxu0 %v1226
      %1325 = vmatprep.subr.mxu0 0.0
      %1326 = vmatpush1.msra.mxu0 0.0
      %1327 = vmatprep.subr.mxu0 0.0
      %1328 = vmatpush1.msra.mxu0 0.0
      %1329 = vmatprep.subr.mxu0 0.0
      %1330 = vmatpush1.msra.mxu0 0.0
      %1331 = vmatprep.subr.mxu0 0.0
      %1332 = vmatpush1.msra.mxu0 0.0
      %1333 = vmatprep.subr.mxu0 0.0
      %1334 = vmatpush1.msra.mxu0 0.0
      %1335 = vmatprep.subr.mxu0 0.0
      %1336 = vmatpush1.msra.mxu0 0.0
      %1337 = vmatprep.subr.mxu0 0.0
      %1338 = vmatpush1.msra.mxu0 0.0
      %1339 = vmatprep.subr.mxu0 0.0
      %1340 = vmatpush1.msra.mxu0 0.0
      %1341 = vmatprep.subr.mxu0 0.0
      %1342 = vmatpush1.msra.mxu0 0.0
      %1343 = vmatprep.subr.mxu0 0.0
      %1344 = vmatpush1.msra.mxu0 0.0
      %1345 = vmatprep.subr.mxu0 0.0
      %1346 = vmatpush1.msra.mxu0 0.0
      %1347 = vmatprep.subr.mxu0 0.0
      %1348 = vmatpush1.msra.mxu0 0.0
      %1349 = vmatprep.subr.mxu0 0.0
      %1350 = vmatpush1.msra.mxu0 0.0
      %1351 = vmatprep.subr.mxu0 0.0
      %1352 = vmatpush1.msra.mxu0 0.0
      %1353 = vmatprep.subr.mxu0 0.0
      %1354 = vmatpush1.msra.mxu0 0.0
      %1355 = vmatprep.subr.mxu0 0.0
      %1356 = vmatpush1.msra.mxu0 0.0
      %1357 = vmatprep.subr.mxu0 0.0
      %1358 = vmatpush1.msra.mxu0 0.0
      %1359 = vmatprep.subr.mxu0 0.0
      %1360 = vmatpush1.msra.mxu0 0.0
      %1361 = vmatprep.subr.mxu0 0.0
      %1362 = vmatpush1.msra.mxu0 0.0
      %1363 = vmatprep.subr.mxu0 0.0
      %1364 = vmatpush1.msra.mxu0 0.0
      %1365 = vmatprep.subr.mxu0 0.0
      %1366 = vmatpush1.msra.mxu0 0.0
      %1367 = vmatprep.subr.mxu0 0.0
      %1368 = vmatpush1.msra.mxu0 0.0
      %1369 = vmatprep.subr.mxu0 0.0
      %1370 = vmatpush1.msra.mxu0 0.0
      %1371 = vmatprep.subr.mxu0 0.0
      %1372 = vmatpush1.msra.mxu0 0.0
      %1373 = vmatprep.subr.mxu0 0.0
      %1374 = vmatpush1.msra.mxu0 0.0
      %1375 = vmatprep.subr.mxu0 0.0
      %1376 = vmatpush1.msra.mxu0 0.0
      %1377 = vmatprep.subr.mxu0 0.0
      %1378 = vmatpush1.msra.mxu0 0.0
      %1379 = vmatprep.subr.mxu0 0.0
      %1380 = vmatpush1.msra.mxu0 0.0
      %1381 = vmatprep.subr.mxu0 0.0
      %1382 = vmatpush1.msra.mxu0 0.0
      %1383 = vmatprep.subr.mxu0 0.0
      %1384 = vmatpush1.msra.mxu0 0.0
      %1385 = vmatprep.subr.mxu0 0.0
      %1386 = vmatpush1.msra.mxu0 0.0
      %1387 = vmatprep.mubr.f32.mxu0 0.0
      %1388 = vmatmul.mubr.f32.gmra.mrb[0].mxu0 %v1228
      %v1389 = vpop.f32.mrb[0].mxu0
      %v1390 = vadd.f32 0.0, %v1389
      %v1391 = vpop.f32.mrb[0].mxu0
      %1392 = vmatprep.mubr.f32.mxu0 0.0
      %1393 = vmatmul.mubr.f32.gmra.mrb[0].mxu0 %v1231
      %v1394 = vpop.f32.mrb[0].mxu0
      %v1395 = vadd.f32 0.0, %v1394
      %v1396 = vpop.f32.mrb[0].mxu0
      %1397 = vmatprep.mubr.f32.mxu0 0.0
      %1398 = vmatmul.mubr.f32.gmra.mrb[0].mxu0 %v1234
      %v1399 = vpop.f32.mrb[0].mxu0
      %v1400 = vadd.f32 0.0, %v1399
      %v1401 = vpop.f32.mrb[0].mxu0
      %1402 = vmatprep.mubr.f32.mxu0 0.0
      %1403 = vmatmul.mubr.f32.gmra.mrb[0].mxu0 %v1237
      %v1404 = vpop.f32.mrb[0].mxu0
      %v1405 = vadd.f32 0.0, %v1404
      %v1406 = vpop.f32.mrb[0].mxu0
      %1407 = vmatprep.mubr.f32.mxu0 0.0
      %1408 = vmatmul.mubr.f32.gmra.mrb[0].mxu0 %v1240
      %v1409 = vpop.f32.mrb[0].mxu0
      %v1410 = vadd.f32 0.0, %v1409
      %v1411 = vpop.f32.mrb[0].mxu0
      %1412 = vmatprep.mubr.f32.mxu0 0.0
      %1413 = vmatmul.mubr.f32.gmra.mrb[0].mxu0 %v1243
      %v1414 = vpop.f32.mrb[0].mxu0
      %v1415 = vadd.f32 0.0, %v1414
      %v1416 = vpop.f32.mrb[0].mxu0
      %1417 = vmatprep.mubr.f32.mxu0 0.0
      %1418 = vmatmul.mubr.f32.gmra.mrb[0].mxu0 %v1246
      %v1419 = vpop.f32.mrb[0].mxu0
      %v1420 = vadd.f32 0.0, %v1419
      %v1421 = vpop.f32.mrb[0].mxu0
      %1422 = vmatprep.mubr.f32.mxu0 0.0
      %1423 = vmatmul.mubr.f32.gmra.mrb[0].mxu0 %v1249
      %v1424 = vpop.f32.mrb[0].mxu0
      %v1425 = vadd.f32 0.0, %v1424
      %v1426 = vpop.f32.mrb[0].mxu0
      %1427 = vmatprep.mubr.f32.mxu0 0.0
      %1428 = vmatmul.mubr.f32.gmra.mrb[0].mxu0 %v1252
      %v1429 = vpop.f32.mrb[0].mxu0
      %v1430 = vadd.f32 0.0, %v1429
      %v1431 = vpop.f32.mrb[0].mxu0
      %1432 = vmatprep.mubr.f32.mxu0 0.0
      %1433 = vmatmul.mubr.f32.gmra.mrb[0].mxu0 %v1255
      %v1434 = vpop.f32.mrb[0].mxu0
      %v1435 = vadd.f32 0.0, %v1434
      %v1436 = vpop.f32.mrb[0].mxu0
      %1437 = vmatprep.mubr.f32.mxu0 0.0
      %1438 = vmatmul.mubr.f32.gmra.mrb[0].mxu0 %v1258
      %v1439 = vpop.f32.mrb[0].mxu0
      %v1440 = vadd.f32 0.0, %v1439
      %v1441 = vpop.f32.mrb[0].mxu0
      %1442 = vmatprep.mubr.f32.mxu0 0.0
      %1443 = vmatmul.mubr.f32.gmra.mrb[0].mxu0 %v1261
      %v1444 = vpop.f32.mrb[0].mxu0
      %v1445 = vadd.f32 0.0, %v1444
      %v1446 = vpop.f32.mrb[0].mxu0
      %1447 = vmatprep.mubr.f32.mxu0 0.0
      %1448 = vmatmul.mubr.f32.gmra.mrb[0].mxu0 %v1264
      %v1449 = vpop.f32.mrb[0].mxu0
      %v1450 = vadd.f32 0.0, %v1449
      %v1451 = vpop.f32.mrb[0].mxu0
      %1452 = vmatprep.mubr.f32.mxu0 0.0
      %1453 = vmatmul.mubr.f32.gmra.mrb[0].mxu0 %v1267
      %v1454 = vpop.f32.mrb[0].mxu0
      %v1455 = vadd.f32 0.0, %v1454
      %v1456 = vpop.f32.mrb[0].mxu0
      %1457 = vmatprep.mubr.f32.mxu0 0.0
      %1458 = vmatmul.mubr.f32.gmra.mrb[0].mxu0 %v1270
      %v1459 = vpop.f32.mrb[0].mxu0
      %v1460 = vadd.f32 0.0, %v1459
      %v1461 = vpop.f32.mrb[0].mxu0
      %1462 = vmatprep.mubr.f32.mxu0 0.0
      %1463 = vmatmul.mubr.f32.gmra.mrb[0].mxu0 %v1273
      %v1464 = vpop.f32.mrb[0].mxu0
      %v1465 = vadd.f32 0.0, %v1464
      %v1466 = vpop.f32.mrb[0].mxu0
      %1467 = vmatprep.mubr.f32.mxu0 0.0
      %1468 = vmatmul.mubr.f32.gmra.mrb[0].mxu0 %v1276
      %v1469 = vpop.f32.mrb[0].mxu0
      %v1470 = vadd.f32 0.0, %v1469
      %v1471 = vpop.f32.mrb[0].mxu0
      %1472 = vmatprep.mubr.f32.mxu0 0.0
      %1473 = vmatmul.mubr.f32.gmra.mrb[0].mxu0 %v1279
      %v1474 = vpop.f32.mrb[0].mxu0
      %v1475 = vadd.f32 0.0, %v1474
      %v1476 = vpop.f32.mrb[0].mxu0
      %1477 = vmatprep.mubr.f32.mxu0 0.0
      %1478 = vmatmul.mubr.f32.gmra.mrb[0].mxu0 %v1282
      %v1479 = vpop.f32.mrb[0].mxu0
      %v1480 = vadd.f32 0.0, %v1479
      %v1481 = vpop.f32.mrb[0].mxu0
      %1482 = vmatprep.mubr.f32.mxu0 0.0
      %1483 = vmatmul.mubr.f32.gmra.mrb[0].mxu0 %v1285
      %v1484 = vpop.f32.mrb[0].mxu0
      %v1485 = vadd.f32 0.0, %v1484
      %v1486 = vpop.f32.mrb[0].mxu0
      %1487 = vmatprep.mubr.f32.mxu0 0.0
      %1488 = vmatmul.mubr.f32.gmra.mrb[0].mxu0 %v1288
      %v1489 = vpop.f32.mrb[0].mxu0
      %v1490 = vadd.f32 0.0, %v1489
      %v1491 = vpop.f32.mrb[0].mxu0
      %1492 = vmatprep.mubr.f32.mxu0 0.0
      %1493 = vmatmul.mubr.f32.gmra.mrb[0].mxu0 %v1291
      %v1494 = vpop.f32.mrb[0].mxu0
      %v1495 = vadd.f32 0.0, %v1494
      %v1496 = vpop.f32.mrb[0].mxu0
      %1497 = vmatprep.mubr.f32.mxu0 0.0
      %1498 = vmatmul.mubr.f32.gmra.mrb[0].mxu0 %v1294
      %v1499 = vpop.f32.mrb[0].mxu0
      %v1500 = vadd.f32 0.0, %v1499
      %v1501 = vpop.f32.mrb[0].mxu0
      %1502 = vmatprep.mubr.f32.mxu0 0.0
      %1503 = vmatmul.mubr.f32.gmra.mrb[0].mxu0 %v1297
      %v1504 = vpop.f32.mrb[0].mxu0
      %v1505 = vadd.f32 0.0, %v1504
      %v1506 = vpop.f32.mrb[0].mxu0
      %1507 = vmatprep.mubr.f32.mxu0 0.0
      %1508 = vmatmul.mubr.f32.gmra.mrb[0].mxu0 %v1300
      %v1509 = vpop.f32.mrb[0].mxu0
      %v1510 = vadd.f32 0.0, %v1509
      %v1511 = vpop.f32.mrb[0].mxu0
      %1512 = vmatprep.mubr.f32.mxu0 0.0
      %1513 = vmatmul.mubr.f32.gmra.mrb[0].mxu0 %v1303
      %v1514 = vpop.f32.mrb[0].mxu0
      %v1515 = vadd.f32 0.0, %v1514
      %v1516 = vpop.f32.mrb[0].mxu0
      %1517 = vmatprep.mubr.f32.mxu0 0.0
      %1518 = vmatmul.mubr.f32.gmra.mrb[0].mxu0 %v1306
      %v1519 = vpop.f32.mrb[0].mxu0
      %v1520 = vadd.f32 0.0, %v1519
      %v1521 = vpop.f32.mrb[0].mxu0
      %1522 = vmatprep.mubr.f32.mxu0 0.0
      %1523 = vmatmul.mubr.f32.gmra.mrb[0].mxu0 %v1309
      %v1524 = vpop.f32.mrb[0].mxu0
      %v1525 = vadd.f32 0.0, %v1524
      %v1526 = vpop.f32.mrb[0].mxu0
      %1527 = vmatprep.mubr.f32.mxu0 0.0
      %1528 = vmatmul.mubr.f32.gmra.mrb[0].mxu0 %v1312
      %v1529 = vpop.f32.mrb[0].mxu0
      %v1530 = vadd.f32 0.0, %v1529
      %v1531 = vpop.f32.mrb[0].mxu0
      %1532 = vmatprep.mubr.f32.mxu0 0.0
      %1533 = vmatmul.mubr.f32.gmra.mrb[0].mxu0 %v1315
      %v1534 = vpop.f32.mrb[0].mxu0
      %v1535 = vadd.f32 0.0, %v1534
      %v1536 = vpop.f32.mrb[0].mxu0
      %1537 = vmatprep.mubr.f32.mxu0 0.0
      %1538 = vmatmul.mubr.f32.gmra.mrb[0].mxu0 %v1318
      %v1539 = vpop.f32.mrb[0].mxu0
      %v1540 = vadd.f32 0.0, %v1539
      %v1541 = vpop.f32.mrb[0].mxu0
      %1542 = vmatprep.mubr.f32.mxu0 0.0
      %1543 = vmatmul.mubr.f32.gmra.mrb[0].mxu0 %v1321
      %v1544 = vpop.f32.mrb[0].mxu0
      %v1545 = vadd.f32 0.0, %v1544
      %v1546 = vpop.f32.mrb[0].mxu0
      %1547 = vdwg.mxu0
      %v1548 = vadd.f32 %v1035, %v1390
      %v1549 = vadd.f32 %v1040, %v1395
      %v1550 = vadd.f32 %v1045, %v1400
      %v1551 = vadd.f32 %v1050, %v1405
      %v1552 = vadd.f32 %v1055, %v1410
      %v1553 = vadd.f32 %v1060, %v1415
      %v1554 = vadd.f32 %v1065, %v1420
      %v1555 = vadd.f32 %v1070, %v1425
      %v1556 = vadd.f32 %v1075, %v1430
      %v1557 = vadd.f32 %v1080, %v1435
      %v1558 = vadd.f32 %v1085, %v1440
      %v1559 = vadd.f32 %v1090, %v1445
      %v1560 = vadd.f32 %v1095, %v1450
      %v1561 = vadd.f32 %v1100, %v1455
      %v1562 = vadd.f32 %v1105, %v1460
      %v1563 = vadd.f32 %v1110, %v1465
      %v1564 = vadd.f32 %v1115, %v1470
      %v1565 = vadd.f32 %v1120, %v1475
      %v1566 = vadd.f32 %v1125, %v1480
      %v1567 = vadd.f32 %v1130, %v1485
      %v1568 = vadd.f32 %v1135, %v1490
      %v1569 = vadd.f32 %v1140, %v1495
      %v1570 = vadd.f32 %v1145, %v1500
      %v1571 = vadd.f32 %v1150, %v1505
      %v1572 = vadd.f32 %v1155, %v1510
      %v1573 = vadd.f32 %v1160, %v1515
      %v1574 = vadd.f32 %v1165, %v1520
      %v1575 = vadd.f32 %v1170, %v1525
      %v1576 = vadd.f32 %v1175, %v1530
      %v1577 = vadd.f32 %v1180, %v1535
      %v1578 = vadd.f32 %v1185, %v1540
      %v1579 = vadd.f32 %v1190, %v1545
      %v1580 = vld [vmem:[%s451] sm:$0xff]
      %v1581 = vld [vmem:[%s451 + $0x8] sm:$0xff]
      %v1582 = vld [vmem:[%s451 + $0x18] sm:$0xff]
      %v1583 = vld [vmem:[%s451 + $0x20] sm:$0xff]
      %v1584 = vld [vmem:[%s451 + $0x30] sm:$0xff]
      %v1585 = vld [vmem:[%s451 + $0x38] sm:$0xff]
      %v1586 = vld [vmem:[%s451 + $0x48] sm:$0xff]
      %v1587 = vld [vmem:[%s451 + $0x50] sm:$0xff]
      %v1588 = vld [vmem:[%s451 + $0x60] sm:$0xff]
      %v1589 = vld [vmem:[%s451 + $0x68] sm:$0xff]
      %v1590 = vld [vmem:[%s451 + $0x78] sm:$0xff]
      %v1591 = vld [vmem:[%s451 + $0x80] sm:$0xff]
      %v1592 = vld [vmem:[%s451 + $0x90] sm:$0xff]
      %v1593 = vld [vmem:[%s451 + $0x98] sm:$0xff]
      %v1594 = vld [vmem:[%s451 + $0xa8] sm:$0xff]
      %v1595 = vld [vmem:[%s451 + $0xb0] sm:$0xff]
      %v1596 = vld [vmem:[%s451 + $0xc0] sm:$0xff]
      %v1597 = vld [vmem:[%s451 + $0xc8] sm:$0xff]
      %v1598 = vld [vmem:[%s451 + $0xd8] sm:$0xff]
      %v1599 = vld [vmem:[%s451 + $0xe0] sm:$0xff]
      %v1600 = vld [vmem:[%s451 + $0xf0] sm:$0xff]
      %v1601 = vld [vmem:[%s451 + $0xf8] sm:$0xff]
      %v1602 = vld [vmem:[%s451 + $0x108] sm:$0xff]
      %v1603 = vld [vmem:[%s451 + $0x110] sm:$0xff]
      %v1604 = vld [vmem:[%s451 + $0x120] sm:$0xff]
      %v1605 = vld [vmem:[%s451 + $0x128] sm:$0xff]
      %v1606 = vld [vmem:[%s451 + $0x138] sm:$0xff]
      %v1607 = vld [vmem:[%s451 + $0x140] sm:$0xff]
      %v1608 = vld [vmem:[%s451 + $0x150] sm:$0xff]
      %v1609 = vld [vmem:[%s451 + $0x158] sm:$0xff]
      %v1610 = vld [vmem:[%s451 + $0x168] sm:$0xff]
      %v1611 = vld [vmem:[%s451 + $0x170] sm:$0xff]
      %s1612 = scalar_lea.vmem %s3, 24
      %v1613 = vld [vmem:[%s1612] sm:$0xff]
      %v1615 = vsel %vm405, %v1580, 0
      %v1618 = vsel %vm405, %v1581, 0
      %v1621 = vsel %vm405, %v1582, 0
      %v1624 = vsel %vm405, %v1583, 0
      %v1627 = vsel %vm405, %v1584, 0
      %v1630 = vsel %vm405, %v1585, 0
      %v1633 = vsel %vm405, %v1586, 0
      %v1636 = vsel %vm405, %v1587, 0
      %v1639 = vsel %vm405, %v1588, 0
      %v1642 = vsel %vm405, %v1589, 0
      %v1645 = vsel %vm405, %v1590, 0
      %v1648 = vsel %vm405, %v1591, 0
      %v1651 = vsel %vm405, %v1592, 0
      %v1654 = vsel %vm405, %v1593, 0
      %v1657 = vsel %vm405, %v1594, 0
      %v1660 = vsel %vm405, %v1595, 0
      %v1663 = vsel %vm405, %v1596, 0
      %v1666 = vsel %vm405, %v1597, 0
      %v1669 = vsel %vm405, %v1598, 0
      %v1672 = vsel %vm405, %v1599, 0
      %v1675 = vsel %vm405, %v1600, 0
      %v1678 = vsel %vm405, %v1601, 0
      %v1681 = vsel %vm405, %v1602, 0
      %v1684 = vsel %vm405, %v1603, 0
      %v1687 = vsel %vm405, %v1604, 0
      %v1690 = vsel %vm405, %v1605, 0
      %v1693 = vsel %vm405, %v1606, 0
      %v1696 = vsel %vm405, %v1607, 0
      %v1699 = vsel %vm405, %v1608, 0
      %v1702 = vsel %vm405, %v1609, 0
      %v1705 = vsel %vm405, %v1610, 0
      %v1708 = vsel %vm405, %v1611, 0
      %1710 = vmatprep.subr.mxu0 0.0
      %1711 = vmatpush1.msra.mxu0 %v1613
      %1712 = vmatprep.subr.mxu0 0.0
      %1713 = vmatpush1.msra.mxu0 0.0
      %1714 = vmatprep.subr.mxu0 0.0
      %1715 = vmatpush1.msra.mxu0 0.0
      %1716 = vmatprep.subr.mxu0 0.0
      %1717 = vmatpush1.msra.mxu0 0.0
      %1718 = vmatprep.subr.mxu0 0.0
      %1719 = vmatpush1.msra.mxu0 0.0
      %1720 = vmatprep.subr.mxu0 0.0
      %1721 = vmatpush1.msra.mxu0 0.0
      %1722 = vmatprep.subr.mxu0 0.0
      %1723 = vmatpush1.msra.mxu0 0.0
      %1724 = vmatprep.subr.mxu0 0.0
      %1725 = vmatpush1.msra.mxu0 0.0
      %1726 = vmatprep.subr.mxu0 0.0
      %1727 = vmatpush1.msra.mxu0 0.0
      %1728 = vmatprep.subr.mxu0 0.0
      %1729 = vmatpush1.msra.mxu0 0.0
      %1730 = vmatprep.subr.mxu0 0.0
      %1731 = vmatpush1.msra.mxu0 0.0
      %1732 = vmatprep.subr.mxu0 0.0
      %1733 = vmatpush1.msra.mxu0 0.0
      %1734 = vmatprep.subr.mxu0 0.0
      %1735 = vmatpush1.msra.mxu0 0.0
      %1736 = vmatprep.subr.mxu0 0.0
      %1737 = vmatpush1.msra.mxu0 0.0
      %1738 = vmatprep.subr.mxu0 0.0
      %1739 = vmatpush1.msra.mxu0 0.0
      %1740 = vmatprep.subr.mxu0 0.0
      %1741 = vmatpush1.msra.mxu0 0.0
      %1742 = vmatprep.subr.mxu0 0.0
      %1743 = vmatpush1.msra.mxu0 0.0
      %1744 = vmatprep.subr.mxu0 0.0
      %1745 = vmatpush1.msra.mxu0 0.0
      %1746 = vmatprep.subr.mxu0 0.0
      %1747 = vmatpush1.msra.mxu0 0.0
      %1748 = vmatprep.subr.mxu0 0.0
      %1749 = vmatpush1.msra.mxu0 0.0
      %1750 = vmatprep.subr.mxu0 0.0
      %1751 = vmatpush1.msra.mxu0 0.0
      %1752 = vmatprep.subr.mxu0 0.0
      %1753 = vmatpush1.msra.mxu0 0.0
      %1754 = vmatprep.subr.mxu0 0.0
      %1755 = vmatpush1.msra.mxu0 0.0
      %1756 = vmatprep.subr.mxu0 0.0
      %1757 = vmatpush1.msra.mxu0 0.0
      %1758 = vmatprep.subr.mxu0 0.0
      %1759 = vmatpush1.msra.mxu0 0.0
      %1760 = vmatprep.subr.mxu0 0.0
      %1761 = vmatpush1.msra.mxu0 0.0
      %1762 = vmatprep.subr.mxu0 0.0
      %1763 = vmatpush1.msra.mxu0 0.0
      %1764 = vmatprep.subr.mxu0 0.0
      %1765 = vmatpush1.msra.mxu0 0.0
      %1766 = vmatprep.subr.mxu0 0.0
      %1767 = vmatpush1.msra.mxu0 0.0
      %1768 = vmatprep.subr.mxu0 0.0
      %1769 = vmatpush1.msra.mxu0 0.0
      %1770 = vmatprep.subr.mxu0 0.0
      %1771 = vmatpush1.msra.mxu0 0.0
      %1772 = vmatprep.subr.mxu0 0.0
      %1773 = vmatpush1.msra.mxu0 0.0
      %1774 = vmatprep.mubr.f32.mxu0 0.0
      %1775 = vmatmul.mubr.f32.gmra.mrb[0].mxu0 %v1615
      %v1776 = vpop.f32.mrb[0].mxu0
      %v1777 = vadd.f32 0.0, %v1776
      %v1778 = vpop.f32.mrb[0].mxu0
      %1779 = vmatprep.mubr.f32.mxu0 0.0
      %1780 = vmatmul.mubr.f32.gmra.mrb[0].mxu0 %v1618
      %v1781 = vpop.f32.mrb[0].mxu0
      %v1782 = vadd.f32 0.0, %v1781
      %v1783 = vpop.f32.mrb[0].mxu0
      %1784 = vmatprep.mubr.f32.mxu0 0.0
      %1785 = vmatmul.mubr.f32.gmra.mrb[0].mxu0 %v1621
      %v1786 = vpop.f32.mrb[0].mxu0
      %v1787 = vadd.f32 0.0, %v1786
      %v1788 = vpop.f32.mrb[0].mxu0
      %1789 = vmatprep.mubr.f32.mxu0 0.0
      %1790 = vmatmul.mubr.f32.gmra.mrb[0].mxu0 %v1624
      %v1791 = vpop.f32.mrb[0].mxu0
      %v1792 = vadd.f32 0.0, %v1791
      %v1793 = vpop.f32.mrb[0].mxu0
      %1794 = vmatprep.mubr.f32.mxu0 0.0
      %1795 = vmatmul.mubr.f32.gmra.mrb[0].mxu0 %v1627
      %v1796 = vpop.f32.mrb[0].mxu0
      %v1797 = vadd.f32 0.0, %v1796
      %v1798 = vpop.f32.mrb[0].mxu0
      %1799 = vmatprep.mubr.f32.mxu0 0.0
      %1800 = vmatmul.mubr.f32.gmra.mrb[0].mxu0 %v1630
      %v1801 = vpop.f32.mrb[0].mxu0
      %v1802 = vadd.f32 0.0, %v1801
      %v1803 = vpop.f32.mrb[0].mxu0
      %1804 = vmatprep.mubr.f32.mxu0 0.0
      %1805 = vmatmul.mubr.f32.gmra.mrb[0].mxu0 %v1633
      %v1806 = vpop.f32.mrb[0].mxu0
      %v1807 = vadd.f32 0.0, %v1806
      %v1808 = vpop.f32.mrb[0].mxu0
      %1809 = vmatprep.mubr.f32.mxu0 0.0
      %1810 = vmatmul.mubr.f32.gmra.mrb[0].mxu0 %v1636
      %v1811 = vpop.f32.mrb[0].mxu0
      %v1812 = vadd.f32 0.0, %v1811
      %v1813 = vpop.f32.mrb[0].mxu0
      %1814 = vmatprep.mubr.f32.mxu0 0.0
      %1815 = vmatmul.mubr.f32.gmra.mrb[0].mxu0 %v1639
      %v1816 = vpop.f32.mrb[0].mxu0
      %v1817 = vadd.f32 0.0, %v1816
      %v1818 = vpop.f32.mrb[0].mxu0
      %1819 = vmatprep.mubr.f32.mxu0 0.0
      %1820 = vmatmul.mubr.f32.gmra.mrb[0].mxu0 %v1642
      %v1821 = vpop.f32.mrb[0].mxu0
      %v1822 = vadd.f32 0.0, %v1821
      %v1823 = vpop.f32.mrb[0].mxu0
      %1824 = vmatprep.mubr.f32.mxu0 0.0
      %1825 = vmatmul.mubr.f32.gmra.mrb[0].mxu0 %v1645
      %v1826 = vpop.f32.mrb[0].mxu0
      %v1827 = vadd.f32 0.0, %v1826
      %v1828 = vpop.f32.mrb[0].mxu0
      %1829 = vmatprep.mubr.f32.mxu0 0.0
      %1830 = vmatmul.mubr.f32.gmra.mrb[0].mxu0 %v1648
      %v1831 = vpop.f32.mrb[0].mxu0
      %v1832 = vadd.f32 0.0, %v1831
      %v1833 = vpop.f32.mrb[0].mxu0
      %1834 = vmatprep.mubr.f32.mxu0 0.0
      %1835 = vmatmul.mubr.f32.gmra.mrb[0].mxu0 %v1651
      %v1836 = vpop.f32.mrb[0].mxu0
      %v1837 = vadd.f32 0.0, %v1836
      %v1838 = vpop.f32.mrb[0].mxu0
      %1839 = vmatprep.mubr.f32.mxu0 0.0
      %1840 = vmatmul.mubr.f32.gmra.mrb[0].mxu0 %v1654
      %v1841 = vpop.f32.mrb[0].mxu0
      %v1842 = vadd.f32 0.0, %v1841
      %v1843 = vpop.f32.mrb[0].mxu0
      %1844 = vmatprep.mubr.f32.mxu0 0.0
      %1845 = vmatmul.mubr.f32.gmra.mrb[0].mxu0 %v1657
      %v1846 = vpop.f32.mrb[0].mxu0
      %v1847 = vadd.f32 0.0, %v1846
      %v1848 = vpop.f32.mrb[0].mxu0
      %1849 = vmatprep.mubr.f32.mxu0 0.0
      %1850 = vmatmul.mubr.f32.gmra.mrb[0].mxu0 %v1660
      %v1851 = vpop.f32.mrb[0].mxu0
      %v1852 = vadd.f32 0.0, %v1851
      %v1853 = vpop.f32.mrb[0].mxu0
      %1854 = vmatprep.mubr.f32.mxu0 0.0
      %1855 = vmatmul.mubr.f32.gmra.mrb[0].mxu0 %v1663
      %v1856 = vpop.f32.mrb[0].mxu0
      %v1857 = vadd.f32 0.0, %v1856
      %v1858 = vpop.f32.mrb[0].mxu0
      %1859 = vmatprep.mubr.f32.mxu0 0.0
      %1860 = vmatmul.mubr.f32.gmra.mrb[0].mxu0 %v1666
      %v1861 = vpop.f32.mrb[0].mxu0
      %v1862 = vadd.f32 0.0, %v1861
      %v1863 = vpop.f32.mrb[0].mxu0
      %1864 = vmatprep.mubr.f32.mxu0 0.0
      %1865 = vmatmul.mubr.f32.gmra.mrb[0].mxu0 %v1669
      %v1866 = vpop.f32.mrb[0].mxu0
      %v1867 = vadd.f32 0.0, %v1866
      %v1868 = vpop.f32.mrb[0].mxu0
      %1869 = vmatprep.mubr.f32.mxu0 0.0
      %1870 = vmatmul.mubr.f32.gmra.mrb[0].mxu0 %v1672
      %v1871 = vpop.f32.mrb[0].mxu0
      %v1872 = vadd.f32 0.0, %v1871
      %v1873 = vpop.f32.mrb[0].mxu0
      %1874 = vmatprep.mubr.f32.mxu0 0.0
      %1875 = vmatmul.mubr.f32.gmra.mrb[0].mxu0 %v1675
      %v1876 = vpop.f32.mrb[0].mxu0
      %v1877 = vadd.f32 0.0, %v1876
      %v1878 = vpop.f32.mrb[0].mxu0
      %1879 = vmatprep.mubr.f32.mxu0 0.0
      %1880 = vmatmul.mubr.f32.gmra.mrb[0].mxu0 %v1678
      %v1881 = vpop.f32.mrb[0].mxu0
      %v1882 = vadd.f32 0.0, %v1881
      %v1883 = vpop.f32.mrb[0].mxu0
      %1884 = vmatprep.mubr.f32.mxu0 0.0
      %1885 = vmatmul.mubr.f32.gmra.mrb[0].mxu0 %v1681
      %v1886 = vpop.f32.mrb[0].mxu0
      %v1887 = vadd.f32 0.0, %v1886
      %v1888 = vpop.f32.mrb[0].mxu0
      %1889 = vmatprep.mubr.f32.mxu0 0.0
      %1890 = vmatmul.mubr.f32.gmra.mrb[0].mxu0 %v1684
      %v1891 = vpop.f32.mrb[0].mxu0
      %v1892 = vadd.f32 0.0, %v1891
      %v1893 = vpop.f32.mrb[0].mxu0
      %1894 = vmatprep.mubr.f32.mxu0 0.0
      %1895 = vmatmul.mubr.f32.gmra.mrb[0].mxu0 %v1687
      %v1896 = vpop.f32.mrb[0].mxu0
      %v1897 = vadd.f32 0.0, %v1896
      %v1898 = vpop.f32.mrb[0].mxu0
      %1899 = vmatprep.mubr.f32.mxu0 0.0
      %1900 = vmatmul.mubr.f32.gmra.mrb[0].mxu0 %v1690
      %v1901 = vpop.f32.mrb[0].mxu0
      %v1902 = vadd.f32 0.0, %v1901
      %v1903 = vpop.f32.mrb[0].mxu0
      %1904 = vmatprep.mubr.f32.mxu0 0.0
      %1905 = vmatmul.mubr.f32.gmra.mrb[0].mxu0 %v1693
      %v1906 = vpop.f32.mrb[0].mxu0
      %v1907 = vadd.f32 0.0, %v1906
      %v1908 = vpop.f32.mrb[0].mxu0
      %1909 = vmatprep.mubr.f32.mxu0 0.0
      %1910 = vmatmul.mubr.f32.gmra.mrb[0].mxu0 %v1696
      %v1911 = vpop.f32.mrb[0].mxu0
      %v1912 = vadd.f32 0.0, %v1911
      %v1913 = vpop.f32.mrb[0].mxu0
      %1914 = vmatprep.mubr.f32.mxu0 0.0
      %1915 = vmatmul.mubr.f32.gmra.mrb[0].mxu0 %v1699
      %v1916 = vpop.f32.mrb[0].mxu0
      %v1917 = vadd.f32 0.0, %v1916
      %v1918 = vpop.f32.mrb[0].mxu0
      %1919 = vmatprep.mubr.f32.mxu0 0.0
      %1920 = vmatmul.mubr.f32.gmra.mrb[0].mxu0 %v1702
      %v1921 = vpop.f32.mrb[0].mxu0
      %v1922 = vadd.f32 0.0, %v1921
      %v1923 = vpop.f32.mrb[0].mxu0
      %1924 = vmatprep.mubr.f32.mxu0 0.0
      %1925 = vmatmul.mubr.f32.gmra.mrb[0].mxu0 %v1705
      %v1926 = vpop.f32.mrb[0].mxu0
      %v1927 = vadd.f32 0.0, %v1926
      %v1928 = vpop.f32.mrb[0].mxu0
      %1929 = vmatprep.mubr.f32.mxu0 0.0
      %1930 = vmatmul.mubr.f32.gmra.mrb[0].mxu0 %v1708
      %v1931 = vpop.f32.mrb[0].mxu0
      %v1932 = vadd.f32 0.0, %v1931
      %v1933 = vpop.f32.mrb[0].mxu0
      %1934 = vdwg.mxu0
      %v1935 = vadd.f32 %v1548, %v1777
      %v1936 = vadd.f32 %v1549, %v1782
      %v1937 = vadd.f32 %v1550, %v1787
      %v1938 = vadd.f32 %v1551, %v1792
      %v1939 = vadd.f32 %v1552, %v1797
      %v1940 = vadd.f32 %v1553, %v1802
      %v1941 = vadd.f32 %v1554, %v1807
      %v1942 = vadd.f32 %v1555, %v1812
      %v1943 = vadd.f32 %v1556, %v1817
      %v1944 = vadd.f32 %v1557, %v1822
      %v1945 = vadd.f32 %v1558, %v1827
      %v1946 = vadd.f32 %v1559, %v1832
      %v1947 = vadd.f32 %v1560, %v1837
      %v1948 = vadd.f32 %v1561, %v1842
      %v1949 = vadd.f32 %v1562, %v1847
      %v1950 = vadd.f32 %v1563, %v1852
      %v1951 = vadd.f32 %v1564, %v1857
      %v1952 = vadd.f32 %v1565, %v1862
      %v1953 = vadd.f32 %v1566, %v1867
      %v1954 = vadd.f32 %v1567, %v1872
      %v1955 = vadd.f32 %v1568, %v1877
      %v1956 = vadd.f32 %v1569, %v1882
      %v1957 = vadd.f32 %v1570, %v1887
      %v1958 = vadd.f32 %v1571, %v1892
      %v1959 = vadd.f32 %v1572, %v1897
      %v1960 = vadd.f32 %v1573, %v1902
      %v1961 = vadd.f32 %v1574, %v1907
      %v1962 = vadd.f32 %v1575, %v1912
      %v1963 = vadd.f32 %v1576, %v1917
      %v1964 = vadd.f32 %v1577, %v1922
      %v1965 = vadd.f32 %v1578, %v1927
      %v1966 = vadd.f32 %v1579, %v1932
      %v1967 = vld [vmem:[%s451 + $0x1] sm:$0xff]
      %v1968 = vld [vmem:[%s451 + $0x9] sm:$0xff]
      %v1969 = vld [vmem:[%s451 + $0x19] sm:$0xff]
      %v1970 = vld [vmem:[%s451 + $0x21] sm:$0xff]
      %v1971 = vld [vmem:[%s451 + $0x31] sm:$0xff]
      %v1972 = vld [vmem:[%s451 + $0x39] sm:$0xff]
      %v1973 = vld [vmem:[%s451 + $0x49] sm:$0xff]
      %v1974 = vld [vmem:[%s451 + $0x51] sm:$0xff]
      %v1975 = vld [vmem:[%s451 + $0x61] sm:$0xff]
      %v1976 = vld [vmem:[%s451 + $0x69] sm:$0xff]
      %v1977 = vld [vmem:[%s451 + $0x79] sm:$0xff]
      %v1978 = vld [vmem:[%s451 + $0x81] sm:$0xff]
      %v1979 = vld [vmem:[%s451 + $0x91] sm:$0xff]
      %v1980 = vld [vmem:[%s451 + $0x99] sm:$0xff]
      %v1981 = vld [vmem:[%s451 + $0xa9] sm:$0xff]
      %v1982 = vld [vmem:[%s451 + $0xb1] sm:$0xff]
      %v1983 = vld [vmem:[%s451 + $0xc1] sm:$0xff]
      %v1984 = vld [vmem:[%s451 + $0xc9] sm:$0xff]
      %v1985 = vld [vmem:[%s451 + $0xd9] sm:$0xff]
      %v1986 = vld [vmem:[%s451 + $0xe1] sm:$0xff]
      %v1987 = vld [vmem:[%s451 + $0xf1] sm:$0xff]
      %v1988 = vld [vmem:[%s451 + $0xf9] sm:$0xff]
      %v1989 = vld [vmem:[%s451 + $0x109] sm:$0xff]
      %v1990 = vld [vmem:[%s451 + $0x111] sm:$0xff]
      %v1991 = vld [vmem:[%s451 + $0x121] sm:$0xff]
      %v1992 = vld [vmem:[%s451 + $0x129] sm:$0xff]
      %v1993 = vld [vmem:[%s451 + $0x139] sm:$0xff]
      %v1994 = vld [vmem:[%s451 + $0x141] sm:$0xff]
      %v1995 = vld [vmem:[%s451 + $0x151] sm:$0xff]
      %v1996 = vld [vmem:[%s451 + $0x159] sm:$0xff]
      %v1997 = vld [vmem:[%s451 + $0x169] sm:$0xff]
      %v1998 = vld [vmem:[%s451 + $0x171] sm:$0xff]
      %s1999 = scalar_lea.vmem %s3, 32
      %v2000 = vld [vmem:[%s1999] sm:$0xff]
      %v2002 = vsel %vm405, %v1967, 0
      %v2005 = vsel %vm405, %v1968, 0
      %v2008 = vsel %vm405, %v1969, 0
      %v2011 = vsel %vm405, %v1970, 0
      %v2014 = vsel %vm405, %v1971, 0
      %v2017 = vsel %vm405, %v1972, 0
      %v2020 = vsel %vm405, %v1973, 0
      %v2023 = vsel %vm405, %v1974, 0
      %v2026 = vsel %vm405, %v1975, 0
      %v2029 = vsel %vm405, %v1976, 0
      %v2032 = vsel %vm405, %v1977, 0
      %v2035 = vsel %vm405, %v1978, 0
      %v2038 = vsel %vm405, %v1979, 0
      %v2041 = vsel %vm405, %v1980, 0
      %v2044 = vsel %vm405, %v1981, 0
      %v2047 = vsel %vm405, %v1982, 0
      %v2050 = vsel %vm405, %v1983, 0
      %v2053 = vsel %vm405, %v1984, 0
      %v2056 = vsel %vm405, %v1985, 0
      %v2059 = vsel %vm405, %v1986, 0
      %v2062 = vsel %vm405, %v1987, 0
      %v2065 = vsel %vm405, %v1988, 0
      %v2068 = vsel %vm405, %v1989, 0
      %v2071 = vsel %vm405, %v1990, 0
      %v2074 = vsel %vm405, %v1991, 0
      %v2077 = vsel %vm405, %v1992, 0
      %v2080 = vsel %vm405, %v1993, 0
      %v2083 = vsel %vm405, %v1994, 0
      %v2086 = vsel %vm405, %v1995, 0
      %v2089 = vsel %vm405, %v1996, 0
      %v2092 = vsel %vm405, %v1997, 0
      %v2095 = vsel %vm405, %v1998, 0
      %2097 = vmatprep.subr.mxu0 0.0
      %2098 = vmatpush1.msra.mxu0 %v2000
      %2099 = vmatprep.subr.mxu0 0.0
      %2100 = vmatpush1.msra.mxu0 0.0
      %2101 = vmatprep.subr.mxu0 0.0
      %2102 = vmatpush1.msra.mxu0 0.0
      %2103 = vmatprep.subr.mxu0 0.0
      %2104 = vmatpush1.msra.mxu0 0.0
      %2105 = vmatprep.subr.mxu0 0.0
      %2106 = vmatpush1.msra.mxu0 0.0
      %2107 = vmatprep.subr.mxu0 0.0
      %2108 = vmatpush1.msra.mxu0 0.0
      %2109 = vmatprep.subr.mxu0 0.0
      %2110 = vmatpush1.msra.mxu0 0.0
      %2111 = vmatprep.subr.mxu0 0.0
      %2112 = vmatpush1.msra.mxu0 0.0
      %2113 = vmatprep.subr.mxu0 0.0
      %2114 = vmatpush1.msra.mxu0 0.0
      %2115 = vmatprep.subr.mxu0 0.0
      %2116 = vmatpush1.msra.mxu0 0.0
      %2117 = vmatprep.subr.mxu0 0.0
      %2118 = vmatpush1.msra.mxu0 0.0
      %2119 = vmatprep.subr.mxu0 0.0
      %2120 = vmatpush1.msra.mxu0 0.0
      %2121 = vmatprep.subr.mxu0 0.0
      %2122 = vmatpush1.msra.mxu0 0.0
      %2123 = vmatprep.subr.mxu0 0.0
      %2124 = vmatpush1.msra.mxu0 0.0
      %2125 = vmatprep.subr.mxu0 0.0
      %2126 = vmatpush1.msra.mxu0 0.0
      %2127 = vmatprep.subr.mxu0 0.0
      %2128 = vmatpush1.msra.mxu0 0.0
      %2129 = vmatprep.subr.mxu0 0.0
      %2130 = vmatpush1.msra.mxu0 0.0
      %2131 = vmatprep.subr.mxu0 0.0
      %2132 = vmatpush1.msra.mxu0 0.0
      %2133 = vmatprep.subr.mxu0 0.0
      %2134 = vmatpush1.msra.mxu0 0.0
      %2135 = vmatprep.subr.mxu0 0.0
      %2136 = vmatpush1.msra.mxu0 0.0
      %2137 = vmatprep.subr.mxu0 0.0
      %2138 = vmatpush1.msra.mxu0 0.0
      %2139 = vmatprep.subr.mxu0 0.0
      %2140 = vmatpush1.msra.mxu0 0.0
      %2141 = vmatprep.subr.mxu0 0.0
      %2142 = vmatpush1.msra.mxu0 0.0
      %2143 = vmatprep.subr.mxu0 0.0
      %2144 = vmatpush1.msra.mxu0 0.0
      %2145 = vmatprep.subr.mxu0 0.0
      %2146 = vmatpush1.msra.mxu0 0.0
      %2147 = vmatprep.subr.mxu0 0.0
      %2148 = vmatpush1.msra.mxu0 0.0
      %2149 = vmatprep.subr.mxu0 0.0
      %2150 = vmatpush1.msra.mxu0 0.0
      %2151 = vmatprep.subr.mxu0 0.0
      %2152 = vmatpush1.msra.mxu0 0.0
      %2153 = vmatprep.subr.mxu0 0.0
      %2154 = vmatpush1.msra.mxu0 0.0
      %2155 = vmatprep.subr.mxu0 0.0
      %2156 = vmatpush1.msra.mxu0 0.0
      %2157 = vmatprep.subr.mxu0 0.0
      %2158 = vmatpush1.msra.mxu0 0.0
      %2159 = vmatprep.subr.mxu0 0.0
      %2160 = vmatpush1.msra.mxu0 0.0
      %2161 = vmatprep.mubr.f32.mxu0 0.0
      %2162 = vmatmul.mubr.f32.gmra.mrb[0].mxu0 %v2002
      %v2163 = vpop.f32.mrb[0].mxu0
      %v2164 = vadd.f32 0.0, %v2163
      %v2165 = vpop.f32.mrb[0].mxu0
      %2166 = vmatprep.mubr.f32.mxu0 0.0
      %2167 = vmatmul.mubr.f32.gmra.mrb[0].mxu0 %v2005
      %v2168 = vpop.f32.mrb[0].mxu0
      %v2169 = vadd.f32 0.0, %v2168
      %v2170 = vpop.f32.mrb[0].mxu0
      %2171 = vmatprep.mubr.f32.mxu0 0.0
      %2172 = vmatmul.mubr.f32.gmra.mrb[0].mxu0 %v2008
      %v2173 = vpop.f32.mrb[0].mxu0
      %v2174 = vadd.f32 0.0, %v2173
      %v2175 = vpop.f32.mrb[0].mxu0
      %2176 = vmatprep.mubr.f32.mxu0 0.0
      %2177 = vmatmul.mubr.f32.gmra.mrb[0].mxu0 %v2011
      %v2178 = vpop.f32.mrb[0].mxu0
      %v2179 = vadd.f32 0.0, %v2178
      %v2180 = vpop.f32.mrb[0].mxu0
      %2181 = vmatprep.mubr.f32.mxu0 0.0
      %2182 = vmatmul.mubr.f32.gmra.mrb[0].mxu0 %v2014
      %v2183 = vpop.f32.mrb[0].mxu0
      %v2184 = vadd.f32 0.0, %v2183
      %v2185 = vpop.f32.mrb[0].mxu0
      %2186 = vmatprep.mubr.f32.mxu0 0.0
      %2187 = vmatmul.mubr.f32.gmra.mrb[0].mxu0 %v2017
      %v2188 = vpop.f32.mrb[0].mxu0
      %v2189 = vadd.f32 0.0, %v2188
      %v2190 = vpop.f32.mrb[0].mxu0
      %2191 = vmatprep.mubr.f32.mxu0 0.0
      %2192 = vmatmul.mubr.f32.gmra.mrb[0].mxu0 %v2020
      %v2193 = vpop.f32.mrb[0].mxu0
      %v2194 = vadd.f32 0.0, %v2193
      %v2195 = vpop.f32.mrb[0].mxu0
      %2196 = vmatprep.mubr.f32.mxu0 0.0
      %2197 = vmatmul.mubr.f32.gmra.mrb[0].mxu0 %v2023
      %v2198 = vpop.f32.mrb[0].mxu0
      %v2199 = vadd.f32 0.0, %v2198
      %v2200 = vpop.f32.mrb[0].mxu0
      %2201 = vmatprep.mubr.f32.mxu0 0.0
      %2202 = vmatmul.mubr.f32.gmra.mrb[0].mxu0 %v2026
      %v2203 = vpop.f32.mrb[0].mxu0
      %v2204 = vadd.f32 0.0, %v2203
      %v2205 = vpop.f32.mrb[0].mxu0
      %2206 = vmatprep.mubr.f32.mxu0 0.0
      %2207 = vmatmul.mubr.f32.gmra.mrb[0].mxu0 %v2029
      %v2208 = vpop.f32.mrb[0].mxu0
      %v2209 = vadd.f32 0.0, %v2208
      %v2210 = vpop.f32.mrb[0].mxu0
      %2211 = vmatprep.mubr.f32.mxu0 0.0
      %2212 = vmatmul.mubr.f32.gmra.mrb[0].mxu0 %v2032
      %v2213 = vpop.f32.mrb[0].mxu0
      %v2214 = vadd.f32 0.0, %v2213
      %v2215 = vpop.f32.mrb[0].mxu0
      %2216 = vmatprep.mubr.f32.mxu0 0.0
      %2217 = vmatmul.mubr.f32.gmra.mrb[0].mxu0 %v2035
      %v2218 = vpop.f32.mrb[0].mxu0
      %v2219 = vadd.f32 0.0, %v2218
      %v2220 = vpop.f32.mrb[0].mxu0
      %2221 = vmatprep.mubr.f32.mxu0 0.0
      %2222 = vmatmul.mubr.f32.gmra.mrb[0].mxu0 %v2038
      %v2223 = vpop.f32.mrb[0].mxu0
      %v2224 = vadd.f32 0.0, %v2223
      %v2225 = vpop.f32.mrb[0].mxu0
      %2226 = vmatprep.mubr.f32.mxu0 0.0
      %2227 = vmatmul.mubr.f32.gmra.mrb[0].mxu0 %v2041
      %v2228 = vpop.f32.mrb[0].mxu0
      %v2229 = vadd.f32 0.0, %v2228
      %v2230 = vpop.f32.mrb[0].mxu0
      %2231 = vmatprep.mubr.f32.mxu0 0.0
      %2232 = vmatmul.mubr.f32.gmra.mrb[0].mxu0 %v2044
      %v2233 = vpop.f32.mrb[0].mxu0
      %v2234 = vadd.f32 0.0, %v2233
      %v2235 = vpop.f32.mrb[0].mxu0
      %2236 = vmatprep.mubr.f32.mxu0 0.0
      %2237 = vmatmul.mubr.f32.gmra.mrb[0].mxu0 %v2047
      %v2238 = vpop.f32.mrb[0].mxu0
      %v2239 = vadd.f32 0.0, %v2238
      %v2240 = vpop.f32.mrb[0].mxu0
      %2241 = vmatprep.mubr.f32.mxu0 0.0
      %2242 = vmatmul.mubr.f32.gmra.mrb[0].mxu0 %v2050
      %v2243 = vpop.f32.mrb[0].mxu0
      %v2244 = vadd.f32 0.0, %v2243
      %v2245 = vpop.f32.mrb[0].mxu0
      %2246 = vmatprep.mubr.f32.mxu0 0.0
      %2247 = vmatmul.mubr.f32.gmra.mrb[0].mxu0 %v2053
      %v2248 = vpop.f32.mrb[0].mxu0
      %v2249 = vadd.f32 0.0, %v2248
      %v2250 = vpop.f32.mrb[0].mxu0
      %2251 = vmatprep.mubr.f32.mxu0 0.0
      %2252 = vmatmul.mubr.f32.gmra.mrb[0].mxu0 %v2056
      %v2253 = vpop.f32.mrb[0].mxu0
      %v2254 = vadd.f32 0.0, %v2253
      %v2255 = vpop.f32.mrb[0].mxu0
      %2256 = vmatprep.mubr.f32.mxu0 0.0
      %2257 = vmatmul.mubr.f32.gmra.mrb[0].mxu0 %v2059
      %v2258 = vpop.f32.mrb[0].mxu0
      %v2259 = vadd.f32 0.0, %v2258
      %v2260 = vpop.f32.mrb[0].mxu0
      %2261 = vmatprep.mubr.f32.mxu0 0.0
      %2262 = vmatmul.mubr.f32.gmra.mrb[0].mxu0 %v2062
      %v2263 = vpop.f32.mrb[0].mxu0
      %v2264 = vadd.f32 0.0, %v2263
      %v2265 = vpop.f32.mrb[0].mxu0
      %2266 = vmatprep.mubr.f32.mxu0 0.0
      %2267 = vmatmul.mubr.f32.gmra.mrb[0].mxu0 %v2065
      %v2268 = vpop.f32.mrb[0].mxu0
      %v2269 = vadd.f32 0.0, %v2268
      %v2270 = vpop.f32.mrb[0].mxu0
      %2271 = vmatprep.mubr.f32.mxu0 0.0
      %2272 = vmatmul.mubr.f32.gmra.mrb[0].mxu0 %v2068
      %v2273 = vpop.f32.mrb[0].mxu0
      %v2274 = vadd.f32 0.0, %v2273
      %v2275 = vpop.f32.mrb[0].mxu0
      %2276 = vmatprep.mubr.f32.mxu0 0.0
      %2277 = vmatmul.mubr.f32.gmra.mrb[0].mxu0 %v2071
      %v2278 = vpop.f32.mrb[0].mxu0
      %v2279 = vadd.f32 0.0, %v2278
      %v2280 = vpop.f32.mrb[0].mxu0
      %2281 = vmatprep.mubr.f32.mxu0 0.0
      %2282 = vmatmul.mubr.f32.gmra.mrb[0].mxu0 %v2074
      %v2283 = vpop.f32.mrb[0].mxu0
      %v2284 = vadd.f32 0.0, %v2283
      %v2285 = vpop.f32.mrb[0].mxu0
      %2286 = vmatprep.mubr.f32.mxu0 0.0
      %2287 = vmatmul.mubr.f32.gmra.mrb[0].mxu0 %v2077
      %v2288 = vpop.f32.mrb[0].mxu0
      %v2289 = vadd.f32 0.0, %v2288
      %v2290 = vpop.f32.mrb[0].mxu0
      %2291 = vmatprep.mubr.f32.mxu0 0.0
      %2292 = vmatmul.mubr.f32.gmra.mrb[0].mxu0 %v2080
      %v2293 = vpop.f32.mrb[0].mxu0
      %v2294 = vadd.f32 0.0, %v2293
      %v2295 = vpop.f32.mrb[0].mxu0
      %2296 = vmatprep.mubr.f32.mxu0 0.0
      %2297 = vmatmul.mubr.f32.gmra.mrb[0].mxu0 %v2083
      %v2298 = vpop.f32.mrb[0].mxu0
      %v2299 = vadd.f32 0.0, %v2298
      %v2300 = vpop.f32.mrb[0].mxu0
      %2301 = vmatprep.mubr.f32.mxu0 0.0
      %2302 = vmatmul.mubr.f32.gmra.mrb[0].mxu0 %v2086
      %v2303 = vpop.f32.mrb[0].mxu0
      %v2304 = vadd.f32 0.0, %v2303
      %v2305 = vpop.f32.mrb[0].mxu0
      %2306 = vmatprep.mubr.f32.mxu0 0.0
      %2307 = vmatmul.mubr.f32.gmra.mrb[0].mxu0 %v2089
      %v2308 = vpop.f32.mrb[0].mxu0
      %v2309 = vadd.f32 0.0, %v2308
      %v2310 = vpop.f32.mrb[0].mxu0
      %2311 = vmatprep.mubr.f32.mxu0 0.0
      %2312 = vmatmul.mubr.f32.gmra.mrb[0].mxu0 %v2092
      %v2313 = vpop.f32.mrb[0].mxu0
      %v2314 = vadd.f32 0.0, %v2313
      %v2315 = vpop.f32.mrb[0].mxu0
      %2316 = vmatprep.mubr.f32.mxu0 0.0
      %2317 = vmatmul.mubr.f32.gmra.mrb[0].mxu0 %v2095
      %v2318 = vpop.f32.mrb[0].mxu0
      %v2319 = vadd.f32 0.0, %v2318
      %v2320 = vpop.f32.mrb[0].mxu0
      %2321 = vdwg.mxu0
      %v2322 = vadd.f32 %v1935, %v2164
      %v2323 = vadd.f32 %v1936, %v2169
      %v2324 = vadd.f32 %v1937, %v2174
      %v2325 = vadd.f32 %v1938, %v2179
      %v2326 = vadd.f32 %v1939, %v2184
      %v2327 = vadd.f32 %v1940, %v2189
      %v2328 = vadd.f32 %v1941, %v2194
      %v2329 = vadd.f32 %v1942, %v2199
      %v2330 = vadd.f32 %v1943, %v2204
      %v2331 = vadd.f32 %v1944, %v2209
      %v2332 = vadd.f32 %v1945, %v2214
      %v2333 = vadd.f32 %v1946, %v2219
      %v2334 = vadd.f32 %v1947, %v2224
      %v2335 = vadd.f32 %v1948, %v2229
      %v2336 = vadd.f32 %v1949, %v2234
      %v2337 = vadd.f32 %v1950, %v2239
      %v2338 = vadd.f32 %v1951, %v2244
      %v2339 = vadd.f32 %v1952, %v2249
      %v2340 = vadd.f32 %v1953, %v2254
      %v2341 = vadd.f32 %v1954, %v2259
      %v2342 = vadd.f32 %v1955, %v2264
      %v2343 = vadd.f32 %v1956, %v2269
      %v2344 = vadd.f32 %v1957, %v2274
      %v2345 = vadd.f32 %v1958, %v2279
      %v2346 = vadd.f32 %v1959, %v2284
      %v2347 = vadd.f32 %v1960, %v2289
      %v2348 = vadd.f32 %v1961, %v2294
      %v2349 = vadd.f32 %v1962, %v2299
      %v2350 = vadd.f32 %v1963, %v2304
      %v2351 = vadd.f32 %v1964, %v2309
      %v2352 = vadd.f32 %v1965, %v2314
      %v2353 = vadd.f32 %v1966, %v2319
      %v2354 = vld [vmem:[%s451 + $0x2] sm:$0xff]
      %v2355 = vld [vmem:[%s451 + $0xa] sm:$0xff]
      %v2356 = vld [vmem:[%s451 + $0x1a] sm:$0xff]
      %v2357 = vld [vmem:[%s451 + $0x22] sm:$0xff]
      %v2358 = vld [vmem:[%s451 + $0x32] sm:$0xff]
      %v2359 = vld [vmem:[%s451 + $0x3a] sm:$0xff]
      %v2360 = vld [vmem:[%s451 + $0x4a] sm:$0xff]
      %v2361 = vld [vmem:[%s451 + $0x52] sm:$0xff]
      %v2362 = vld [vmem:[%s451 + $0x62] sm:$0xff]
      %v2363 = vld [vmem:[%s451 + $0x6a] sm:$0xff]
      %v2364 = vld [vmem:[%s451 + $0x7a] sm:$0xff]
      %v2365 = vld [vmem:[%s451 + $0x82] sm:$0xff]
      %v2366 = vld [vmem:[%s451 + $0x92] sm:$0xff]
      %v2367 = vld [vmem:[%s451 + $0x9a] sm:$0xff]
      %v2368 = vld [vmem:[%s451 + $0xaa] sm:$0xff]
      %v2369 = vld [vmem:[%s451 + $0xb2] sm:$0xff]
      %v2370 = vld [vmem:[%s451 + $0xc2] sm:$0xff]
      %v2371 = vld [vmem:[%s451 + $0xca] sm:$0xff]
      %v2372 = vld [vmem:[%s451 + $0xda] sm:$0xff]
      %v2373 = vld [vmem:[%s451 + $0xe2] sm:$0xff]
      %v2374 = vld [vmem:[%s451 + $0xf2] sm:$0xff]
      %v2375 = vld [vmem:[%s451 + $0xfa] sm:$0xff]
      %v2376 = vld [vmem:[%s451 + $0x10a] sm:$0xff]
      %v2377 = vld [vmem:[%s451 + $0x112] sm:$0xff]
      %v2378 = vld [vmem:[%s451 + $0x122] sm:$0xff]
      %v2379 = vld [vmem:[%s451 + $0x12a] sm:$0xff]
      %v2380 = vld [vmem:[%s451 + $0x13a] sm:$0xff]
      %v2381 = vld [vmem:[%s451 + $0x142] sm:$0xff]
      %v2382 = vld [vmem:[%s451 + $0x152] sm:$0xff]
      %v2383 = vld [vmem:[%s451 + $0x15a] sm:$0xff]
      %v2384 = vld [vmem:[%s451 + $0x16a] sm:$0xff]
      %v2385 = vld [vmem:[%s451 + $0x172] sm:$0xff]
      %s2386 = scalar_lea.vmem %s3, 40
      %v2387 = vld [vmem:[%s2386] sm:$0xff]
      %v2389 = vsel %vm405, %v2354, 0
      %v2392 = vsel %vm405, %v2355, 0
      %v2395 = vsel %vm405, %v2356, 0
      %v2398 = vsel %vm405, %v2357, 0
      %v2401 = vsel %vm405, %v2358, 0
      %v2404 = vsel %vm405, %v2359, 0
      %v2407 = vsel %vm405, %v2360, 0
      %v2410 = vsel %vm405, %v2361, 0
      %v2413 = vsel %vm405, %v2362, 0
      %v2416 = vsel %vm405, %v2363, 0
      %v2419 = vsel %vm405, %v2364, 0
      %v2422 = vsel %vm405, %v2365, 0
      %v2425 = vsel %vm405, %v2366, 0
      %v2428 = vsel %vm405, %v2367, 0
      %v2431 = vsel %vm405, %v2368, 0
      %v2434 = vsel %vm405, %v2369, 0
      %v2437 = vsel %vm405, %v2370, 0
      %v2440 = vsel %vm405, %v2371, 0
      %v2443 = vsel %vm405, %v2372, 0
      %v2446 = vsel %vm405, %v2373, 0
      %v2449 = vsel %vm405, %v2374, 0
      %v2452 = vsel %vm405, %v2375, 0
      %v2455 = vsel %vm405, %v2376, 0
      %v2458 = vsel %vm405, %v2377, 0
      %v2461 = vsel %vm405, %v2378, 0
      %v2464 = vsel %vm405, %v2379, 0
      %v2467 = vsel %vm405, %v2380, 0
      %v2470 = vsel %vm405, %v2381, 0
      %v2473 = vsel %vm405, %v2382, 0
      %v2476 = vsel %vm405, %v2383, 0
      %v2479 = vsel %vm405, %v2384, 0
      %v2482 = vsel %vm405, %v2385, 0
      %2484 = vmatprep.subr.mxu0 0.0
      %2485 = vmatpush1.msra.mxu0 %v2387
      %2486 = vmatprep.subr.mxu0 0.0
      %2487 = vmatpush1.msra.mxu0 0.0
      %2488 = vmatprep.subr.mxu0 0.0
      %2489 = vmatpush1.msra.mxu0 0.0
      %2490 = vmatprep.subr.mxu0 0.0
      %2491 = vmatpush1.msra.mxu0 0.0
      %2492 = vmatprep.subr.mxu0 0.0
      %2493 = vmatpush1.msra.mxu0 0.0
      %2494 = vmatprep.subr.mxu0 0.0
      %2495 = vmatpush1.msra.mxu0 0.0
      %2496 = vmatprep.subr.mxu0 0.0
      %2497 = vmatpush1.msra.mxu0 0.0
      %2498 = vmatprep.subr.mxu0 0.0
      %2499 = vmatpush1.msra.mxu0 0.0
      %2500 = vmatprep.subr.mxu0 0.0
      %2501 = vmatpush1.msra.mxu0 0.0
      %2502 = vmatprep.subr.mxu0 0.0
      %2503 = vmatpush1.msra.mxu0 0.0
      %2504 = vmatprep.subr.mxu0 0.0
      %2505 = vmatpush1.msra.mxu0 0.0
      %2506 = vmatprep.subr.mxu0 0.0
      %2507 = vmatpush1.msra.mxu0 0.0
      %2508 = vmatprep.subr.mxu0 0.0
      %2509 = vmatpush1.msra.mxu0 0.0
      %2510 = vmatprep.subr.mxu0 0.0
      %2511 = vmatpush1.msra.mxu0 0.0
      %2512 = vmatprep.subr.mxu0 0.0
      %2513 = vmatpush1.msra.mxu0 0.0
      %2514 = vmatprep.subr.mxu0 0.0
      %2515 = vmatpush1.msra.mxu0 0.0
      %2516 = vmatprep.subr.mxu0 0.0
      %2517 = vmatpush1.msra.mxu0 0.0
      %2518 = vmatprep.subr.mxu0 0.0
      %2519 = vmatpush1.msra.mxu0 0.0
      %2520 = vmatprep.subr.mxu0 0.0
      %2521 = vmatpush1.msra.mxu0 0.0
      %2522 = vmatprep.subr.mxu0 0.0
      %2523 = vmatpush1.msra.mxu0 0.0
      %2524 = vmatprep.subr.mxu0 0.0
      %2525 = vmatpush1.msra.mxu0 0.0
      %2526 = vmatprep.subr.mxu0 0.0
      %2527 = vmatpush1.msra.mxu0 0.0
      %2528 = vmatprep.subr.mxu0 0.0
      %2529 = vmatpush1.msra.mxu0 0.0
      %2530 = vmatprep.subr.mxu0 0.0
      %2531 = vmatpush1.msra.mxu0 0.0
      %2532 = vmatprep.subr.mxu0 0.0
      %2533 = vmatpush1.msra.mxu0 0.0
      %2534 = vmatprep.subr.mxu0 0.0
      %2535 = vmatpush1.msra.mxu0 0.0
      %2536 = vmatprep.subr.mxu0 0.0
      %2537 = vmatpush1.msra.mxu0 0.0
      %2538 = vmatprep.subr.mxu0 0.0
      %2539 = vmatpush1.msra.mxu0 0.0
      %2540 = vmatprep.subr.mxu0 0.0
      %2541 = vmatpush1.msra.mxu0 0.0
      %2542 = vmatprep.subr.mxu0 0.0
      %2543 = vmatpush1.msra.mxu0 0.0
      %2544 = vmatprep.subr.mxu0 0.0
      %2545 = vmatpush1.msra.mxu0 0.0
      %2546 = vmatprep.subr.mxu0 0.0
      %2547 = vmatpush1.msra.mxu0 0.0
      %2548 = vmatprep.mubr.f32.mxu0 0.0
      %2549 = vmatmul.mubr.f32.gmra.mrb[0].mxu0 %v2389
      %v2550 = vpop.f32.mrb[0].mxu0
      %v2551 = vadd.f32 0.0, %v2550
      %v2552 = vpop.f32.mrb[0].mxu0
      %2553 = vmatprep.mubr.f32.mxu0 0.0
      %2554 = vmatmul.mubr.f32.gmra.mrb[0].mxu0 %v2392
      %v2555 = vpop.f32.mrb[0].mxu0
      %v2556 = vadd.f32 0.0, %v2555
      %v2557 = vpop.f32.mrb[0].mxu0
      %2558 = vmatprep.mubr.f32.mxu0 0.0
      %2559 = vmatmul.mubr.f32.gmra.mrb[0].mxu0 %v2395
      %v2560 = vpop.f32.mrb[0].mxu0
      %v2561 = vadd.f32 0.0, %v2560
      %v2562 = vpop.f32.mrb[0].mxu0
      %2563 = vmatprep.mubr.f32.mxu0 0.0
      %2564 = vmatmul.mubr.f32.gmra.mrb[0].mxu0 %v2398
      %v2565 = vpop.f32.mrb[0].mxu0
      %v2566 = vadd.f32 0.0, %v2565
      %v2567 = vpop.f32.mrb[0].mxu0
      %2568 = vmatprep.mubr.f32.mxu0 0.0
      %2569 = vmatmul.mubr.f32.gmra.mrb[0].mxu0 %v2401
      %v2570 = vpop.f32.mrb[0].mxu0
      %v2571 = vadd.f32 0.0, %v2570
      %v2572 = vpop.f32.mrb[0].mxu0
      %2573 = vmatprep.mubr.f32.mxu0 0.0
      %2574 = vmatmul.mubr.f32.gmra.mrb[0].mxu0 %v2404
      %v2575 = vpop.f32.mrb[0].mxu0
      %v2576 = vadd.f32 0.0, %v2575
      %v2577 = vpop.f32.mrb[0].mxu0
      %2578 = vmatprep.mubr.f32.mxu0 0.0
      %2579 = vmatmul.mubr.f32.gmra.mrb[0].mxu0 %v2407
      %v2580 = vpop.f32.mrb[0].mxu0
      %v2581 = vadd.f32 0.0, %v2580
      %v2582 = vpop.f32.mrb[0].mxu0
      %2583 = vmatprep.mubr.f32.mxu0 0.0
      %2584 = vmatmul.mubr.f32.gmra.mrb[0].mxu0 %v2410
      %v2585 = vpop.f32.mrb[0].mxu0
      %v2586 = vadd.f32 0.0, %v2585
      %v2587 = vpop.f32.mrb[0].mxu0
      %2588 = vmatprep.mubr.f32.mxu0 0.0
      %2589 = vmatmul.mubr.f32.gmra.mrb[0].mxu0 %v2413
      %v2590 = vpop.f32.mrb[0].mxu0
      %v2591 = vadd.f32 0.0, %v2590
      %v2592 = vpop.f32.mrb[0].mxu0
      %2593 = vmatprep.mubr.f32.mxu0 0.0
      %2594 = vmatmul.mubr.f32.gmra.mrb[0].mxu0 %v2416
      %v2595 = vpop.f32.mrb[0].mxu0
      %v2596 = vadd.f32 0.0, %v2595
      %v2597 = vpop.f32.mrb[0].mxu0
      %2598 = vmatprep.mubr.f32.mxu0 0.0
      %2599 = vmatmul.mubr.f32.gmra.mrb[0].mxu0 %v2419
      %v2600 = vpop.f32.mrb[0].mxu0
      %v2601 = vadd.f32 0.0, %v2600
      %v2602 = vpop.f32.mrb[0].mxu0
      %2603 = vmatprep.mubr.f32.mxu0 0.0
      %2604 = vmatmul.mubr.f32.gmra.mrb[0].mxu0 %v2422
      %v2605 = vpop.f32.mrb[0].mxu0
      %v2606 = vadd.f32 0.0, %v2605
      %v2607 = vpop.f32.mrb[0].mxu0
      %2608 = vmatprep.mubr.f32.mxu0 0.0
      %2609 = vmatmul.mubr.f32.gmra.mrb[0].mxu0 %v2425
      %v2610 = vpop.f32.mrb[0].mxu0
      %v2611 = vadd.f32 0.0, %v2610
      %v2612 = vpop.f32.mrb[0].mxu0
      %2613 = vmatprep.mubr.f32.mxu0 0.0
      %2614 = vmatmul.mubr.f32.gmra.mrb[0].mxu0 %v2428
      %v2615 = vpop.f32.mrb[0].mxu0
      %v2616 = vadd.f32 0.0, %v2615
      %v2617 = vpop.f32.mrb[0].mxu0
      %2618 = vmatprep.mubr.f32.mxu0 0.0
      %2619 = vmatmul.mubr.f32.gmra.mrb[0].mxu0 %v2431
      %v2620 = vpop.f32.mrb[0].mxu0
      %v2621 = vadd.f32 0.0, %v2620
      %v2622 = vpop.f32.mrb[0].mxu0
      %2623 = vmatprep.mubr.f32.mxu0 0.0
      %2624 = vmatmul.mubr.f32.gmra.mrb[0].mxu0 %v2434
      %v2625 = vpop.f32.mrb[0].mxu0
      %v2626 = vadd.f32 0.0, %v2625
      %v2627 = vpop.f32.mrb[0].mxu0
      %2628 = vmatprep.mubr.f32.mxu0 0.0
      %2629 = vmatmul.mubr.f32.gmra.mrb[0].mxu0 %v2437
      %v2630 = vpop.f32.mrb[0].mxu0
      %v2631 = vadd.f32 0.0, %v2630
      %v2632 = vpop.f32.mrb[0].mxu0
      %2633 = vmatprep.mubr.f32.mxu0 0.0
      %2634 = vmatmul.mubr.f32.gmra.mrb[0].mxu0 %v2440
      %v2635 = vpop.f32.mrb[0].mxu0
      %v2636 = vadd.f32 0.0, %v2635
      %v2637 = vpop.f32.mrb[0].mxu0
      %2638 = vmatprep.mubr.f32.mxu0 0.0
      %2639 = vmatmul.mubr.f32.gmra.mrb[0].mxu0 %v2443
      %v2640 = vpop.f32.mrb[0].mxu0
      %v2641 = vadd.f32 0.0, %v2640
      %v2642 = vpop.f32.mrb[0].mxu0
      %2643 = vmatprep.mubr.f32.mxu0 0.0
      %2644 = vmatmul.mubr.f32.gmra.mrb[0].mxu0 %v2446
      %v2645 = vpop.f32.mrb[0].mxu0
      %v2646 = vadd.f32 0.0, %v2645
      %v2647 = vpop.f32.mrb[0].mxu0
      %2648 = vmatprep.mubr.f32.mxu0 0.0
      %2649 = vmatmul.mubr.f32.gmra.mrb[0].mxu0 %v2449
      %v2650 = vpop.f32.mrb[0].mxu0
      %v2651 = vadd.f32 0.0, %v2650
      %v2652 = vpop.f32.mrb[0].mxu0
      %2653 = vmatprep.mubr.f32.mxu0 0.0
      %2654 = vmatmul.mubr.f32.gmra.mrb[0].mxu0 %v2452
      %v2655 = vpop.f32.mrb[0].mxu0
      %v2656 = vadd.f32 0.0, %v2655
      %v2657 = vpop.f32.mrb[0].mxu0
      %2658 = vmatprep.mubr.f32.mxu0 0.0
      %2659 = vmatmul.mubr.f32.gmra.mrb[0].mxu0 %v2455
      %v2660 = vpop.f32.mrb[0].mxu0
      %v2661 = vadd.f32 0.0, %v2660
      %v2662 = vpop.f32.mrb[0].mxu0
      %2663 = vmatprep.mubr.f32.mxu0 0.0
      %2664 = vmatmul.mubr.f32.gmra.mrb[0].mxu0 %v2458
      %v2665 = vpop.f32.mrb[0].mxu0
      %v2666 = vadd.f32 0.0, %v2665
      %v2667 = vpop.f32.mrb[0].mxu0
      %2668 = vmatprep.mubr.f32.mxu0 0.0
      %2669 = vmatmul.mubr.f32.gmra.mrb[0].mxu0 %v2461
      %v2670 = vpop.f32.mrb[0].mxu0
      %v2671 = vadd.f32 0.0, %v2670
      %v2672 = vpop.f32.mrb[0].mxu0
      %2673 = vmatprep.mubr.f32.mxu0 0.0
      %2674 = vmatmul.mubr.f32.gmra.mrb[0].mxu0 %v2464
      %v2675 = vpop.f32.mrb[0].mxu0
      %v2676 = vadd.f32 0.0, %v2675
      %v2677 = vpop.f32.mrb[0].mxu0
      %2678 = vmatprep.mubr.f32.mxu0 0.0
      %2679 = vmatmul.mubr.f32.gmra.mrb[0].mxu0 %v2467
      %v2680 = vpop.f32.mrb[0].mxu0
      %v2681 = vadd.f32 0.0, %v2680
      %v2682 = vpop.f32.mrb[0].mxu0
      %2683 = vmatprep.mubr.f32.mxu0 0.0
      %2684 = vmatmul.mubr.f32.gmra.mrb[0].mxu0 %v2470
      %v2685 = vpop.f32.mrb[0].mxu0
      %v2686 = vadd.f32 0.0, %v2685
      %v2687 = vpop.f32.mrb[0].mxu0
      %2688 = vmatprep.mubr.f32.mxu0 0.0
      %2689 = vmatmul.mubr.f32.gmra.mrb[0].mxu0 %v2473
      %v2690 = vpop.f32.mrb[0].mxu0
      %v2691 = vadd.f32 0.0, %v2690
      %v2692 = vpop.f32.mrb[0].mxu0
      %2693 = vmatprep.mubr.f32.mxu0 0.0
      %2694 = vmatmul.mubr.f32.gmra.mrb[0].mxu0 %v2476
      %v2695 = vpop.f32.mrb[0].mxu0
      %v2696 = vadd.f32 0.0, %v2695
      %v2697 = vpop.f32.mrb[0].mxu0
      %2698 = vmatprep.mubr.f32.mxu0 0.0
      %2699 = vmatmul.mubr.f32.gmra.mrb[0].mxu0 %v2479
      %v2700 = vpop.f32.mrb[0].mxu0
      %v2701 = vadd.f32 0.0, %v2700
      %v2702 = vpop.f32.mrb[0].mxu0
      %2703 = vmatprep.mubr.f32.mxu0 0.0
      %2704 = vmatmul.mubr.f32.gmra.mrb[0].mxu0 %v2482
      %v2705 = vpop.f32.mrb[0].mxu0
      %v2706 = vadd.f32 0.0, %v2705
      %v2707 = vpop.f32.mrb[0].mxu0
      %2708 = vdwg.mxu0
      %v2709 = vadd.f32 %v2322, %v2551
      %v2710 = vadd.f32 %v2323, %v2556
      %v2711 = vadd.f32 %v2324, %v2561
      %v2712 = vadd.f32 %v2325, %v2566
      %v2713 = vadd.f32 %v2326, %v2571
      %v2714 = vadd.f32 %v2327, %v2576
      %v2715 = vadd.f32 %v2328, %v2581
      %v2716 = vadd.f32 %v2329, %v2586
      %v2717 = vadd.f32 %v2330, %v2591
      %v2718 = vadd.f32 %v2331, %v2596
      %v2719 = vadd.f32 %v2332, %v2601
      %v2720 = vadd.f32 %v2333, %v2606
      %v2721 = vadd.f32 %v2334, %v2611
      %v2722 = vadd.f32 %v2335, %v2616
      %v2723 = vadd.f32 %v2336, %v2621
      %v2724 = vadd.f32 %v2337, %v2626
      %v2725 = vadd.f32 %v2338, %v2631
      %v2726 = vadd.f32 %v2339, %v2636
      %v2727 = vadd.f32 %v2340, %v2641
      %v2728 = vadd.f32 %v2341, %v2646
      %v2729 = vadd.f32 %v2342, %v2651
      %v2730 = vadd.f32 %v2343, %v2656
      %v2731 = vadd.f32 %v2344, %v2661
      %v2732 = vadd.f32 %v2345, %v2666
      %v2733 = vadd.f32 %v2346, %v2671
      %v2734 = vadd.f32 %v2347, %v2676
      %v2735 = vadd.f32 %v2348, %v2681
      %v2736 = vadd.f32 %v2349, %v2686
      %v2737 = vadd.f32 %v2350, %v2691
      %v2738 = vadd.f32 %v2351, %v2696
      %v2739 = vadd.f32 %v2352, %v2701
      %v2740 = vadd.f32 %v2353, %v2706
      %s2741 = scalar_lea.vmem [#allocation2], 48
      %v2742 = vld [vmem:[%s2741] sm:$0xff]
      %v2743 = vld [vmem:[%s2741 + $0x8] sm:$0xff]
      %v2744 = vld [vmem:[%s2741 + $0x18] sm:$0xff]
      %v2745 = vld [vmem:[%s2741 + $0x20] sm:$0xff]
      %v2746 = vld [vmem:[%s2741 + $0x30] sm:$0xff]
      %v2747 = vld [vmem:[%s2741 + $0x38] sm:$0xff]
      %v2748 = vld [vmem:[%s2741 + $0x48] sm:$0xff]
      %v2749 = vld [vmem:[%s2741 + $0x50] sm:$0xff]
      %v2750 = vld [vmem:[%s2741 + $0x60] sm:$0xff]
      %v2751 = vld [vmem:[%s2741 + $0x68] sm:$0xff]
      %v2752 = vld [vmem:[%s2741 + $0x78] sm:$0xff]
      %v2753 = vld [vmem:[%s2741 + $0x80] sm:$0xff]
      %v2754 = vld [vmem:[%s2741 + $0x90] sm:$0xff]
      %v2755 = vld [vmem:[%s2741 + $0x98] sm:$0xff]
      %v2756 = vld [vmem:[%s2741 + $0xa8] sm:$0xff]
      %v2757 = vld [vmem:[%s2741 + $0xb0] sm:$0xff]
      %v2758 = vld [vmem:[%s2741 + $0xc0] sm:$0xff]
      %v2759 = vld [vmem:[%s2741 + $0xc8] sm:$0xff]
      %v2760 = vld [vmem:[%s2741 + $0xd8] sm:$0xff]
      %v2761 = vld [vmem:[%s2741 + $0xe0] sm:$0xff]
      %v2762 = vld [vmem:[%s2741 + $0xf0] sm:$0xff]
      %v2763 = vld [vmem:[%s2741 + $0xf8] sm:$0xff]
      %v2764 = vld [vmem:[%s2741 + $0x108] sm:$0xff]
      %v2765 = vld [vmem:[%s2741 + $0x110] sm:$0xff]
      %v2766 = vld [vmem:[%s2741 + $0x120] sm:$0xff]
      %v2767 = vld [vmem:[%s2741 + $0x128] sm:$0xff]
      %v2768 = vld [vmem:[%s2741 + $0x138] sm:$0xff]
      %v2769 = vld [vmem:[%s2741 + $0x140] sm:$0xff]
      %v2770 = vld [vmem:[%s2741 + $0x150] sm:$0xff]
      %v2771 = vld [vmem:[%s2741 + $0x158] sm:$0xff]
      %v2772 = vld [vmem:[%s2741 + $0x168] sm:$0xff]
      %v2773 = vld [vmem:[%s2741 + $0x170] sm:$0xff]
      %s2774 = scalar_lea.vmem %s3, 48
      %v2775 = vld [vmem:[%s2774] sm:$0xff]
      %v2777 = vsel %vm405, %v2742, 0
      %v2780 = vsel %vm405, %v2743, 0
      %v2783 = vsel %vm405, %v2744, 0
      %v2786 = vsel %vm405, %v2745, 0
      %v2789 = vsel %vm405, %v2746, 0
      %v2792 = vsel %vm405, %v2747, 0
      %v2795 = vsel %vm405, %v2748, 0
      %v2798 = vsel %vm405, %v2749, 0
      %v2801 = vsel %vm405, %v2750, 0
      %v2804 = vsel %vm405, %v2751, 0
      %v2807 = vsel %vm405, %v2752, 0
      %v2810 = vsel %vm405, %v2753, 0
      %v2813 = vsel %vm405, %v2754, 0
      %v2816 = vsel %vm405, %v2755, 0
      %v2819 = vsel %vm405, %v2756, 0
      %v2822 = vsel %vm405, %v2757, 0
      %v2825 = vsel %vm405, %v2758, 0
      %v2828 = vsel %vm405, %v2759, 0
      %v2831 = vsel %vm405, %v2760, 0
      %v2834 = vsel %vm405, %v2761, 0
      %v2837 = vsel %vm405, %v2762, 0
      %v2840 = vsel %vm405, %v2763, 0
      %v2843 = vsel %vm405, %v2764, 0
      %v2846 = vsel %vm405, %v2765, 0
      %v2849 = vsel %vm405, %v2766, 0
      %v2852 = vsel %vm405, %v2767, 0
      %v2855 = vsel %vm405, %v2768, 0
      %v2858 = vsel %vm405, %v2769, 0
      %v2861 = vsel %vm405, %v2770, 0
      %v2864 = vsel %vm405, %v2771, 0
      %v2867 = vsel %vm405, %v2772, 0
      %v2870 = vsel %vm405, %v2773, 0
      %2872 = vmatprep.subr.mxu0 0.0
      %2873 = vmatpush1.msra.mxu0 %v2775
      %2874 = vmatprep.subr.mxu0 0.0
      %2875 = vmatpush1.msra.mxu0 0.0
      %2876 = vmatprep.subr.mxu0 0.0
      %2877 = vmatpush1.msra.mxu0 0.0
      %2878 = vmatprep.subr.mxu0 0.0
      %2879 = vmatpush1.msra.mxu0 0.0
      %2880 = vmatprep.subr.mxu0 0.0
      %2881 = vmatpush1.msra.mxu0 0.0
      %2882 = vmatprep.subr.mxu0 0.0
      %2883 = vmatpush1.msra.mxu0 0.0
      %2884 = vmatprep.subr.mxu0 0.0
      %2885 = vmatpush1.msra.mxu0 0.0
      %2886 = vmatprep.subr.mxu0 0.0
      %2887 = vmatpush1.msra.mxu0 0.0
      %2888 = vmatprep.subr.mxu0 0.0
      %2889 = vmatpush1.msra.mxu0 0.0
      %2890 = vmatprep.subr.mxu0 0.0
      %2891 = vmatpush1.msra.mxu0 0.0
      %2892 = vmatprep.subr.mxu0 0.0
      %2893 = vmatpush1.msra.mxu0 0.0
      %2894 = vmatprep.subr.mxu0 0.0
      %2895 = vmatpush1.msra.mxu0 0.0
      %2896 = vmatprep.subr.mxu0 0.0
      %2897 = vmatpush1.msra.mxu0 0.0
      %2898 = vmatprep.subr.mxu0 0.0
      %2899 = vmatpush1.msra.mxu0 0.0
      %2900 = vmatprep.subr.mxu0 0.0
      %2901 = vmatpush1.msra.mxu0 0.0
      %2902 = vmatprep.subr.mxu0 0.0
      %2903 = vmatpush1.msra.mxu0 0.0
      %2904 = vmatprep.subr.mxu0 0.0
      %2905 = vmatpush1.msra.mxu0 0.0
      %2906 = vmatprep.subr.mxu0 0.0
      %2907 = vmatpush1.msra.mxu0 0.0
      %2908 = vmatprep.subr.mxu0 0.0
      %2909 = vmatpush1.msra.mxu0 0.0
      %2910 = vmatprep.subr.mxu0 0.0
      %2911 = vmatpush1.msra.mxu0 0.0
      %2912 = vmatprep.subr.mxu0 0.0
      %2913 = vmatpush1.msra.mxu0 0.0
      %2914 = vmatprep.subr.mxu0 0.0
      %2915 = vmatpush1.msra.mxu0 0.0
      %2916 = vmatprep.subr.mxu0 0.0
      %2917 = vmatpush1.msra.mxu0 0.0
      %2918 = vmatprep.subr.mxu0 0.0
      %2919 = vmatpush1.msra.mxu0 0.0
      %2920 = vmatprep.subr.mxu0 0.0
      %2921 = vmatpush1.msra.mxu0 0.0
      %2922 = vmatprep.subr.mxu0 0.0
      %2923 = vmatpush1.msra.mxu0 0.0
      %2924 = vmatprep.subr.mxu0 0.0
      %2925 = vmatpush1.msra.mxu0 0.0
      %2926 = vmatprep.subr.mxu0 0.0
      %2927 = vmatpush1.msra.mxu0 0.0
      %2928 = vmatprep.subr.mxu0 0.0
      %2929 = vmatpush1.msra.mxu0 0.0
      %2930 = vmatprep.subr.mxu0 0.0
      %2931 = vmatpush1.msra.mxu0 0.0
      %2932 = vmatprep.subr.mxu0 0.0
      %2933 = vmatpush1.msra.mxu0 0.0
      %2934 = vmatprep.subr.mxu0 0.0
      %2935 = vmatpush1.msra.mxu0 0.0
      %2936 = vmatprep.mubr.f32.mxu0 0.0
      %2937 = vmatmul.mubr.f32.gmra.mrb[0].mxu0 %v2777
      %v2938 = vpop.f32.mrb[0].mxu0
      %v2939 = vadd.f32 0.0, %v2938
      %v2940 = vpop.f32.mrb[0].mxu0
      %2941 = vmatprep.mubr.f32.mxu0 0.0
      %2942 = vmatmul.mubr.f32.gmra.mrb[0].mxu0 %v2780
      %v2943 = vpop.f32.mrb[0].mxu0
      %v2944 = vadd.f32 0.0, %v2943
      %v2945 = vpop.f32.mrb[0].mxu0
      %2946 = vmatprep.mubr.f32.mxu0 0.0
      %2947 = vmatmul.mubr.f32.gmra.mrb[0].mxu0 %v2783
      %v2948 = vpop.f32.mrb[0].mxu0
      %v2949 = vadd.f32 0.0, %v2948
      %v2950 = vpop.f32.mrb[0].mxu0
      %2951 = vmatprep.mubr.f32.mxu0 0.0
      %2952 = vmatmul.mubr.f32.gmra.mrb[0].mxu0 %v2786
      %v2953 = vpop.f32.mrb[0].mxu0
      %v2954 = vadd.f32 0.0, %v2953
      %v2955 = vpop.f32.mrb[0].mxu0
      %2956 = vmatprep.mubr.f32.mxu0 0.0
      %2957 = vmatmul.mubr.f32.gmra.mrb[0].mxu0 %v2789
      %v2958 = vpop.f32.mrb[0].mxu0
      %v2959 = vadd.f32 0.0, %v2958
      %v2960 = vpop.f32.mrb[0].mxu0
      %2961 = vmatprep.mubr.f32.mxu0 0.0
      %2962 = vmatmul.mubr.f32.gmra.mrb[0].mxu0 %v2792
      %v2963 = vpop.f32.mrb[0].mxu0
      %v2964 = vadd.f32 0.0, %v2963
      %v2965 = vpop.f32.mrb[0].mxu0
      %2966 = vmatprep.mubr.f32.mxu0 0.0
      %2967 = vmatmul.mubr.f32.gmra.mrb[0].mxu0 %v2795
      %v2968 = vpop.f32.mrb[0].mxu0
      %v2969 = vadd.f32 0.0, %v2968
      %v2970 = vpop.f32.mrb[0].mxu0
      %2971 = vmatprep.mubr.f32.mxu0 0.0
      %2972 = vmatmul.mubr.f32.gmra.mrb[0].mxu0 %v2798
      %v2973 = vpop.f32.mrb[0].mxu0
      %v2974 = vadd.f32 0.0, %v2973
      %v2975 = vpop.f32.mrb[0].mxu0
      %2976 = vmatprep.mubr.f32.mxu0 0.0
      %2977 = vmatmul.mubr.f32.gmra.mrb[0].mxu0 %v2801
      %v2978 = vpop.f32.mrb[0].mxu0
      %v2979 = vadd.f32 0.0, %v2978
      %v2980 = vpop.f32.mrb[0].mxu0
      %2981 = vmatprep.mubr.f32.mxu0 0.0
      %2982 = vmatmul.mubr.f32.gmra.mrb[0].mxu0 %v2804
      %v2983 = vpop.f32.mrb[0].mxu0
      %v2984 = vadd.f32 0.0, %v2983
      %v2985 = vpop.f32.mrb[0].mxu0
      %2986 = vmatprep.mubr.f32.mxu0 0.0
      %2987 = vmatmul.mubr.f32.gmra.mrb[0].mxu0 %v2807
      %v2988 = vpop.f32.mrb[0].mxu0
      %v2989 = vadd.f32 0.0, %v2988
      %v2990 = vpop.f32.mrb[0].mxu0
      %2991 = vmatprep.mubr.f32.mxu0 0.0
      %2992 = vmatmul.mubr.f32.gmra.mrb[0].mxu0 %v2810
      %v2993 = vpop.f32.mrb[0].mxu0
      %v2994 = vadd.f32 0.0, %v2993
      %v2995 = vpop.f32.mrb[0].mxu0
      %2996 = vmatprep.mubr.f32.mxu0 0.0
      %2997 = vmatmul.mubr.f32.gmra.mrb[0].mxu0 %v2813
      %v2998 = vpop.f32.mrb[0].mxu0
      %v2999 = vadd.f32 0.0, %v2998
      %v3000 = vpop.f32.mrb[0].mxu0
      %3001 = vmatprep.mubr.f32.mxu0 0.0
      %3002 = vmatmul.mubr.f32.gmra.mrb[0].mxu0 %v2816
      %v3003 = vpop.f32.mrb[0].mxu0
      %v3004 = vadd.f32 0.0, %v3003
      %v3005 = vpop.f32.mrb[0].mxu0
      %3006 = vmatprep.mubr.f32.mxu0 0.0
      %3007 = vmatmul.mubr.f32.gmra.mrb[0].mxu0 %v2819
      %v3008 = vpop.f32.mrb[0].mxu0
      %v3009 = vadd.f32 0.0, %v3008
      %v3010 = vpop.f32.mrb[0].mxu0
      %3011 = vmatprep.mubr.f32.mxu0 0.0
      %3012 = vmatmul.mubr.f32.gmra.mrb[0].mxu0 %v2822
      %v3013 = vpop.f32.mrb[0].mxu0
      %v3014 = vadd.f32 0.0, %v3013
      %v3015 = vpop.f32.mrb[0].mxu0
      %3016 = vmatprep.mubr.f32.mxu0 0.0
      %3017 = vmatmul.mubr.f32.gmra.mrb[0].mxu0 %v2825
      %v3018 = vpop.f32.mrb[0].mxu0
      %v3019 = vadd.f32 0.0, %v3018
      %v3020 = vpop.f32.mrb[0].mxu0
      %3021 = vmatprep.mubr.f32.mxu0 0.0
      %3022 = vmatmul.mubr.f32.gmra.mrb[0].mxu0 %v2828
      %v3023 = vpop.f32.mrb[0].mxu0
      %v3024 = vadd.f32 0.0, %v3023
      %v3025 = vpop.f32.mrb[0].mxu0
      %3026 = vmatprep.mubr.f32.mxu0 0.0
      %3027 = vmatmul.mubr.f32.gmra.mrb[0].mxu0 %v2831
      %v3028 = vpop.f32.mrb[0].mxu0
      %v3029 = vadd.f32 0.0, %v3028
      %v3030 = vpop.f32.mrb[0].mxu0
      %3031 = vmatprep.mubr.f32.mxu0 0.0
      %3032 = vmatmul.mubr.f32.gmra.mrb[0].mxu0 %v2834
      %v3033 = vpop.f32.mrb[0].mxu0
      %v3034 = vadd.f32 0.0, %v3033
      %v3035 = vpop.f32.mrb[0].mxu0
      %3036 = vmatprep.mubr.f32.mxu0 0.0
      %3037 = vmatmul.mubr.f32.gmra.mrb[0].mxu0 %v2837
      %v3038 = vpop.f32.mrb[0].mxu0
      %v3039 = vadd.f32 0.0, %v3038
      %v3040 = vpop.f32.mrb[0].mxu0
      %3041 = vmatprep.mubr.f32.mxu0 0.0
      %3042 = vmatmul.mubr.f32.gmra.mrb[0].mxu0 %v2840
      %v3043 = vpop.f32.mrb[0].mxu0
      %v3044 = vadd.f32 0.0, %v3043
      %v3045 = vpop.f32.mrb[0].mxu0
      %3046 = vmatprep.mubr.f32.mxu0 0.0
      %3047 = vmatmul.mubr.f32.gmra.mrb[0].mxu0 %v2843
      %v3048 = vpop.f32.mrb[0].mxu0
      %v3049 = vadd.f32 0.0, %v3048
      %v3050 = vpop.f32.mrb[0].mxu0
      %3051 = vmatprep.mubr.f32.mxu0 0.0
      %3052 = vmatmul.mubr.f32.gmra.mrb[0].mxu0 %v2846
      %v3053 = vpop.f32.mrb[0].mxu0
      %v3054 = vadd.f32 0.0, %v3053
      %v3055 = vpop.f32.mrb[0].mxu0
      %3056 = vmatprep.mubr.f32.mxu0 0.0
      %3057 = vmatmul.mubr.f32.gmra.mrb[0].mxu0 %v2849
      %v3058 = vpop.f32.mrb[0].mxu0
      %v3059 = vadd.f32 0.0, %v3058
      %v3060 = vpop.f32.mrb[0].mxu0
      %3061 = vmatprep.mubr.f32.mxu0 0.0
      %3062 = vmatmul.mubr.f32.gmra.mrb[0].mxu0 %v2852
      %v3063 = vpop.f32.mrb[0].mxu0
      %v3064 = vadd.f32 0.0, %v3063
      %v3065 = vpop.f32.mrb[0].mxu0
      %3066 = vmatprep.mubr.f32.mxu0 0.0
      %3067 = vmatmul.mubr.f32.gmra.mrb[0].mxu0 %v2855
      %v3068 = vpop.f32.mrb[0].mxu0
      %v3069 = vadd.f32 0.0, %v3068
      %v3070 = vpop.f32.mrb[0].mxu0
      %3071 = vmatprep.mubr.f32.mxu0 0.0
      %3072 = vmatmul.mubr.f32.gmra.mrb[0].mxu0 %v2858
      %v3073 = vpop.f32.mrb[0].mxu0
      %v3074 = vadd.f32 0.0, %v3073
      %v3075 = vpop.f32.mrb[0].mxu0
      %3076 = vmatprep.mubr.f32.mxu0 0.0
      %3077 = vmatmul.mubr.f32.gmra.mrb[0].mxu0 %v2861
      %v3078 = vpop.f32.mrb[0].mxu0
      %v3079 = vadd.f32 0.0, %v3078
      %v3080 = vpop.f32.mrb[0].mxu0
      %3081 = vmatprep.mubr.f32.mxu0 0.0
      %3082 = vmatmul.mubr.f32.gmra.mrb[0].mxu0 %v2864
      %v3083 = vpop.f32.mrb[0].mxu0
      %v3084 = vadd.f32 0.0, %v3083
      %v3085 = vpop.f32.mrb[0].mxu0
      %3086 = vmatprep.mubr.f32.mxu0 0.0
      %3087 = vmatmul.mubr.f32.gmra.mrb[0].mxu0 %v2867
      %v3088 = vpop.f32.mrb[0].mxu0
      %v3089 = vadd.f32 0.0, %v3088
      %v3090 = vpop.f32.mrb[0].mxu0
      %3091 = vmatprep.mubr.f32.mxu0 0.0
      %3092 = vmatmul.mubr.f32.gmra.mrb[0].mxu0 %v2870
      %v3093 = vpop.f32.mrb[0].mxu0
      %v3094 = vadd.f32 0.0, %v3093
      %v3095 = vpop.f32.mrb[0].mxu0
      %3096 = vdwg.mxu0
      %v3097 = vadd.f32 %v2709, %v2939
      %v3098 = vadd.f32 %v2710, %v2944
      %v3099 = vadd.f32 %v2711, %v2949
      %v3100 = vadd.f32 %v2712, %v2954
      %v3101 = vadd.f32 %v2713, %v2959
      %v3102 = vadd.f32 %v2714, %v2964
      %v3103 = vadd.f32 %v2715, %v2969
      %v3104 = vadd.f32 %v2716, %v2974
      %v3105 = vadd.f32 %v2717, %v2979
      %v3106 = vadd.f32 %v2718, %v2984
      %v3107 = vadd.f32 %v2719, %v2989
      %v3108 = vadd.f32 %v2720, %v2994
      %v3109 = vadd.f32 %v2721, %v2999
      %v3110 = vadd.f32 %v2722, %v3004
      %v3111 = vadd.f32 %v2723, %v3009
      %v3112 = vadd.f32 %v2724, %v3014
      %v3113 = vadd.f32 %v2725, %v3019
      %v3114 = vadd.f32 %v2726, %v3024
      %v3115 = vadd.f32 %v2727, %v3029
      %v3116 = vadd.f32 %v2728, %v3034
      %v3117 = vadd.f32 %v2729, %v3039
      %v3118 = vadd.f32 %v2730, %v3044
      %v3119 = vadd.f32 %v2731, %v3049
      %v3120 = vadd.f32 %v2732, %v3054
      %v3121 = vadd.f32 %v2733, %v3059
      %v3122 = vadd.f32 %v2734, %v3064
      %v3123 = vadd.f32 %v2735, %v3069
      %v3124 = vadd.f32 %v2736, %v3074
      %v3125 = vadd.f32 %v2737, %v3079
      %v3126 = vadd.f32 %v2738, %v3084
      %v3127 = vadd.f32 %v2739, %v3089
      %v3128 = vadd.f32 %v2740, %v3094
      %v3129 = vld [vmem:[%s2741 + $0x1] sm:$0xff]
      %v3130 = vld [vmem:[%s2741 + $0x9] sm:$0xff]
      %v3131 = vld [vmem:[%s2741 + $0x19] sm:$0xff]
      %v3132 = vld [vmem:[%s2741 + $0x21] sm:$0xff]
      %v3133 = vld [vmem:[%s2741 + $0x31] sm:$0xff]
      %v3134 = vld [vmem:[%s2741 + $0x39] sm:$0xff]
      %v3135 = vld [vmem:[%s2741 + $0x49] sm:$0xff]
      %v3136 = vld [vmem:[%s2741 + $0x51] sm:$0xff]
      %v3137 = vld [vmem:[%s2741 + $0x61] sm:$0xff]
      %v3138 = vld [vmem:[%s2741 + $0x69] sm:$0xff]
      %v3139 = vld [vmem:[%s2741 + $0x79] sm:$0xff]
      %v3140 = vld [vmem:[%s2741 + $0x81] sm:$0xff]
      %v3141 = vld [vmem:[%s2741 + $0x91] sm:$0xff]
      %v3142 = vld [vmem:[%s2741 + $0x99] sm:$0xff]
      %v3143 = vld [vmem:[%s2741 + $0xa9] sm:$0xff]
      %v3144 = vld [vmem:[%s2741 + $0xb1] sm:$0xff]
      %v3145 = vld [vmem:[%s2741 + $0xc1] sm:$0xff]
      %v3146 = vld [vmem:[%s2741 + $0xc9] sm:$0xff]
      %v3147 = vld [vmem:[%s2741 + $0xd9] sm:$0xff]
      %v3148 = vld [vmem:[%s2741 + $0xe1] sm:$0xff]
      %v3149 = vld [vmem:[%s2741 + $0xf1] sm:$0xff]
      %v3150 = vld [vmem:[%s2741 + $0xf9] sm:$0xff]
      %v3151 = vld [vmem:[%s2741 + $0x109] sm:$0xff]
      %v3152 = vld [vmem:[%s2741 + $0x111] sm:$0xff]
      %v3153 = vld [vmem:[%s2741 + $0x121] sm:$0xff]
      %v3154 = vld [vmem:[%s2741 + $0x129] sm:$0xff]
      %v3155 = vld [vmem:[%s2741 + $0x139] sm:$0xff]
      %v3156 = vld [vmem:[%s2741 + $0x141] sm:$0xff]
      %v3157 = vld [vmem:[%s2741 + $0x151] sm:$0xff]
      %v3158 = vld [vmem:[%s2741 + $0x159] sm:$0xff]
      %v3159 = vld [vmem:[%s2741 + $0x169] sm:$0xff]
      %v3160 = vld [vmem:[%s2741 + $0x171] sm:$0xff]
      %s3161 = scalar_lea.vmem %s3, 56
      %v3162 = vld [vmem:[%s3161] sm:$0xff]
      %v3164 = vsel %vm405, %v3129, 0
      %v3167 = vsel %vm405, %v3130, 0
      %v3170 = vsel %vm405, %v3131, 0
      %v3173 = vsel %vm405, %v3132, 0
      %v3176 = vsel %vm405, %v3133, 0
      %v3179 = vsel %vm405, %v3134, 0
      %v3182 = vsel %vm405, %v3135, 0
      %v3185 = vsel %vm405, %v3136, 0
      %v3188 = vsel %vm405, %v3137, 0
      %v3191 = vsel %vm405, %v3138, 0
      %v3194 = vsel %vm405, %v3139, 0
      %v3197 = vsel %vm405, %v3140, 0
      %v3200 = vsel %vm405, %v3141, 0
      %v3203 = vsel %vm405, %v3142, 0
      %v3206 = vsel %vm405, %v3143, 0
      %v3209 = vsel %vm405, %v3144, 0
      %v3212 = vsel %vm405, %v3145, 0
      %v3215 = vsel %vm405, %v3146, 0
      %v3218 = vsel %vm405, %v3147, 0
      %v3221 = vsel %vm405, %v3148, 0
      %v3224 = vsel %vm405, %v3149, 0
      %v3227 = vsel %vm405, %v3150, 0
      %v3230 = vsel %vm405, %v3151, 0
      %v3233 = vsel %vm405, %v3152, 0
      %v3236 = vsel %vm405, %v3153, 0
      %v3239 = vsel %vm405, %v3154, 0
      %v3242 = vsel %vm405, %v3155, 0
      %v3245 = vsel %vm405, %v3156, 0
      %v3248 = vsel %vm405, %v3157, 0
      %v3251 = vsel %vm405, %v3158, 0
      %v3254 = vsel %vm405, %v3159, 0
      %v3257 = vsel %vm405, %v3160, 0
      %3259 = vmatprep.subr.mxu0 0.0
      %3260 = vmatpush1.msra.mxu0 %v3162
      %3261 = vmatprep.subr.mxu0 0.0
      %3262 = vmatpush1.msra.mxu0 0.0
      %3263 = vmatprep.subr.mxu0 0.0
      %3264 = vmatpush1.msra.mxu0 0.0
      %3265 = vmatprep.subr.mxu0 0.0
      %3266 = vmatpush1.msra.mxu0 0.0
      %3267 = vmatprep.subr.mxu0 0.0
      %3268 = vmatpush1.msra.mxu0 0.0
      %3269 = vmatprep.subr.mxu0 0.0
      %3270 = vmatpush1.msra.mxu0 0.0
      %3271 = vmatprep.subr.mxu0 0.0
      %3272 = vmatpush1.msra.mxu0 0.0
      %3273 = vmatprep.subr.mxu0 0.0
      %3274 = vmatpush1.msra.mxu0 0.0
      %3275 = vmatprep.subr.mxu0 0.0
      %3276 = vmatpush1.msra.mxu0 0.0
      %3277 = vmatprep.subr.mxu0 0.0
      %3278 = vmatpush1.msra.mxu0 0.0
      %3279 = vmatprep.subr.mxu0 0.0
      %3280 = vmatpush1.msra.mxu0 0.0
      %3281 = vmatprep.subr.mxu0 0.0
      %3282 = vmatpush1.msra.mxu0 0.0
      %3283 = vmatprep.subr.mxu0 0.0
      %3284 = vmatpush1.msra.mxu0 0.0
      %3285 = vmatprep.subr.mxu0 0.0
      %3286 = vmatpush1.msra.mxu0 0.0
      %3287 = vmatprep.subr.mxu0 0.0
      %3288 = vmatpush1.msra.mxu0 0.0
      %3289 = vmatprep.subr.mxu0 0.0
      %3290 = vmatpush1.msra.mxu0 0.0
      %3291 = vmatprep.subr.mxu0 0.0
      %3292 = vmatpush1.msra.mxu0 0.0
      %3293 = vmatprep.subr.mxu0 0.0
      %3294 = vmatpush1.msra.mxu0 0.0
      %3295 = vmatprep.subr.mxu0 0.0
      %3296 = vmatpush1.msra.mxu0 0.0
      %3297 = vmatprep.subr.mxu0 0.0
      %3298 = vmatpush1.msra.mxu0 0.0
      %3299 = vmatprep.subr.mxu0 0.0
      %3300 = vmatpush1.msra.mxu0 0.0
      %3301 = vmatprep.subr.mxu0 0.0
      %3302 = vmatpush1.msra.mxu0 0.0
      %3303 = vmatprep.subr.mxu0 0.0
      %3304 = vmatpush1.msra.mxu0 0.0
      %3305 = vmatprep.subr.mxu0 0.0
      %3306 = vmatpush1.msra.mxu0 0.0
      %3307 = vmatprep.subr.mxu0 0.0
      %3308 = vmatpush1.msra.mxu0 0.0
      %3309 = vmatprep.subr.mxu0 0.0
      %3310 = vmatpush1.msra.mxu0 0.0
      %3311 = vmatprep.subr.mxu0 0.0
      %3312 = vmatpush1.msra.mxu0 0.0
      %3313 = vmatprep.subr.mxu0 0.0
      %3314 = vmatpush1.msra.mxu0 0.0
      %3315 = vmatprep.subr.mxu0 0.0
      %3316 = vmatpush1.msra.mxu0 0.0
      %3317 = vmatprep.subr.mxu0 0.0
      %3318 = vmatpush1.msra.mxu0 0.0
      %3319 = vmatprep.subr.mxu0 0.0
      %3320 = vmatpush1.msra.mxu0 0.0
      %3321 = vmatprep.subr.mxu0 0.0
      %3322 = vmatpush1.msra.mxu0 0.0
      %3323 = vmatprep.mubr.f32.mxu0 0.0
      %3324 = vmatmul.mubr.f32.gmra.mrb[0].mxu0 %v3164
      %v3325 = vpop.f32.mrb[0].mxu0
      %v3326 = vadd.f32 0.0, %v3325
      %v3327 = vpop.f32.mrb[0].mxu0
      %3328 = vmatprep.mubr.f32.mxu0 0.0
      %3329 = vmatmul.mubr.f32.gmra.mrb[0].mxu0 %v3167
      %v3330 = vpop.f32.mrb[0].mxu0
      %v3331 = vadd.f32 0.0, %v3330
      %v3332 = vpop.f32.mrb[0].mxu0
      %3333 = vmatprep.mubr.f32.mxu0 0.0
      %3334 = vmatmul.mubr.f32.gmra.mrb[0].mxu0 %v3170
      %v3335 = vpop.f32.mrb[0].mxu0
      %v3336 = vadd.f32 0.0, %v3335
      %v3337 = vpop.f32.mrb[0].mxu0
      %3338 = vmatprep.mubr.f32.mxu0 0.0
      %3339 = vmatmul.mubr.f32.gmra.mrb[0].mxu0 %v3173
      %v3340 = vpop.f32.mrb[0].mxu0
      %v3341 = vadd.f32 0.0, %v3340
      %v3342 = vpop.f32.mrb[0].mxu0
      %3343 = vmatprep.mubr.f32.mxu0 0.0
      %3344 = vmatmul.mubr.f32.gmra.mrb[0].mxu0 %v3176
      %v3345 = vpop.f32.mrb[0].mxu0
      %v3346 = vadd.f32 0.0, %v3345
      %v3347 = vpop.f32.mrb[0].mxu0
      %3348 = vmatprep.mubr.f32.mxu0 0.0
      %3349 = vmatmul.mubr.f32.gmra.mrb[0].mxu0 %v3179
      %v3350 = vpop.f32.mrb[0].mxu0
      %v3351 = vadd.f32 0.0, %v3350
      %v3352 = vpop.f32.mrb[0].mxu0
      %3353 = vmatprep.mubr.f32.mxu0 0.0
      %3354 = vmatmul.mubr.f32.gmra.mrb[0].mxu0 %v3182
      %v3355 = vpop.f32.mrb[0].mxu0
      %v3356 = vadd.f32 0.0, %v3355
      %v3357 = vpop.f32.mrb[0].mxu0
      %3358 = vmatprep.mubr.f32.mxu0 0.0
      %3359 = vmatmul.mubr.f32.gmra.mrb[0].mxu0 %v3185
      %v3360 = vpop.f32.mrb[0].mxu0
      %v3361 = vadd.f32 0.0, %v3360
      %v3362 = vpop.f32.mrb[0].mxu0
      %3363 = vmatprep.mubr.f32.mxu0 0.0
      %3364 = vmatmul.mubr.f32.gmra.mrb[0].mxu0 %v3188
      %v3365 = vpop.f32.mrb[0].mxu0
      %v3366 = vadd.f32 0.0, %v3365
      %v3367 = vpop.f32.mrb[0].mxu0
      %3368 = vmatprep.mubr.f32.mxu0 0.0
      %3369 = vmatmul.mubr.f32.gmra.mrb[0].mxu0 %v3191
      %v3370 = vpop.f32.mrb[0].mxu0
      %v3371 = vadd.f32 0.0, %v3370
      %v3372 = vpop.f32.mrb[0].mxu0
      %3373 = vmatprep.mubr.f32.mxu0 0.0
      %3374 = vmatmul.mubr.f32.gmra.mrb[0].mxu0 %v3194
      %v3375 = vpop.f32.mrb[0].mxu0
      %v3376 = vadd.f32 0.0, %v3375
      %v3377 = vpop.f32.mrb[0].mxu0
      %3378 = vmatprep.mubr.f32.mxu0 0.0
      %3379 = vmatmul.mubr.f32.gmra.mrb[0].mxu0 %v3197
      %v3380 = vpop.f32.mrb[0].mxu0
      %v3381 = vadd.f32 0.0, %v3380
      %v3382 = vpop.f32.mrb[0].mxu0
      %3383 = vmatprep.mubr.f32.mxu0 0.0
      %3384 = vmatmul.mubr.f32.gmra.mrb[0].mxu0 %v3200
      %v3385 = vpop.f32.mrb[0].mxu0
      %v3386 = vadd.f32 0.0, %v3385
      %v3387 = vpop.f32.mrb[0].mxu0
      %3388 = vmatprep.mubr.f32.mxu0 0.0
      %3389 = vmatmul.mubr.f32.gmra.mrb[0].mxu0 %v3203
      %v3390 = vpop.f32.mrb[0].mxu0
      %v3391 = vadd.f32 0.0, %v3390
      %v3392 = vpop.f32.mrb[0].mxu0
      %3393 = vmatprep.mubr.f32.mxu0 0.0
      %3394 = vmatmul.mubr.f32.gmra.mrb[0].mxu0 %v3206
      %v3395 = vpop.f32.mrb[0].mxu0
      %v3396 = vadd.f32 0.0, %v3395
      %v3397 = vpop.f32.mrb[0].mxu0
      %3398 = vmatprep.mubr.f32.mxu0 0.0
      %3399 = vmatmul.mubr.f32.gmra.mrb[0].mxu0 %v3209
      %v3400 = vpop.f32.mrb[0].mxu0
      %v3401 = vadd.f32 0.0, %v3400
      %v3402 = vpop.f32.mrb[0].mxu0
      %3403 = vmatprep.mubr.f32.mxu0 0.0
      %3404 = vmatmul.mubr.f32.gmra.mrb[0].mxu0 %v3212
      %v3405 = vpop.f32.mrb[0].mxu0
      %v3406 = vadd.f32 0.0, %v3405
      %v3407 = vpop.f32.mrb[0].mxu0
      %3408 = vmatprep.mubr.f32.mxu0 0.0
      %3409 = vmatmul.mubr.f32.gmra.mrb[0].mxu0 %v3215
      %v3410 = vpop.f32.mrb[0].mxu0
      %v3411 = vadd.f32 0.0, %v3410
      %v3412 = vpop.f32.mrb[0].mxu0
      %3413 = vmatprep.mubr.f32.mxu0 0.0
      %3414 = vmatmul.mubr.f32.gmra.mrb[0].mxu0 %v3218
      %v3415 = vpop.f32.mrb[0].mxu0
      %v3416 = vadd.f32 0.0, %v3415
      %v3417 = vpop.f32.mrb[0].mxu0
      %3418 = vmatprep.mubr.f32.mxu0 0.0
      %3419 = vmatmul.mubr.f32.gmra.mrb[0].mxu0 %v3221
      %v3420 = vpop.f32.mrb[0].mxu0
      %v3421 = vadd.f32 0.0, %v3420
      %v3422 = vpop.f32.mrb[0].mxu0
      %3423 = vmatprep.mubr.f32.mxu0 0.0
      %3424 = vmatmul.mubr.f32.gmra.mrb[0].mxu0 %v3224
      %v3425 = vpop.f32.mrb[0].mxu0
      %v3426 = vadd.f32 0.0, %v3425
      %v3427 = vpop.f32.mrb[0].mxu0
      %3428 = vmatprep.mubr.f32.mxu0 0.0
      %3429 = vmatmul.mubr.f32.gmra.mrb[0].mxu0 %v3227
      %v3430 = vpop.f32.mrb[0].mxu0
      %v3431 = vadd.f32 0.0, %v3430
      %v3432 = vpop.f32.mrb[0].mxu0
      %3433 = vmatprep.mubr.f32.mxu0 0.0
      %3434 = vmatmul.mubr.f32.gmra.mrb[0].mxu0 %v3230
      %v3435 = vpop.f32.mrb[0].mxu0
      %v3436 = vadd.f32 0.0, %v3435
      %v3437 = vpop.f32.mrb[0].mxu0
      %3438 = vmatprep.mubr.f32.mxu0 0.0
      %3439 = vmatmul.mubr.f32.gmra.mrb[0].mxu0 %v3233
      %v3440 = vpop.f32.mrb[0].mxu0
      %v3441 = vadd.f32 0.0, %v3440
      %v3442 = vpop.f32.mrb[0].mxu0
      %3443 = vmatprep.mubr.f32.mxu0 0.0
      %3444 = vmatmul.mubr.f32.gmra.mrb[0].mxu0 %v3236
      %v3445 = vpop.f32.mrb[0].mxu0
      %v3446 = vadd.f32 0.0, %v3445
      %v3447 = vpop.f32.mrb[0].mxu0
      %3448 = vmatprep.mubr.f32.mxu0 0.0
      %3449 = vmatmul.mubr.f32.gmra.mrb[0].mxu0 %v3239
      %v3450 = vpop.f32.mrb[0].mxu0
      %v3451 = vadd.f32 0.0, %v3450
      %v3452 = vpop.f32.mrb[0].mxu0
      %3453 = vmatprep.mubr.f32.mxu0 0.0
      %3454 = vmatmul.mubr.f32.gmra.mrb[0].mxu0 %v3242
      %v3455 = vpop.f32.mrb[0].mxu0
      %v3456 = vadd.f32 0.0, %v3455
      %v3457 = vpop.f32.mrb[0].mxu0
      %3458 = vmatprep.mubr.f32.mxu0 0.0
      %3459 = vmatmul.mubr.f32.gmra.mrb[0].mxu0 %v3245
      %v3460 = vpop.f32.mrb[0].mxu0
      %v3461 = vadd.f32 0.0, %v3460
      %v3462 = vpop.f32.mrb[0].mxu0
      %3463 = vmatprep.mubr.f32.mxu0 0.0
      %3464 = vmatmul.mubr.f32.gmra.mrb[0].mxu0 %v3248
      %v3465 = vpop.f32.mrb[0].mxu0
      %v3466 = vadd.f32 0.0, %v3465
      %v3467 = vpop.f32.mrb[0].mxu0
      %3468 = vmatprep.mubr.f32.mxu0 0.0
      %3469 = vmatmul.mubr.f32.gmra.mrb[0].mxu0 %v3251
      %v3470 = vpop.f32.mrb[0].mxu0
      %v3471 = vadd.f32 0.0, %v3470
      %v3472 = vpop.f32.mrb[0].mxu0
      %3473 = vmatprep.mubr.f32.mxu0 0.0
      %3474 = vmatmul.mubr.f32.gmra.mrb[0].mxu0 %v3254
      %v3475 = vpop.f32.mrb[0].mxu0
      %v3476 = vadd.f32 0.0, %v3475
      %v3477 = vpop.f32.mrb[0].mxu0
      %3478 = vmatprep.mubr.f32.mxu0 0.0
      %3479 = vmatmul.mubr.f32.gmra.mrb[0].mxu0 %v3257
      %v3480 = vpop.f32.mrb[0].mxu0
      %v3481 = vadd.f32 0.0, %v3480
      %v3482 = vpop.f32.mrb[0].mxu0
      %3483 = vdwg.mxu0
      %v3484 = vadd.f32 %v3097, %v3326
      %v3485 = vadd.f32 %v3098, %v3331
      %v3486 = vadd.f32 %v3099, %v3336
      %v3487 = vadd.f32 %v3100, %v3341
      %v3488 = vadd.f32 %v3101, %v3346
      %v3489 = vadd.f32 %v3102, %v3351
      %v3490 = vadd.f32 %v3103, %v3356
      %v3491 = vadd.f32 %v3104, %v3361
      %v3492 = vadd.f32 %v3105, %v3366
      %v3493 = vadd.f32 %v3106, %v3371
      %v3494 = vadd.f32 %v3107, %v3376
      %v3495 = vadd.f32 %v3108, %v3381
      %v3496 = vadd.f32 %v3109, %v3386
      %v3497 = vadd.f32 %v3110, %v3391
      %v3498 = vadd.f32 %v3111, %v3396
      %v3499 = vadd.f32 %v3112, %v3401
      %v3500 = vadd.f32 %v3113, %v3406
      %v3501 = vadd.f32 %v3114, %v3411
      %v3502 = vadd.f32 %v3115, %v3416
      %v3503 = vadd.f32 %v3116, %v3421
      %v3504 = vadd.f32 %v3117, %v3426
      %v3505 = vadd.f32 %v3118, %v3431
      %v3506 = vadd.f32 %v3119, %v3436
      %v3507 = vadd.f32 %v3120, %v3441
      %v3508 = vadd.f32 %v3121, %v3446
      %v3509 = vadd.f32 %v3122, %v3451
      %v3510 = vadd.f32 %v3123, %v3456
      %v3511 = vadd.f32 %v3124, %v3461
      %v3512 = vadd.f32 %v3125, %v3466
      %v3513 = vadd.f32 %v3126, %v3471
      %v3514 = vadd.f32 %v3127, %v3476
      %v3515 = vadd.f32 %v3128, %v3481
      %v3516 = vld [vmem:[%s2741 + $0x2] sm:$0xff]
      %v3517 = vld [vmem:[%s2741 + $0xa] sm:$0xff]
      %v3518 = vld [vmem:[%s2741 + $0x1a] sm:$0xff]
      %v3519 = vld [vmem:[%s2741 + $0x22] sm:$0xff]
      %v3520 = vld [vmem:[%s2741 + $0x32] sm:$0xff]
      %v3521 = vld [vmem:[%s2741 + $0x3a] sm:$0xff]
      %v3522 = vld [vmem:[%s2741 + $0x4a] sm:$0xff]
      %v3523 = vld [vmem:[%s2741 + $0x52] sm:$0xff]
      %v3524 = vld [vmem:[%s2741 + $0x62] sm:$0xff]
      %v3525 = vld [vmem:[%s2741 + $0x6a] sm:$0xff]
      %v3526 = vld [vmem:[%s2741 + $0x7a] sm:$0xff]
      %v3527 = vld [vmem:[%s2741 + $0x82] sm:$0xff]
      %v3528 = vld [vmem:[%s2741 + $0x92] sm:$0xff]
      %v3529 = vld [vmem:[%s2741 + $0x9a] sm:$0xff]
      %v3530 = vld [vmem:[%s2741 + $0xaa] sm:$0xff]
      %v3531 = vld [vmem:[%s2741 + $0xb2] sm:$0xff]
      %v3532 = vld [vmem:[%s2741 + $0xc2] sm:$0xff]
      %v3533 = vld [vmem:[%s2741 + $0xca] sm:$0xff]
      %v3534 = vld [vmem:[%s2741 + $0xda] sm:$0xff]
      %v3535 = vld [vmem:[%s2741 + $0xe2] sm:$0xff]
      %v3536 = vld [vmem:[%s2741 + $0xf2] sm:$0xff]
      %v3537 = vld [vmem:[%s2741 + $0xfa] sm:$0xff]
      %v3538 = vld [vmem:[%s2741 + $0x10a] sm:$0xff]
      %v3539 = vld [vmem:[%s2741 + $0x112] sm:$0xff]
      %v3540 = vld [vmem:[%s2741 + $0x122] sm:$0xff]
      %v3541 = vld [vmem:[%s2741 + $0x12a] sm:$0xff]
      %v3542 = vld [vmem:[%s2741 + $0x13a] sm:$0xff]
      %v3543 = vld [vmem:[%s2741 + $0x142] sm:$0xff]
      %v3544 = vld [vmem:[%s2741 + $0x152] sm:$0xff]
      %v3545 = vld [vmem:[%s2741 + $0x15a] sm:$0xff]
      %v3546 = vld [vmem:[%s2741 + $0x16a] sm:$0xff]
      %v3547 = vld [vmem:[%s2741 + $0x172] sm:$0xff]
      %s3548 = scalar_lea.vmem %s3, 64
      %v3549 = vld [vmem:[%s3548] sm:$0xff]
      %v3551 = vsel %vm405, %v3516, 0
      %v3554 = vsel %vm405, %v3517, 0
      %v3557 = vsel %vm405, %v3518, 0
      %v3560 = vsel %vm405, %v3519, 0
      %v3563 = vsel %vm405, %v3520, 0
      %v3566 = vsel %vm405, %v3521, 0
      %v3569 = vsel %vm405, %v3522, 0
      %v3572 = vsel %vm405, %v3523, 0
      %v3575 = vsel %vm405, %v3524, 0
      %v3578 = vsel %vm405, %v3525, 0
      %v3581 = vsel %vm405, %v3526, 0
      %v3584 = vsel %vm405, %v3527, 0
      %v3587 = vsel %vm405, %v3528, 0
      %v3590 = vsel %vm405, %v3529, 0
      %v3593 = vsel %vm405, %v3530, 0
      %v3596 = vsel %vm405, %v3531, 0
      %v3599 = vsel %vm405, %v3532, 0
      %v3602 = vsel %vm405, %v3533, 0
      %v3605 = vsel %vm405, %v3534, 0
      %v3608 = vsel %vm405, %v3535, 0
      %v3611 = vsel %vm405, %v3536, 0
      %v3614 = vsel %vm405, %v3537, 0
      %v3617 = vsel %vm405, %v3538, 0
      %v3620 = vsel %vm405, %v3539, 0
      %v3623 = vsel %vm405, %v3540, 0
      %v3626 = vsel %vm405, %v3541, 0
      %v3629 = vsel %vm405, %v3542, 0
      %v3632 = vsel %vm405, %v3543, 0
      %v3635 = vsel %vm405, %v3544, 0
      %v3638 = vsel %vm405, %v3545, 0
      %v3641 = vsel %vm405, %v3546, 0
      %v3644 = vsel %vm405, %v3547, 0
      %3646 = vmatprep.subr.mxu0 0.0
      %3647 = vmatpush1.msra.mxu0 %v3549
      %3648 = vmatprep.subr.mxu0 0.0
      %3649 = vmatpush1.msra.mxu0 0.0
      %3650 = vmatprep.subr.mxu0 0.0
      %3651 = vmatpush1.msra.mxu0 0.0
      %3652 = vmatprep.subr.mxu0 0.0
      %3653 = vmatpush1.msra.mxu0 0.0
      %3654 = vmatprep.subr.mxu0 0.0
      %3655 = vmatpush1.msra.mxu0 0.0
      %3656 = vmatprep.subr.mxu0 0.0
      %3657 = vmatpush1.msra.mxu0 0.0
      %3658 = vmatprep.subr.mxu0 0.0
      %3659 = vmatpush1.msra.mxu0 0.0
      %3660 = vmatprep.subr.mxu0 0.0
      %3661 = vmatpush1.msra.mxu0 0.0
      %3662 = vmatprep.subr.mxu0 0.0
      %3663 = vmatpush1.msra.mxu0 0.0
      %3664 = vmatprep.subr.mxu0 0.0
      %3665 = vmatpush1.msra.mxu0 0.0
      %3666 = vmatprep.subr.mxu0 0.0
      %3667 = vmatpush1.msra.mxu0 0.0
      %3668 = vmatprep.subr.mxu0 0.0
      %3669 = vmatpush1.msra.mxu0 0.0
      %3670 = vmatprep.subr.mxu0 0.0
      %3671 = vmatpush1.msra.mxu0 0.0
      %3672 = vmatprep.subr.mxu0 0.0
      %3673 = vmatpush1.msra.mxu0 0.0
      %3674 = vmatprep.subr.mxu0 0.0
      %3675 = vmatpush1.msra.mxu0 0.0
      %3676 = vmatprep.subr.mxu0 0.0
      %3677 = vmatpush1.msra.mxu0 0.0
      %3678 = vmatprep.subr.mxu0 0.0
      %3679 = vmatpush1.msra.mxu0 0.0
      %3680 = vmatprep.subr.mxu0 0.0
      %3681 = vmatpush1.msra.mxu0 0.0
      %3682 = vmatprep.subr.mxu0 0.0
      %3683 = vmatpush1.msra.mxu0 0.0
      %3684 = vmatprep.subr.mxu0 0.0
      %3685 = vmatpush1.msra.mxu0 0.0
      %3686 = vmatprep.subr.mxu0 0.0
      %3687 = vmatpush1.msra.mxu0 0.0
      %3688 = vmatprep.subr.mxu0 0.0
      %3689 = vmatpush1.msra.mxu0 0.0
      %3690 = vmatprep.subr.mxu0 0.0
      %3691 = vmatpush1.msra.mxu0 0.0
      %3692 = vmatprep.subr.mxu0 0.0
      %3693 = vmatpush1.msra.mxu0 0.0
      %3694 = vmatprep.subr.mxu0 0.0
      %3695 = vmatpush1.msra.mxu0 0.0
      %3696 = vmatprep.subr.mxu0 0.0
      %3697 = vmatpush1.msra.mxu0 0.0
      %3698 = vmatprep.subr.mxu0 0.0
      %3699 = vmatpush1.msra.mxu0 0.0
      %3700 = vmatprep.subr.mxu0 0.0
      %3701 = vmatpush1.msra.mxu0 0.0
      %3702 = vmatprep.subr.mxu0 0.0
      %3703 = vmatpush1.msra.mxu0 0.0
      %3704 = vmatprep.subr.mxu0 0.0
      %3705 = vmatpush1.msra.mxu0 0.0
      %3706 = vmatprep.subr.mxu0 0.0
      %3707 = vmatpush1.msra.mxu0 0.0
      %3708 = vmatprep.subr.mxu0 0.0
      %3709 = vmatpush1.msra.mxu0 0.0
      %3710 = vmatprep.mubr.f32.mxu0 0.0
      %3711 = vmatmul.mubr.f32.gmra.mrb[0].mxu0 %v3551
      %v3712 = vpop.f32.mrb[0].mxu0
      %v3713 = vadd.f32 0.0, %v3712
      %v3714 = vpop.f32.mrb[0].mxu0
      %3715 = vmatprep.mubr.f32.mxu0 0.0
      %3716 = vmatmul.mubr.f32.gmra.mrb[0].mxu0 %v3554
      %v3717 = vpop.f32.mrb[0].mxu0
      %v3718 = vadd.f32 0.0, %v3717
      %v3719 = vpop.f32.mrb[0].mxu0
      %3720 = vmatprep.mubr.f32.mxu0 0.0
      %3721 = vmatmul.mubr.f32.gmra.mrb[0].mxu0 %v3557
      %v3722 = vpop.f32.mrb[0].mxu0
      %v3723 = vadd.f32 0.0, %v3722
      %v3724 = vpop.f32.mrb[0].mxu0
      %3725 = vmatprep.mubr.f32.mxu0 0.0
      %3726 = vmatmul.mubr.f32.gmra.mrb[0].mxu0 %v3560
      %v3727 = vpop.f32.mrb[0].mxu0
      %v3728 = vadd.f32 0.0, %v3727
      %v3729 = vpop.f32.mrb[0].mxu0
      %3730 = vmatprep.mubr.f32.mxu0 0.0
      %3731 = vmatmul.mubr.f32.gmra.mrb[0].mxu0 %v3563
      %v3732 = vpop.f32.mrb[0].mxu0
      %v3733 = vadd.f32 0.0, %v3732
      %v3734 = vpop.f32.mrb[0].mxu0
      %3735 = vmatprep.mubr.f32.mxu0 0.0
      %3736 = vmatmul.mubr.f32.gmra.mrb[0].mxu0 %v3566
      %v3737 = vpop.f32.mrb[0].mxu0
      %v3738 = vadd.f32 0.0, %v3737
      %v3739 = vpop.f32.mrb[0].mxu0
      %3740 = vmatprep.mubr.f32.mxu0 0.0
      %3741 = vmatmul.mubr.f32.gmra.mrb[0].mxu0 %v3569
      %v3742 = vpop.f32.mrb[0].mxu0
      %v3743 = vadd.f32 0.0, %v3742
      %v3744 = vpop.f32.mrb[0].mxu0
      %3745 = vmatprep.mubr.f32.mxu0 0.0
      %3746 = vmatmul.mubr.f32.gmra.mrb[0].mxu0 %v3572
      %v3747 = vpop.f32.mrb[0].mxu0
      %v3748 = vadd.f32 0.0, %v3747
      %v3749 = vpop.f32.mrb[0].mxu0
      %3750 = vmatprep.mubr.f32.mxu0 0.0
      %3751 = vmatmul.mubr.f32.gmra.mrb[0].mxu0 %v3575
      %v3752 = vpop.f32.mrb[0].mxu0
      %v3753 = vadd.f32 0.0, %v3752
      %v3754 = vpop.f32.mrb[0].mxu0
      %3755 = vmatprep.mubr.f32.mxu0 0.0
      %3756 = vmatmul.mubr.f32.gmra.mrb[0].mxu0 %v3578
      %v3757 = vpop.f32.mrb[0].mxu0
      %v3758 = vadd.f32 0.0, %v3757
      %v3759 = vpop.f32.mrb[0].mxu0
      %3760 = vmatprep.mubr.f32.mxu0 0.0
      %3761 = vmatmul.mubr.f32.gmra.mrb[0].mxu0 %v3581
      %v3762 = vpop.f32.mrb[0].mxu0
      %v3763 = vadd.f32 0.0, %v3762
      %v3764 = vpop.f32.mrb[0].mxu0
      %3765 = vmatprep.mubr.f32.mxu0 0.0
      %3766 = vmatmul.mubr.f32.gmra.mrb[0].mxu0 %v3584
      %v3767 = vpop.f32.mrb[0].mxu0
      %v3768 = vadd.f32 0.0, %v3767
      %v3769 = vpop.f32.mrb[0].mxu0
      %3770 = vmatprep.mubr.f32.mxu0 0.0
      %3771 = vmatmul.mubr.f32.gmra.mrb[0].mxu0 %v3587
      %v3772 = vpop.f32.mrb[0].mxu0
      %v3773 = vadd.f32 0.0, %v3772
      %v3774 = vpop.f32.mrb[0].mxu0
      %3775 = vmatprep.mubr.f32.mxu0 0.0
      %3776 = vmatmul.mubr.f32.gmra.mrb[0].mxu0 %v3590
      %v3777 = vpop.f32.mrb[0].mxu0
      %v3778 = vadd.f32 0.0, %v3777
      %v3779 = vpop.f32.mrb[0].mxu0
      %3780 = vmatprep.mubr.f32.mxu0 0.0
      %3781 = vmatmul.mubr.f32.gmra.mrb[0].mxu0 %v3593
      %v3782 = vpop.f32.mrb[0].mxu0
      %v3783 = vadd.f32 0.0, %v3782
      %v3784 = vpop.f32.mrb[0].mxu0
      %3785 = vmatprep.mubr.f32.mxu0 0.0
      %3786 = vmatmul.mubr.f32.gmra.mrb[0].mxu0 %v3596
      %v3787 = vpop.f32.mrb[0].mxu0
      %v3788 = vadd.f32 0.0, %v3787
      %v3789 = vpop.f32.mrb[0].mxu0
      %3790 = vmatprep.mubr.f32.mxu0 0.0
      %3791 = vmatmul.mubr.f32.gmra.mrb[0].mxu0 %v3599
      %v3792 = vpop.f32.mrb[0].mxu0
      %v3793 = vadd.f32 0.0, %v3792
      %v3794 = vpop.f32.mrb[0].mxu0
      %3795 = vmatprep.mubr.f32.mxu0 0.0
      %3796 = vmatmul.mubr.f32.gmra.mrb[0].mxu0 %v3602
      %v3797 = vpop.f32.mrb[0].mxu0
      %v3798 = vadd.f32 0.0, %v3797
      %v3799 = vpop.f32.mrb[0].mxu0
      %3800 = vmatprep.mubr.f32.mxu0 0.0
      %3801 = vmatmul.mubr.f32.gmra.mrb[0].mxu0 %v3605
      %v3802 = vpop.f32.mrb[0].mxu0
      %v3803 = vadd.f32 0.0, %v3802
      %v3804 = vpop.f32.mrb[0].mxu0
      %3805 = vmatprep.mubr.f32.mxu0 0.0
      %3806 = vmatmul.mubr.f32.gmra.mrb[0].mxu0 %v3608
      %v3807 = vpop.f32.mrb[0].mxu0
      %v3808 = vadd.f32 0.0, %v3807
      %v3809 = vpop.f32.mrb[0].mxu0
      %3810 = vmatprep.mubr.f32.mxu0 0.0
      %3811 = vmatmul.mubr.f32.gmra.mrb[0].mxu0 %v3611
      %v3812 = vpop.f32.mrb[0].mxu0
      %v3813 = vadd.f32 0.0, %v3812
      %v3814 = vpop.f32.mrb[0].mxu0
      %3815 = vmatprep.mubr.f32.mxu0 0.0
      %3816 = vmatmul.mubr.f32.gmra.mrb[0].mxu0 %v3614
      %v3817 = vpop.f32.mrb[0].mxu0
      %v3818 = vadd.f32 0.0, %v3817
      %v3819 = vpop.f32.mrb[0].mxu0
      %3820 = vmatprep.mubr.f32.mxu0 0.0
      %3821 = vmatmul.mubr.f32.gmra.mrb[0].mxu0 %v3617
      %v3822 = vpop.f32.mrb[0].mxu0
      %v3823 = vadd.f32 0.0, %v3822
      %v3824 = vpop.f32.mrb[0].mxu0
      %3825 = vmatprep.mubr.f32.mxu0 0.0
      %3826 = vmatmul.mubr.f32.gmra.mrb[0].mxu0 %v3620
      %v3827 = vpop.f32.mrb[0].mxu0
      %v3828 = vadd.f32 0.0, %v3827
      %v3829 = vpop.f32.mrb[0].mxu0
      %3830 = vmatprep.mubr.f32.mxu0 0.0
      %3831 = vmatmul.mubr.f32.gmra.mrb[0].mxu0 %v3623
      %v3832 = vpop.f32.mrb[0].mxu0
      %v3833 = vadd.f32 0.0, %v3832
      %v3834 = vpop.f32.mrb[0].mxu0
      %3835 = vmatprep.mubr.f32.mxu0 0.0
      %3836 = vmatmul.mubr.f32.gmra.mrb[0].mxu0 %v3626
      %v3837 = vpop.f32.mrb[0].mxu0
      %v3838 = vadd.f32 0.0, %v3837
      %v3839 = vpop.f32.mrb[0].mxu0
      %3840 = vmatprep.mubr.f32.mxu0 0.0
      %3841 = vmatmul.mubr.f32.gmra.mrb[0].mxu0 %v3629
      %v3842 = vpop.f32.mrb[0].mxu0
      %v3843 = vadd.f32 0.0, %v3842
      %v3844 = vpop.f32.mrb[0].mxu0
      %3845 = vmatprep.mubr.f32.mxu0 0.0
      %3846 = vmatmul.mubr.f32.gmra.mrb[0].mxu0 %v3632
      %v3847 = vpop.f32.mrb[0].mxu0
      %v3848 = vadd.f32 0.0, %v3847
      %v3849 = vpop.f32.mrb[0].mxu0
      %3850 = vmatprep.mubr.f32.mxu0 0.0
      %3851 = vmatmul.mubr.f32.gmra.mrb[0].mxu0 %v3635
      %v3852 = vpop.f32.mrb[0].mxu0
      %v3853 = vadd.f32 0.0, %v3852
      %v3854 = vpop.f32.mrb[0].mxu0
      %3855 = vmatprep.mubr.f32.mxu0 0.0
      %3856 = vmatmul.mubr.f32.gmra.mrb[0].mxu0 %v3638
      %v3857 = vpop.f32.mrb[0].mxu0
      %v3858 = vadd.f32 0.0, %v3857
      %v3859 = vpop.f32.mrb[0].mxu0
      %3860 = vmatprep.mubr.f32.mxu0 0.0
      %3861 = vmatmul.mubr.f32.gmra.mrb[0].mxu0 %v3641
      %v3862 = vpop.f32.mrb[0].mxu0
      %v3863 = vadd.f32 0.0, %v3862
      %v3864 = vpop.f32.mrb[0].mxu0
      %3865 = vmatprep.mubr.f32.mxu0 0.0
      %3866 = vmatmul.mubr.f32.gmra.mrb[0].mxu0 %v3644
      %v3867 = vpop.f32.mrb[0].mxu0
      %v3868 = vadd.f32 0.0, %v3867
      %v3869 = vpop.f32.mrb[0].mxu0
      %3870 = vdwg.mxu0
      %v3871 = vadd.f32 %v3484, %v3713
      %v3872 = vadd.f32 %v3485, %v3718
      %v3873 = vadd.f32 %v3486, %v3723
      %v3874 = vadd.f32 %v3487, %v3728
      %v3875 = vadd.f32 %v3488, %v3733
      %v3876 = vadd.f32 %v3489, %v3738
      %v3877 = vadd.f32 %v3490, %v3743
      %v3878 = vadd.f32 %v3491, %v3748
      %v3879 = vadd.f32 %v3492, %v3753
      %v3880 = vadd.f32 %v3493, %v3758
      %v3881 = vadd.f32 %v3494, %v3763
      %v3882 = vadd.f32 %v3495, %v3768
      %v3883 = vadd.f32 %v3496, %v3773
      %v3884 = vadd.f32 %v3497, %v3778
      %v3885 = vadd.f32 %v3498, %v3783
      %v3886 = vadd.f32 %v3499, %v3788
      %v3887 = vadd.f32 %v3500, %v3793
      %v3888 = vadd.f32 %v3501, %v3798
      %v3889 = vadd.f32 %v3502, %v3803
      %v3890 = vadd.f32 %v3503, %v3808
      %v3891 = vadd.f32 %v3504, %v3813
      %v3892 = vadd.f32 %v3505, %v3818
      %v3893 = vadd.f32 %v3506, %v3823
      %v3894 = vadd.f32 %v3507, %v3828
      %v3895 = vadd.f32 %v3508, %v3833
      %v3896 = vadd.f32 %v3509, %v3838
      %v3897 = vadd.f32 %v3510, %v3843
      %v3898 = vadd.f32 %v3511, %v3848
      %v3899 = vadd.f32 %v3512, %v3853
      %v3900 = vadd.f32 %v3513, %v3858
      %v3901 = vadd.f32 %v3514, %v3863
      %v3902 = vadd.f32 %v3515, %v3868
      %v3903 = vld [vmem:[%s4] sm:$0x1]
      %v3905 = vlaneseq
      %v3906 = vshrl.u32 %v3905, 7
      %v3907 = vsub.s32 0, %v3906
      %v3908 = vrot.slane %v3903, %v3907
      %v3910 = vadd.f32 %v3871, %v3908
      %v3911 = vadd.f32 %v3872, %v3908
      %v3912 = vadd.f32 %v3873, %v3908
      %v3913 = vadd.f32 %v3874, %v3908
      %v3914 = vadd.f32 %v3875, %v3908
      %v3915 = vadd.f32 %v3876, %v3908
      %v3916 = vadd.f32 %v3877, %v3908
      %v3917 = vadd.f32 %v3878, %v3908
      %v3918 = vadd.f32 %v3879, %v3908
      %v3919 = vadd.f32 %v3880, %v3908
      %v3920 = vadd.f32 %v3881, %v3908
      %v3921 = vadd.f32 %v3882, %v3908
      %v3922 = vadd.f32 %v3883, %v3908
      %v3923 = vadd.f32 %v3884, %v3908
      %v3924 = vadd.f32 %v3885, %v3908
      %v3925 = vadd.f32 %v3886, %v3908
      %v3926 = vadd.f32 %v3887, %v3908
      %v3927 = vadd.f32 %v3888, %v3908
      %v3928 = vadd.f32 %v3889, %v3908
      %v3929 = vadd.f32 %v3890, %v3908
      %v3930 = vadd.f32 %v3891, %v3908
      %v3931 = vadd.f32 %v3892, %v3908
      %v3932 = vadd.f32 %v3893, %v3908
      %v3933 = vadd.f32 %v3894, %v3908
      %v3934 = vadd.f32 %v3895, %v3908
      %v3935 = vadd.f32 %v3896, %v3908
      %v3936 = vadd.f32 %v3897, %v3908
      %v3937 = vadd.f32 %v3898, %v3908
      %v3938 = vadd.f32 %v3899, %v3908
      %v3939 = vadd.f32 %v3900, %v3908
      %v3940 = vadd.f32 %v3901, %v3908
      %v3941 = vadd.f32 %v3902, %v3908
      %3942 = vst.msk [vmem:[%s258] sm:$0xff] %vm405, %v3910
      %3943 = vst.msk [vmem:[%s258 + $0x8] sm:$0xff] %vm405, %v3911
      %3944 = vst.msk [vmem:[%s258 + $0x10] sm:$0xff] %vm405, %v3912
      %3945 = vst.msk [vmem:[%s258 + $0x18] sm:$0xff] %vm405, %v3913
      %3946 = vst.msk [vmem:[%s258 + $0x20] sm:$0xff] %vm405, %v3914
      %3947 = vst.msk [vmem:[%s258 + $0x28] sm:$0xff] %vm405, %v3915
      %3948 = vst.msk [vmem:[%s258 + $0x30] sm:$0xff] %vm405, %v3916
      %3949 = vst.msk [vmem:[%s258 + $0x38] sm:$0xff] %vm405, %v3917
      %3950 = vst.msk [vmem:[%s258 + $0x40] sm:$0xff] %vm405, %v3918
      %3951 = vst.msk [vmem:[%s258 + $0x48] sm:$0xff] %vm405, %v3919
      %3952 = vst.msk [vmem:[%s258 + $0x50] sm:$0xff] %vm405, %v3920
      %3953 = vst.msk [vmem:[%s258 + $0x58] sm:$0xff] %vm405, %v3921
      %3954 = vst.msk [vmem:[%s258 + $0x60] sm:$0xff] %vm405, %v3922
      %3955 = vst.msk [vmem:[%s258 + $0x68] sm:$0xff] %vm405, %v3923
      %3956 = vst.msk [vmem:[%s258 + $0x70] sm:$0xff] %vm405, %v3924
      %3957 = vst.msk [vmem:[%s258 + $0x78] sm:$0xff] %vm405, %v3925
      %3958 = vst.msk [vmem:[%s258 + $0x80] sm:$0xff] %vm405, %v3926
      %3959 = vst.msk [vmem:[%s258 + $0x88] sm:$0xff] %vm405, %v3927
      %3960 = vst.msk [vmem:[%s258 + $0x90] sm:$0xff] %vm405, %v3928
      %3961 = vst.msk [vmem:[%s258 + $0x98] sm:$0xff] %vm405, %v3929
      %3962 = vst.msk [vmem:[%s258 + $0xa0] sm:$0xff] %vm405, %v3930
      %3963 = vst.msk [vmem:[%s258 + $0xa8] sm:$0xff] %vm405, %v3931
      %3964 = vst.msk [vmem:[%s258 + $0xb0] sm:$0xff] %vm405, %v3932
      %3965 = vst.msk [vmem:[%s258 + $0xb8] sm:$0xff] %vm405, %v3933
      %3966 = vst.msk [vmem:[%s258 + $0xc0] sm:$0xff] %vm405, %v3934
      %3967 = vst.msk [vmem:[%s258 + $0xc8] sm:$0xff] %vm405, %v3935
      %3968 = vst.msk [vmem:[%s258 + $0xd0] sm:$0xff] %vm405, %v3936
      %3969 = vst.msk [vmem:[%s258 + $0xd8] sm:$0xff] %vm405, %v3937
      %3970 = vst.msk [vmem:[%s258 + $0xe0] sm:$0xff] %vm405, %v3938
      %3971 = vst.msk [vmem:[%s258 + $0xe8] sm:$0xff] %vm405, %v3939
      %3972 = vst.msk [vmem:[%s258 + $0xf0] sm:$0xff] %vm405, %v3940
      %3973 = vst.msk [vmem:[%s258 + $0xf8] sm:$0xff] %vm405, %v3941
      %v3974 = vsel %vm405, %v3910, 0.0
      %v3975 = vsel %vm405, %v3911, 0.0
      %v3976 = vadd.f32 %v3974, %v3975
      %v3977 = vsel %vm405, %v3912, 0.0
      %v3978 = vadd.f32 %v3976, %v3977
      %v3979 = vsel %vm405, %v3913, 0.0
      %v3980 = vadd.f32 %v3978, %v3979
      %v3981 = vsel %vm405, %v3914, 0.0
      %v3982 = vadd.f32 %v3980, %v3981
      %v3983 = vsel %vm405, %v3915, 0.0
      %v3984 = vadd.f32 %v3982, %v3983
      %v3985 = vsel %vm405, %v3916, 0.0
      %v3986 = vadd.f32 %v3984, %v3985
      %v3987 = vsel %vm405, %v3917, 0.0
      %v3988 = vadd.f32 %v3986, %v3987
      %v3989 = vsel %vm405, %v3918, 0.0
      %v3990 = vadd.f32 %v3988, %v3989
      %v3991 = vsel %vm405, %v3919, 0.0
      %v3992 = vadd.f32 %v3990, %v3991
      %v3993 = vsel %vm405, %v3920, 0.0
      %v3994 = vadd.f32 %v3992, %v3993
      %v3995 = vsel %vm405, %v3921, 0.0
      %v3996 = vadd.f32 %v3994, %v3995
      %v3997 = vsel %vm405, %v3922, 0.0
      %v3998 = vadd.f32 %v3996, %v3997
      %v3999 = vsel %vm405, %v3923, 0.0
      %v4000 = vadd.f32 %v3998, %v3999
      %v4001 = vsel %vm405, %v3924, 0.0
      %v4002 = vadd.f32 %v4000, %v4001
      %v4003 = vsel %vm405, %v3925, 0.0
      %v4004 = vadd.f32 %v4002, %v4003
      %v4005 = vsel %vm405, %v3926, 0.0
      %v4006 = vadd.f32 %v4004, %v4005
      %v4007 = vsel %vm405, %v3927, 0.0
      %v4008 = vadd.f32 %v4006, %v4007
      %v4009 = vsel %vm405, %v3928, 0.0
      %v4010 = vadd.f32 %v4008, %v4009
      %v4011 = vsel %vm405, %v3929, 0.0
      %v4012 = vadd.f32 %v4010, %v4011
      %v4013 = vsel %vm405, %v3930, 0.0
      %v4014 = vadd.f32 %v4012, %v4013
      %v4015 = vsel %vm405, %v3931, 0.0
      %v4016 = vadd.f32 %v4014, %v4015
      %v4017 = vsel %vm405, %v3932, 0.0
      %v4018 = vadd.f32 %v4016, %v4017
      %v4019 = vsel %vm405, %v3933, 0.0
      %v4020 = vadd.f32 %v4018, %v4019
      %v4021 = vsel %vm405, %v3934, 0.0
      %v4022 = vadd.f32 %v4020, %v4021
      %v4023 = vsel %vm405, %v3935, 0.0
      %v4024 = vadd.f32 %v4022, %v4023
      %v4025 = vsel %vm405, %v3936, 0.0
      %v4026 = vadd.f32 %v4024, %v4025
      %v4027 = vsel %vm405, %v3937, 0.0
      %v4028 = vadd.f32 %v4026, %v4027
      %v4029 = vsel %vm405, %v3938, 0.0
      %v4030 = vadd.f32 %v4028, %v4029
      %v4031 = vsel %vm405, %v3939, 0.0
      %v4032 = vadd.f32 %v4030, %v4031
      %v4033 = vsel %vm405, %v3940, 0.0
      %v4034 = vadd.f32 %v4032, %v4033
      %v4035 = vsel %vm405, %v3941, 0.0
      %v4036 = vadd.f32 %v4034, %v4035
      %v4037 = vrot.slane %v4036, 4
      %v4038 = vadd.f32 %v4036, %v4037
      %v4039 = vrot.slane %v4038, 2
      %v4040 = vadd.f32 %v4038, %v4039
      %v4041 = vrot.slane %v4040, 1
      %v4042 = vadd.f32 %v4040, %v4041
      %v4043 = vrcp.pop 256.0
      %v4044 = vmul.f32 %v4042, %v4043
      %v4045 = vsub.f32 %v3910, %v4044
      %v4046 = vsub.f32 %v3911, %v4044
      %v4047 = vsub.f32 %v3912, %v4044
      %v4048 = vsub.f32 %v3913, %v4044
      %v4049 = vsub.f32 %v3914, %v4044
      %v4050 = vsub.f32 %v3915, %v4044
      %v4051 = vsub.f32 %v3916, %v4044
      %v4052 = vsub.f32 %v3917, %v4044
      %v4053 = vsub.f32 %v3918, %v4044
      %v4054 = vsub.f32 %v3919, %v4044
      %v4055 = vsub.f32 %v3920, %v4044
      %v4056 = vsub.f32 %v3921, %v4044
      %v4057 = vsub.f32 %v3922, %v4044
      %v4058 = vsub.f32 %v3923, %v4044
      %v4059 = vsub.f32 %v3924, %v4044
      %v4060 = vsub.f32 %v3925, %v4044
      %v4061 = vsub.f32 %v3926, %v4044
      %v4062 = vsub.f32 %v3927, %v4044
      %v4063 = vsub.f32 %v3928, %v4044
      %v4064 = vsub.f32 %v3929, %v4044
      %v4065 = vsub.f32 %v3930, %v4044
      %v4066 = vsub.f32 %v3931, %v4044
      %v4067 = vsub.f32 %v3932, %v4044
      %v4068 = vsub.f32 %v3933, %v4044
      %v4069 = vsub.f32 %v3934, %v4044
      %v4070 = vsub.f32 %v3935, %v4044
      %v4071 = vsub.f32 %v3936, %v4044
      %v4072 = vsub.f32 %v3937, %v4044
      %v4073 = vsub.f32 %v3938, %v4044
      %v4074 = vsub.f32 %v3939, %v4044
      %v4075 = vsub.f32 %v3940, %v4044
      %v4076 = vsub.f32 %v3941, %v4044
      %v4077 = vmul.f32 %v4045, %v4045
      %v4078 = vmul.f32 %v4046, %v4046
      %v4079 = vmul.f32 %v4047, %v4047
      %v4080 = vmul.f32 %v4048, %v4048
      %v4081 = vmul.f32 %v4049, %v4049
      %v4082 = vmul.f32 %v4050, %v4050
      %v4083 = vmul.f32 %v4051, %v4051
      %v4084 = vmul.f32 %v4052, %v4052
      %v4085 = vmul.f32 %v4053, %v4053
      %v4086 = vmul.f32 %v4054, %v4054
      %v4087 = vmul.f32 %v4055, %v4055
      %v4088 = vmul.f32 %v4056, %v4056
      %v4089 = vmul.f32 %v4057, %v4057
      %v4090 = vmul.f32 %v4058, %v4058
      %v4091 = vmul.f32 %v4059, %v4059
      %v4092 = vmul.f32 %v4060, %v4060
      %v4093 = vmul.f32 %v4061, %v4061
      %v4094 = vmul.f32 %v4062, %v4062
      %v4095 = vmul.f32 %v4063, %v4063
      %v4096 = vmul.f32 %v4064, %v4064
      %v4097 = vmul.f32 %v4065, %v4065
      %v4098 = vmul.f32 %v4066, %v4066
      %v4099 = vmul.f32 %v4067, %v4067
      %v4100 = vmul.f32 %v4068, %v4068
      %v4101 = vmul.f32 %v4069, %v4069
      %v4102 = vmul.f32 %v4070, %v4070
      %v4103 = vmul.f32 %v4071, %v4071
      %v4104 = vmul.f32 %v4072, %v4072
      %v4105 = vmul.f32 %v4073, %v4073
      %v4106 = vmul.f32 %v4074, %v4074
      %v4107 = vmul.f32 %v4075, %v4075
      %v4108 = vmul.f32 %v4076, %v4076
      %v4109 = vsel %vm405, %v4077, 0.0
      %v4110 = vsel %vm405, %v4078, 0.0
      %v4111 = vadd.f32 %v4109, %v4110
      %v4112 = vsel %vm405, %v4079, 0.0
      %v4113 = vadd.f32 %v4111, %v4112
      %v4114 = vsel %vm405, %v4080, 0.0
      %v4115 = vadd.f32 %v4113, %v4114
      %v4116 = vsel %vm405, %v4081, 0.0
      %v4117 = vadd.f32 %v4115, %v4116
      %v4118 = vsel %vm405, %v4082, 0.0
      %v4119 = vadd.f32 %v4117, %v4118
      %v4120 = vsel %vm405, %v4083, 0.0
      %v4121 = vadd.f32 %v4119, %v4120
      %v4122 = vsel %vm405, %v4084, 0.0
      %v4123 = vadd.f32 %v4121, %v4122
      %v4124 = vsel %vm405, %v4085, 0.0
      %v4125 = vadd.f32 %v4123, %v4124
      %v4126 = vsel %vm405, %v4086, 0.0
      %v4127 = vadd.f32 %v4125, %v4126
      %v4128 = vsel %vm405, %v4087, 0.0
      %v4129 = vadd.f32 %v4127, %v4128
      %v4130 = vsel %vm405, %v4088, 0.0
      %v4131 = vadd.f32 %v4129, %v4130
      %v4132 = vsel %vm405, %v4089, 0.0
      %v4133 = vadd.f32 %v4131, %v4132
      %v4134 = vsel %vm405, %v4090, 0.0
      %v4135 = vadd.f32 %v4133, %v4134
      %v4136 = vsel %vm405, %v4091, 0.0
      %v4137 = vadd.f32 %v4135, %v4136
      %v4138 = vsel %vm405, %v4092, 0.0
      %v4139 = vadd.f32 %v4137, %v4138
      %v4140 = vsel %vm405, %v4093, 0.0
      %v4141 = vadd.f32 %v4139, %v4140
      %v4142 = vsel %vm405, %v4094, 0.0
      %v4143 = vadd.f32 %v4141, %v4142
      %v4144 = vsel %vm405, %v4095, 0.0
      %v4145 = vadd.f32 %v4143, %v4144
      %v4146 = vsel %vm405, %v4096, 0.0
      %v4147 = vadd.f32 %v4145, %v4146
      %v4148 = vsel %vm405, %v4097, 0.0
      %v4149 = vadd.f32 %v4147, %v4148
      %v4150 = vsel %vm405, %v4098, 0.0
      %v4151 = vadd.f32 %v4149, %v4150
      %v4152 = vsel %vm405, %v4099, 0.0
      %v4153 = vadd.f32 %v4151, %v4152
      %v4154 = vsel %vm405, %v4100, 0.0
      %v4155 = vadd.f32 %v4153, %v4154
      %v4156 = vsel %vm405, %v4101, 0.0
      %v4157 = vadd.f32 %v4155, %v4156
      %v4158 = vsel %vm405, %v4102, 0.0
      %v4159 = vadd.f32 %v4157, %v4158
      %v4160 = vsel %vm405, %v4103, 0.0
      %v4161 = vadd.f32 %v4159, %v4160
      %v4162 = vsel %vm405, %v4104, 0.0
      %v4163 = vadd.f32 %v4161, %v4162
      %v4164 = vsel %vm405, %v4105, 0.0
      %v4165 = vadd.f32 %v4163, %v4164
      %v4166 = vsel %vm405, %v4106, 0.0
      %v4167 = vadd.f32 %v4165, %v4166
      %v4168 = vsel %vm405, %v4107, 0.0
      %v4169 = vadd.f32 %v4167, %v4168
      %v4170 = vsel %vm405, %v4108, 0.0
      %v4171 = vadd.f32 %v4169, %v4170
      %v4172 = vrot.slane %v4171, 4
      %v4173 = vadd.f32 %v4171, %v4172
      %v4174 = vrot.slane %v4173, 2
      %v4175 = vadd.f32 %v4173, %v4174
      %v4176 = vrot.slane %v4175, 1
      %v4177 = vadd.f32 %v4175, %v4176
      %vm4178 = vcmask 1040384
      %v4179 = vsel %vm4178, %v4044, %v4177
      %4180 = vst.msk [vmem:[%s262] sm:$0x3] %vm408, %v4179
      %p4181 = scmp.lt.s32.totalorder %s18, 1
      %s4182 = scalar_select %p4181, %s18, 1
      %s4183 = smul.addr %s4182, 32
      %s4184 = smul.addr %s4183, 8
      %s4185 = scalar_lea.vmem %s5, %s4184
      %p4186 = scmp.lt.s32.totalorder %s18, 1
      %s4187 = scalar_select %p4186, %s18, 1
      %s4188 = smul.addr %s4187, 2
      %s4189 = scalar_lea.vmem %s6, %s4188
      // Predicated region
      $region41: #{conv_block_forward.4} parent=39 // pred_check
        %p4190 = pneg %p146
      $region42: #{conv_block_forward.4} parent=39 // pred_check_branch
        %4192 = sbr.rel (%p4190) target = $region44
      $region43: #{conv_block_forward.4} parent=39 // pred_region
        _
      $region44: #{conv_block_forward.4} parent=39 // pred_fallthru
        _
      // Predicated region
      $region45: #{conv_block_forward.4} parent=39 // pred_check
        %p4193 = pneg %p172
      $region46: #{conv_block_forward.4} parent=39 // pred_check_branch
        %4195 = sbr.rel (%p4193) target = $region48
      $region47: #{conv_block_forward.4} parent=39 // pred_region
        _
      $region48: #{conv_block_forward.4} parent=39 // pred_fallthru
        _
    $region40: #{conv_block_forward.4} parent=5 // pred_fallthru
      _
    %p4196 = scmp.le.s32.totalorder 2, %s13
    // Predicated region
    $region49: #{conv_block_forward.4} parent=5 // pred_check
      %p4197 = pneg %p4196
    $region50: #{conv_block_forward.4} parent=5 // pred_check_branch
      %4199 = sbr.rel (%p4197) target = $region52
    $region51: #{conv_block_forward.4} parent=5 // pred_region
      %s4200 = ssub.s32 %s13, 2
      // Predicated region
      $region53: #{conv_block_forward.4} parent=51 // pred_check
        %p4201 = pneg %p152
      $region54: #{conv_block_forward.4} parent=51 // pred_check_branch
        %4203 = sbr.rel (%p4201) target = $region56
      $region55: #{conv_block_forward.4} parent=51 // pred_region
        %p4204 = scmp.lt.s32.totalorder %s19, 1
        %s4205 = scalar_select %p4204, %s19, 1
        %s4206 = smul.addr %s4205, 32
        %s4207 = smul.addr %s4206, 8
        %s4208 = scalar_lea.vmem %s5, %s4207
      $region56: #{conv_block_forward.4} parent=51 // pred_fallthru
        _
      // Predicated region
      $region57: #{conv_block_forward.4} parent=51 // pred_check
        %p4209 = pneg %p178
      $region58: #{conv_block_forward.4} parent=51 // pred_check_branch
        %4211 = sbr.rel (%p4209) target = $region60
      $region59: #{conv_block_forward.4} parent=51 // pred_region
        %p4212 = scmp.lt.s32.totalorder %s19, 1
        %s4213 = scalar_select %p4212, %s19, 1
        %s4214 = smul.addr %s4213, 2
        %s4215 = scalar_lea.vmem %s6, %s4214
      $region60: #{conv_block_forward.4} parent=51 // pred_fallthru
        _
    $region52: #{conv_block_forward.4} parent=5 // pred_fallthru
      _
  $region6: #{conv_block_forward.4} parent=0 // loop_footer
    %s17 = sadd.s32 1, %s13
  $region7: #{conv_block_forward.4} parent=0 // loop_footer_branch
    %12 = sbr.rel target = $region3
  $region8: #{conv_block_forward.4} parent=0 // loop_exit
    _

</llo_original>
